<compile_context>
chip_gen: v7x
topology: tpu7x:2x2x1
jax: 0.10.0
libtpu: 0.0.40
codegen_flags: <defaults>
</compile_context>

<pallas_src>
import functools

import jax
import jax.numpy as jnp
from jax import lax
from jax.experimental import pallas as pl
from jax.experimental.pallas import tpu as pltpu

EPS = 1e-5


def _log2(v: int) -> int:
    assert v > 0 and (v & (v - 1)) == 0, v
    return v.bit_length() - 1


# ----------------------------- kernel helpers ------------------------------- #

def _grid_coords(Hg, Wg, R):
    """Per-row (h, w) coordinates on the (Hg, Wg) grid for an (R, C) slab."""
    r = lax.broadcasted_iota(jnp.int32, (R, 1), 0)
    w_i = r & (Wg - 1)
    h_i = (r >> _log2(Wg)) & (Hg - 1)
    return h_i, w_i


def _conv3x3_bias_relu(act, w_ref, bias_row, h_i, w_i, *, level, Hg, Wg, cout):
    """3x3 conv (padding=1) + folded-BN bias + ReLU as ONE MXU matmul.

    act:      (R, cin)       input slab (R = bn*Hg*Wg rows, any float dtype)
    w_ref:    (9*cin, cout)  bf16 folded conv/BN weight
    bias_row: (1, cout)      f32 folded bias
    h_i/w_i:  (R, 1) int32   row coordinates on the (Hg, Wg) base grid
    level:    dilation level (0 = dense grid, 1 = every other row/col valid)
    """
    step = 1 << level
    Hk, Wk = Hg >> level, Wg >> level
    hk, wk = h_i >> level, w_i >> level

    act_bf = act.astype(jnp.bfloat16)               # single bf16 cast per layer
    taps = []
    for dy in (-1, 0, 1):
        for dx in (-1, 0, 1):
            shift = (dy * Wg + dx) * step
            tap = act_bf if shift == 0 else jnp.roll(act_bf, -shift, axis=0)
            valid = ((hk + dy >= 0) & (hk + dy < Hk) &
                     (wk + dx >= 0) & (wk + dx < Wk))
            taps.append(jnp.where(valid, tap, 0.0))
    patches = jnp.concatenate(taps, axis=1)         # (R, 9*cin) bf16 im2col
    acc = jnp.dot(patches, w_ref[...],
                  preferred_element_type=jnp.float32)   # one K=9*cin MXU pass
    return jnp.maximum(acc + bias_row, 0.0)


def _maxpool_2x2(y, *, level, Wg):
    """2x2 / stride-2 max-pool; the result is valid at rows whose (h, w) are
    multiples of 2^(level+1) (other rows hold partial maxes we never read)."""
    step = 1 << level
    a = jnp.maximum(y, jnp.roll(y, -step, axis=0))             # pair over w
    return jnp.maximum(a, jnp.roll(a, -(Wg * step), axis=0))   # pair over h


def _compact_even(y, scratch_ref, *, bn, Hg, Wg):
    """Keep only rows with even (h, w) on the (Hg, Wg) grid, producing the
    compact (bn * Hg/2 * Wg/2, C) slab for the next (half-resolution) level."""
    R, C = y.shape
    # even-h rows: regroup h-pairs into the second-minor dim (2*Wg >= 16, so no
    # sublane padding) and keep the first half of each group.
    z = y.reshape(bn * Hg // 2, 2 * Wg, C)[:, :Wg, :].reshape(R // 2, C)
    # even-w rows: stride-2 row selection through a small VMEM scratch.
    scratch_ref[0:R // 2, :] = z
    return scratch_ref[pl.ds(0, R // 4, 2), :]


# ------------------------------- Pallas kernel ------------------------------ #

def mnist_cnn_kernel(x_ref, w1_ref, w2_ref, w3_ref, w4_ref, b_ref, out_ref,
                     pool_scr, *, bn, H, W, couts):
    biases = b_ref[...]                                       # (4, 128) f32

    # ---- block 1: (H, W) grid, compact layout -------------------------------
    R1 = bn * H * W
    act = x_ref[...]                                          # (R1, cin0) f32
    h_i, w_i = _grid_coords(H, W, R1)
    y = _conv3x3_bias_relu(act, w1_ref, biases[0:1, :couts[0]], h_i, w_i,
                           level=0, Hg=H, Wg=W, cout=couts[0])
    y = _maxpool_2x2(y, level=0, Wg=W)
    act = _compact_even(y, pool_scr, bn=bn, Hg=H, Wg=W)       # (R1//4, c1)

    # ---- block 2: (H/2, W/2) grid, compact layout ---------------------------
    H2, W2 = H // 2, W // 2
    R2 = bn * H2 * W2
    h_i, w_i = _grid_coords(H2, W2, R2)
    y = _conv3x3_bias_relu(act, w2_ref, biases[1:2, :couts[1]], h_i, w_i,
                           level=0, Hg=H2, Wg=W2, cout=couts[1])
    y = _maxpool_2x2(y, level=0, Wg=W2)
    act = _compact_even(y, pool_scr, bn=bn, Hg=H2, Wg=W2)     # (R2//4, c2)

    # ---- blocks 3 & 4: (H/4, W/4) grid, dilation levels 0 and 1 --------------
    # The grid is tiny here (16 cells/image for H=16), so the redundant rows of
    # the dilated layout are cheaper than two more compaction passes.
    H4, W4 = H // 4, W // 4
    R4 = bn * H4 * W4
    h_i, w_i = _grid_coords(H4, W4, R4)
    y = _conv3x3_bias_relu(act, w3_ref, biases[2:3, :couts[2]], h_i, w_i,
                           level=0, Hg=H4, Wg=W4, cout=couts[2])
    act = _maxpool_2x2(y, level=0, Wg=W4)                     # valid at level 1

    y = _conv3x3_bias_relu(act, w4_ref, biases[3:4, :couts[3]], h_i, w_i,
                           level=1, Hg=H4, Wg=W4, cout=couts[3])
    y = _maxpool_2x2(y, level=1, Wg=W4)                       # valid at level 2

    # ---- AdaptiveAvgPool2d((1,1)) + flatten ----------------------------------
    # Only rows at level-2 grid positions hold pooled values; average them.
    sel = ((h_i & 3) == 0) & ((w_i & 3) == 0)
    n_cells = (H4 // 4) * (W4 // 4)
    pooled = jnp.sum(jnp.where(sel, y, 0.0).reshape(bn, H4 * W4, couts[3]),
                     axis=1) * (1.0 / n_cells)
    out_ref[...] = pooled.astype(out_ref.dtype)               # (bn, 128) lane-dense


# -------------------------------- JAX wrapper ------------------------------- #

def _fold_block_params(p):
    """Fold conv bias + eval-mode BatchNorm into the conv weight / a bias row."""
    cout, cin = p["w"].shape[0], p["w"].shape[1]
    scale = p["gamma"] / jnp.sqrt(p["var"] + EPS)                     # (cout,)
    w_mat = jnp.transpose(p["w"], (2, 3, 1, 0)).reshape(9 * cin, cout)
    w_mat = (w_mat * scale[None, :]).astype(jnp.bfloat16)             # scale folded
    bias = (p["beta"] + (p["b"] - p["mean"]) * scale).astype(jnp.float32)
    return w_mat, bias


def _images_per_step(n):
    """Images per grid step: up to 32 (v7x VMEM headroom) while keeping at
    least two grid steps when the batch allows it (feeds both v7x TCs)."""
    if n < 2:
        return 1
    return min(32, n // 2)


def mnist_cnn_forward(x_nchw, params):
    """Equivalent of MNIST_CNN.forward: 4x[conv3x3-BN-ReLU-maxpool2] ->
    AdaptiveAvgPool2d((1,1)) -> flatten.  BatchNorm uses running stats."""
    N, cin0, H, W = x_nchw.shape
    assert H == W and H >= 16 and (H & (H - 1)) == 0, (
        "fused kernel assumes square power-of-two spatial dims >= 16")

    cins = tuple(p["w"].shape[1] for p in params)
    couts = tuple(p["w"].shape[0] for p in params)
    assert cins[0] == cin0
    assert couts[0] == couts[1], "pool scratch assumes conv1/conv2 widths match"
    c_out = couts[-1]
    HW = H * W

    bn = _images_per_step(N)
    G = -(-N // bn)
    n_pad = G * bn

    x = jnp.transpose(x_nchw, (0, 2, 3, 1)).reshape(N, HW, cin0)
    x = x.astype(jnp.float32)
    if n_pad != N:
        x = jnp.concatenate(
            [x, jnp.zeros((n_pad - N, HW, cin0), x.dtype)], axis=0)
    x = x.reshape(G, bn * HW, cin0)

    folded = [_fold_block_params(p) for p in params]
    w_mats = [f[0] for f in folded]
    bias_all = jnp.stack(
        [jnp.pad(f[1], (0, 128 - f[1].shape[0])) for f in folded])    # (4, 128)

    kernel = functools.partial(mnist_cnn_kernel, bn=bn, H=H, W=W, couts=couts)
    out = pl.pallas_call(
        kernel,
        out_shape=jax.ShapeDtypeStruct((G, bn, c_out), jnp.float32),
        grid_spec=pltpu.PrefetchScalarGridSpec(
            num_scalar_prefetch=0,
            grid=(G,),
            in_specs=[
                pl.BlockSpec((None, bn * HW, cin0), lambda i: (i, 0, 0)),
                pl.BlockSpec(w_mats[0].shape, lambda i: (0, 0)),
                pl.BlockSpec(w_mats[1].shape, lambda i: (0, 0)),
                pl.BlockSpec(w_mats[2].shape, lambda i: (0, 0)),
                pl.BlockSpec(w_mats[3].shape, lambda i: (0, 0)),
                pl.BlockSpec((4, 128), lambda i: (0, 0)),
            ],
            out_specs=pl.BlockSpec((None, bn, c_out), lambda i: (i, 0, 0)),
            scratch_shapes=[
                pltpu.VMEM((bn * HW // 2, couts[0]), jnp.float32)],
        ),
        compiler_params=pltpu.CompilerParams(
            dimension_semantics=("parallel",),
            vmem_limit_bytes=48 * 1024 * 1024),
    )(x, *w_mats, bias_all)
    return out.reshape(n_pad, c_out)[:N]


# ----------------------------- reference (plain JAX) ------------------------ #

def reference_forward(x_nchw, params):
    x = jnp.transpose(x_nchw, (0, 2, 3, 1))
    for p in params:
        y = lax.conv_general_dilated(
            x, jnp.transpose(p["w"], (2, 3, 1, 0)), (1, 1), "SAME",
            dimension_numbers=("NHWC", "HWIO", "NHWC"))
        y = y + p["b"]
        y = p["gamma"] * (y - p["mean"]) / jnp.sqrt(p["var"] + EPS) + p["beta"]
        y = jnp.maximum(y, 0.0)
        x = lax.reduce_window(y, -jnp.inf, lax.max,
                              (1, 2, 2, 1), (1, 2, 2, 1), "VALID")
    return jnp.mean(x, axis=(1, 2))


# ----------------------------------- params --------------------------------- #

def init_block_params(key, cin, cout):
    ks = jax.random.split(key, 6)
    fan_in = cin * 9
    return dict(
        w=jax.random.normal(ks[0], (cout, cin, 3, 3), jnp.float32) / jnp.sqrt(fan_in),
        b=0.05 * jax.random.normal(ks[1], (cout,), jnp.float32),
        gamma=1.0 + 0.1 * jax.random.normal(ks[2], (cout,), jnp.float32),
        beta=0.1 * jax.random.normal(ks[3], (cout,), jnp.float32),
        mean=0.1 * jax.random.normal(ks[4], (cout,), jnp.float32),
        var=1.0 + 0.1 * jax.random.uniform(ks[5], (cout,), jnp.float32),
    )


if __name__ == "__main__":
    key = jax.random.PRNGKey(0)
    kx, k1, k2, k3, k4 = jax.random.split(key, 5)

    # MNIST-like: single channel, small power-of-two spatial, batch=2 (NCHW).
    x = jax.random.normal(kx, (2, 1, 16, 16), jnp.float32)

    params = [
        init_block_params(k1, 1, 64),    # conv1
        init_block_params(k2, 64, 64),   # conv2
        init_block_params(k3, 64, 64),   # conv3
        init_block_params(k4, 64, 128),  # conv4
    ]

    out = jax.block_until_ready(mnist_cnn_forward(x, params))
    assert out.shape == (2, 128), out.shape

    ref = reference_forward(x, params)
    max_err = float(jnp.max(jnp.abs(out - ref)))
    # bf16 MXU operands (f32 accumulation) for all four conv layers -> looser
    # tolerance than a pure-f32 comparison.
    assert jnp.allclose(out, ref, rtol=4e-2, atol=4e-2), f"max_err={max_err}"

    print("KERNEL_OK")
</pallas_src>

<mosaic_0001>
module attributes {stable_mosaic.version = 11 : i64} {
  func.func @mnist_cnn_kernel(%arg0: i32, %arg1: memref<1x256x1xf32, #tpu.memory_space<vmem>>, %arg2: memref<9x64xbf16, #tpu.memory_space<vmem>>, %arg3: memref<576x64xbf16, #tpu.memory_space<vmem>>, %arg4: memref<576x64xbf16, #tpu.memory_space<vmem>>, %arg5: memref<576x128xbf16, #tpu.memory_space<vmem>>, %arg6: memref<4x128xf32, #tpu.memory_space<vmem>>, %arg7: memref<1x1x128xf32, #tpu.memory_space<vmem>>, %arg8: memref<128x64xf32, #tpu.memory_space<vmem>>) attributes {dimension_semantics = [#tpu.dimension_semantics<parallel>], iteration_bounds = array<i64: 2>, scalar_prefetch = 0 : i64, scratch_operands = 1 : i64, tpu.core_type = #tpu.core_type<tc>, window_params = [{transform_indices = @transform_0, window_bounds = array<i64: 1, 256, 1>}, {pipeline_mode = #tpu.pipeline_mode<synchronous>, transform_indices = @transform_1, window_bounds = array<i64: 9, 64>}, {pipeline_mode = #tpu.pipeline_mode<synchronous>, transform_indices = @transform_2, window_bounds = array<i64: 576, 64>}, {pipeline_mode = #tpu.pipeline_mode<synchronous>, transform_indices = @transform_3, window_bounds = array<i64: 576, 64>}, {pipeline_mode = #tpu.pipeline_mode<synchronous>, transform_indices = @transform_4, window_bounds = array<i64: 576, 128>}, {pipeline_mode = #tpu.pipeline_mode<synchronous>, transform_indices = @transform_5, window_bounds = array<i64: 4, 128>}, {transform_indices = @transform_6, window_bounds = array<i64: 1, 1, 128>}]} {
    %c0 = arith.constant 0 : index
    %c0_0 = arith.constant 0 : index
    %0 = vector.load %arg6[%c0, %c0_0] : memref<4x128xf32, #tpu.memory_space<vmem>>, vector<4x128xf32>
    %c0_1 = arith.constant 0 : index
    %c0_2 = arith.constant 0 : index
    %c0_3 = arith.constant 0 : index
    %1 = vector.load %arg1[%c0_1, %c0_2, %c0_3] : memref<1x256x1xf32, #tpu.memory_space<vmem>>, vector<1x256x1xf32>
    %2 = vector.shape_cast %1 : vector<1x256x1xf32> to vector<256x1xf32>
    %3 = tpu.iota {dimensions = array<i32: 0>} : vector<256x1xi32>
    %c15_i32 = arith.constant 15 : i32
    %4 = vector.broadcast %c15_i32 : i32 to vector<256x1xi32>
    %5 = arith.andi %3, %4 : vector<256x1xi32>
    %c4_i32 = arith.constant 4 : i32
    %6 = vector.broadcast %c4_i32 : i32 to vector<256x1xi32>
    %7 = arith.shrsi %3, %6 : vector<256x1xi32>
    %c15_i32_4 = arith.constant 15 : i32
    %8 = vector.broadcast %c15_i32_4 : i32 to vector<256x1xi32>
    %9 = arith.andi %7, %8 : vector<256x1xi32>
    %10 = vector.extract_strided_slice %0 {offsets = [0, 0], sizes = [1, 64], strides = [1, 1]} : vector<4x128xf32> to vector<1x64xf32>
    %c0_i32 = arith.constant 0 : i32
    %11 = vector.broadcast %c0_i32 : i32 to vector<256x1xi32>
    %12 = arith.shrsi %9, %11 : vector<256x1xi32>
    %c0_i32_5 = arith.constant 0 : i32
    %13 = vector.broadcast %c0_i32_5 : i32 to vector<256x1xi32>
    %14 = arith.shrsi %5, %13 : vector<256x1xi32>
    %15 = arith.truncf %2 : vector<256x1xf32> to vector<256x1xbf16>
    %16 = vector.extract_strided_slice %15 {offsets = [239, 0], sizes = [17, 1], strides = [1, 1]} : vector<256x1xbf16> to vector<17x1xbf16>
    %17 = vector.extract_strided_slice %15 {offsets = [0, 0], sizes = [239, 1], strides = [1, 1]} : vector<256x1xbf16> to vector<239x1xbf16>
    %18 = tpu.concatenate %16, %17 in 0 : vector<17x1xbf16>, vector<239x1xbf16> -> vector<256x1xbf16>
    %c-1_i32 = arith.constant -1 : i32
    %19 = vector.broadcast %c-1_i32 : i32 to vector<256x1xi32>
    %20 = arith.addi %12, %19 : vector<256x1xi32>
    %c0_i32_6 = arith.constant 0 : i32
    %21 = vector.broadcast %c0_i32_6 : i32 to vector<256x1xi32>
    %22 = arith.cmpi sge, %20, %21 : vector<256x1xi32>
    %c-1_i32_7 = arith.constant -1 : i32
    %23 = vector.broadcast %c-1_i32_7 : i32 to vector<256x1xi32>
    %24 = arith.addi %12, %23 : vector<256x1xi32>
    %c16_i32 = arith.constant 16 : i32
    %25 = vector.broadcast %c16_i32 : i32 to vector<256x1xi32>
    %26 = arith.cmpi slt, %24, %25 : vector<256x1xi32>
    %27 = arith.andi %22, %26 : vector<256x1xi1>
    %c-1_i32_8 = arith.constant -1 : i32
    %28 = vector.broadcast %c-1_i32_8 : i32 to vector<256x1xi32>
    %29 = arith.addi %14, %28 : vector<256x1xi32>
    %c0_i32_9 = arith.constant 0 : i32
    %30 = vector.broadcast %c0_i32_9 : i32 to vector<256x1xi32>
    %31 = arith.cmpi sge, %29, %30 : vector<256x1xi32>
    %32 = arith.andi %27, %31 : vector<256x1xi1>
    %c-1_i32_10 = arith.constant -1 : i32
    %33 = vector.broadcast %c-1_i32_10 : i32 to vector<256x1xi32>
    %34 = arith.addi %14, %33 : vector<256x1xi32>
    %c16_i32_11 = arith.constant 16 : i32
    %35 = vector.broadcast %c16_i32_11 : i32 to vector<256x1xi32>
    %36 = arith.cmpi slt, %34, %35 : vector<256x1xi32>
    %37 = arith.andi %32, %36 : vector<256x1xi1>
    %cst = arith.constant 0.000000e+00 : f32
    %38 = arith.truncf %cst : f32 to bf16
    %39 = vector.broadcast %38 : bf16 to vector<256x1xbf16>
    %40 = arith.select %37, %18, %39 : vector<256x1xi1>, vector<256x1xbf16>
    %41 = vector.extract_strided_slice %15 {offsets = [240, 0], sizes = [16, 1], strides = [1, 1]} : vector<256x1xbf16> to vector<16x1xbf16>
    %42 = vector.extract_strided_slice %15 {offsets = [0, 0], sizes = [240, 1], strides = [1, 1]} : vector<256x1xbf16> to vector<240x1xbf16>
    %43 = tpu.concatenate %41, %42 in 0 : vector<16x1xbf16>, vector<240x1xbf16> -> vector<256x1xbf16>
    %c-1_i32_12 = arith.constant -1 : i32
    %44 = vector.broadcast %c-1_i32_12 : i32 to vector<256x1xi32>
    %45 = arith.addi %12, %44 : vector<256x1xi32>
    %c0_i32_13 = arith.constant 0 : i32
    %46 = vector.broadcast %c0_i32_13 : i32 to vector<256x1xi32>
    %47 = arith.cmpi sge, %45, %46 : vector<256x1xi32>
    %c-1_i32_14 = arith.constant -1 : i32
    %48 = vector.broadcast %c-1_i32_14 : i32 to vector<256x1xi32>
    %49 = arith.addi %12, %48 : vector<256x1xi32>
    %c16_i32_15 = arith.constant 16 : i32
    %50 = vector.broadcast %c16_i32_15 : i32 to vector<256x1xi32>
    %51 = arith.cmpi slt, %49, %50 : vector<256x1xi32>
    %52 = arith.andi %47, %51 : vector<256x1xi1>
    %c0_i32_16 = arith.constant 0 : i32
    %53 = vector.broadcast %c0_i32_16 : i32 to vector<256x1xi32>
    %54 = arith.addi %14, %53 : vector<256x1xi32>
    %c0_i32_17 = arith.constant 0 : i32
    %55 = vector.broadcast %c0_i32_17 : i32 to vector<256x1xi32>
    %56 = arith.cmpi sge, %54, %55 : vector<256x1xi32>
    %57 = arith.andi %52, %56 : vector<256x1xi1>
    %c0_i32_18 = arith.constant 0 : i32
    %58 = vector.broadcast %c0_i32_18 : i32 to vector<256x1xi32>
    %59 = arith.addi %14, %58 : vector<256x1xi32>
    %c16_i32_19 = arith.constant 16 : i32
    %60 = vector.broadcast %c16_i32_19 : i32 to vector<256x1xi32>
    %61 = arith.cmpi slt, %59, %60 : vector<256x1xi32>
    %62 = arith.andi %57, %61 : vector<256x1xi1>
    %cst_20 = arith.constant 0.000000e+00 : f32
    %63 = arith.truncf %cst_20 : f32 to bf16
    %64 = vector.broadcast %63 : bf16 to vector<256x1xbf16>
    %65 = arith.select %62, %43, %64 : vector<256x1xi1>, vector<256x1xbf16>
    %66 = vector.extract_strided_slice %15 {offsets = [241, 0], sizes = [15, 1], strides = [1, 1]} : vector<256x1xbf16> to vector<15x1xbf16>
    %67 = vector.extract_strided_slice %15 {offsets = [0, 0], sizes = [241, 1], strides = [1, 1]} : vector<256x1xbf16> to vector<241x1xbf16>
    %68 = tpu.concatenate %66, %67 in 0 : vector<15x1xbf16>, vector<241x1xbf16> -> vector<256x1xbf16>
    %c-1_i32_21 = arith.constant -1 : i32
    %69 = vector.broadcast %c-1_i32_21 : i32 to vector<256x1xi32>
    %70 = arith.addi %12, %69 : vector<256x1xi32>
    %c0_i32_22 = arith.constant 0 : i32
    %71 = vector.broadcast %c0_i32_22 : i32 to vector<256x1xi32>
    %72 = arith.cmpi sge, %70, %71 : vector<256x1xi32>
    %c-1_i32_23 = arith.constant -1 : i32
    %73 = vector.broadcast %c-1_i32_23 : i32 to vector<256x1xi32>
    %74 = arith.addi %12, %73 : vector<256x1xi32>
    %c16_i32_24 = arith.constant 16 : i32
    %75 = vector.broadcast %c16_i32_24 : i32 to vector<256x1xi32>
    %76 = arith.cmpi slt, %74, %75 : vector<256x1xi32>
    %77 = arith.andi %72, %76 : vector<256x1xi1>
    %c1_i32 = arith.constant 1 : i32
    %78 = vector.broadcast %c1_i32 : i32 to vector<256x1xi32>
    %79 = arith.addi %14, %78 : vector<256x1xi32>
    %c0_i32_25 = arith.constant 0 : i32
    %80 = vector.broadcast %c0_i32_25 : i32 to vector<256x1xi32>
    %81 = arith.cmpi sge, %79, %80 : vector<256x1xi32>
    %82 = arith.andi %77, %81 : vector<256x1xi1>
    %c1_i32_26 = arith.constant 1 : i32
    %83 = vector.broadcast %c1_i32_26 : i32 to vector<256x1xi32>
    %84 = arith.addi %14, %83 : vector<256x1xi32>
    %c16_i32_27 = arith.constant 16 : i32
    %85 = vector.broadcast %c16_i32_27 : i32 to vector<256x1xi32>
    %86 = arith.cmpi slt, %84, %85 : vector<256x1xi32>
    %87 = arith.andi %82, %86 : vector<256x1xi1>
    %cst_28 = arith.constant 0.000000e+00 : f32
    %88 = arith.truncf %cst_28 : f32 to bf16
    %89 = vector.broadcast %88 : bf16 to vector<256x1xbf16>
    %90 = arith.select %87, %68, %89 : vector<256x1xi1>, vector<256x1xbf16>
    %91 = vector.extract_strided_slice %15 {offsets = [255, 0], sizes = [1, 1], strides = [1, 1]} : vector<256x1xbf16> to vector<1x1xbf16>
    %92 = vector.extract_strided_slice %15 {offsets = [0, 0], sizes = [255, 1], strides = [1, 1]} : vector<256x1xbf16> to vector<255x1xbf16>
    %93 = tpu.concatenate %91, %92 in 0 : vector<1x1xbf16>, vector<255x1xbf16> -> vector<256x1xbf16>
    %c0_i32_29 = arith.constant 0 : i32
    %94 = vector.broadcast %c0_i32_29 : i32 to vector<256x1xi32>
    %95 = arith.addi %12, %94 : vector<256x1xi32>
    %c0_i32_30 = arith.constant 0 : i32
    %96 = vector.broadcast %c0_i32_30 : i32 to vector<256x1xi32>
    %97 = arith.cmpi sge, %95, %96 : vector<256x1xi32>
    %c0_i32_31 = arith.constant 0 : i32
    %98 = vector.broadcast %c0_i32_31 : i32 to vector<256x1xi32>
    %99 = arith.addi %12, %98 : vector<256x1xi32>
    %c16_i32_32 = arith.constant 16 : i32
    %100 = vector.broadcast %c16_i32_32 : i32 to vector<256x1xi32>
    %101 = arith.cmpi slt, %99, %100 : vector<256x1xi32>
    %102 = arith.andi %97, %101 : vector<256x1xi1>
    %c-1_i32_33 = arith.constant -1 : i32
    %103 = vector.broadcast %c-1_i32_33 : i32 to vector<256x1xi32>
    %104 = arith.addi %14, %103 : vector<256x1xi32>
    %c0_i32_34 = arith.constant 0 : i32
    %105 = vector.broadcast %c0_i32_34 : i32 to vector<256x1xi32>
    %106 = arith.cmpi sge, %104, %105 : vector<256x1xi32>
    %107 = arith.andi %102, %106 : vector<256x1xi1>
    %c-1_i32_35 = arith.constant -1 : i32
    %108 = vector.broadcast %c-1_i32_35 : i32 to vector<256x1xi32>
    %109 = arith.addi %14, %108 : vector<256x1xi32>
    %c16_i32_36 = arith.constant 16 : i32
    %110 = vector.broadcast %c16_i32_36 : i32 to vector<256x1xi32>
    %111 = arith.cmpi slt, %109, %110 : vector<256x1xi32>
    %112 = arith.andi %107, %111 : vector<256x1xi1>
    %cst_37 = arith.constant 0.000000e+00 : f32
    %113 = arith.truncf %cst_37 : f32 to bf16
    %114 = vector.broadcast %113 : bf16 to vector<256x1xbf16>
    %115 = arith.select %112, %93, %114 : vector<256x1xi1>, vector<256x1xbf16>
    %c0_i32_38 = arith.constant 0 : i32
    %116 = vector.broadcast %c0_i32_38 : i32 to vector<256x1xi32>
    %117 = arith.addi %12, %116 : vector<256x1xi32>
    %c0_i32_39 = arith.constant 0 : i32
    %118 = vector.broadcast %c0_i32_39 : i32 to vector<256x1xi32>
    %119 = arith.cmpi sge, %117, %118 : vector<256x1xi32>
    %c0_i32_40 = arith.constant 0 : i32
    %120 = vector.broadcast %c0_i32_40 : i32 to vector<256x1xi32>
    %121 = arith.addi %12, %120 : vector<256x1xi32>
    %c16_i32_41 = arith.constant 16 : i32
    %122 = vector.broadcast %c16_i32_41 : i32 to vector<256x1xi32>
    %123 = arith.cmpi slt, %121, %122 : vector<256x1xi32>
    %124 = arith.andi %119, %123 : vector<256x1xi1>
    %c0_i32_42 = arith.constant 0 : i32
    %125 = vector.broadcast %c0_i32_42 : i32 to vector<256x1xi32>
    %126 = arith.addi %14, %125 : vector<256x1xi32>
    %c0_i32_43 = arith.constant 0 : i32
    %127 = vector.broadcast %c0_i32_43 : i32 to vector<256x1xi32>
    %128 = arith.cmpi sge, %126, %127 : vector<256x1xi32>
    %129 = arith.andi %124, %128 : vector<256x1xi1>
    %c0_i32_44 = arith.constant 0 : i32
    %130 = vector.broadcast %c0_i32_44 : i32 to vector<256x1xi32>
    %131 = arith.addi %14, %130 : vector<256x1xi32>
    %c16_i32_45 = arith.constant 16 : i32
    %132 = vector.broadcast %c16_i32_45 : i32 to vector<256x1xi32>
    %133 = arith.cmpi slt, %131, %132 : vector<256x1xi32>
    %134 = arith.andi %129, %133 : vector<256x1xi1>
    %cst_46 = arith.constant 0.000000e+00 : f32
    %135 = arith.truncf %cst_46 : f32 to bf16
    %136 = vector.broadcast %135 : bf16 to vector<256x1xbf16>
    %137 = arith.select %134, %15, %136 : vector<256x1xi1>, vector<256x1xbf16>
    %138 = vector.extract_strided_slice %15 {offsets = [1, 0], sizes = [255, 1], strides = [1, 1]} : vector<256x1xbf16> to vector<255x1xbf16>
    %139 = vector.extract_strided_slice %15 {offsets = [0, 0], sizes = [1, 1], strides = [1, 1]} : vector<256x1xbf16> to vector<1x1xbf16>
    %140 = tpu.concatenate %138, %139 in 0 : vector<255x1xbf16>, vector<1x1xbf16> -> vector<256x1xbf16>
    %c0_i32_47 = arith.constant 0 : i32
    %141 = vector.broadcast %c0_i32_47 : i32 to vector<256x1xi32>
    %142 = arith.addi %12, %141 : vector<256x1xi32>
    %c0_i32_48 = arith.constant 0 : i32
    %143 = vector.broadcast %c0_i32_48 : i32 to vector<256x1xi32>
    %144 = arith.cmpi sge, %142, %143 : vector<256x1xi32>
    %c0_i32_49 = arith.constant 0 : i32
    %145 = vector.broadcast %c0_i32_49 : i32 to vector<256x1xi32>
    %146 = arith.addi %12, %145 : vector<256x1xi32>
    %c16_i32_50 = arith.constant 16 : i32
    %147 = vector.broadcast %c16_i32_50 : i32 to vector<256x1xi32>
    %148 = arith.cmpi slt, %146, %147 : vector<256x1xi32>
    %149 = arith.andi %144, %148 : vector<256x1xi1>
    %c1_i32_51 = arith.constant 1 : i32
    %150 = vector.broadcast %c1_i32_51 : i32 to vector<256x1xi32>
    %151 = arith.addi %14, %150 : vector<256x1xi32>
    %c0_i32_52 = arith.constant 0 : i32
    %152 = vector.broadcast %c0_i32_52 : i32 to vector<256x1xi32>
    %153 = arith.cmpi sge, %151, %152 : vector<256x1xi32>
    %154 = arith.andi %149, %153 : vector<256x1xi1>
    %c1_i32_53 = arith.constant 1 : i32
    %155 = vector.broadcast %c1_i32_53 : i32 to vector<256x1xi32>
    %156 = arith.addi %14, %155 : vector<256x1xi32>
    %c16_i32_54 = arith.constant 16 : i32
    %157 = vector.broadcast %c16_i32_54 : i32 to vector<256x1xi32>
    %158 = arith.cmpi slt, %156, %157 : vector<256x1xi32>
    %159 = arith.andi %154, %158 : vector<256x1xi1>
    %cst_55 = arith.constant 0.000000e+00 : f32
    %160 = arith.truncf %cst_55 : f32 to bf16
    %161 = vector.broadcast %160 : bf16 to vector<256x1xbf16>
    %162 = arith.select %159, %140, %161 : vector<256x1xi1>, vector<256x1xbf16>
    %163 = vector.extract_strided_slice %15 {offsets = [15, 0], sizes = [241, 1], strides = [1, 1]} : vector<256x1xbf16> to vector<241x1xbf16>
    %164 = vector.extract_strided_slice %15 {offsets = [0, 0], sizes = [15, 1], strides = [1, 1]} : vector<256x1xbf16> to vector<15x1xbf16>
    %165 = tpu.concatenate %163, %164 in 0 : vector<241x1xbf16>, vector<15x1xbf16> -> vector<256x1xbf16>
    %c1_i32_56 = arith.constant 1 : i32
    %166 = vector.broadcast %c1_i32_56 : i32 to vector<256x1xi32>
    %167 = arith.addi %12, %166 : vector<256x1xi32>
    %c0_i32_57 = arith.constant 0 : i32
    %168 = vector.broadcast %c0_i32_57 : i32 to vector<256x1xi32>
    %169 = arith.cmpi sge, %167, %168 : vector<256x1xi32>
    %c1_i32_58 = arith.constant 1 : i32
    %170 = vector.broadcast %c1_i32_58 : i32 to vector<256x1xi32>
    %171 = arith.addi %12, %170 : vector<256x1xi32>
    %c16_i32_59 = arith.constant 16 : i32
    %172 = vector.broadcast %c16_i32_59 : i32 to vector<256x1xi32>
    %173 = arith.cmpi slt, %171, %172 : vector<256x1xi32>
    %174 = arith.andi %169, %173 : vector<256x1xi1>
    %c-1_i32_60 = arith.constant -1 : i32
    %175 = vector.broadcast %c-1_i32_60 : i32 to vector<256x1xi32>
    %176 = arith.addi %14, %175 : vector<256x1xi32>
    %c0_i32_61 = arith.constant 0 : i32
    %177 = vector.broadcast %c0_i32_61 : i32 to vector<256x1xi32>
    %178 = arith.cmpi sge, %176, %177 : vector<256x1xi32>
    %179 = arith.andi %174, %178 : vector<256x1xi1>
    %c-1_i32_62 = arith.constant -1 : i32
    %180 = vector.broadcast %c-1_i32_62 : i32 to vector<256x1xi32>
    %181 = arith.addi %14, %180 : vector<256x1xi32>
    %c16_i32_63 = arith.constant 16 : i32
    %182 = vector.broadcast %c16_i32_63 : i32 to vector<256x1xi32>
    %183 = arith.cmpi slt, %181, %182 : vector<256x1xi32>
    %184 = arith.andi %179, %183 : vector<256x1xi1>
    %cst_64 = arith.constant 0.000000e+00 : f32
    %185 = arith.truncf %cst_64 : f32 to bf16
    %186 = vector.broadcast %185 : bf16 to vector<256x1xbf16>
    %187 = arith.select %184, %165, %186 : vector<256x1xi1>, vector<256x1xbf16>
    %188 = vector.extract_strided_slice %15 {offsets = [16, 0], sizes = [240, 1], strides = [1, 1]} : vector<256x1xbf16> to vector<240x1xbf16>
    %189 = vector.extract_strided_slice %15 {offsets = [0, 0], sizes = [16, 1], strides = [1, 1]} : vector<256x1xbf16> to vector<16x1xbf16>
    %190 = tpu.concatenate %188, %189 in 0 : vector<240x1xbf16>, vector<16x1xbf16> -> vector<256x1xbf16>
    %c1_i32_65 = arith.constant 1 : i32
    %191 = vector.broadcast %c1_i32_65 : i32 to vector<256x1xi32>
    %192 = arith.addi %12, %191 : vector<256x1xi32>
    %c0_i32_66 = arith.constant 0 : i32
    %193 = vector.broadcast %c0_i32_66 : i32 to vector<256x1xi32>
    %194 = arith.cmpi sge, %192, %193 : vector<256x1xi32>
    %c1_i32_67 = arith.constant 1 : i32
    %195 = vector.broadcast %c1_i32_67 : i32 to vector<256x1xi32>
    %196 = arith.addi %12, %195 : vector<256x1xi32>
    %c16_i32_68 = arith.constant 16 : i32
    %197 = vector.broadcast %c16_i32_68 : i32 to vector<256x1xi32>
    %198 = arith.cmpi slt, %196, %197 : vector<256x1xi32>
    %199 = arith.andi %194, %198 : vector<256x1xi1>
    %c0_i32_69 = arith.constant 0 : i32
    %200 = vector.broadcast %c0_i32_69 : i32 to vector<256x1xi32>
    %201 = arith.addi %14, %200 : vector<256x1xi32>
    %c0_i32_70 = arith.constant 0 : i32
    %202 = vector.broadcast %c0_i32_70 : i32 to vector<256x1xi32>
    %203 = arith.cmpi sge, %201, %202 : vector<256x1xi32>
    %204 = arith.andi %199, %203 : vector<256x1xi1>
    %c0_i32_71 = arith.constant 0 : i32
    %205 = vector.broadcast %c0_i32_71 : i32 to vector<256x1xi32>
    %206 = arith.addi %14, %205 : vector<256x1xi32>
    %c16_i32_72 = arith.constant 16 : i32
    %207 = vector.broadcast %c16_i32_72 : i32 to vector<256x1xi32>
    %208 = arith.cmpi slt, %206, %207 : vector<256x1xi32>
    %209 = arith.andi %204, %208 : vector<256x1xi1>
    %cst_73 = arith.constant 0.000000e+00 : f32
    %210 = arith.truncf %cst_73 : f32 to bf16
    %211 = vector.broadcast %210 : bf16 to vector<256x1xbf16>
    %212 = arith.select %209, %190, %211 : vector<256x1xi1>, vector<256x1xbf16>
    %213 = vector.extract_strided_slice %15 {offsets = [17, 0], sizes = [239, 1], strides = [1, 1]} : vector<256x1xbf16> to vector<239x1xbf16>
    %214 = vector.extract_strided_slice %15 {offsets = [0, 0], sizes = [17, 1], strides = [1, 1]} : vector<256x1xbf16> to vector<17x1xbf16>
    %215 = tpu.concatenate %213, %214 in 0 : vector<239x1xbf16>, vector<17x1xbf16> -> vector<256x1xbf16>
    %c1_i32_74 = arith.constant 1 : i32
    %216 = vector.broadcast %c1_i32_74 : i32 to vector<256x1xi32>
    %217 = arith.addi %12, %216 : vector<256x1xi32>
    %c0_i32_75 = arith.constant 0 : i32
    %218 = vector.broadcast %c0_i32_75 : i32 to vector<256x1xi32>
    %219 = arith.cmpi sge, %217, %218 : vector<256x1xi32>
    %c1_i32_76 = arith.constant 1 : i32
    %220 = vector.broadcast %c1_i32_76 : i32 to vector<256x1xi32>
    %221 = arith.addi %12, %220 : vector<256x1xi32>
    %c16_i32_77 = arith.constant 16 : i32
    %222 = vector.broadcast %c16_i32_77 : i32 to vector<256x1xi32>
    %223 = arith.cmpi slt, %221, %222 : vector<256x1xi32>
    %224 = arith.andi %219, %223 : vector<256x1xi1>
    %c1_i32_78 = arith.constant 1 : i32
    %225 = vector.broadcast %c1_i32_78 : i32 to vector<256x1xi32>
    %226 = arith.addi %14, %225 : vector<256x1xi32>
    %c0_i32_79 = arith.constant 0 : i32
    %227 = vector.broadcast %c0_i32_79 : i32 to vector<256x1xi32>
    %228 = arith.cmpi sge, %226, %227 : vector<256x1xi32>
    %229 = arith.andi %224, %228 : vector<256x1xi1>
    %c1_i32_80 = arith.constant 1 : i32
    %230 = vector.broadcast %c1_i32_80 : i32 to vector<256x1xi32>
    %231 = arith.addi %14, %230 : vector<256x1xi32>
    %c16_i32_81 = arith.constant 16 : i32
    %232 = vector.broadcast %c16_i32_81 : i32 to vector<256x1xi32>
    %233 = arith.cmpi slt, %231, %232 : vector<256x1xi32>
    %234 = arith.andi %229, %233 : vector<256x1xi1>
    %cst_82 = arith.constant 0.000000e+00 : f32
    %235 = arith.truncf %cst_82 : f32 to bf16
    %236 = vector.broadcast %235 : bf16 to vector<256x1xbf16>
    %237 = arith.select %234, %215, %236 : vector<256x1xi1>, vector<256x1xbf16>
    %238 = tpu.concatenate %40, %65, %90, %115, %137, %162, %187, %212, %237 in 1 : vector<256x1xbf16>, vector<256x1xbf16>, vector<256x1xbf16>, vector<256x1xbf16>, vector<256x1xbf16>, vector<256x1xbf16>, vector<256x1xbf16>, vector<256x1xbf16>, vector<256x1xbf16> -> vector<256x9xbf16>
    %c0_83 = arith.constant 0 : index
    %c0_84 = arith.constant 0 : index
    %239 = vector.load %arg2[%c0_83, %c0_84] : memref<9x64xbf16, #tpu.memory_space<vmem>>, vector<9x64xbf16>
    %cst_85 = arith.constant dense<0.000000e+00> : vector<256x64xf32>
    %240 = tpu.matmul %238, %239, %cst_85 {dimension_numbers = #tpu.dot_dimension_numbers<[1], [0], [0], [1], [0, 0, 1, 1], [], []>} : vector<256x9xbf16>, vector<9x64xbf16>, vector<256x64xf32> -> vector<256x64xf32>
    %241 = vector.broadcast %10 : vector<1x64xf32> to vector<256x64xf32>
    %242 = arith.addf %240, %241 : vector<256x64xf32>
    %cst_86 = arith.constant 0.000000e+00 : f32
    %243 = vector.broadcast %cst_86 : f32 to vector<256x64xf32>
    %244 = arith.maximumf %242, %243 : vector<256x64xf32>
    %245 = vector.extract_strided_slice %244 {offsets = [1, 0], sizes = [255, 64], strides = [1, 1]} : vector<256x64xf32> to vector<255x64xf32>
    %246 = vector.extract_strided_slice %244 {offsets = [0, 0], sizes = [1, 64], strides = [1, 1]} : vector<256x64xf32> to vector<1x64xf32>
    %247 = tpu.concatenate %245, %246 in 0 : vector<255x64xf32>, vector<1x64xf32> -> vector<256x64xf32>
    %248 = arith.maximumf %244, %247 : vector<256x64xf32>
    %249 = vector.extract_strided_slice %248 {offsets = [16, 0], sizes = [240, 64], strides = [1, 1]} : vector<256x64xf32> to vector<240x64xf32>
    %250 = vector.extract_strided_slice %248 {offsets = [0, 0], sizes = [16, 64], strides = [1, 1]} : vector<256x64xf32> to vector<16x64xf32>
    %251 = tpu.concatenate %249, %250 in 0 : vector<240x64xf32>, vector<16x64xf32> -> vector<256x64xf32>
    %252 = arith.maximumf %248, %251 : vector<256x64xf32>
    %253 = vector.shape_cast %252 : vector<256x64xf32> to vector<8x32x64xf32>
    %254 = vector.extract_strided_slice %253 {offsets = [0, 0, 0], sizes = [8, 16, 64], strides = [1, 1, 1]} : vector<8x32x64xf32> to vector<8x16x64xf32>
    %255 = vector.shape_cast %254 : vector<8x16x64xf32> to vector<128x64xf32>
    %c0_87 = arith.constant 0 : index
    %c0_88 = arith.constant 0 : index
    %256 = vector.load %arg8[%c0_87, %c0_88] : memref<128x64xf32, #tpu.memory_space<vmem>>, vector<128x64xf32>
    tpu.vector_store %arg8[%c0_87, %c0_88], %255 {strides = array<i32>} : memref<128x64xf32, #tpu.memory_space<vmem>>, vector<128x64xf32>,
    %c0_89 = arith.constant 0 : index
    %c0_90 = arith.constant 0 : index
    %257 = tpu.strided_load %arg8[%c0_89, %c0_90] {strides = array<i32: 2, 1>} : memref<128x64xf32, #tpu.memory_space<vmem>>, vector<64x64xf32>
    %258 = tpu.iota {dimensions = array<i32: 0>} : vector<64x1xi32>
    %c7_i32 = arith.constant 7 : i32
    %259 = vector.broadcast %c7_i32 : i32 to vector<64x1xi32>
    %260 = arith.andi %258, %259 : vector<64x1xi32>
    %c3_i32 = arith.constant 3 : i32
    %261 = vector.broadcast %c3_i32 : i32 to vector<64x1xi32>
    %262 = arith.shrsi %258, %261 : vector<64x1xi32>
    %c7_i32_91 = arith.constant 7 : i32
    %263 = vector.broadcast %c7_i32_91 : i32 to vector<64x1xi32>
    %264 = arith.andi %262, %263 : vector<64x1xi32>
    %265 = vector.extract_strided_slice %0 {offsets = [1, 0], sizes = [1, 64], strides = [1, 1]} : vector<4x128xf32> to vector<1x64xf32>
    %c0_i32_92 = arith.constant 0 : i32
    %266 = vector.broadcast %c0_i32_92 : i32 to vector<64x1xi32>
    %267 = arith.shrsi %264, %266 : vector<64x1xi32>
    %c0_i32_93 = arith.constant 0 : i32
    %268 = vector.broadcast %c0_i32_93 : i32 to vector<64x1xi32>
    %269 = arith.shrsi %260, %268 : vector<64x1xi32>
    %270 = arith.truncf %257 : vector<64x64xf32> to vector<64x64xbf16>
    %271 = vector.extract_strided_slice %270 {offsets = [55, 0], sizes = [9, 64], strides = [1, 1]} : vector<64x64xbf16> to vector<9x64xbf16>
    %272 = vector.extract_strided_slice %270 {offsets = [0, 0], sizes = [55, 64], strides = [1, 1]} : vector<64x64xbf16> to vector<55x64xbf16>
    %273 = tpu.concatenate %271, %272 in 0 : vector<9x64xbf16>, vector<55x64xbf16> -> vector<64x64xbf16>
    %c-1_i32_94 = arith.constant -1 : i32
    %274 = vector.broadcast %c-1_i32_94 : i32 to vector<64x1xi32>
    %275 = arith.addi %267, %274 : vector<64x1xi32>
    %c0_i32_95 = arith.constant 0 : i32
    %276 = vector.broadcast %c0_i32_95 : i32 to vector<64x1xi32>
    %277 = arith.cmpi sge, %275, %276 : vector<64x1xi32>
    %c-1_i32_96 = arith.constant -1 : i32
    %278 = vector.broadcast %c-1_i32_96 : i32 to vector<64x1xi32>
    %279 = arith.addi %267, %278 : vector<64x1xi32>
    %c8_i32 = arith.constant 8 : i32
    %280 = vector.broadcast %c8_i32 : i32 to vector<64x1xi32>
    %281 = arith.cmpi slt, %279, %280 : vector<64x1xi32>
    %282 = arith.andi %277, %281 : vector<64x1xi1>
    %c-1_i32_97 = arith.constant -1 : i32
    %283 = vector.broadcast %c-1_i32_97 : i32 to vector<64x1xi32>
    %284 = arith.addi %269, %283 : vector<64x1xi32>
    %c0_i32_98 = arith.constant 0 : i32
    %285 = vector.broadcast %c0_i32_98 : i32 to vector<64x1xi32>
    %286 = arith.cmpi sge, %284, %285 : vector<64x1xi32>
    %287 = arith.andi %282, %286 : vector<64x1xi1>
    %c-1_i32_99 = arith.constant -1 : i32
    %288 = vector.broadcast %c-1_i32_99 : i32 to vector<64x1xi32>
    %289 = arith.addi %269, %288 : vector<64x1xi32>
    %c8_i32_100 = arith.constant 8 : i32
    %290 = vector.broadcast %c8_i32_100 : i32 to vector<64x1xi32>
    %291 = arith.cmpi slt, %289, %290 : vector<64x1xi32>
    %292 = arith.andi %287, %291 : vector<64x1xi1>
    %cst_101 = arith.constant 0.000000e+00 : f32
    %293 = arith.truncf %cst_101 : f32 to bf16
    %294 = vector.shape_cast %292 : vector<64x1xi1> to vector<64x1xi1>
    %295 = vector.broadcast %294 : vector<64x1xi1> to vector<64x64xi1>
    %296 = vector.broadcast %293 : bf16 to vector<64x64xbf16>
    %297 = arith.select %295, %273, %296 : vector<64x64xi1>, vector<64x64xbf16>
    %298 = vector.extract_strided_slice %270 {offsets = [56, 0], sizes = [8, 64], strides = [1, 1]} : vector<64x64xbf16> to vector<8x64xbf16>
    %299 = vector.extract_strided_slice %270 {offsets = [0, 0], sizes = [56, 64], strides = [1, 1]} : vector<64x64xbf16> to vector<56x64xbf16>
    %300 = tpu.concatenate %298, %299 in 0 : vector<8x64xbf16>, vector<56x64xbf16> -> vector<64x64xbf16>
    %c-1_i32_102 = arith.constant -1 : i32
    %301 = vector.broadcast %c-1_i32_102 : i32 to vector<64x1xi32>
    %302 = arith.addi %267, %301 : vector<64x1xi32>
    %c0_i32_103 = arith.constant 0 : i32
    %303 = vector.broadcast %c0_i32_103 : i32 to vector<64x1xi32>
    %304 = arith.cmpi sge, %302, %303 : vector<64x1xi32>
    %c-1_i32_104 = arith.constant -1 : i32
    %305 = vector.broadcast %c-1_i32_104 : i32 to vector<64x1xi32>
    %306 = arith.addi %267, %305 : vector<64x1xi32>
    %c8_i32_105 = arith.constant 8 : i32
    %307 = vector.broadcast %c8_i32_105 : i32 to vector<64x1xi32>
    %308 = arith.cmpi slt, %306, %307 : vector<64x1xi32>
    %309 = arith.andi %304, %308 : vector<64x1xi1>
    %c0_i32_106 = arith.constant 0 : i32
    %310 = vector.broadcast %c0_i32_106 : i32 to vector<64x1xi32>
    %311 = arith.addi %269, %310 : vector<64x1xi32>
    %c0_i32_107 = arith.constant 0 : i32
    %312 = vector.broadcast %c0_i32_107 : i32 to vector<64x1xi32>
    %313 = arith.cmpi sge, %311, %312 : vector<64x1xi32>
    %314 = arith.andi %309, %313 : vector<64x1xi1>
    %c0_i32_108 = arith.constant 0 : i32
    %315 = vector.broadcast %c0_i32_108 : i32 to vector<64x1xi32>
    %316 = arith.addi %269, %315 : vector<64x1xi32>
    %c8_i32_109 = arith.constant 8 : i32
    %317 = vector.broadcast %c8_i32_109 : i32 to vector<64x1xi32>
    %318 = arith.cmpi slt, %316, %317 : vector<64x1xi32>
    %319 = arith.andi %314, %318 : vector<64x1xi1>
    %cst_110 = arith.constant 0.000000e+00 : f32
    %320 = arith.truncf %cst_110 : f32 to bf16
    %321 = vector.shape_cast %319 : vector<64x1xi1> to vector<64x1xi1>
    %322 = vector.broadcast %321 : vector<64x1xi1> to vector<64x64xi1>
    %323 = vector.broadcast %320 : bf16 to vector<64x64xbf16>
    %324 = arith.select %322, %300, %323 : vector<64x64xi1>, vector<64x64xbf16>
    %325 = vector.extract_strided_slice %270 {offsets = [57, 0], sizes = [7, 64], strides = [1, 1]} : vector<64x64xbf16> to vector<7x64xbf16>
    %326 = vector.extract_strided_slice %270 {offsets = [0, 0], sizes = [57, 64], strides = [1, 1]} : vector<64x64xbf16> to vector<57x64xbf16>
    %327 = tpu.concatenate %325, %326 in 0 : vector<7x64xbf16>, vector<57x64xbf16> -> vector<64x64xbf16>
    %c-1_i32_111 = arith.constant -1 : i32
    %328 = vector.broadcast %c-1_i32_111 : i32 to vector<64x1xi32>
    %329 = arith.addi %267, %328 : vector<64x1xi32>
    %c0_i32_112 = arith.constant 0 : i32
    %330 = vector.broadcast %c0_i32_112 : i32 to vector<64x1xi32>
    %331 = arith.cmpi sge, %329, %330 : vector<64x1xi32>
    %c-1_i32_113 = arith.constant -1 : i32
    %332 = vector.broadcast %c-1_i32_113 : i32 to vector<64x1xi32>
    %333 = arith.addi %267, %332 : vector<64x1xi32>
    %c8_i32_114 = arith.constant 8 : i32
    %334 = vector.broadcast %c8_i32_114 : i32 to vector<64x1xi32>
    %335 = arith.cmpi slt, %333, %334 : vector<64x1xi32>
    %336 = arith.andi %331, %335 : vector<64x1xi1>
    %c1_i32_115 = arith.constant 1 : i32
    %337 = vector.broadcast %c1_i32_115 : i32 to vector<64x1xi32>
    %338 = arith.addi %269, %337 : vector<64x1xi32>
    %c0_i32_116 = arith.constant 0 : i32
    %339 = vector.broadcast %c0_i32_116 : i32 to vector<64x1xi32>
    %340 = arith.cmpi sge, %338, %339 : vector<64x1xi32>
    %341 = arith.andi %336, %340 : vector<64x1xi1>
    %c1_i32_117 = arith.constant 1 : i32
    %342 = vector.broadcast %c1_i32_117 : i32 to vector<64x1xi32>
    %343 = arith.addi %269, %342 : vector<64x1xi32>
    %c8_i32_118 = arith.constant 8 : i32
    %344 = vector.broadcast %c8_i32_118 : i32 to vector<64x1xi32>
    %345 = arith.cmpi slt, %343, %344 : vector<64x1xi32>
    %346 = arith.andi %341, %345 : vector<64x1xi1>
    %cst_119 = arith.constant 0.000000e+00 : f32
    %347 = arith.truncf %cst_119 : f32 to bf16
    %348 = vector.shape_cast %346 : vector<64x1xi1> to vector<64x1xi1>
    %349 = vector.broadcast %348 : vector<64x1xi1> to vector<64x64xi1>
    %350 = vector.broadcast %347 : bf16 to vector<64x64xbf16>
    %351 = arith.select %349, %327, %350 : vector<64x64xi1>, vector<64x64xbf16>
    %352 = vector.extract_strided_slice %270 {offsets = [63, 0], sizes = [1, 64], strides = [1, 1]} : vector<64x64xbf16> to vector<1x64xbf16>
    %353 = vector.extract_strided_slice %270 {offsets = [0, 0], sizes = [63, 64], strides = [1, 1]} : vector<64x64xbf16> to vector<63x64xbf16>
    %354 = tpu.concatenate %352, %353 in 0 : vector<1x64xbf16>, vector<63x64xbf16> -> vector<64x64xbf16>
    %c0_i32_120 = arith.constant 0 : i32
    %355 = vector.broadcast %c0_i32_120 : i32 to vector<64x1xi32>
    %356 = arith.addi %267, %355 : vector<64x1xi32>
    %c0_i32_121 = arith.constant 0 : i32
    %357 = vector.broadcast %c0_i32_121 : i32 to vector<64x1xi32>
    %358 = arith.cmpi sge, %356, %357 : vector<64x1xi32>
    %c0_i32_122 = arith.constant 0 : i32
    %359 = vector.broadcast %c0_i32_122 : i32 to vector<64x1xi32>
    %360 = arith.addi %267, %359 : vector<64x1xi32>
    %c8_i32_123 = arith.constant 8 : i32
    %361 = vector.broadcast %c8_i32_123 : i32 to vector<64x1xi32>
    %362 = arith.cmpi slt, %360, %361 : vector<64x1xi32>
    %363 = arith.andi %358, %362 : vector<64x1xi1>
    %c-1_i32_124 = arith.constant -1 : i32
    %364 = vector.broadcast %c-1_i32_124 : i32 to vector<64x1xi32>
    %365 = arith.addi %269, %364 : vector<64x1xi32>
    %c0_i32_125 = arith.constant 0 : i32
    %366 = vector.broadcast %c0_i32_125 : i32 to vector<64x1xi32>
    %367 = arith.cmpi sge, %365, %366 : vector<64x1xi32>
    %368 = arith.andi %363, %367 : vector<64x1xi1>
    %c-1_i32_126 = arith.constant -1 : i32
    %369 = vector.broadcast %c-1_i32_126 : i32 to vector<64x1xi32>
    %370 = arith.addi %269, %369 : vector<64x1xi32>
    %c8_i32_127 = arith.constant 8 : i32
    %371 = vector.broadcast %c8_i32_127 : i32 to vector<64x1xi32>
    %372 = arith.cmpi slt, %370, %371 : vector<64x1xi32>
    %373 = arith.andi %368, %372 : vector<64x1xi1>
    %cst_128 = arith.constant 0.000000e+00 : f32
    %374 = arith.truncf %cst_128 : f32 to bf16
    %375 = vector.shape_cast %373 : vector<64x1xi1> to vector<64x1xi1>
    %376 = vector.broadcast %375 : vector<64x1xi1> to vector<64x64xi1>
    %377 = vector.broadcast %374 : bf16 to vector<64x64xbf16>
    %378 = arith.select %376, %354, %377 : vector<64x64xi1>, vector<64x64xbf16>
    %c0_i32_129 = arith.constant 0 : i32
    %379 = vector.broadcast %c0_i32_129 : i32 to vector<64x1xi32>
    %380 = arith.addi %267, %379 : vector<64x1xi32>
    %c0_i32_130 = arith.constant 0 : i32
    %381 = vector.broadcast %c0_i32_130 : i32 to vector<64x1xi32>
    %382 = arith.cmpi sge, %380, %381 : vector<64x1xi32>
    %c0_i32_131 = arith.constant 0 : i32
    %383 = vector.broadcast %c0_i32_131 : i32 to vector<64x1xi32>
    %384 = arith.addi %267, %383 : vector<64x1xi32>
    %c8_i32_132 = arith.constant 8 : i32
    %385 = vector.broadcast %c8_i32_132 : i32 to vector<64x1xi32>
    %386 = arith.cmpi slt, %384, %385 : vector<64x1xi32>
    %387 = arith.andi %382, %386 : vector<64x1xi1>
    %c0_i32_133 = arith.constant 0 : i32
    %388 = vector.broadcast %c0_i32_133 : i32 to vector<64x1xi32>
    %389 = arith.addi %269, %388 : vector<64x1xi32>
    %c0_i32_134 = arith.constant 0 : i32
    %390 = vector.broadcast %c0_i32_134 : i32 to vector<64x1xi32>
    %391 = arith.cmpi sge, %389, %390 : vector<64x1xi32>
    %392 = arith.andi %387, %391 : vector<64x1xi1>
    %c0_i32_135 = arith.constant 0 : i32
    %393 = vector.broadcast %c0_i32_135 : i32 to vector<64x1xi32>
    %394 = arith.addi %269, %393 : vector<64x1xi32>
    %c8_i32_136 = arith.constant 8 : i32
    %395 = vector.broadcast %c8_i32_136 : i32 to vector<64x1xi32>
    %396 = arith.cmpi slt, %394, %395 : vector<64x1xi32>
    %397 = arith.andi %392, %396 : vector<64x1xi1>
    %cst_137 = arith.constant 0.000000e+00 : f32
    %398 = arith.truncf %cst_137 : f32 to bf16
    %399 = vector.shape_cast %397 : vector<64x1xi1> to vector<64x1xi1>
    %400 = vector.broadcast %399 : vector<64x1xi1> to vector<64x64xi1>
    %401 = vector.broadcast %398 : bf16 to vector<64x64xbf16>
    %402 = arith.select %400, %270, %401 : vector<64x64xi1>, vector<64x64xbf16>
    %403 = vector.extract_strided_slice %270 {offsets = [1, 0], sizes = [63, 64], strides = [1, 1]} : vector<64x64xbf16> to vector<63x64xbf16>
    %404 = vector.extract_strided_slice %270 {offsets = [0, 0], sizes = [1, 64], strides = [1, 1]} : vector<64x64xbf16> to vector<1x64xbf16>
    %405 = tpu.concatenate %403, %404 in 0 : vector<63x64xbf16>, vector<1x64xbf16> -> vector<64x64xbf16>
    %c0_i32_138 = arith.constant 0 : i32
    %406 = vector.broadcast %c0_i32_138 : i32 to vector<64x1xi32>
    %407 = arith.addi %267, %406 : vector<64x1xi32>
    %c0_i32_139 = arith.constant 0 : i32
    %408 = vector.broadcast %c0_i32_139 : i32 to vector<64x1xi32>
    %409 = arith.cmpi sge, %407, %408 : vector<64x1xi32>
    %c0_i32_140 = arith.constant 0 : i32
    %410 = vector.broadcast %c0_i32_140 : i32 to vector<64x1xi32>
    %411 = arith.addi %267, %410 : vector<64x1xi32>
    %c8_i32_141 = arith.constant 8 : i32
    %412 = vector.broadcast %c8_i32_141 : i32 to vector<64x1xi32>
    %413 = arith.cmpi slt, %411, %412 : vector<64x1xi32>
    %414 = arith.andi %409, %413 : vector<64x1xi1>
    %c1_i32_142 = arith.constant 1 : i32
    %415 = vector.broadcast %c1_i32_142 : i32 to vector<64x1xi32>
    %416 = arith.addi %269, %415 : vector<64x1xi32>
    %c0_i32_143 = arith.constant 0 : i32
    %417 = vector.broadcast %c0_i32_143 : i32 to vector<64x1xi32>
    %418 = arith.cmpi sge, %416, %417 : vector<64x1xi32>
    %419 = arith.andi %414, %418 : vector<64x1xi1>
    %c1_i32_144 = arith.constant 1 : i32
    %420 = vector.broadcast %c1_i32_144 : i32 to vector<64x1xi32>
    %421 = arith.addi %269, %420 : vector<64x1xi32>
    %c8_i32_145 = arith.constant 8 : i32
    %422 = vector.broadcast %c8_i32_145 : i32 to vector<64x1xi32>
    %423 = arith.cmpi slt, %421, %422 : vector<64x1xi32>
    %424 = arith.andi %419, %423 : vector<64x1xi1>
    %cst_146 = arith.constant 0.000000e+00 : f32
    %425 = arith.truncf %cst_146 : f32 to bf16
    %426 = vector.shape_cast %424 : vector<64x1xi1> to vector<64x1xi1>
    %427 = vector.broadcast %426 : vector<64x1xi1> to vector<64x64xi1>
    %428 = vector.broadcast %425 : bf16 to vector<64x64xbf16>
    %429 = arith.select %427, %405, %428 : vector<64x64xi1>, vector<64x64xbf16>
    %430 = vector.extract_strided_slice %270 {offsets = [7, 0], sizes = [57, 64], strides = [1, 1]} : vector<64x64xbf16> to vector<57x64xbf16>
    %431 = vector.extract_strided_slice %270 {offsets = [0, 0], sizes = [7, 64], strides = [1, 1]} : vector<64x64xbf16> to vector<7x64xbf16>
    %432 = tpu.concatenate %430, %431 in 0 : vector<57x64xbf16>, vector<7x64xbf16> -> vector<64x64xbf16>
    %c1_i32_147 = arith.constant 1 : i32
    %433 = vector.broadcast %c1_i32_147 : i32 to vector<64x1xi32>
    %434 = arith.addi %267, %433 : vector<64x1xi32>
    %c0_i32_148 = arith.constant 0 : i32
    %435 = vector.broadcast %c0_i32_148 : i32 to vector<64x1xi32>
    %436 = arith.cmpi sge, %434, %435 : vector<64x1xi32>
    %c1_i32_149 = arith.constant 1 : i32
    %437 = vector.broadcast %c1_i32_149 : i32 to vector<64x1xi32>
    %438 = arith.addi %267, %437 : vector<64x1xi32>
    %c8_i32_150 = arith.constant 8 : i32
    %439 = vector.broadcast %c8_i32_150 : i32 to vector<64x1xi32>
    %440 = arith.cmpi slt, %438, %439 : vector<64x1xi32>
    %441 = arith.andi %436, %440 : vector<64x1xi1>
    %c-1_i32_151 = arith.constant -1 : i32
    %442 = vector.broadcast %c-1_i32_151 : i32 to vector<64x1xi32>
    %443 = arith.addi %269, %442 : vector<64x1xi32>
    %c0_i32_152 = arith.constant 0 : i32
    %444 = vector.broadcast %c0_i32_152 : i32 to vector<64x1xi32>
    %445 = arith.cmpi sge, %443, %444 : vector<64x1xi32>
    %446 = arith.andi %441, %445 : vector<64x1xi1>
    %c-1_i32_153 = arith.constant -1 : i32
    %447 = vector.broadcast %c-1_i32_153 : i32 to vector<64x1xi32>
    %448 = arith.addi %269, %447 : vector<64x1xi32>
    %c8_i32_154 = arith.constant 8 : i32
    %449 = vector.broadcast %c8_i32_154 : i32 to vector<64x1xi32>
    %450 = arith.cmpi slt, %448, %449 : vector<64x1xi32>
    %451 = arith.andi %446, %450 : vector<64x1xi1>
    %cst_155 = arith.constant 0.000000e+00 : f32
    %452 = arith.truncf %cst_155 : f32 to bf16
    %453 = vector.shape_cast %451 : vector<64x1xi1> to vector<64x1xi1>
    %454 = vector.broadcast %453 : vector<64x1xi1> to vector<64x64xi1>
    %455 = vector.broadcast %452 : bf16 to vector<64x64xbf16>
    %456 = arith.select %454, %432, %455 : vector<64x64xi1>, vector<64x64xbf16>
    %457 = vector.extract_strided_slice %270 {offsets = [8, 0], sizes = [56, 64], strides = [1, 1]} : vector<64x64xbf16> to vector<56x64xbf16>
    %458 = vector.extract_strided_slice %270 {offsets = [0, 0], sizes = [8, 64], strides = [1, 1]} : vector<64x64xbf16> to vector<8x64xbf16>
    %459 = tpu.concatenate %457, %458 in 0 : vector<56x64xbf16>, vector<8x64xbf16> -> vector<64x64xbf16>
    %c1_i32_156 = arith.constant 1 : i32
    %460 = vector.broadcast %c1_i32_156 : i32 to vector<64x1xi32>
    %461 = arith.addi %267, %460 : vector<64x1xi32>
    %c0_i32_157 = arith.constant 0 : i32
    %462 = vector.broadcast %c0_i32_157 : i32 to vector<64x1xi32>
    %463 = arith.cmpi sge, %461, %462 : vector<64x1xi32>
    %c1_i32_158 = arith.constant 1 : i32
    %464 = vector.broadcast %c1_i32_158 : i32 to vector<64x1xi32>
    %465 = arith.addi %267, %464 : vector<64x1xi32>
    %c8_i32_159 = arith.constant 8 : i32
    %466 = vector.broadcast %c8_i32_159 : i32 to vector<64x1xi32>
    %467 = arith.cmpi slt, %465, %466 : vector<64x1xi32>
    %468 = arith.andi %463, %467 : vector<64x1xi1>
    %c0_i32_160 = arith.constant 0 : i32
    %469 = vector.broadcast %c0_i32_160 : i32 to vector<64x1xi32>
    %470 = arith.addi %269, %469 : vector<64x1xi32>
    %c0_i32_161 = arith.constant 0 : i32
    %471 = vector.broadcast %c0_i32_161 : i32 to vector<64x1xi32>
    %472 = arith.cmpi sge, %470, %471 : vector<64x1xi32>
    %473 = arith.andi %468, %472 : vector<64x1xi1>
    %c0_i32_162 = arith.constant 0 : i32
    %474 = vector.broadcast %c0_i32_162 : i32 to vector<64x1xi32>
    %475 = arith.addi %269, %474 : vector<64x1xi32>
    %c8_i32_163 = arith.constant 8 : i32
    %476 = vector.broadcast %c8_i32_163 : i32 to vector<64x1xi32>
    %477 = arith.cmpi slt, %475, %476 : vector<64x1xi32>
    %478 = arith.andi %473, %477 : vector<64x1xi1>
    %cst_164 = arith.constant 0.000000e+00 : f32
    %479 = arith.truncf %cst_164 : f32 to bf16
    %480 = vector.shape_cast %478 : vector<64x1xi1> to vector<64x1xi1>
    %481 = vector.broadcast %480 : vector<64x1xi1> to vector<64x64xi1>
    %482 = vector.broadcast %479 : bf16 to vector<64x64xbf16>
    %483 = arith.select %481, %459, %482 : vector<64x64xi1>, vector<64x64xbf16>
    %484 = vector.extract_strided_slice %270 {offsets = [9, 0], sizes = [55, 64], strides = [1, 1]} : vector<64x64xbf16> to vector<55x64xbf16>
    %485 = vector.extract_strided_slice %270 {offsets = [0, 0], sizes = [9, 64], strides = [1, 1]} : vector<64x64xbf16> to vector<9x64xbf16>
    %486 = tpu.concatenate %484, %485 in 0 : vector<55x64xbf16>, vector<9x64xbf16> -> vector<64x64xbf16>
    %c1_i32_165 = arith.constant 1 : i32
    %487 = vector.broadcast %c1_i32_165 : i32 to vector<64x1xi32>
    %488 = arith.addi %267, %487 : vector<64x1xi32>
    %c0_i32_166 = arith.constant 0 : i32
    %489 = vector.broadcast %c0_i32_166 : i32 to vector<64x1xi32>
    %490 = arith.cmpi sge, %488, %489 : vector<64x1xi32>
    %c1_i32_167 = arith.constant 1 : i32
    %491 = vector.broadcast %c1_i32_167 : i32 to vector<64x1xi32>
    %492 = arith.addi %267, %491 : vector<64x1xi32>
    %c8_i32_168 = arith.constant 8 : i32
    %493 = vector.broadcast %c8_i32_168 : i32 to vector<64x1xi32>
    %494 = arith.cmpi slt, %492, %493 : vector<64x1xi32>
    %495 = arith.andi %490, %494 : vector<64x1xi1>
    %c1_i32_169 = arith.constant 1 : i32
    %496 = vector.broadcast %c1_i32_169 : i32 to vector<64x1xi32>
    %497 = arith.addi %269, %496 : vector<64x1xi32>
    %c0_i32_170 = arith.constant 0 : i32
    %498 = vector.broadcast %c0_i32_170 : i32 to vector<64x1xi32>
    %499 = arith.cmpi sge, %497, %498 : vector<64x1xi32>
    %500 = arith.andi %495, %499 : vector<64x1xi1>
    %c1_i32_171 = arith.constant 1 : i32
    %501 = vector.broadcast %c1_i32_171 : i32 to vector<64x1xi32>
    %502 = arith.addi %269, %501 : vector<64x1xi32>
    %c8_i32_172 = arith.constant 8 : i32
    %503 = vector.broadcast %c8_i32_172 : i32 to vector<64x1xi32>
    %504 = arith.cmpi slt, %502, %503 : vector<64x1xi32>
    %505 = arith.andi %500, %504 : vector<64x1xi1>
    %cst_173 = arith.constant 0.000000e+00 : f32
    %506 = arith.truncf %cst_173 : f32 to bf16
    %507 = vector.shape_cast %505 : vector<64x1xi1> to vector<64x1xi1>
    %508 = vector.broadcast %507 : vector<64x1xi1> to vector<64x64xi1>
    %509 = vector.broadcast %506 : bf16 to vector<64x64xbf16>
    %510 = arith.select %508, %486, %509 : vector<64x64xi1>, vector<64x64xbf16>
    %511 = tpu.concatenate %297, %324, %351, %378, %402, %429, %456, %483, %510 in 1 : vector<64x64xbf16>, vector<64x64xbf16>, vector<64x64xbf16>, vector<64x64xbf16>, vector<64x64xbf16>, vector<64x64xbf16>, vector<64x64xbf16>, vector<64x64xbf16>, vector<64x64xbf16> -> vector<64x576xbf16>
    %c0_174 = arith.constant 0 : index
    %c0_175 = arith.constant 0 : index
    %512 = vector.load %arg3[%c0_174, %c0_175] : memref<576x64xbf16, #tpu.memory_space<vmem>>, vector<576x64xbf16>
    %cst_176 = arith.constant dense<0.000000e+00> : vector<64x64xf32>
    %513 = tpu.matmul %511, %512, %cst_176 {dimension_numbers = #tpu.dot_dimension_numbers<[1], [0], [0], [1], [0, 0, 1, 1], [], []>} : vector<64x576xbf16>, vector<576x64xbf16>, vector<64x64xf32> -> vector<64x64xf32>
    %514 = vector.broadcast %265 : vector<1x64xf32> to vector<64x64xf32>
    %515 = arith.addf %513, %514 : vector<64x64xf32>
    %cst_177 = arith.constant 0.000000e+00 : f32
    %516 = vector.broadcast %cst_177 : f32 to vector<64x64xf32>
    %517 = arith.maximumf %515, %516 : vector<64x64xf32>
    %518 = vector.extract_strided_slice %517 {offsets = [1, 0], sizes = [63, 64], strides = [1, 1]} : vector<64x64xf32> to vector<63x64xf32>
    %519 = vector.extract_strided_slice %517 {offsets = [0, 0], sizes = [1, 64], strides = [1, 1]} : vector<64x64xf32> to vector<1x64xf32>
    %520 = tpu.concatenate %518, %519 in 0 : vector<63x64xf32>, vector<1x64xf32> -> vector<64x64xf32>
    %521 = arith.maximumf %517, %520 : vector<64x64xf32>
    %522 = vector.extract_strided_slice %521 {offsets = [8, 0], sizes = [56, 64], strides = [1, 1]} : vector<64x64xf32> to vector<56x64xf32>
    %523 = vector.extract_strided_slice %521 {offsets = [0, 0], sizes = [8, 64], strides = [1, 1]} : vector<64x64xf32> to vector<8x64xf32>
    %524 = tpu.concatenate %522, %523 in 0 : vector<56x64xf32>, vector<8x64xf32> -> vector<64x64xf32>
    %525 = arith.maximumf %521, %524 : vector<64x64xf32>
    %526 = vector.shape_cast %525 : vector<64x64xf32> to vector<4x16x64xf32>
    %527 = vector.extract_strided_slice %526 {offsets = [0, 0, 0], sizes = [4, 8, 64], strides = [1, 1, 1]} : vector<4x16x64xf32> to vector<4x8x64xf32>
    %528 = vector.shape_cast %527 : vector<4x8x64xf32> to vector<32x64xf32>
    %c0_178 = arith.constant 0 : index
    %c0_179 = arith.constant 0 : index
    %529 = vector.load %arg8[%c0_178, %c0_179] : memref<128x64xf32, #tpu.memory_space<vmem>>, vector<32x64xf32>
    tpu.vector_store %arg8[%c0_178, %c0_179], %528 {strides = array<i32>} : memref<128x64xf32, #tpu.memory_space<vmem>>, vector<32x64xf32>,
    %c0_180 = arith.constant 0 : index
    %c0_181 = arith.constant 0 : index
    %530 = tpu.strided_load %arg8[%c0_180, %c0_181] {strides = array<i32: 2, 1>} : memref<128x64xf32, #tpu.memory_space<vmem>>, vector<16x64xf32>
    %531 = tpu.iota {dimensions = array<i32: 0>} : vector<16x1xi32>
    %c3_i32_182 = arith.constant 3 : i32
    %532 = vector.broadcast %c3_i32_182 : i32 to vector<16x1xi32>
    %533 = arith.andi %531, %532 : vector<16x1xi32>
    %c2_i32 = arith.constant 2 : i32
    %534 = vector.broadcast %c2_i32 : i32 to vector<16x1xi32>
    %535 = arith.shrsi %531, %534 : vector<16x1xi32>
    %c3_i32_183 = arith.constant 3 : i32
    %536 = vector.broadcast %c3_i32_183 : i32 to vector<16x1xi32>
    %537 = arith.andi %535, %536 : vector<16x1xi32>
    %538 = vector.extract_strided_slice %0 {offsets = [2, 0], sizes = [1, 64], strides = [1, 1]} : vector<4x128xf32> to vector<1x64xf32>
    %c0_i32_184 = arith.constant 0 : i32
    %539 = vector.broadcast %c0_i32_184 : i32 to vector<16x1xi32>
    %540 = arith.shrsi %537, %539 : vector<16x1xi32>
    %c0_i32_185 = arith.constant 0 : i32
    %541 = vector.broadcast %c0_i32_185 : i32 to vector<16x1xi32>
    %542 = arith.shrsi %533, %541 : vector<16x1xi32>
    %543 = arith.truncf %530 : vector<16x64xf32> to vector<16x64xbf16>
    %544 = vector.extract_strided_slice %543 {offsets = [11, 0], sizes = [5, 64], strides = [1, 1]} : vector<16x64xbf16> to vector<5x64xbf16>
    %545 = vector.extract_strided_slice %543 {offsets = [0, 0], sizes = [11, 64], strides = [1, 1]} : vector<16x64xbf16> to vector<11x64xbf16>
    %546 = tpu.concatenate %544, %545 in 0 : vector<5x64xbf16>, vector<11x64xbf16> -> vector<16x64xbf16>
    %c-1_i32_186 = arith.constant -1 : i32
    %547 = vector.broadcast %c-1_i32_186 : i32 to vector<16x1xi32>
    %548 = arith.addi %540, %547 : vector<16x1xi32>
    %c0_i32_187 = arith.constant 0 : i32
    %549 = vector.broadcast %c0_i32_187 : i32 to vector<16x1xi32>
    %550 = arith.cmpi sge, %548, %549 : vector<16x1xi32>
    %c-1_i32_188 = arith.constant -1 : i32
    %551 = vector.broadcast %c-1_i32_188 : i32 to vector<16x1xi32>
    %552 = arith.addi %540, %551 : vector<16x1xi32>
    %c4_i32_189 = arith.constant 4 : i32
    %553 = vector.broadcast %c4_i32_189 : i32 to vector<16x1xi32>
    %554 = arith.cmpi slt, %552, %553 : vector<16x1xi32>
    %555 = arith.andi %550, %554 : vector<16x1xi1>
    %c-1_i32_190 = arith.constant -1 : i32
    %556 = vector.broadcast %c-1_i32_190 : i32 to vector<16x1xi32>
    %557 = arith.addi %542, %556 : vector<16x1xi32>
    %c0_i32_191 = arith.constant 0 : i32
    %558 = vector.broadcast %c0_i32_191 : i32 to vector<16x1xi32>
    %559 = arith.cmpi sge, %557, %558 : vector<16x1xi32>
    %560 = arith.andi %555, %559 : vector<16x1xi1>
    %c-1_i32_192 = arith.constant -1 : i32
    %561 = vector.broadcast %c-1_i32_192 : i32 to vector<16x1xi32>
    %562 = arith.addi %542, %561 : vector<16x1xi32>
    %c4_i32_193 = arith.constant 4 : i32
    %563 = vector.broadcast %c4_i32_193 : i32 to vector<16x1xi32>
    %564 = arith.cmpi slt, %562, %563 : vector<16x1xi32>
    %565 = arith.andi %560, %564 : vector<16x1xi1>
    %cst_194 = arith.constant 0.000000e+00 : f32
    %566 = arith.truncf %cst_194 : f32 to bf16
    %567 = vector.shape_cast %565 : vector<16x1xi1> to vector<16x1xi1>
    %568 = vector.broadcast %567 : vector<16x1xi1> to vector<16x64xi1>
    %569 = vector.broadcast %566 : bf16 to vector<16x64xbf16>
    %570 = arith.select %568, %546, %569 : vector<16x64xi1>, vector<16x64xbf16>
    %571 = vector.extract_strided_slice %543 {offsets = [12, 0], sizes = [4, 64], strides = [1, 1]} : vector<16x64xbf16> to vector<4x64xbf16>
    %572 = vector.extract_strided_slice %543 {offsets = [0, 0], sizes = [12, 64], strides = [1, 1]} : vector<16x64xbf16> to vector<12x64xbf16>
    %573 = tpu.concatenate %571, %572 in 0 : vector<4x64xbf16>, vector<12x64xbf16> -> vector<16x64xbf16>
    %c-1_i32_195 = arith.constant -1 : i32
    %574 = vector.broadcast %c-1_i32_195 : i32 to vector<16x1xi32>
    %575 = arith.addi %540, %574 : vector<16x1xi32>
    %c0_i32_196 = arith.constant 0 : i32
    %576 = vector.broadcast %c0_i32_196 : i32 to vector<16x1xi32>
    %577 = arith.cmpi sge, %575, %576 : vector<16x1xi32>
    %c-1_i32_197 = arith.constant -1 : i32
    %578 = vector.broadcast %c-1_i32_197 : i32 to vector<16x1xi32>
    %579 = arith.addi %540, %578 : vector<16x1xi32>
    %c4_i32_198 = arith.constant 4 : i32
    %580 = vector.broadcast %c4_i32_198 : i32 to vector<16x1xi32>
    %581 = arith.cmpi slt, %579, %580 : vector<16x1xi32>
    %582 = arith.andi %577, %581 : vector<16x1xi1>
    %c0_i32_199 = arith.constant 0 : i32
    %583 = vector.broadcast %c0_i32_199 : i32 to vector<16x1xi32>
    %584 = arith.addi %542, %583 : vector<16x1xi32>
    %c0_i32_200 = arith.constant 0 : i32
    %585 = vector.broadcast %c0_i32_200 : i32 to vector<16x1xi32>
    %586 = arith.cmpi sge, %584, %585 : vector<16x1xi32>
    %587 = arith.andi %582, %586 : vector<16x1xi1>
    %c0_i32_201 = arith.constant 0 : i32
    %588 = vector.broadcast %c0_i32_201 : i32 to vector<16x1xi32>
    %589 = arith.addi %542, %588 : vector<16x1xi32>
    %c4_i32_202 = arith.constant 4 : i32
    %590 = vector.broadcast %c4_i32_202 : i32 to vector<16x1xi32>
    %591 = arith.cmpi slt, %589, %590 : vector<16x1xi32>
    %592 = arith.andi %587, %591 : vector<16x1xi1>
    %cst_203 = arith.constant 0.000000e+00 : f32
    %593 = arith.truncf %cst_203 : f32 to bf16
    %594 = vector.shape_cast %592 : vector<16x1xi1> to vector<16x1xi1>
    %595 = vector.broadcast %594 : vector<16x1xi1> to vector<16x64xi1>
    %596 = vector.broadcast %593 : bf16 to vector<16x64xbf16>
    %597 = arith.select %595, %573, %596 : vector<16x64xi1>, vector<16x64xbf16>
    %598 = vector.extract_strided_slice %543 {offsets = [13, 0], sizes = [3, 64], strides = [1, 1]} : vector<16x64xbf16> to vector<3x64xbf16>
    %599 = vector.extract_strided_slice %543 {offsets = [0, 0], sizes = [13, 64], strides = [1, 1]} : vector<16x64xbf16> to vector<13x64xbf16>
    %600 = tpu.concatenate %598, %599 in 0 : vector<3x64xbf16>, vector<13x64xbf16> -> vector<16x64xbf16>
    %c-1_i32_204 = arith.constant -1 : i32
    %601 = vector.broadcast %c-1_i32_204 : i32 to vector<16x1xi32>
    %602 = arith.addi %540, %601 : vector<16x1xi32>
    %c0_i32_205 = arith.constant 0 : i32
    %603 = vector.broadcast %c0_i32_205 : i32 to vector<16x1xi32>
    %604 = arith.cmpi sge, %602, %603 : vector<16x1xi32>
    %c-1_i32_206 = arith.constant -1 : i32
    %605 = vector.broadcast %c-1_i32_206 : i32 to vector<16x1xi32>
    %606 = arith.addi %540, %605 : vector<16x1xi32>
    %c4_i32_207 = arith.constant 4 : i32
    %607 = vector.broadcast %c4_i32_207 : i32 to vector<16x1xi32>
    %608 = arith.cmpi slt, %606, %607 : vector<16x1xi32>
    %609 = arith.andi %604, %608 : vector<16x1xi1>
    %c1_i32_208 = arith.constant 1 : i32
    %610 = vector.broadcast %c1_i32_208 : i32 to vector<16x1xi32>
    %611 = arith.addi %542, %610 : vector<16x1xi32>
    %c0_i32_209 = arith.constant 0 : i32
    %612 = vector.broadcast %c0_i32_209 : i32 to vector<16x1xi32>
    %613 = arith.cmpi sge, %611, %612 : vector<16x1xi32>
    %614 = arith.andi %609, %613 : vector<16x1xi1>
    %c1_i32_210 = arith.constant 1 : i32
    %615 = vector.broadcast %c1_i32_210 : i32 to vector<16x1xi32>
    %616 = arith.addi %542, %615 : vector<16x1xi32>
    %c4_i32_211 = arith.constant 4 : i32
    %617 = vector.broadcast %c4_i32_211 : i32 to vector<16x1xi32>
    %618 = arith.cmpi slt, %616, %617 : vector<16x1xi32>
    %619 = arith.andi %614, %618 : vector<16x1xi1>
    %cst_212 = arith.constant 0.000000e+00 : f32
    %620 = arith.truncf %cst_212 : f32 to bf16
    %621 = vector.shape_cast %619 : vector<16x1xi1> to vector<16x1xi1>
    %622 = vector.broadcast %621 : vector<16x1xi1> to vector<16x64xi1>
    %623 = vector.broadcast %620 : bf16 to vector<16x64xbf16>
    %624 = arith.select %622, %600, %623 : vector<16x64xi1>, vector<16x64xbf16>
    %625 = vector.extract_strided_slice %543 {offsets = [15, 0], sizes = [1, 64], strides = [1, 1]} : vector<16x64xbf16> to vector<1x64xbf16>
    %626 = vector.extract_strided_slice %543 {offsets = [0, 0], sizes = [15, 64], strides = [1, 1]} : vector<16x64xbf16> to vector<15x64xbf16>
    %627 = tpu.concatenate %625, %626 in 0 : vector<1x64xbf16>, vector<15x64xbf16> -> vector<16x64xbf16>
    %c0_i32_213 = arith.constant 0 : i32
    %628 = vector.broadcast %c0_i32_213 : i32 to vector<16x1xi32>
    %629 = arith.addi %540, %628 : vector<16x1xi32>
    %c0_i32_214 = arith.constant 0 : i32
    %630 = vector.broadcast %c0_i32_214 : i32 to vector<16x1xi32>
    %631 = arith.cmpi sge, %629, %630 : vector<16x1xi32>
    %c0_i32_215 = arith.constant 0 : i32
    %632 = vector.broadcast %c0_i32_215 : i32 to vector<16x1xi32>
    %633 = arith.addi %540, %632 : vector<16x1xi32>
    %c4_i32_216 = arith.constant 4 : i32
    %634 = vector.broadcast %c4_i32_216 : i32 to vector<16x1xi32>
    %635 = arith.cmpi slt, %633, %634 : vector<16x1xi32>
    %636 = arith.andi %631, %635 : vector<16x1xi1>
    %c-1_i32_217 = arith.constant -1 : i32
    %637 = vector.broadcast %c-1_i32_217 : i32 to vector<16x1xi32>
    %638 = arith.addi %542, %637 : vector<16x1xi32>
    %c0_i32_218 = arith.constant 0 : i32
    %639 = vector.broadcast %c0_i32_218 : i32 to vector<16x1xi32>
    %640 = arith.cmpi sge, %638, %639 : vector<16x1xi32>
    %641 = arith.andi %636, %640 : vector<16x1xi1>
    %c-1_i32_219 = arith.constant -1 : i32
    %642 = vector.broadcast %c-1_i32_219 : i32 to vector<16x1xi32>
    %643 = arith.addi %542, %642 : vector<16x1xi32>
    %c4_i32_220 = arith.constant 4 : i32
    %644 = vector.broadcast %c4_i32_220 : i32 to vector<16x1xi32>
    %645 = arith.cmpi slt, %643, %644 : vector<16x1xi32>
    %646 = arith.andi %641, %645 : vector<16x1xi1>
    %cst_221 = arith.constant 0.000000e+00 : f32
    %647 = arith.truncf %cst_221 : f32 to bf16
    %648 = vector.shape_cast %646 : vector<16x1xi1> to vector<16x1xi1>
    %649 = vector.broadcast %648 : vector<16x1xi1> to vector<16x64xi1>
    %650 = vector.broadcast %647 : bf16 to vector<16x64xbf16>
    %651 = arith.select %649, %627, %650 : vector<16x64xi1>, vector<16x64xbf16>
    %c0_i32_222 = arith.constant 0 : i32
    %652 = vector.broadcast %c0_i32_222 : i32 to vector<16x1xi32>
    %653 = arith.addi %540, %652 : vector<16x1xi32>
    %c0_i32_223 = arith.constant 0 : i32
    %654 = vector.broadcast %c0_i32_223 : i32 to vector<16x1xi32>
    %655 = arith.cmpi sge, %653, %654 : vector<16x1xi32>
    %c0_i32_224 = arith.constant 0 : i32
    %656 = vector.broadcast %c0_i32_224 : i32 to vector<16x1xi32>
    %657 = arith.addi %540, %656 : vector<16x1xi32>
    %c4_i32_225 = arith.constant 4 : i32
    %658 = vector.broadcast %c4_i32_225 : i32 to vector<16x1xi32>
    %659 = arith.cmpi slt, %657, %658 : vector<16x1xi32>
    %660 = arith.andi %655, %659 : vector<16x1xi1>
    %c0_i32_226 = arith.constant 0 : i32
    %661 = vector.broadcast %c0_i32_226 : i32 to vector<16x1xi32>
    %662 = arith.addi %542, %661 : vector<16x1xi32>
    %c0_i32_227 = arith.constant 0 : i32
    %663 = vector.broadcast %c0_i32_227 : i32 to vector<16x1xi32>
    %664 = arith.cmpi sge, %662, %663 : vector<16x1xi32>
    %665 = arith.andi %660, %664 : vector<16x1xi1>
    %c0_i32_228 = arith.constant 0 : i32
    %666 = vector.broadcast %c0_i32_228 : i32 to vector<16x1xi32>
    %667 = arith.addi %542, %666 : vector<16x1xi32>
    %c4_i32_229 = arith.constant 4 : i32
    %668 = vector.broadcast %c4_i32_229 : i32 to vector<16x1xi32>
    %669 = arith.cmpi slt, %667, %668 : vector<16x1xi32>
    %670 = arith.andi %665, %669 : vector<16x1xi1>
    %cst_230 = arith.constant 0.000000e+00 : f32
    %671 = arith.truncf %cst_230 : f32 to bf16
    %672 = vector.shape_cast %670 : vector<16x1xi1> to vector<16x1xi1>
    %673 = vector.broadcast %672 : vector<16x1xi1> to vector<16x64xi1>
    %674 = vector.broadcast %671 : bf16 to vector<16x64xbf16>
    %675 = arith.select %673, %543, %674 : vector<16x64xi1>, vector<16x64xbf16>
    %676 = vector.extract_strided_slice %543 {offsets = [1, 0], sizes = [15, 64], strides = [1, 1]} : vector<16x64xbf16> to vector<15x64xbf16>
    %677 = vector.extract_strided_slice %543 {offsets = [0, 0], sizes = [1, 64], strides = [1, 1]} : vector<16x64xbf16> to vector<1x64xbf16>
    %678 = tpu.concatenate %676, %677 in 0 : vector<15x64xbf16>, vector<1x64xbf16> -> vector<16x64xbf16>
    %c0_i32_231 = arith.constant 0 : i32
    %679 = vector.broadcast %c0_i32_231 : i32 to vector<16x1xi32>
    %680 = arith.addi %540, %679 : vector<16x1xi32>
    %c0_i32_232 = arith.constant 0 : i32
    %681 = vector.broadcast %c0_i32_232 : i32 to vector<16x1xi32>
    %682 = arith.cmpi sge, %680, %681 : vector<16x1xi32>
    %c0_i32_233 = arith.constant 0 : i32
    %683 = vector.broadcast %c0_i32_233 : i32 to vector<16x1xi32>
    %684 = arith.addi %540, %683 : vector<16x1xi32>
    %c4_i32_234 = arith.constant 4 : i32
    %685 = vector.broadcast %c4_i32_234 : i32 to vector<16x1xi32>
    %686 = arith.cmpi slt, %684, %685 : vector<16x1xi32>
    %687 = arith.andi %682, %686 : vector<16x1xi1>
    %c1_i32_235 = arith.constant 1 : i32
    %688 = vector.broadcast %c1_i32_235 : i32 to vector<16x1xi32>
    %689 = arith.addi %542, %688 : vector<16x1xi32>
    %c0_i32_236 = arith.constant 0 : i32
    %690 = vector.broadcast %c0_i32_236 : i32 to vector<16x1xi32>
    %691 = arith.cmpi sge, %689, %690 : vector<16x1xi32>
    %692 = arith.andi %687, %691 : vector<16x1xi1>
    %c1_i32_237 = arith.constant 1 : i32
    %693 = vector.broadcast %c1_i32_237 : i32 to vector<16x1xi32>
    %694 = arith.addi %542, %693 : vector<16x1xi32>
    %c4_i32_238 = arith.constant 4 : i32
    %695 = vector.broadcast %c4_i32_238 : i32 to vector<16x1xi32>
    %696 = arith.cmpi slt, %694, %695 : vector<16x1xi32>
    %697 = arith.andi %692, %696 : vector<16x1xi1>
    %cst_239 = arith.constant 0.000000e+00 : f32
    %698 = arith.truncf %cst_239 : f32 to bf16
    %699 = vector.shape_cast %697 : vector<16x1xi1> to vector<16x1xi1>
    %700 = vector.broadcast %699 : vector<16x1xi1> to vector<16x64xi1>
    %701 = vector.broadcast %698 : bf16 to vector<16x64xbf16>
    %702 = arith.select %700, %678, %701 : vector<16x64xi1>, vector<16x64xbf16>
    %703 = vector.extract_strided_slice %543 {offsets = [3, 0], sizes = [13, 64], strides = [1, 1]} : vector<16x64xbf16> to vector<13x64xbf16>
    %704 = vector.extract_strided_slice %543 {offsets = [0, 0], sizes = [3, 64], strides = [1, 1]} : vector<16x64xbf16> to vector<3x64xbf16>
    %705 = tpu.concatenate %703, %704 in 0 : vector<13x64xbf16>, vector<3x64xbf16> -> vector<16x64xbf16>
    %c1_i32_240 = arith.constant 1 : i32
    %706 = vector.broadcast %c1_i32_240 : i32 to vector<16x1xi32>
    %707 = arith.addi %540, %706 : vector<16x1xi32>
    %c0_i32_241 = arith.constant 0 : i32
    %708 = vector.broadcast %c0_i32_241 : i32 to vector<16x1xi32>
    %709 = arith.cmpi sge, %707, %708 : vector<16x1xi32>
    %c1_i32_242 = arith.constant 1 : i32
    %710 = vector.broadcast %c1_i32_242 : i32 to vector<16x1xi32>
    %711 = arith.addi %540, %710 : vector<16x1xi32>
    %c4_i32_243 = arith.constant 4 : i32
    %712 = vector.broadcast %c4_i32_243 : i32 to vector<16x1xi32>
    %713 = arith.cmpi slt, %711, %712 : vector<16x1xi32>
    %714 = arith.andi %709, %713 : vector<16x1xi1>
    %c-1_i32_244 = arith.constant -1 : i32
    %715 = vector.broadcast %c-1_i32_244 : i32 to vector<16x1xi32>
    %716 = arith.addi %542, %715 : vector<16x1xi32>
    %c0_i32_245 = arith.constant 0 : i32
    %717 = vector.broadcast %c0_i32_245 : i32 to vector<16x1xi32>
    %718 = arith.cmpi sge, %716, %717 : vector<16x1xi32>
    %719 = arith.andi %714, %718 : vector<16x1xi1>
    %c-1_i32_246 = arith.constant -1 : i32
    %720 = vector.broadcast %c-1_i32_246 : i32 to vector<16x1xi32>
    %721 = arith.addi %542, %720 : vector<16x1xi32>
    %c4_i32_247 = arith.constant 4 : i32
    %722 = vector.broadcast %c4_i32_247 : i32 to vector<16x1xi32>
    %723 = arith.cmpi slt, %721, %722 : vector<16x1xi32>
    %724 = arith.andi %719, %723 : vector<16x1xi1>
    %cst_248 = arith.constant 0.000000e+00 : f32
    %725 = arith.truncf %cst_248 : f32 to bf16
    %726 = vector.shape_cast %724 : vector<16x1xi1> to vector<16x1xi1>
    %727 = vector.broadcast %726 : vector<16x1xi1> to vector<16x64xi1>
    %728 = vector.broadcast %725 : bf16 to vector<16x64xbf16>
    %729 = arith.select %727, %705, %728 : vector<16x64xi1>, vector<16x64xbf16>
    %730 = vector.extract_strided_slice %543 {offsets = [4, 0], sizes = [12, 64], strides = [1, 1]} : vector<16x64xbf16> to vector<12x64xbf16>
    %731 = vector.extract_strided_slice %543 {offsets = [0, 0], sizes = [4, 64], strides = [1, 1]} : vector<16x64xbf16> to vector<4x64xbf16>
    %732 = tpu.concatenate %730, %731 in 0 : vector<12x64xbf16>, vector<4x64xbf16> -> vector<16x64xbf16>
    %c1_i32_249 = arith.constant 1 : i32
    %733 = vector.broadcast %c1_i32_249 : i32 to vector<16x1xi32>
    %734 = arith.addi %540, %733 : vector<16x1xi32>
    %c0_i32_250 = arith.constant 0 : i32
    %735 = vector.broadcast %c0_i32_250 : i32 to vector<16x1xi32>
    %736 = arith.cmpi sge, %734, %735 : vector<16x1xi32>
    %c1_i32_251 = arith.constant 1 : i32
    %737 = vector.broadcast %c1_i32_251 : i32 to vector<16x1xi32>
    %738 = arith.addi %540, %737 : vector<16x1xi32>
    %c4_i32_252 = arith.constant 4 : i32
    %739 = vector.broadcast %c4_i32_252 : i32 to vector<16x1xi32>
    %740 = arith.cmpi slt, %738, %739 : vector<16x1xi32>
    %741 = arith.andi %736, %740 : vector<16x1xi1>
    %c0_i32_253 = arith.constant 0 : i32
    %742 = vector.broadcast %c0_i32_253 : i32 to vector<16x1xi32>
    %743 = arith.addi %542, %742 : vector<16x1xi32>
    %c0_i32_254 = arith.constant 0 : i32
    %744 = vector.broadcast %c0_i32_254 : i32 to vector<16x1xi32>
    %745 = arith.cmpi sge, %743, %744 : vector<16x1xi32>
    %746 = arith.andi %741, %745 : vector<16x1xi1>
    %c0_i32_255 = arith.constant 0 : i32
    %747 = vector.broadcast %c0_i32_255 : i32 to vector<16x1xi32>
    %748 = arith.addi %542, %747 : vector<16x1xi32>
    %c4_i32_256 = arith.constant 4 : i32
    %749 = vector.broadcast %c4_i32_256 : i32 to vector<16x1xi32>
    %750 = arith.cmpi slt, %748, %749 : vector<16x1xi32>
    %751 = arith.andi %746, %750 : vector<16x1xi1>
    %cst_257 = arith.constant 0.000000e+00 : f32
    %752 = arith.truncf %cst_257 : f32 to bf16
    %753 = vector.shape_cast %751 : vector<16x1xi1> to vector<16x1xi1>
    %754 = vector.broadcast %753 : vector<16x1xi1> to vector<16x64xi1>
    %755 = vector.broadcast %752 : bf16 to vector<16x64xbf16>
    %756 = arith.select %754, %732, %755 : vector<16x64xi1>, vector<16x64xbf16>
    %757 = vector.extract_strided_slice %543 {offsets = [5, 0], sizes = [11, 64], strides = [1, 1]} : vector<16x64xbf16> to vector<11x64xbf16>
    %758 = vector.extract_strided_slice %543 {offsets = [0, 0], sizes = [5, 64], strides = [1, 1]} : vector<16x64xbf16> to vector<5x64xbf16>
    %759 = tpu.concatenate %757, %758 in 0 : vector<11x64xbf16>, vector<5x64xbf16> -> vector<16x64xbf16>
    %c1_i32_258 = arith.constant 1 : i32
    %760 = vector.broadcast %c1_i32_258 : i32 to vector<16x1xi32>
    %761 = arith.addi %540, %760 : vector<16x1xi32>
    %c0_i32_259 = arith.constant 0 : i32
    %762 = vector.broadcast %c0_i32_259 : i32 to vector<16x1xi32>
    %763 = arith.cmpi sge, %761, %762 : vector<16x1xi32>
    %c1_i32_260 = arith.constant 1 : i32
    %764 = vector.broadcast %c1_i32_260 : i32 to vector<16x1xi32>
    %765 = arith.addi %540, %764 : vector<16x1xi32>
    %c4_i32_261 = arith.constant 4 : i32
    %766 = vector.broadcast %c4_i32_261 : i32 to vector<16x1xi32>
    %767 = arith.cmpi slt, %765, %766 : vector<16x1xi32>
    %768 = arith.andi %763, %767 : vector<16x1xi1>
    %c1_i32_262 = arith.constant 1 : i32
    %769 = vector.broadcast %c1_i32_262 : i32 to vector<16x1xi32>
    %770 = arith.addi %542, %769 : vector<16x1xi32>
    %c0_i32_263 = arith.constant 0 : i32
    %771 = vector.broadcast %c0_i32_263 : i32 to vector<16x1xi32>
    %772 = arith.cmpi sge, %770, %771 : vector<16x1xi32>
    %773 = arith.andi %768, %772 : vector<16x1xi1>
    %c1_i32_264 = arith.constant 1 : i32
    %774 = vector.broadcast %c1_i32_264 : i32 to vector<16x1xi32>
    %775 = arith.addi %542, %774 : vector<16x1xi32>
    %c4_i32_265 = arith.constant 4 : i32
    %776 = vector.broadcast %c4_i32_265 : i32 to vector<16x1xi32>
    %777 = arith.cmpi slt, %775, %776 : vector<16x1xi32>
    %778 = arith.andi %773, %777 : vector<16x1xi1>
    %cst_266 = arith.constant 0.000000e+00 : f32
    %779 = arith.truncf %cst_266 : f32 to bf16
    %780 = vector.shape_cast %778 : vector<16x1xi1> to vector<16x1xi1>
    %781 = vector.broadcast %780 : vector<16x1xi1> to vector<16x64xi1>
    %782 = vector.broadcast %779 : bf16 to vector<16x64xbf16>
    %783 = arith.select %781, %759, %782 : vector<16x64xi1>, vector<16x64xbf16>
    %784 = tpu.concatenate %570, %597, %624, %651, %675, %702, %729, %756, %783 in 1 : vector<16x64xbf16>, vector<16x64xbf16>, vector<16x64xbf16>, vector<16x64xbf16>, vector<16x64xbf16>, vector<16x64xbf16>, vector<16x64xbf16>, vector<16x64xbf16>, vector<16x64xbf16> -> vector<16x576xbf16>
    %c0_267 = arith.constant 0 : index
    %c0_268 = arith.constant 0 : index
    %785 = vector.load %arg4[%c0_267, %c0_268] : memref<576x64xbf16, #tpu.memory_space<vmem>>, vector<576x64xbf16>
    %cst_269 = arith.constant dense<0.000000e+00> : vector<16x64xf32>
    %786 = tpu.matmul %784, %785, %cst_269 {dimension_numbers = #tpu.dot_dimension_numbers<[1], [0], [0], [1], [0, 0, 1, 1], [], []>} : vector<16x576xbf16>, vector<576x64xbf16>, vector<16x64xf32> -> vector<16x64xf32>
    %787 = vector.broadcast %538 : vector<1x64xf32> to vector<16x64xf32>
    %788 = arith.addf %786, %787 : vector<16x64xf32>
    %cst_270 = arith.constant 0.000000e+00 : f32
    %789 = vector.broadcast %cst_270 : f32 to vector<16x64xf32>
    %790 = arith.maximumf %788, %789 : vector<16x64xf32>
    %791 = vector.extract_strided_slice %790 {offsets = [1, 0], sizes = [15, 64], strides = [1, 1]} : vector<16x64xf32> to vector<15x64xf32>
    %792 = vector.extract_strided_slice %790 {offsets = [0, 0], sizes = [1, 64], strides = [1, 1]} : vector<16x64xf32> to vector<1x64xf32>
    %793 = tpu.concatenate %791, %792 in 0 : vector<15x64xf32>, vector<1x64xf32> -> vector<16x64xf32>
    %794 = arith.maximumf %790, %793 : vector<16x64xf32>
    %795 = vector.extract_strided_slice %794 {offsets = [4, 0], sizes = [12, 64], strides = [1, 1]} : vector<16x64xf32> to vector<12x64xf32>
    %796 = vector.extract_strided_slice %794 {offsets = [0, 0], sizes = [4, 64], strides = [1, 1]} : vector<16x64xf32> to vector<4x64xf32>
    %797 = tpu.concatenate %795, %796 in 0 : vector<12x64xf32>, vector<4x64xf32> -> vector<16x64xf32>
    %798 = arith.maximumf %794, %797 : vector<16x64xf32>
    %799 = vector.extract_strided_slice %0 {offsets = [3, 0], sizes = [1, 128], strides = [1, 1]} : vector<4x128xf32> to vector<1x128xf32>
    %c1_i32_271 = arith.constant 1 : i32
    %800 = vector.broadcast %c1_i32_271 : i32 to vector<16x1xi32>
    %801 = arith.shrsi %537, %800 : vector<16x1xi32>
    %c1_i32_272 = arith.constant 1 : i32
    %802 = vector.broadcast %c1_i32_272 : i32 to vector<16x1xi32>
    %803 = arith.shrsi %533, %802 : vector<16x1xi32>
    %804 = arith.truncf %798 : vector<16x64xf32> to vector<16x64xbf16>
    %805 = vector.extract_strided_slice %804 {offsets = [6, 0], sizes = [10, 64], strides = [1, 1]} : vector<16x64xbf16> to vector<10x64xbf16>
    %806 = vector.extract_strided_slice %804 {offsets = [0, 0], sizes = [6, 64], strides = [1, 1]} : vector<16x64xbf16> to vector<6x64xbf16>
    %807 = tpu.concatenate %805, %806 in 0 : vector<10x64xbf16>, vector<6x64xbf16> -> vector<16x64xbf16>
    %c-1_i32_273 = arith.constant -1 : i32
    %808 = vector.broadcast %c-1_i32_273 : i32 to vector<16x1xi32>
    %809 = arith.addi %801, %808 : vector<16x1xi32>
    %c0_i32_274 = arith.constant 0 : i32
    %810 = vector.broadcast %c0_i32_274 : i32 to vector<16x1xi32>
    %811 = arith.cmpi sge, %809, %810 : vector<16x1xi32>
    %c-1_i32_275 = arith.constant -1 : i32
    %812 = vector.broadcast %c-1_i32_275 : i32 to vector<16x1xi32>
    %813 = arith.addi %801, %812 : vector<16x1xi32>
    %c2_i32_276 = arith.constant 2 : i32
    %814 = vector.broadcast %c2_i32_276 : i32 to vector<16x1xi32>
    %815 = arith.cmpi slt, %813, %814 : vector<16x1xi32>
    %816 = arith.andi %811, %815 : vector<16x1xi1>
    %c-1_i32_277 = arith.constant -1 : i32
    %817 = vector.broadcast %c-1_i32_277 : i32 to vector<16x1xi32>
    %818 = arith.addi %803, %817 : vector<16x1xi32>
    %c0_i32_278 = arith.constant 0 : i32
    %819 = vector.broadcast %c0_i32_278 : i32 to vector<16x1xi32>
    %820 = arith.cmpi sge, %818, %819 : vector<16x1xi32>
    %821 = arith.andi %816, %820 : vector<16x1xi1>
    %c-1_i32_279 = arith.constant -1 : i32
    %822 = vector.broadcast %c-1_i32_279 : i32 to vector<16x1xi32>
    %823 = arith.addi %803, %822 : vector<16x1xi32>
    %c2_i32_280 = arith.constant 2 : i32
    %824 = vector.broadcast %c2_i32_280 : i32 to vector<16x1xi32>
    %825 = arith.cmpi slt, %823, %824 : vector<16x1xi32>
    %826 = arith.andi %821, %825 : vector<16x1xi1>
    %cst_281 = arith.constant 0.000000e+00 : f32
    %827 = arith.truncf %cst_281 : f32 to bf16
    %828 = vector.shape_cast %826 : vector<16x1xi1> to vector<16x1xi1>
    %829 = vector.broadcast %828 : vector<16x1xi1> to vector<16x64xi1>
    %830 = vector.broadcast %827 : bf16 to vector<16x64xbf16>
    %831 = arith.select %829, %807, %830 : vector<16x64xi1>, vector<16x64xbf16>
    %832 = vector.extract_strided_slice %804 {offsets = [8, 0], sizes = [8, 64], strides = [1, 1]} : vector<16x64xbf16> to vector<8x64xbf16>
    %833 = vector.extract_strided_slice %804 {offsets = [0, 0], sizes = [8, 64], strides = [1, 1]} : vector<16x64xbf16> to vector<8x64xbf16>
    %834 = tpu.concatenate %832, %833 in 0 : vector<8x64xbf16>, vector<8x64xbf16> -> vector<16x64xbf16>
    %c-1_i32_282 = arith.constant -1 : i32
    %835 = vector.broadcast %c-1_i32_282 : i32 to vector<16x1xi32>
    %836 = arith.addi %801, %835 : vector<16x1xi32>
    %c0_i32_283 = arith.constant 0 : i32
    %837 = vector.broadcast %c0_i32_283 : i32 to vector<16x1xi32>
    %838 = arith.cmpi sge, %836, %837 : vector<16x1xi32>
    %c-1_i32_284 = arith.constant -1 : i32
    %839 = vector.broadcast %c-1_i32_284 : i32 to vector<16x1xi32>
    %840 = arith.addi %801, %839 : vector<16x1xi32>
    %c2_i32_285 = arith.constant 2 : i32
    %841 = vector.broadcast %c2_i32_285 : i32 to vector<16x1xi32>
    %842 = arith.cmpi slt, %840, %841 : vector<16x1xi32>
    %843 = arith.andi %838, %842 : vector<16x1xi1>
    %c0_i32_286 = arith.constant 0 : i32
    %844 = vector.broadcast %c0_i32_286 : i32 to vector<16x1xi32>
    %845 = arith.addi %803, %844 : vector<16x1xi32>
    %c0_i32_287 = arith.constant 0 : i32
    %846 = vector.broadcast %c0_i32_287 : i32 to vector<16x1xi32>
    %847 = arith.cmpi sge, %845, %846 : vector<16x1xi32>
    %848 = arith.andi %843, %847 : vector<16x1xi1>
    %c0_i32_288 = arith.constant 0 : i32
    %849 = vector.broadcast %c0_i32_288 : i32 to vector<16x1xi32>
    %850 = arith.addi %803, %849 : vector<16x1xi32>
    %c2_i32_289 = arith.constant 2 : i32
    %851 = vector.broadcast %c2_i32_289 : i32 to vector<16x1xi32>
    %852 = arith.cmpi slt, %850, %851 : vector<16x1xi32>
    %853 = arith.andi %848, %852 : vector<16x1xi1>
    %cst_290 = arith.constant 0.000000e+00 : f32
    %854 = arith.truncf %cst_290 : f32 to bf16
    %855 = vector.shape_cast %853 : vector<16x1xi1> to vector<16x1xi1>
    %856 = vector.broadcast %855 : vector<16x1xi1> to vector<16x64xi1>
    %857 = vector.broadcast %854 : bf16 to vector<16x64xbf16>
    %858 = arith.select %856, %834, %857 : vector<16x64xi1>, vector<16x64xbf16>
    %859 = vector.extract_strided_slice %804 {offsets = [10, 0], sizes = [6, 64], strides = [1, 1]} : vector<16x64xbf16> to vector<6x64xbf16>
    %860 = vector.extract_strided_slice %804 {offsets = [0, 0], sizes = [10, 64], strides = [1, 1]} : vector<16x64xbf16> to vector<10x64xbf16>
    %861 = tpu.concatenate %859, %860 in 0 : vector<6x64xbf16>, vector<10x64xbf16> -> vector<16x64xbf16>
    %c-1_i32_291 = arith.constant -1 : i32
    %862 = vector.broadcast %c-1_i32_291 : i32 to vector<16x1xi32>
    %863 = arith.addi %801, %862 : vector<16x1xi32>
    %c0_i32_292 = arith.constant 0 : i32
    %864 = vector.broadcast %c0_i32_292 : i32 to vector<16x1xi32>
    %865 = arith.cmpi sge, %863, %864 : vector<16x1xi32>
    %c-1_i32_293 = arith.constant -1 : i32
    %866 = vector.broadcast %c-1_i32_293 : i32 to vector<16x1xi32>
    %867 = arith.addi %801, %866 : vector<16x1xi32>
    %c2_i32_294 = arith.constant 2 : i32
    %868 = vector.broadcast %c2_i32_294 : i32 to vector<16x1xi32>
    %869 = arith.cmpi slt, %867, %868 : vector<16x1xi32>
    %870 = arith.andi %865, %869 : vector<16x1xi1>
    %c1_i32_295 = arith.constant 1 : i32
    %871 = vector.broadcast %c1_i32_295 : i32 to vector<16x1xi32>
    %872 = arith.addi %803, %871 : vector<16x1xi32>
    %c0_i32_296 = arith.constant 0 : i32
    %873 = vector.broadcast %c0_i32_296 : i32 to vector<16x1xi32>
    %874 = arith.cmpi sge, %872, %873 : vector<16x1xi32>
    %875 = arith.andi %870, %874 : vector<16x1xi1>
    %c1_i32_297 = arith.constant 1 : i32
    %876 = vector.broadcast %c1_i32_297 : i32 to vector<16x1xi32>
    %877 = arith.addi %803, %876 : vector<16x1xi32>
    %c2_i32_298 = arith.constant 2 : i32
    %878 = vector.broadcast %c2_i32_298 : i32 to vector<16x1xi32>
    %879 = arith.cmpi slt, %877, %878 : vector<16x1xi32>
    %880 = arith.andi %875, %879 : vector<16x1xi1>
    %cst_299 = arith.constant 0.000000e+00 : f32
    %881 = arith.truncf %cst_299 : f32 to bf16
    %882 = vector.shape_cast %880 : vector<16x1xi1> to vector<16x1xi1>
    %883 = vector.broadcast %882 : vector<16x1xi1> to vector<16x64xi1>
    %884 = vector.broadcast %881 : bf16 to vector<16x64xbf16>
    %885 = arith.select %883, %861, %884 : vector<16x64xi1>, vector<16x64xbf16>
    %886 = vector.extract_strided_slice %804 {offsets = [14, 0], sizes = [2, 64], strides = [1, 1]} : vector<16x64xbf16> to vector<2x64xbf16>
    %887 = vector.extract_strided_slice %804 {offsets = [0, 0], sizes = [14, 64], strides = [1, 1]} : vector<16x64xbf16> to vector<14x64xbf16>
    %888 = tpu.concatenate %886, %887 in 0 : vector<2x64xbf16>, vector<14x64xbf16> -> vector<16x64xbf16>
    %c0_i32_300 = arith.constant 0 : i32
    %889 = vector.broadcast %c0_i32_300 : i32 to vector<16x1xi32>
    %890 = arith.addi %801, %889 : vector<16x1xi32>
    %c0_i32_301 = arith.constant 0 : i32
    %891 = vector.broadcast %c0_i32_301 : i32 to vector<16x1xi32>
    %892 = arith.cmpi sge, %890, %891 : vector<16x1xi32>
    %c0_i32_302 = arith.constant 0 : i32
    %893 = vector.broadcast %c0_i32_302 : i32 to vector<16x1xi32>
    %894 = arith.addi %801, %893 : vector<16x1xi32>
    %c2_i32_303 = arith.constant 2 : i32
    %895 = vector.broadcast %c2_i32_303 : i32 to vector<16x1xi32>
    %896 = arith.cmpi slt, %894, %895 : vector<16x1xi32>
    %897 = arith.andi %892, %896 : vector<16x1xi1>
    %c-1_i32_304 = arith.constant -1 : i32
    %898 = vector.broadcast %c-1_i32_304 : i32 to vector<16x1xi32>
    %899 = arith.addi %803, %898 : vector<16x1xi32>
    %c0_i32_305 = arith.constant 0 : i32
    %900 = vector.broadcast %c0_i32_305 : i32 to vector<16x1xi32>
    %901 = arith.cmpi sge, %899, %900 : vector<16x1xi32>
    %902 = arith.andi %897, %901 : vector<16x1xi1>
    %c-1_i32_306 = arith.constant -1 : i32
    %903 = vector.broadcast %c-1_i32_306 : i32 to vector<16x1xi32>
    %904 = arith.addi %803, %903 : vector<16x1xi32>
    %c2_i32_307 = arith.constant 2 : i32
    %905 = vector.broadcast %c2_i32_307 : i32 to vector<16x1xi32>
    %906 = arith.cmpi slt, %904, %905 : vector<16x1xi32>
    %907 = arith.andi %902, %906 : vector<16x1xi1>
    %cst_308 = arith.constant 0.000000e+00 : f32
    %908 = arith.truncf %cst_308 : f32 to bf16
    %909 = vector.shape_cast %907 : vector<16x1xi1> to vector<16x1xi1>
    %910 = vector.broadcast %909 : vector<16x1xi1> to vector<16x64xi1>
    %911 = vector.broadcast %908 : bf16 to vector<16x64xbf16>
    %912 = arith.select %910, %888, %911 : vector<16x64xi1>, vector<16x64xbf16>
    %c0_i32_309 = arith.constant 0 : i32
    %913 = vector.broadcast %c0_i32_309 : i32 to vector<16x1xi32>
    %914 = arith.addi %801, %913 : vector<16x1xi32>
    %c0_i32_310 = arith.constant 0 : i32
    %915 = vector.broadcast %c0_i32_310 : i32 to vector<16x1xi32>
    %916 = arith.cmpi sge, %914, %915 : vector<16x1xi32>
    %c0_i32_311 = arith.constant 0 : i32
    %917 = vector.broadcast %c0_i32_311 : i32 to vector<16x1xi32>
    %918 = arith.addi %801, %917 : vector<16x1xi32>
    %c2_i32_312 = arith.constant 2 : i32
    %919 = vector.broadcast %c2_i32_312 : i32 to vector<16x1xi32>
    %920 = arith.cmpi slt, %918, %919 : vector<16x1xi32>
    %921 = arith.andi %916, %920 : vector<16x1xi1>
    %c0_i32_313 = arith.constant 0 : i32
    %922 = vector.broadcast %c0_i32_313 : i32 to vector<16x1xi32>
    %923 = arith.addi %803, %922 : vector<16x1xi32>
    %c0_i32_314 = arith.constant 0 : i32
    %924 = vector.broadcast %c0_i32_314 : i32 to vector<16x1xi32>
    %925 = arith.cmpi sge, %923, %924 : vector<16x1xi32>
    %926 = arith.andi %921, %925 : vector<16x1xi1>
    %c0_i32_315 = arith.constant 0 : i32
    %927 = vector.broadcast %c0_i32_315 : i32 to vector<16x1xi32>
    %928 = arith.addi %803, %927 : vector<16x1xi32>
    %c2_i32_316 = arith.constant 2 : i32
    %929 = vector.broadcast %c2_i32_316 : i32 to vector<16x1xi32>
    %930 = arith.cmpi slt, %928, %929 : vector<16x1xi32>
    %931 = arith.andi %926, %930 : vector<16x1xi1>
    %cst_317 = arith.constant 0.000000e+00 : f32
    %932 = arith.truncf %cst_317 : f32 to bf16
    %933 = vector.shape_cast %931 : vector<16x1xi1> to vector<16x1xi1>
    %934 = vector.broadcast %933 : vector<16x1xi1> to vector<16x64xi1>
    %935 = vector.broadcast %932 : bf16 to vector<16x64xbf16>
    %936 = arith.select %934, %804, %935 : vector<16x64xi1>, vector<16x64xbf16>
    %937 = vector.extract_strided_slice %804 {offsets = [2, 0], sizes = [14, 64], strides = [1, 1]} : vector<16x64xbf16> to vector<14x64xbf16>
    %938 = vector.extract_strided_slice %804 {offsets = [0, 0], sizes = [2, 64], strides = [1, 1]} : vector<16x64xbf16> to vector<2x64xbf16>
    %939 = tpu.concatenate %937, %938 in 0 : vector<14x64xbf16>, vector<2x64xbf16> -> vector<16x64xbf16>
    %c0_i32_318 = arith.constant 0 : i32
    %940 = vector.broadcast %c0_i32_318 : i32 to vector<16x1xi32>
    %941 = arith.addi %801, %940 : vector<16x1xi32>
    %c0_i32_319 = arith.constant 0 : i32
    %942 = vector.broadcast %c0_i32_319 : i32 to vector<16x1xi32>
    %943 = arith.cmpi sge, %941, %942 : vector<16x1xi32>
    %c0_i32_320 = arith.constant 0 : i32
    %944 = vector.broadcast %c0_i32_320 : i32 to vector<16x1xi32>
    %945 = arith.addi %801, %944 : vector<16x1xi32>
    %c2_i32_321 = arith.constant 2 : i32
    %946 = vector.broadcast %c2_i32_321 : i32 to vector<16x1xi32>
    %947 = arith.cmpi slt, %945, %946 : vector<16x1xi32>
    %948 = arith.andi %943, %947 : vector<16x1xi1>
    %c1_i32_322 = arith.constant 1 : i32
    %949 = vector.broadcast %c1_i32_322 : i32 to vector<16x1xi32>
    %950 = arith.addi %803, %949 : vector<16x1xi32>
    %c0_i32_323 = arith.constant 0 : i32
    %951 = vector.broadcast %c0_i32_323 : i32 to vector<16x1xi32>
    %952 = arith.cmpi sge, %950, %951 : vector<16x1xi32>
    %953 = arith.andi %948, %952 : vector<16x1xi1>
    %c1_i32_324 = arith.constant 1 : i32
    %954 = vector.broadcast %c1_i32_324 : i32 to vector<16x1xi32>
    %955 = arith.addi %803, %954 : vector<16x1xi32>
    %c2_i32_325 = arith.constant 2 : i32
    %956 = vector.broadcast %c2_i32_325 : i32 to vector<16x1xi32>
    %957 = arith.cmpi slt, %955, %956 : vector<16x1xi32>
    %958 = arith.andi %953, %957 : vector<16x1xi1>
    %cst_326 = arith.constant 0.000000e+00 : f32
    %959 = arith.truncf %cst_326 : f32 to bf16
    %960 = vector.shape_cast %958 : vector<16x1xi1> to vector<16x1xi1>
    %961 = vector.broadcast %960 : vector<16x1xi1> to vector<16x64xi1>
    %962 = vector.broadcast %959 : bf16 to vector<16x64xbf16>
    %963 = arith.select %961, %939, %962 : vector<16x64xi1>, vector<16x64xbf16>
    %964 = vector.extract_strided_slice %804 {offsets = [6, 0], sizes = [10, 64], strides = [1, 1]} : vector<16x64xbf16> to vector<10x64xbf16>
    %965 = vector.extract_strided_slice %804 {offsets = [0, 0], sizes = [6, 64], strides = [1, 1]} : vector<16x64xbf16> to vector<6x64xbf16>
    %966 = tpu.concatenate %964, %965 in 0 : vector<10x64xbf16>, vector<6x64xbf16> -> vector<16x64xbf16>
    %c1_i32_327 = arith.constant 1 : i32
    %967 = vector.broadcast %c1_i32_327 : i32 to vector<16x1xi32>
    %968 = arith.addi %801, %967 : vector<16x1xi32>
    %c0_i32_328 = arith.constant 0 : i32
    %969 = vector.broadcast %c0_i32_328 : i32 to vector<16x1xi32>
    %970 = arith.cmpi sge, %968, %969 : vector<16x1xi32>
    %c1_i32_329 = arith.constant 1 : i32
    %971 = vector.broadcast %c1_i32_329 : i32 to vector<16x1xi32>
    %972 = arith.addi %801, %971 : vector<16x1xi32>
    %c2_i32_330 = arith.constant 2 : i32
    %973 = vector.broadcast %c2_i32_330 : i32 to vector<16x1xi32>
    %974 = arith.cmpi slt, %972, %973 : vector<16x1xi32>
    %975 = arith.andi %970, %974 : vector<16x1xi1>
    %c-1_i32_331 = arith.constant -1 : i32
    %976 = vector.broadcast %c-1_i32_331 : i32 to vector<16x1xi32>
    %977 = arith.addi %803, %976 : vector<16x1xi32>
    %c0_i32_332 = arith.constant 0 : i32
    %978 = vector.broadcast %c0_i32_332 : i32 to vector<16x1xi32>
    %979 = arith.cmpi sge, %977, %978 : vector<16x1xi32>
    %980 = arith.andi %975, %979 : vector<16x1xi1>
    %c-1_i32_333 = arith.constant -1 : i32
    %981 = vector.broadcast %c-1_i32_333 : i32 to vector<16x1xi32>
    %982 = arith.addi %803, %981 : vector<16x1xi32>
    %c2_i32_334 = arith.constant 2 : i32
    %983 = vector.broadcast %c2_i32_334 : i32 to vector<16x1xi32>
    %984 = arith.cmpi slt, %982, %983 : vector<16x1xi32>
    %985 = arith.andi %980, %984 : vector<16x1xi1>
    %cst_335 = arith.constant 0.000000e+00 : f32
    %986 = arith.truncf %cst_335 : f32 to bf16
    %987 = vector.shape_cast %985 : vector<16x1xi1> to vector<16x1xi1>
    %988 = vector.broadcast %987 : vector<16x1xi1> to vector<16x64xi1>
    %989 = vector.broadcast %986 : bf16 to vector<16x64xbf16>
    %990 = arith.select %988, %966, %989 : vector<16x64xi1>, vector<16x64xbf16>
    %991 = vector.extract_strided_slice %804 {offsets = [8, 0], sizes = [8, 64], strides = [1, 1]} : vector<16x64xbf16> to vector<8x64xbf16>
    %992 = vector.extract_strided_slice %804 {offsets = [0, 0], sizes = [8, 64], strides = [1, 1]} : vector<16x64xbf16> to vector<8x64xbf16>
    %993 = tpu.concatenate %991, %992 in 0 : vector<8x64xbf16>, vector<8x64xbf16> -> vector<16x64xbf16>
    %c1_i32_336 = arith.constant 1 : i32
    %994 = vector.broadcast %c1_i32_336 : i32 to vector<16x1xi32>
    %995 = arith.addi %801, %994 : vector<16x1xi32>
    %c0_i32_337 = arith.constant 0 : i32
    %996 = vector.broadcast %c0_i32_337 : i32 to vector<16x1xi32>
    %997 = arith.cmpi sge, %995, %996 : vector<16x1xi32>
    %c1_i32_338 = arith.constant 1 : i32
    %998 = vector.broadcast %c1_i32_338 : i32 to vector<16x1xi32>
    %999 = arith.addi %801, %998 : vector<16x1xi32>
    %c2_i32_339 = arith.constant 2 : i32
    %1000 = vector.broadcast %c2_i32_339 : i32 to vector<16x1xi32>
    %1001 = arith.cmpi slt, %999, %1000 : vector<16x1xi32>
    %1002 = arith.andi %997, %1001 : vector<16x1xi1>
    %c0_i32_340 = arith.constant 0 : i32
    %1003 = vector.broadcast %c0_i32_340 : i32 to vector<16x1xi32>
    %1004 = arith.addi %803, %1003 : vector<16x1xi32>
    %c0_i32_341 = arith.constant 0 : i32
    %1005 = vector.broadcast %c0_i32_341 : i32 to vector<16x1xi32>
    %1006 = arith.cmpi sge, %1004, %1005 : vector<16x1xi32>
    %1007 = arith.andi %1002, %1006 : vector<16x1xi1>
    %c0_i32_342 = arith.constant 0 : i32
    %1008 = vector.broadcast %c0_i32_342 : i32 to vector<16x1xi32>
    %1009 = arith.addi %803, %1008 : vector<16x1xi32>
    %c2_i32_343 = arith.constant 2 : i32
    %1010 = vector.broadcast %c2_i32_343 : i32 to vector<16x1xi32>
    %1011 = arith.cmpi slt, %1009, %1010 : vector<16x1xi32>
    %1012 = arith.andi %1007, %1011 : vector<16x1xi1>
    %cst_344 = arith.constant 0.000000e+00 : f32
    %1013 = arith.truncf %cst_344 : f32 to bf16
    %1014 = vector.shape_cast %1012 : vector<16x1xi1> to vector<16x1xi1>
    %1015 = vector.broadcast %1014 : vector<16x1xi1> to vector<16x64xi1>
    %1016 = vector.broadcast %1013 : bf16 to vector<16x64xbf16>
    %1017 = arith.select %1015, %993, %1016 : vector<16x64xi1>, vector<16x64xbf16>
    %1018 = vector.extract_strided_slice %804 {offsets = [10, 0], sizes = [6, 64], strides = [1, 1]} : vector<16x64xbf16> to vector<6x64xbf16>
    %1019 = vector.extract_strided_slice %804 {offsets = [0, 0], sizes = [10, 64], strides = [1, 1]} : vector<16x64xbf16> to vector<10x64xbf16>
    %1020 = tpu.concatenate %1018, %1019 in 0 : vector<6x64xbf16>, vector<10x64xbf16> -> vector<16x64xbf16>
    %c1_i32_345 = arith.constant 1 : i32
    %1021 = vector.broadcast %c1_i32_345 : i32 to vector<16x1xi32>
    %1022 = arith.addi %801, %1021 : vector<16x1xi32>
    %c0_i32_346 = arith.constant 0 : i32
    %1023 = vector.broadcast %c0_i32_346 : i32 to vector<16x1xi32>
    %1024 = arith.cmpi sge, %1022, %1023 : vector<16x1xi32>
    %c1_i32_347 = arith.constant 1 : i32
    %1025 = vector.broadcast %c1_i32_347 : i32 to vector<16x1xi32>
    %1026 = arith.addi %801, %1025 : vector<16x1xi32>
    %c2_i32_348 = arith.constant 2 : i32
    %1027 = vector.broadcast %c2_i32_348 : i32 to vector<16x1xi32>
    %1028 = arith.cmpi slt, %1026, %1027 : vector<16x1xi32>
    %1029 = arith.andi %1024, %1028 : vector<16x1xi1>
    %c1_i32_349 = arith.constant 1 : i32
    %1030 = vector.broadcast %c1_i32_349 : i32 to vector<16x1xi32>
    %1031 = arith.addi %803, %1030 : vector<16x1xi32>
    %c0_i32_350 = arith.constant 0 : i32
    %1032 = vector.broadcast %c0_i32_350 : i32 to vector<16x1xi32>
    %1033 = arith.cmpi sge, %1031, %1032 : vector<16x1xi32>
    %1034 = arith.andi %1029, %1033 : vector<16x1xi1>
    %c1_i32_351 = arith.constant 1 : i32
    %1035 = vector.broadcast %c1_i32_351 : i32 to vector<16x1xi32>
    %1036 = arith.addi %803, %1035 : vector<16x1xi32>
    %c2_i32_352 = arith.constant 2 : i32
    %1037 = vector.broadcast %c2_i32_352 : i32 to vector<16x1xi32>
    %1038 = arith.cmpi slt, %1036, %1037 : vector<16x1xi32>
    %1039 = arith.andi %1034, %1038 : vector<16x1xi1>
    %cst_353 = arith.constant 0.000000e+00 : f32
    %1040 = arith.truncf %cst_353 : f32 to bf16
    %1041 = vector.shape_cast %1039 : vector<16x1xi1> to vector<16x1xi1>
    %1042 = vector.broadcast %1041 : vector<16x1xi1> to vector<16x64xi1>
    %1043 = vector.broadcast %1040 : bf16 to vector<16x64xbf16>
    %1044 = arith.select %1042, %1020, %1043 : vector<16x64xi1>, vector<16x64xbf16>
    %1045 = tpu.concatenate %831, %858, %885, %912, %936, %963, %990, %1017, %1044 in 1 : vector<16x64xbf16>, vector<16x64xbf16>, vector<16x64xbf16>, vector<16x64xbf16>, vector<16x64xbf16>, vector<16x64xbf16>, vector<16x64xbf16>, vector<16x64xbf16>, vector<16x64xbf16> -> vector<16x576xbf16>
    %c0_354 = arith.constant 0 : index
    %c0_355 = arith.constant 0 : index
    %1046 = vector.load %arg5[%c0_354, %c0_355] : memref<576x128xbf16, #tpu.memory_space<vmem>>, vector<576x128xbf16>
    %cst_356 = arith.constant dense<0.000000e+00> : vector<16x128xf32>
    %1047 = tpu.matmul %1045, %1046, %cst_356 {dimension_numbers = #tpu.dot_dimension_numbers<[1], [0], [0], [1], [0, 0, 1, 1], [], []>} : vector<16x576xbf16>, vector<576x128xbf16>, vector<16x128xf32> -> vector<16x128xf32>
    %1048 = vector.broadcast %799 : vector<1x128xf32> to vector<16x128xf32>
    %1049 = arith.addf %1047, %1048 : vector<16x128xf32>
    %cst_357 = arith.constant 0.000000e+00 : f32
    %1050 = vector.broadcast %cst_357 : f32 to vector<16x128xf32>
    %1051 = arith.maximumf %1049, %1050 : vector<16x128xf32>
    %1052 = vector.extract_strided_slice %1051 {offsets = [2, 0], sizes = [14, 128], strides = [1, 1]} : vector<16x128xf32> to vector<14x128xf32>
    %1053 = vector.extract_strided_slice %1051 {offsets = [0, 0], sizes = [2, 128], strides = [1, 1]} : vector<16x128xf32> to vector<2x128xf32>
    %1054 = tpu.concatenate %1052, %1053 in 0 : vector<14x128xf32>, vector<2x128xf32> -> vector<16x128xf32>
    %1055 = arith.maximumf %1051, %1054 : vector<16x128xf32>
    %1056 = vector.extract_strided_slice %1055 {offsets = [8, 0], sizes = [8, 128], strides = [1, 1]} : vector<16x128xf32> to vector<8x128xf32>
    %1057 = vector.extract_strided_slice %1055 {offsets = [0, 0], sizes = [8, 128], strides = [1, 1]} : vector<16x128xf32> to vector<8x128xf32>
    %1058 = tpu.concatenate %1056, %1057 in 0 : vector<8x128xf32>, vector<8x128xf32> -> vector<16x128xf32>
    %1059 = arith.maximumf %1055, %1058 : vector<16x128xf32>
    %c3_i32_358 = arith.constant 3 : i32
    %1060 = vector.broadcast %c3_i32_358 : i32 to vector<16x1xi32>
    %1061 = arith.andi %537, %1060 : vector<16x1xi32>
    %c0_i32_359 = arith.constant 0 : i32
    %1062 = vector.broadcast %c0_i32_359 : i32 to vector<16x1xi32>
    %1063 = arith.cmpi eq, %1061, %1062 : vector<16x1xi32>
    %c3_i32_360 = arith.constant 3 : i32
    %1064 = vector.broadcast %c3_i32_360 : i32 to vector<16x1xi32>
    %1065 = arith.andi %533, %1064 : vector<16x1xi32>
    %c0_i32_361 = arith.constant 0 : i32
    %1066 = vector.broadcast %c0_i32_361 : i32 to vector<16x1xi32>
    %1067 = arith.cmpi eq, %1065, %1066 : vector<16x1xi32>
    %1068 = arith.andi %1063, %1067 : vector<16x1xi1>
    %cst_362 = arith.constant 0.000000e+00 : f32
    %1069 = vector.shape_cast %1068 : vector<16x1xi1> to vector<16x1xi1>
    %1070 = vector.broadcast %1069 : vector<16x1xi1> to vector<16x128xi1>
    %1071 = vector.broadcast %cst_362 : f32 to vector<16x128xf32>
    %1072 = arith.select %1070, %1059, %1071 : vector<16x128xi1>, vector<16x128xf32>
    %1073 = vector.shape_cast %1072 : vector<16x128xf32> to vector<1x16x128xf32>
    %cst_363 = arith.constant dense<0.000000e+00> : vector<1x128xf32>
    %1074 = vector.multi_reduction <add>, %1073, %cst_363 [1] : vector<1x16x128xf32> to vector<1x128xf32>
    %cst_364 = arith.constant 1.000000e+00 : f32
    %1075 = vector.broadcast %cst_364 : f32 to vector<1x128xf32>
    %1076 = arith.mulf %1074, %1075 : vector<1x128xf32>
    %c0_365 = arith.constant 0 : index
    %c0_366 = arith.constant 0 : index
    %c0_367 = arith.constant 0 : index
    %1077 = vector.load %arg7[%c0_365, %c0_366, %c0_367] : memref<1x1x128xf32, #tpu.memory_space<vmem>>, vector<1x1x128xf32>
    %1078 = vector.shape_cast %1077 : vector<1x1x128xf32> to vector<1x128xf32>
    %1079 = vector.shape_cast %1076 : vector<1x128xf32> to vector<1x1x128xf32>
    tpu.vector_store %arg7[%c0_365, %c0_366, %c0_367], %1079 {strides = array<i32>} : memref<1x1x128xf32, #tpu.memory_space<vmem>>, vector<1x1x128xf32>,
    return
  }
  func.func @transform_0(%arg0: i32) -> (i32, i32, i32) {
    %c0_i32 = arith.constant 0 : i32
    %c0_i32_0 = arith.constant 0 : i32
    %c0_i32_1 = arith.constant 0 : i32
    return %arg0, %c0_i32, %c0_i32_0 : i32, i32, i32
  }
  func.func @transform_1(%arg0: i32) -> (i32, i32) {
    %c0_i32 = arith.constant 0 : i32
    %c0_i32_0 = arith.constant 0 : i32
    %c0_i32_1 = arith.constant 0 : i32
    return %c0_i32, %c0_i32_0 : i32, i32
  }
  func.func @transform_2(%arg0: i32) -> (i32, i32) {
    %c0_i32 = arith.constant 0 : i32
    %c0_i32_0 = arith.constant 0 : i32
    %c0_i32_1 = arith.constant 0 : i32
    return %c0_i32, %c0_i32_0 : i32, i32
  }
  func.func @transform_3(%arg0: i32) -> (i32, i32) {
    %c0_i32 = arith.constant 0 : i32
    %c0_i32_0 = arith.constant 0 : i32
    %c0_i32_1 = arith.constant 0 : i32
    return %c0_i32, %c0_i32_0 : i32, i32
  }
  func.func @transform_4(%arg0: i32) -> (i32, i32) {
    %c0_i32 = arith.constant 0 : i32
    %c0_i32_0 = arith.constant 0 : i32
    %c0_i32_1 = arith.constant 0 : i32
    return %c0_i32, %c0_i32_0 : i32, i32
  }
  func.func @transform_5(%arg0: i32) -> (i32, i32) {
    %c0_i32 = arith.constant 0 : i32
    %c0_i32_0 = arith.constant 0 : i32
    %c0_i32_1 = arith.constant 0 : i32
    return %c0_i32, %c0_i32_0 : i32, i32
  }
  func.func @transform_6(%arg0: i32) -> (i32, i32, i32) {
    %c0_i32 = arith.constant 0 : i32
    %c0_i32_0 = arith.constant 0 : i32
    %c0_i32_1 = arith.constant 0 : i32
    return %arg0, %c0_i32, %c0_i32_0 : i32, i32, i32
  }
}

</mosaic_0001>

<llo_original>
// kernel: tpu_custom_call.1
$region0: #{tpu_custom_call.1}
  #allocation0 [shape = 'u32[]', space=smem, size = 0x4, offset = 0x4, fixed_abs, tag = 'smem constant byte address 0x4 - core index']
  #allocation1 [shape = 'u32[144,128]{1,0:T(1,128)}', space=vmem, size = 0x12000, scoped, tag = 'internal scratch']
  #allocation2 [shape = 'f32[128,64]{1,0:T(8,128)}', space=vmem, size = 0x10000, scoped, tag = 'scratch operand']
  %s0 = inlined_call_operand.vmem [shape: f32[2,256,1], index: 0, kind: input, shape index: {}]
  %s1 = inlined_call_operand.vmem [shape: bf16[9,64], index: 1, kind: input, shape index: {}]
  %s2 = inlined_call_operand.vmem [shape: bf16[576,64], index: 2, kind: input, shape index: {}]
  %s3 = inlined_call_operand.vmem [shape: bf16[576,64], index: 3, kind: input, shape index: {}]
  %s4 = inlined_call_operand.vmem [shape: bf16[576,128], index: 4, kind: input, shape index: {}]
  %s5 = inlined_call_operand.vmem [shape: f32[4,128], index: 5, kind: input, shape index: {}]
  %s6 = inlined_call_operand.hbm [shape: f32[2,1,128], index: 6, kind: output, shape index: {}]
  %s7 = sld [smem:[#allocation0]]
  $region57: #{tpu_custom_call.1} parent=0
    _
  %s9 = ssub.s32 1, %s7
  %s10 = scalar_select 0, %s9, %s7
  $region1: #{tpu_custom_call.1} parent=0
    #allocation3 [shape = 'u8[1024]{0}', space=vmem, size = 0x400, scoped, tag = 'output window, operand 0']
    #allocation4 [shape = 's32[2]{0}', space=sflag, size = 0x8, scoped, tag = 'scoped memory for tpu_custom_call.1']
    %11 = vsyncpa [#allocation4], 0
    %s12 = scalar_lea.sflag [#allocation4], 1
    %13 = vsyncpa %s12, 0
    loop: start=0, step=1, limit=4
    $region2: #{tpu_custom_call.1} parent=1 // loop_pre_header
      _
    $region3: #{tpu_custom_call.1} parent=1 // loop_header
      %s15 = sphi 0, %s19
      %p16 = scmp.ge.s32.totalorder %s15, 4
      %s25 = sphi 0, %s27
      %s28 = sphi 0, %s25
      %s29 = sphi 0, %s28
      %s45 = sphi 0, %s29
      %s49 = sphi 0, %s49
      %s51 = sphi 0, %s49
      %s52 = sphi 0, %s51
      %s66 = sphi 0, %s52
      %s70 = sphi 0, %s70
      %s72 = sphi 0, %s70
      %s73 = sphi 0, %s72
      %s87 = sphi 0, %s73
      %s91 = sphi 0, %s91
      %s93 = sphi 0, %s91
      %s94 = sphi 0, %s93
      %s108 = sphi 0, %s94
      %s112 = sphi 0, %s112
      %s114 = sphi 0, %s112
      %s115 = sphi 0, %s114
      %s129 = sphi 0, %s115
      %s133 = sphi 0, %s133
      %s135 = sphi 0, %s133
      %s136 = sphi 0, %s135
      %s150 = sphi 0, %s136
      %s156 = sphi 0, %s158
      %s159 = sphi 0, %s156
      %s160 = sphi 0, %s159
      %s176 = sphi 0, %s160
    $region4: #{tpu_custom_call.1} parent=1 // loop_header_branch
      %18 = sbr.rel (%p16) target = $region8
    $region5: #{tpu_custom_call.1} parent=1 // loop_body
      %s20 = ssub.s32 %s15, 1
      %s21 = ssub.s32 %s15, 2
      %s22 = sadd.s32 %s15, 1
      %s23 = ssub.s32 %s15, %s22
      %p24 = scmp.eq.s32.totalorder %s23, 0
      %s26 = sadd.s32 %s25, 1
      %s27 = scalar_select %p24, %s25, %s26
      %p30 = pneg %p24
      %p31 = scmp.eq.s32.totalorder %s15, 1
      %p32 = por %p30, %p31
      %p33 = scmp.ne.s32.totalorder %s25, %s28
      %p34 = scmp.eq.s32.totalorder %s15, 0
      %p35 = por %p33, %p34
      %p36 = scmp.ne.s32.totalorder %s25, %s28
      %p37 = scmp.eq.s32.totalorder %s20, 1
      %p38 = por %p36, %p37
      %p39 = scmp.ne.s32.totalorder %s28, %s29
      %p40 = scmp.eq.s32.totalorder %s20, 0
      %p41 = por %p39, %p40
      %p42 = scmp.ne.s32.totalorder %s28, %s29
      %p43 = scmp.eq.s32.totalorder %s21, 1
      %p44 = por %p42, %p43
      %p46 = scmp.ne.s32.totalorder %s29, %s45
      %p47 = scmp.eq.s32.totalorder %s21, 0
      %p48 = por %p46, %p47
      %s50 = sadd.s32 %s49, 1
      %p53 = scmp.eq.s32.totalorder %s15, 1
      %p54 = scmp.ne.s32.totalorder %s49, %s51
      %p55 = scmp.eq.s32.totalorder %s15, 0
      %p56 = por %p54, %p55
      %p57 = scmp.ne.s32.totalorder %s49, %s51
      %p58 = scmp.eq.s32.totalorder %s20, 1
      %p59 = por %p57, %p58
      %p60 = scmp.ne.s32.totalorder %s51, %s52
      %p61 = scmp.eq.s32.totalorder %s20, 0
      %p62 = por %p60, %p61
      %p63 = scmp.ne.s32.totalorder %s51, %s52
      %p64 = scmp.eq.s32.totalorder %s21, 1
      %p65 = por %p63, %p64
      %p67 = scmp.ne.s32.totalorder %s52, %s66
      %p68 = scmp.eq.s32.totalorder %s21, 0
      %p69 = por %p67, %p68
      %s71 = sadd.s32 %s70, 1
      %p74 = scmp.eq.s32.totalorder %s15, 1
      %p75 = scmp.ne.s32.totalorder %s70, %s72
      %p76 = scmp.eq.s32.totalorder %s15, 0
      %p77 = por %p75, %p76
      %p78 = scmp.ne.s32.totalorder %s70, %s72
      %p79 = scmp.eq.s32.totalorder %s20, 1
      %p80 = por %p78, %p79
      %p81 = scmp.ne.s32.totalorder %s72, %s73
      %p82 = scmp.eq.s32.totalorder %s20, 0
      %p83 = por %p81, %p82
      %p84 = scmp.ne.s32.totalorder %s72, %s73
      %p85 = scmp.eq.s32.totalorder %s21, 1
      %p86 = por %p84, %p85
      %p88 = scmp.ne.s32.totalorder %s73, %s87
      %p89 = scmp.eq.s32.totalorder %s21, 0
      %p90 = por %p88, %p89
      %s92 = sadd.s32 %s91, 1
      %p95 = scmp.eq.s32.totalorder %s15, 1
      %p96 = scmp.ne.s32.totalorder %s91, %s93
      %p97 = scmp.eq.s32.totalorder %s15, 0
      %p98 = por %p96, %p97
      %p99 = scmp.ne.s32.totalorder %s91, %s93
      %p100 = scmp.eq.s32.totalorder %s20, 1
      %p101 = por %p99, %p100
      %p102 = scmp.ne.s32.totalorder %s93, %s94
      %p103 = scmp.eq.s32.totalorder %s20, 0
      %p104 = por %p102, %p103
      %p105 = scmp.ne.s32.totalorder %s93, %s94
      %p106 = scmp.eq.s32.totalorder %s21, 1
      %p107 = por %p105, %p106
      %p109 = scmp.ne.s32.totalorder %s94, %s108
      %p110 = scmp.eq.s32.totalorder %s21, 0
      %p111 = por %p109, %p110
      %s113 = sadd.s32 %s112, 1
      %p116 = scmp.eq.s32.totalorder %s15, 1
      %p117 = scmp.ne.s32.totalorder %s112, %s114
      %p118 = scmp.eq.s32.totalorder %s15, 0
      %p119 = por %p117, %p118
      %p120 = scmp.ne.s32.totalorder %s112, %s114
      %p121 = scmp.eq.s32.totalorder %s20, 1
      %p122 = por %p120, %p121
      %p123 = scmp.ne.s32.totalorder %s114, %s115
      %p124 = scmp.eq.s32.totalorder %s20, 0
      %p125 = por %p123, %p124
      %p126 = scmp.ne.s32.totalorder %s114, %s115
      %p127 = scmp.eq.s32.totalorder %s21, 1
      %p128 = por %p126, %p127
      %p130 = scmp.ne.s32.totalorder %s115, %s129
      %p131 = scmp.eq.s32.totalorder %s21, 0
      %p132 = por %p130, %p131
      %s134 = sadd.s32 %s133, 1
      %p137 = scmp.eq.s32.totalorder %s15, 1
      %p138 = scmp.ne.s32.totalorder %s133, %s135
      %p139 = scmp.eq.s32.totalorder %s15, 0
      %p140 = por %p138, %p139
      %p141 = scmp.ne.s32.totalorder %s133, %s135
      %p142 = scmp.eq.s32.totalorder %s20, 1
      %p143 = por %p141, %p142
      %p144 = scmp.ne.s32.totalorder %s135, %s136
      %p145 = scmp.eq.s32.totalorder %s20, 0
      %p146 = por %p144, %p145
      %p147 = scmp.ne.s32.totalorder %s135, %s136
      %p148 = scmp.eq.s32.totalorder %s21, 1
      %p149 = por %p147, %p148
      %p151 = scmp.ne.s32.totalorder %s136, %s150
      %p152 = scmp.eq.s32.totalorder %s21, 0
      %p153 = por %p151, %p152
      %s154 = ssub.s32 %s15, %s22
      %p155 = scmp.eq.s32.totalorder %s154, 0
      %s157 = sadd.s32 %s156, 1
      %s158 = scalar_select %p155, %s156, %s157
      %p161 = pneg %p155
      %p162 = scmp.eq.s32.totalorder %s15, 1
      %p163 = por %p161, %p162
      %p164 = scmp.ne.s32.totalorder %s156, %s159
      %p165 = scmp.eq.s32.totalorder %s15, 0
      %p166 = por %p164, %p165
      %p167 = scmp.ne.s32.totalorder %s156, %s159
      %p168 = scmp.eq.s32.totalorder %s20, 1
      %p169 = por %p167, %p168
      %p170 = scmp.ne.s32.totalorder %s159, %s160
      %p171 = scmp.eq.s32.totalorder %s20, 0
      %p172 = por %p170, %p171
      %p173 = scmp.ne.s32.totalorder %s159, %s160
      %p174 = scmp.eq.s32.totalorder %s21, 1
      %p175 = por %p173, %p174
      %p177 = scmp.ne.s32.totalorder %s160, %s176
      %p178 = scmp.eq.s32.totalorder %s21, 0
      %p179 = por %p177, %p178
      %p180 = scmp.le.s32.totalorder 1, %s15
      %p181 = scmp.lt.s32.totalorder %s15, 3
      %p182 = pnand %p180, %p181
      %p183 = pneg %p182
      // Predicated region
      $region9: #{tpu_custom_call.1} parent=5 // pred_check
        _
      $region10: #{tpu_custom_call.1} parent=5 // pred_check_branch
        %185 = sbr.rel (%p182) target = $region12
      $region11: #{tpu_custom_call.1} parent=5 // pred_region
        %s186 = ssub.s32 %s15, 1
        // Predicated region
        $region13: #{tpu_custom_call.1} parent=11 // pred_check
          %p187 = pneg %p62
        $region14: #{tpu_custom_call.1} parent=11 // pred_check_branch
          %189 = sbr.rel (%p187) target = $region16
        $region15: #{tpu_custom_call.1} parent=11 // pred_region
          _
        $region16: #{tpu_custom_call.1} parent=11 // pred_fallthru
          _
        // Predicated region
        $region17: #{tpu_custom_call.1} parent=11 // pred_check
          %p190 = pneg %p83
        $region18: #{tpu_custom_call.1} parent=11 // pred_check_branch
          %192 = sbr.rel (%p190) target = $region20
        $region19: #{tpu_custom_call.1} parent=11 // pred_region
          _
        $region20: #{tpu_custom_call.1} parent=11 // pred_fallthru
          _
        // Predicated region
        $region21: #{tpu_custom_call.1} parent=11 // pred_check
          %p193 = pneg %p104
        $region22: #{tpu_custom_call.1} parent=11 // pred_check_branch
          %195 = sbr.rel (%p193) target = $region24
        $region23: #{tpu_custom_call.1} parent=11 // pred_region
          _
        $region24: #{tpu_custom_call.1} parent=11 // pred_fallthru
          _
        // Predicated region
        $region25: #{tpu_custom_call.1} parent=11 // pred_check
          %p196 = pneg %p125
        $region26: #{tpu_custom_call.1} parent=11 // pred_check_branch
          %198 = sbr.rel (%p196) target = $region28
        $region27: #{tpu_custom_call.1} parent=11 // pred_region
          _
        $region28: #{tpu_custom_call.1} parent=11 // pred_fallthru
          _
        // Predicated region
        $region29: #{tpu_custom_call.1} parent=11 // pred_check
          %p199 = pneg %p146
        $region30: #{tpu_custom_call.1} parent=11 // pred_check_branch
          %201 = sbr.rel (%p199) target = $region32
        $region31: #{tpu_custom_call.1} parent=11 // pred_region
          _
        $region32: #{tpu_custom_call.1} parent=11 // pred_fallthru
          _
      $region12: #{tpu_custom_call.1} parent=5 // pred_fallthru
        _
      %p202 = scmp.lt.s32.totalorder %s15, 2
      // Predicated region
      $region33: #{tpu_custom_call.1} parent=5 // pred_check
        %p203 = pneg %p202
      $region34: #{tpu_custom_call.1} parent=5 // pred_check_branch
        %205 = sbr.rel (%p203) target = $region36
      $region35: #{tpu_custom_call.1} parent=5 // pred_region
        // Predicated region
        $region37: #{tpu_custom_call.1} parent=35 // pred_check
          %p206 = pneg %p35
        $region38: #{tpu_custom_call.1} parent=35 // pred_check_branch
          %208 = sbr.rel (%p206) target = $region40
        $region39: #{tpu_custom_call.1} parent=35 // pred_region
          %p209 = scmp.lt.s32.totalorder %s15, 1
          %s210 = scalar_select %p209, %s15, 1
          %s211 = smul.addr %s210, 32
          %s212 = smul.addr %s211, 8
          %s213 = scalar_lea.vmem %s0, %s212
        $region40: #{tpu_custom_call.1} parent=35 // pred_fallthru
          _
      $region36: #{tpu_custom_call.1} parent=5 // pred_fallthru
        _
      %p214 = scmp.le.s32.totalorder 1, %s15
      %p215 = scmp.lt.s32.totalorder %s15, 3
      %p216 = pnand %p214, %p215
      %p217 = pneg %p216
      // Predicated region
      $region41: #{tpu_custom_call.1} parent=5 // pred_check
        _
      $region42: #{tpu_custom_call.1} parent=5 // pred_check_branch
        %219 = sbr.rel (%p216) target = $region44
      $region43: #{tpu_custom_call.1} parent=5 // pred_region
        %s220 = ssub.s32 %s15, 1
        %p221 = scmp.lt.s32.totalorder %s20, 1
        %s222 = scalar_select %p221, %s20, 1
        %s223 = smul.addr %s222, 32
        %s224 = smul.addr %s223, 8
        %s225 = scalar_lea.vmem %s0, %s224
        %p226 = pneg %p41
        %p227 = pneg %p38
        %p228 = pneg %p62
        %p229 = pneg %p59
        %p230 = pneg %p83
        %p231 = pneg %p80
        %p232 = pneg %p104
        %p233 = pneg %p101
        %p234 = pneg %p125
        %p235 = pneg %p122
        %p236 = pneg %p146
        %p237 = pneg %p143
        %p238 = pneg %p172
        %p239 = pneg %p169
        %s240 = sand.u32 %s159, 1
        %s241 = scalar_lea.sflag [#allocation4], %s240
        %s242 = sand.u32 %s159, 1
        %s243 = scalar_lea.vmem [#allocation3], %s242
        %p244 = scmp.lt.s32.totalorder %s20, 1
        %s245 = scalar_select %p244, %s20, 1
        %s246 = smul.addr %s245, 32
        %s247 = smul.addr %s246, 8
        %s248 = scalar_lea.vmem %s0, %s247
        %v252 = vld [vmem:[%s5] sm:$0xf]
        %v253 = vld [vmem:[%s248] sm:$0xff]
        %v254 = vld [vmem:[%s248 + $0x8] sm:$0xff]
        %v255 = vld [vmem:[%s248 + $0x10] sm:$0xff]
        %v256 = vld [vmem:[%s248 + $0x18] sm:$0xff]
        %v257 = vld [vmem:[%s248 + $0x20] sm:$0xff]
        %v258 = vld [vmem:[%s248 + $0x28] sm:$0xff]
        %v259 = vld [vmem:[%s248 + $0x30] sm:$0xff]
        %v260 = vld [vmem:[%s248 + $0x38] sm:$0xff]
        %v261 = vld [vmem:[%s248 + $0x40] sm:$0xff]
        %v262 = vld [vmem:[%s248 + $0x48] sm:$0xff]
        %v263 = vld [vmem:[%s248 + $0x50] sm:$0xff]
        %v264 = vld [vmem:[%s248 + $0x58] sm:$0xff]
        %v265 = vld [vmem:[%s248 + $0x60] sm:$0xff]
        %v266 = vld [vmem:[%s248 + $0x68] sm:$0xff]
        %v267 = vld [vmem:[%s248 + $0x70] sm:$0xff]
        %v268 = vld [vmem:[%s248 + $0x78] sm:$0xff]
        %v269 = vld [vmem:[%s248 + $0x80] sm:$0xff]
        %v270 = vld [vmem:[%s248 + $0x88] sm:$0xff]
        %v271 = vld [vmem:[%s248 + $0x90] sm:$0xff]
        %v272 = vld [vmem:[%s248 + $0x98] sm:$0xff]
        %v273 = vld [vmem:[%s248 + $0xa0] sm:$0xff]
        %v274 = vld [vmem:[%s248 + $0xa8] sm:$0xff]
        %v275 = vld [vmem:[%s248 + $0xb0] sm:$0xff]
        %v276 = vld [vmem:[%s248 + $0xb8] sm:$0xff]
        %v277 = vld [vmem:[%s248 + $0xc0] sm:$0xff]
        %v278 = vld [vmem:[%s248 + $0xc8] sm:$0xff]
        %v279 = vld [vmem:[%s248 + $0xd0] sm:$0xff]
        %v280 = vld [vmem:[%s248 + $0xd8] sm:$0xff]
        %v281 = vld [vmem:[%s248 + $0xe0] sm:$0xff]
        %v282 = vld [vmem:[%s248 + $0xe8] sm:$0xff]
        %v283 = vld [vmem:[%s248 + $0xf0] sm:$0xff]
        %v284 = vld [vmem:[%s248 + $0xf8] sm:$0xff]
        %v285 = vlaneseq
        %v286 = vshrl.u32 %v285, 7
        %v287 = vadd.s32 %v286, 8
        %v288 = vadd.s32 %v286, 16
        %v289 = vadd.s32 %v286, 24
        %v290 = vadd.s32 %v286, 32
        %v291 = vadd.s32 %v286, 40
        %v292 = vadd.s32 %v286, 48
        %v293 = vadd.s32 %v286, 56
        %v294 = vadd.s32 %v286, 64
        %v295 = vadd.s32 %v286, 72
        %v296 = vadd.s32 %v286, 80
        %v297 = vadd.s32 %v286, 88
        %v298 = vadd.s32 %v286, 96
        %v299 = vadd.s32 %v286, 104
        %v300 = vadd.s32 %v286, 112
        %v301 = vadd.s32 %v286, 120
        %v302 = vadd.s32 %v286, 128
        %v303 = vadd.s32 %v286, 136
        %v304 = vadd.s32 %v286, 144
        %v305 = vadd.s32 %v286, 152
        %v306 = vadd.s32 %v286, 160
        %v307 = vadd.s32 %v286, 168
        %v308 = vadd.s32 %v286, 176
        %v309 = vadd.s32 %v286, 184
        %v310 = vadd.s32 %v286, 192
        %v311 = vadd.s32 %v286, 200
        %v312 = vadd.s32 %v286, 208
        %v313 = vadd.s32 %v286, 216
        %v314 = vadd.s32 %v286, 224
        %v315 = vadd.s32 %v286, 232
        %v316 = vadd.s32 %v286, 240
        %v317 = vadd.s32 %v286, 248
        %v318 = vand.u32 %v286, 15
        %v319 = vand.u32 %v287, 15
        %v320 = vand.u32 %v288, 15
        %v321 = vand.u32 %v289, 15
        %v322 = vand.u32 %v290, 15
        %v323 = vand.u32 %v291, 15
        %v324 = vand.u32 %v292, 15
        %v325 = vand.u32 %v293, 15
        %v326 = vand.u32 %v294, 15
        %v327 = vand.u32 %v295, 15
        %v328 = vand.u32 %v296, 15
        %v329 = vand.u32 %v297, 15
        %v330 = vand.u32 %v298, 15
        %v331 = vand.u32 %v299, 15
        %v332 = vand.u32 %v300, 15
        %v333 = vand.u32 %v301, 15
        %v334 = vand.u32 %v302, 15
        %v335 = vand.u32 %v303, 15
        %v336 = vand.u32 %v304, 15
        %v337 = vand.u32 %v305, 15
        %v338 = vand.u32 %v306, 15
        %v339 = vand.u32 %v307, 15
        %v340 = vand.u32 %v308, 15
        %v341 = vand.u32 %v309, 15
        %v342 = vand.u32 %v310, 15
        %v343 = vand.u32 %v311, 15
        %v344 = vand.u32 %v312, 15
        %v345 = vand.u32 %v313, 15
        %v346 = vand.u32 %v314, 15
        %v347 = vand.u32 %v315, 15
        %v348 = vand.u32 %v316, 15
        %v349 = vand.u32 %v317, 15
        %v350 = vshra.s32 %v286, 4
        %v351 = vshra.s32 %v287, 4
        %v352 = vshra.s32 %v288, 4
        %v353 = vshra.s32 %v289, 4
        %v354 = vshra.s32 %v290, 4
        %v355 = vshra.s32 %v291, 4
        %v356 = vshra.s32 %v292, 4
        %v357 = vshra.s32 %v293, 4
        %v358 = vshra.s32 %v294, 4
        %v359 = vshra.s32 %v295, 4
        %v360 = vshra.s32 %v296, 4
        %v361 = vshra.s32 %v297, 4
        %v362 = vshra.s32 %v298, 4
        %v363 = vshra.s32 %v299, 4
        %v364 = vshra.s32 %v300, 4
        %v365 = vshra.s32 %v301, 4
        %v366 = vshra.s32 %v302, 4
        %v367 = vshra.s32 %v303, 4
        %v368 = vshra.s32 %v304, 4
        %v369 = vshra.s32 %v305, 4
        %v370 = vshra.s32 %v306, 4
        %v371 = vshra.s32 %v307, 4
        %v372 = vshra.s32 %v308, 4
        %v373 = vshra.s32 %v309, 4
        %v374 = vshra.s32 %v310, 4
        %v375 = vshra.s32 %v311, 4
        %v376 = vshra.s32 %v312, 4
        %v377 = vshra.s32 %v313, 4
        %v378 = vshra.s32 %v314, 4
        %v379 = vshra.s32 %v315, 4
        %v380 = vshra.s32 %v316, 4
        %v381 = vshra.s32 %v317, 4
        %v382 = vand.u32 %v350, 15
        %v383 = vand.u32 %v351, 15
        %v384 = vand.u32 %v352, 15
        %v385 = vand.u32 %v353, 15
        %v386 = vand.u32 %v354, 15
        %v387 = vand.u32 %v355, 15
        %v388 = vand.u32 %v356, 15
        %v389 = vand.u32 %v357, 15
        %v390 = vand.u32 %v358, 15
        %v391 = vand.u32 %v359, 15
        %v392 = vand.u32 %v360, 15
        %v393 = vand.u32 %v361, 15
        %v394 = vand.u32 %v362, 15
        %v395 = vand.u32 %v363, 15
        %v396 = vand.u32 %v364, 15
        %v397 = vand.u32 %v365, 15
        %v398 = vand.u32 %v366, 15
        %v399 = vand.u32 %v367, 15
        %v400 = vand.u32 %v368, 15
        %v401 = vand.u32 %v369, 15
        %v402 = vand.u32 %v370, 15
        %v403 = vand.u32 %v371, 15
        %v404 = vand.u32 %v372, 15
        %v405 = vand.u32 %v373, 15
        %v406 = vand.u32 %v374, 15
        %v407 = vand.u32 %v375, 15
        %v408 = vand.u32 %v376, 15
        %v409 = vand.u32 %v377, 15
        %v410 = vand.u32 %v378, 15
        %v411 = vand.u32 %v379, 15
        %v412 = vand.u32 %v380, 15
        %v413 = vand.u32 %v381, 15
        %v414 = vpack.c.bf16 %v254, %v253
        %v415 = vpack.c.bf16 %v256, %v255
        %v416 = vpack.c.bf16 %v258, %v257
        %v417 = vpack.c.bf16 %v260, %v259
        %v418 = vpack.c.bf16 %v262, %v261
        %v419 = vpack.c.bf16 %v264, %v263
        %v420 = vpack.c.bf16 %v266, %v265
        %v421 = vpack.c.bf16 %v268, %v267
        %v422 = vpack.c.bf16 %v270, %v269
        %v423 = vpack.c.bf16 %v272, %v271
        %v424 = vpack.c.bf16 %v274, %v273
        %v425 = vpack.c.bf16 %v276, %v275
        %v426 = vpack.c.bf16 %v278, %v277
        %v427 = vpack.c.bf16 %v280, %v279
        %v428 = vpack.c.bf16 %v282, %v281
        %v429 = vpack.c.bf16 %v284, %v283
        %vm430 = vsmask.f32 256
        %v432 = vshrl.u32 %v428, 16
        %v434 = vrot.slane %v432, 7
        %v436 = vshrl.u32 %v429, 16
        %v438 = vrot.slane %v436, 7
        %v439 = vshll.u32 %v429, 16
        %v441 = vor.u32 %v438, %v439
        %v442 = vsel %vm430, %v434, %v441
        %v446 = vshrl.u32 %v414, 16
        %v448 = vrot.slane %v446, 7
        %v449 = vshll.u32 %v414, 16
        %v451 = vor.u32 %v448, %v449
        %v453 = vshrl.u32 %v415, 16
        %v455 = vrot.slane %v453, 7
        %v456 = vshll.u32 %v415, 16
        %v458 = vor.u32 %v455, %v456
        %v459 = vsel %vm430, %v448, %v458
        %v461 = vshrl.u32 %v416, 16
        %v463 = vrot.slane %v461, 7
        %v464 = vshll.u32 %v416, 16
        %v466 = vor.u32 %v463, %v464
        %v467 = vsel %vm430, %v455, %v466
        %v469 = vshrl.u32 %v417, 16
        %v471 = vrot.slane %v469, 7
        %v472 = vshll.u32 %v417, 16
        %v474 = vor.u32 %v471, %v472
        %v475 = vsel %vm430, %v463, %v474
        %v477 = vshrl.u32 %v418, 16
        %v479 = vrot.slane %v477, 7
        %v480 = vshll.u32 %v418, 16
        %v482 = vor.u32 %v479, %v480
        %v483 = vsel %vm430, %v471, %v482
        %v485 = vshrl.u32 %v419, 16
        %v487 = vrot.slane %v485, 7
        %v488 = vshll.u32 %v419, 16
        %v490 = vor.u32 %v487, %v488
        %v491 = vsel %vm430, %v479, %v490
        %v493 = vshrl.u32 %v420, 16
        %v495 = vrot.slane %v493, 7
        %v496 = vshll.u32 %v420, 16
        %v498 = vor.u32 %v495, %v496
        %v499 = vsel %vm430, %v487, %v498
        %v501 = vshrl.u32 %v421, 16
        %v503 = vrot.slane %v501, 7
        %v504 = vshll.u32 %v421, 16
        %v506 = vor.u32 %v503, %v504
        %v507 = vsel %vm430, %v495, %v506
        %v509 = vshrl.u32 %v422, 16
        %v511 = vrot.slane %v509, 7
        %v512 = vshll.u32 %v422, 16
        %v514 = vor.u32 %v511, %v512
        %v515 = vsel %vm430, %v503, %v514
        %v517 = vshrl.u32 %v423, 16
        %v519 = vrot.slane %v517, 7
        %v520 = vshll.u32 %v423, 16
        %v522 = vor.u32 %v519, %v520
        %v523 = vsel %vm430, %v511, %v522
        %v525 = vshrl.u32 %v424, 16
        %v527 = vrot.slane %v525, 7
        %v528 = vshll.u32 %v424, 16
        %v530 = vor.u32 %v527, %v528
        %v531 = vsel %vm430, %v519, %v530
        %v533 = vshrl.u32 %v425, 16
        %v535 = vrot.slane %v533, 7
        %v536 = vshll.u32 %v425, 16
        %v538 = vor.u32 %v535, %v536
        %v539 = vsel %vm430, %v527, %v538
        %v541 = vshrl.u32 %v426, 16
        %v543 = vrot.slane %v541, 7
        %v544 = vshll.u32 %v426, 16
        %v546 = vor.u32 %v543, %v544
        %v547 = vsel %vm430, %v535, %v546
        %v549 = vshrl.u32 %v427, 16
        %v551 = vrot.slane %v549, 7
        %v552 = vshll.u32 %v427, 16
        %v554 = vor.u32 %v551, %v552
        %v555 = vsel %vm430, %v543, %v554
        %v556 = vshll.u32 %v428, 16
        %v558 = vor.u32 %v434, %v556
        %v559 = vsel %vm430, %v551, %v558
        %vm575 = vcmask 1040384
        %vm576 = vmand %vm575, %vm430
        %v577 = vsel %vm576, %v438, %v451
        %v578 = vadd.s32 %v382, 4294967295
        %v579 = vadd.s32 %v383, 4294967295
        %v580 = vadd.s32 %v384, 4294967295
        %v581 = vadd.s32 %v385, 4294967295
        %v582 = vadd.s32 %v386, 4294967295
        %v583 = vadd.s32 %v387, 4294967295
        %v584 = vadd.s32 %v388, 4294967295
        %v585 = vadd.s32 %v389, 4294967295
        %v586 = vadd.s32 %v390, 4294967295
        %v587 = vadd.s32 %v391, 4294967295
        %v588 = vadd.s32 %v392, 4294967295
        %v589 = vadd.s32 %v393, 4294967295
        %v590 = vadd.s32 %v394, 4294967295
        %v591 = vadd.s32 %v395, 4294967295
        %v592 = vadd.s32 %v396, 4294967295
        %v593 = vadd.s32 %v397, 4294967295
        %v594 = vadd.s32 %v398, 4294967295
        %v595 = vadd.s32 %v399, 4294967295
        %v596 = vadd.s32 %v400, 4294967295
        %v597 = vadd.s32 %v401, 4294967295
        %v598 = vadd.s32 %v402, 4294967295
        %v599 = vadd.s32 %v403, 4294967295
        %v600 = vadd.s32 %v404, 4294967295
        %v601 = vadd.s32 %v405, 4294967295
        %v602 = vadd.s32 %v406, 4294967295
        %v603 = vadd.s32 %v407, 4294967295
        %v604 = vadd.s32 %v408, 4294967295
        %v605 = vadd.s32 %v409, 4294967295
        %v606 = vadd.s32 %v410, 4294967295
        %v607 = vadd.s32 %v411, 4294967295
        %v608 = vadd.s32 %v412, 4294967295
        %v609 = vadd.s32 %v413, 4294967295
        %vm610 = vcmp.ge.s32.totalorder %v578, 0
        %vm611 = vcmp.ge.s32.totalorder %v579, 0
        %vm612 = vcmp.ge.s32.totalorder %v580, 0
        %vm613 = vcmp.ge.s32.totalorder %v581, 0
        %vm614 = vcmp.ge.s32.totalorder %v582, 0
        %vm615 = vcmp.ge.s32.totalorder %v583, 0
        %vm616 = vcmp.ge.s32.totalorder %v584, 0
        %vm617 = vcmp.ge.s32.totalorder %v585, 0
        %vm618 = vcmp.ge.s32.totalorder %v586, 0
        %vm619 = vcmp.ge.s32.totalorder %v587, 0
        %vm620 = vcmp.ge.s32.totalorder %v588, 0
        %vm621 = vcmp.ge.s32.totalorder %v589, 0
        %vm622 = vcmp.ge.s32.totalorder %v590, 0
        %vm623 = vcmp.ge.s32.totalorder %v591, 0
        %vm624 = vcmp.ge.s32.totalorder %v592, 0
        %vm625 = vcmp.ge.s32.totalorder %v593, 0
        %vm626 = vcmp.ge.s32.totalorder %v594, 0
        %vm627 = vcmp.ge.s32.totalorder %v595, 0
        %vm628 = vcmp.ge.s32.totalorder %v596, 0
        %vm629 = vcmp.ge.s32.totalorder %v597, 0
        %vm630 = vcmp.ge.s32.totalorder %v598, 0
        %vm631 = vcmp.ge.s32.totalorder %v599, 0
        %vm632 = vcmp.ge.s32.totalorder %v600, 0
        %vm633 = vcmp.ge.s32.totalorder %v601, 0
        %vm634 = vcmp.ge.s32.totalorder %v602, 0
        %vm635 = vcmp.ge.s32.totalorder %v603, 0
        %vm636 = vcmp.ge.s32.totalorder %v604, 0
        %vm637 = vcmp.ge.s32.totalorder %v605, 0
        %vm638 = vcmp.ge.s32.totalorder %v606, 0
        %vm639 = vcmp.ge.s32.totalorder %v607, 0
        %vm640 = vcmp.ge.s32.totalorder %v608, 0
        %vm641 = vcmp.ge.s32.totalorder %v609, 0
        %vm642 = vcmp.lt.s32.totalorder %v578, 16
        %vm643 = vcmp.lt.s32.totalorder %v579, 16
        %vm644 = vcmp.lt.s32.totalorder %v580, 16
        %vm645 = vcmp.lt.s32.totalorder %v581, 16
        %vm646 = vcmp.lt.s32.totalorder %v582, 16
        %vm647 = vcmp.lt.s32.totalorder %v583, 16
        %vm648 = vcmp.lt.s32.totalorder %v584, 16
        %vm649 = vcmp.lt.s32.totalorder %v585, 16
        %vm650 = vcmp.lt.s32.totalorder %v586, 16
        %vm651 = vcmp.lt.s32.totalorder %v587, 16
        %vm652 = vcmp.lt.s32.totalorder %v588, 16
        %vm653 = vcmp.lt.s32.totalorder %v589, 16
        %vm654 = vcmp.lt.s32.totalorder %v590, 16
        %vm655 = vcmp.lt.s32.totalorder %v591, 16
        %vm656 = vcmp.lt.s32.totalorder %v592, 16
        %vm657 = vcmp.lt.s32.totalorder %v593, 16
        %vm658 = vcmp.lt.s32.totalorder %v594, 16
        %vm659 = vcmp.lt.s32.totalorder %v595, 16
        %vm660 = vcmp.lt.s32.totalorder %v596, 16
        %vm661 = vcmp.lt.s32.totalorder %v597, 16
        %vm662 = vcmp.lt.s32.totalorder %v598, 16
        %vm663 = vcmp.lt.s32.totalorder %v599, 16
        %vm664 = vcmp.lt.s32.totalorder %v600, 16
        %vm665 = vcmp.lt.s32.totalorder %v601, 16
        %vm666 = vcmp.lt.s32.totalorder %v602, 16
        %vm667 = vcmp.lt.s32.totalorder %v603, 16
        %vm668 = vcmp.lt.s32.totalorder %v604, 16
        %vm669 = vcmp.lt.s32.totalorder %v605, 16
        %vm670 = vcmp.lt.s32.totalorder %v606, 16
        %vm671 = vcmp.lt.s32.totalorder %v607, 16
        %vm672 = vcmp.lt.s32.totalorder %v608, 16
        %vm673 = vcmp.lt.s32.totalorder %v609, 16
        %vm674 = vmand %vm610, %vm642
        %vm675 = vmand %vm611, %vm643
        %vm676 = vmand %vm612, %vm644
        %vm677 = vmand %vm613, %vm645
        %vm678 = vmand %vm614, %vm646
        %vm679 = vmand %vm615, %vm647
        %vm680 = vmand %vm616, %vm648
        %vm681 = vmand %vm617, %vm649
        %vm682 = vmand %vm618, %vm650
        %vm683 = vmand %vm619, %vm651
        %vm684 = vmand %vm620, %vm652
        %vm685 = vmand %vm621, %vm653
        %vm686 = vmand %vm622, %vm654
        %vm687 = vmand %vm623, %vm655
        %vm688 = vmand %vm624, %vm656
        %vm689 = vmand %vm625, %vm657
        %vm690 = vmand %vm626, %vm658
        %vm691 = vmand %vm627, %vm659
        %vm692 = vmand %vm628, %vm660
        %vm693 = vmand %vm629, %vm661
        %vm694 = vmand %vm630, %vm662
        %vm695 = vmand %vm631, %vm663
        %vm696 = vmand %vm632, %vm664
        %vm697 = vmand %vm633, %vm665
        %vm698 = vmand %vm634, %vm666
        %vm699 = vmand %vm635, %vm667
        %vm700 = vmand %vm636, %vm668
        %vm701 = vmand %vm637, %vm669
        %vm702 = vmand %vm638, %vm670
        %vm703 = vmand %vm639, %vm671
        %vm704 = vmand %vm640, %vm672
        %vm705 = vmand %vm641, %vm673
        %v706 = vadd.s32 %v318, 4294967295
        %v707 = vadd.s32 %v319, 4294967295
        %v708 = vadd.s32 %v320, 4294967295
        %v709 = vadd.s32 %v321, 4294967295
        %v710 = vadd.s32 %v322, 4294967295
        %v711 = vadd.s32 %v323, 4294967295
        %v712 = vadd.s32 %v324, 4294967295
        %v713 = vadd.s32 %v325, 4294967295
        %v714 = vadd.s32 %v326, 4294967295
        %v715 = vadd.s32 %v327, 4294967295
        %v716 = vadd.s32 %v328, 4294967295
        %v717 = vadd.s32 %v329, 4294967295
        %v718 = vadd.s32 %v330, 4294967295
        %v719 = vadd.s32 %v331, 4294967295
        %v720 = vadd.s32 %v332, 4294967295
        %v721 = vadd.s32 %v333, 4294967295
        %v722 = vadd.s32 %v334, 4294967295
        %v723 = vadd.s32 %v335, 4294967295
        %v724 = vadd.s32 %v336, 4294967295
        %v725 = vadd.s32 %v337, 4294967295
        %v726 = vadd.s32 %v338, 4294967295
        %v727 = vadd.s32 %v339, 4294967295
        %v728 = vadd.s32 %v340, 4294967295
        %v729 = vadd.s32 %v341, 4294967295
        %v730 = vadd.s32 %v342, 4294967295
        %v731 = vadd.s32 %v343, 4294967295
        %v732 = vadd.s32 %v344, 4294967295
        %v733 = vadd.s32 %v345, 4294967295
        %v734 = vadd.s32 %v346, 4294967295
        %v735 = vadd.s32 %v347, 4294967295
        %v736 = vadd.s32 %v348, 4294967295
        %v737 = vadd.s32 %v349, 4294967295
        %vm738 = vcmp.ge.s32.totalorder %v706, 0
        %vm739 = vcmp.ge.s32.totalorder %v707, 0
        %vm740 = vcmp.ge.s32.totalorder %v708, 0
        %vm741 = vcmp.ge.s32.totalorder %v709, 0
        %vm742 = vcmp.ge.s32.totalorder %v710, 0
        %vm743 = vcmp.ge.s32.totalorder %v711, 0
        %vm744 = vcmp.ge.s32.totalorder %v712, 0
        %vm745 = vcmp.ge.s32.totalorder %v713, 0
        %vm746 = vcmp.ge.s32.totalorder %v714, 0
        %vm747 = vcmp.ge.s32.totalorder %v715, 0
        %vm748 = vcmp.ge.s32.totalorder %v716, 0
        %vm749 = vcmp.ge.s32.totalorder %v717, 0
        %vm750 = vcmp.ge.s32.totalorder %v718, 0
        %vm751 = vcmp.ge.s32.totalorder %v719, 0
        %vm752 = vcmp.ge.s32.totalorder %v720, 0
        %vm753 = vcmp.ge.s32.totalorder %v721, 0
        %vm754 = vcmp.ge.s32.totalorder %v722, 0
        %vm755 = vcmp.ge.s32.totalorder %v723, 0
        %vm756 = vcmp.ge.s32.totalorder %v724, 0
        %vm757 = vcmp.ge.s32.totalorder %v725, 0
        %vm758 = vcmp.ge.s32.totalorder %v726, 0
        %vm759 = vcmp.ge.s32.totalorder %v727, 0
        %vm760 = vcmp.ge.s32.totalorder %v728, 0
        %vm761 = vcmp.ge.s32.totalorder %v729, 0
        %vm762 = vcmp.ge.s32.totalorder %v730, 0
        %vm763 = vcmp.ge.s32.totalorder %v731, 0
        %vm764 = vcmp.ge.s32.totalorder %v732, 0
        %vm765 = vcmp.ge.s32.totalorder %v733, 0
        %vm766 = vcmp.ge.s32.totalorder %v734, 0
        %vm767 = vcmp.ge.s32.totalorder %v735, 0
        %vm768 = vcmp.ge.s32.totalorder %v736, 0
        %vm769 = vcmp.ge.s32.totalorder %v737, 0
        %vm770 = vmand %vm674, %vm738
        %vm771 = vmand %vm675, %vm739
        %vm772 = vmand %vm676, %vm740
        %vm773 = vmand %vm677, %vm741
        %vm774 = vmand %vm678, %vm742
        %vm775 = vmand %vm679, %vm743
        %vm776 = vmand %vm680, %vm744
        %vm777 = vmand %vm681, %vm745
        %vm778 = vmand %vm682, %vm746
        %vm779 = vmand %vm683, %vm747
        %vm780 = vmand %vm684, %vm748
        %vm781 = vmand %vm685, %vm749
        %vm782 = vmand %vm686, %vm750
        %vm783 = vmand %vm687, %vm751
        %vm784 = vmand %vm688, %vm752
        %vm785 = vmand %vm689, %vm753
        %vm786 = vmand %vm690, %vm754
        %vm787 = vmand %vm691, %vm755
        %vm788 = vmand %vm692, %vm756
        %vm789 = vmand %vm693, %vm757
        %vm790 = vmand %vm694, %vm758
        %vm791 = vmand %vm695, %vm759
        %vm792 = vmand %vm696, %vm760
        %vm793 = vmand %vm697, %vm761
        %vm794 = vmand %vm698, %vm762
        %vm795 = vmand %vm699, %vm763
        %vm796 = vmand %vm700, %vm764
        %vm797 = vmand %vm701, %vm765
        %vm798 = vmand %vm702, %vm766
        %vm799 = vmand %vm703, %vm767
        %vm800 = vmand %vm704, %vm768
        %vm801 = vmand %vm705, %vm769
        %vm802 = vcmp.lt.s32.totalorder %v706, 16
        %vm803 = vcmp.lt.s32.totalorder %v707, 16
        %vm804 = vcmp.lt.s32.totalorder %v708, 16
        %vm805 = vcmp.lt.s32.totalorder %v709, 16
        %vm806 = vcmp.lt.s32.totalorder %v710, 16
        %vm807 = vcmp.lt.s32.totalorder %v711, 16
        %vm808 = vcmp.lt.s32.totalorder %v712, 16
        %vm809 = vcmp.lt.s32.totalorder %v713, 16
        %vm810 = vcmp.lt.s32.totalorder %v714, 16
        %vm811 = vcmp.lt.s32.totalorder %v715, 16
        %vm812 = vcmp.lt.s32.totalorder %v716, 16
        %vm813 = vcmp.lt.s32.totalorder %v717, 16
        %vm814 = vcmp.lt.s32.totalorder %v718, 16
        %vm815 = vcmp.lt.s32.totalorder %v719, 16
        %vm816 = vcmp.lt.s32.totalorder %v720, 16
        %vm817 = vcmp.lt.s32.totalorder %v721, 16
        %vm818 = vcmp.lt.s32.totalorder %v722, 16
        %vm819 = vcmp.lt.s32.totalorder %v723, 16
        %vm820 = vcmp.lt.s32.totalorder %v724, 16
        %vm821 = vcmp.lt.s32.totalorder %v725, 16
        %vm822 = vcmp.lt.s32.totalorder %v726, 16
        %vm823 = vcmp.lt.s32.totalorder %v727, 16
        %vm824 = vcmp.lt.s32.totalorder %v728, 16
        %vm825 = vcmp.lt.s32.totalorder %v729, 16
        %vm826 = vcmp.lt.s32.totalorder %v730, 16
        %vm827 = vcmp.lt.s32.totalorder %v731, 16
        %vm828 = vcmp.lt.s32.totalorder %v732, 16
        %vm829 = vcmp.lt.s32.totalorder %v733, 16
        %vm830 = vcmp.lt.s32.totalorder %v734, 16
        %vm831 = vcmp.lt.s32.totalorder %v735, 16
        %vm832 = vcmp.lt.s32.totalorder %v736, 16
        %vm833 = vcmp.lt.s32.totalorder %v737, 16
        %vm834 = vmand %vm770, %vm802
        %vm835 = vmand %vm771, %vm803
        %vm836 = vmand %vm772, %vm804
        %vm837 = vmand %vm773, %vm805
        %vm838 = vmand %vm774, %vm806
        %vm839 = vmand %vm775, %vm807
        %vm840 = vmand %vm776, %vm808
        %vm841 = vmand %vm777, %vm809
        %vm842 = vmand %vm778, %vm810
        %vm843 = vmand %vm779, %vm811
        %vm844 = vmand %vm780, %vm812
        %vm845 = vmand %vm781, %vm813
        %vm846 = vmand %vm782, %vm814
        %vm847 = vmand %vm783, %vm815
        %vm848 = vmand %vm784, %vm816
        %vm849 = vmand %vm785, %vm817
        %vm850 = vmand %vm786, %vm818
        %vm851 = vmand %vm787, %vm819
        %vm852 = vmand %vm788, %vm820
        %vm853 = vmand %vm789, %vm821
        %vm854 = vmand %vm790, %vm822
        %vm855 = vmand %vm791, %vm823
        %vm856 = vmand %vm792, %vm824
        %vm857 = vmand %vm793, %vm825
        %vm858 = vmand %vm794, %vm826
        %vm859 = vmand %vm795, %vm827
        %vm860 = vmand %vm796, %vm828
        %vm861 = vmand %vm797, %vm829
        %vm862 = vmand %vm798, %vm830
        %vm863 = vmand %vm799, %vm831
        %vm864 = vmand %vm800, %vm832
        %vm865 = vmand %vm801, %vm833
        %vm866 = vmpackc.low %vm834, %vm834
        %vm867 = vmpackc.low %vm835, %vm835
        %vm868 = vmpackc.low %vm836, %vm836
        %vm869 = vmpackc.low %vm837, %vm837
        %vm870 = vmpackc.low %vm838, %vm838
        %vm871 = vmpackc.low %vm839, %vm839
        %vm872 = vmpackc.low %vm840, %vm840
        %vm873 = vmpackc.low %vm841, %vm841
        %vm874 = vmpackc.low %vm842, %vm842
        %vm875 = vmpackc.low %vm843, %vm843
        %vm876 = vmpackc.low %vm844, %vm844
        %vm877 = vmpackc.low %vm845, %vm845
        %vm878 = vmpackc.low %vm846, %vm846
        %vm879 = vmpackc.low %vm847, %vm847
        %vm880 = vmpackc.low %vm848, %vm848
        %vm881 = vmpackc.low %vm849, %vm849
        %vm882 = vmpackc.low %vm850, %vm850
        %vm883 = vmpackc.low %vm851, %vm851
        %vm884 = vmpackc.low %vm852, %vm852
        %vm885 = vmpackc.low %vm853, %vm853
        %vm886 = vmpackc.low %vm854, %vm854
        %vm887 = vmpackc.low %vm855, %vm855
        %vm888 = vmpackc.low %vm856, %vm856
        %vm889 = vmpackc.low %vm857, %vm857
        %vm890 = vmpackc.low %vm858, %vm858
        %vm891 = vmpackc.low %vm859, %vm859
        %vm892 = vmpackc.low %vm860, %vm860
        %vm893 = vmpackc.low %vm861, %vm861
        %vm894 = vmpackc.low %vm862, %vm862
        %vm895 = vmpackc.low %vm863, %vm863
        %vm896 = vmpackc.low %vm864, %vm864
        %vm897 = vmpackc.low %vm865, %vm865
        %v898 = vsel %vm866, 65537, 0
        %v899 = vsel %vm867, 65537, 0
        %v900 = vsel %vm868, 65537, 0
        %v901 = vsel %vm869, 65537, 0
        %v902 = vsel %vm870, 65537, 0
        %v903 = vsel %vm871, 65537, 0
        %v904 = vsel %vm872, 65537, 0
        %v905 = vsel %vm873, 65537, 0
        %v906 = vsel %vm874, 65537, 0
        %v907 = vsel %vm875, 65537, 0
        %v908 = vsel %vm876, 65537, 0
        %v909 = vsel %vm877, 65537, 0
        %v910 = vsel %vm878, 65537, 0
        %v911 = vsel %vm879, 65537, 0
        %v912 = vsel %vm880, 65537, 0
        %v913 = vsel %vm881, 65537, 0
        %v914 = vsel %vm882, 65537, 0
        %v915 = vsel %vm883, 65537, 0
        %v916 = vsel %vm884, 65537, 0
        %v917 = vsel %vm885, 65537, 0
        %v918 = vsel %vm886, 65537, 0
        %v919 = vsel %vm887, 65537, 0
        %v920 = vsel %vm888, 65537, 0
        %v921 = vsel %vm889, 65537, 0
        %v922 = vsel %vm890, 65537, 0
        %v923 = vsel %vm891, 65537, 0
        %v924 = vsel %vm892, 65537, 0
        %v925 = vsel %vm893, 65537, 0
        %v926 = vsel %vm894, 65537, 0
        %v927 = vsel %vm895, 65537, 0
        %v928 = vsel %vm896, 65537, 0
        %v929 = vsel %vm897, 65537, 0
        %v930 = vunpack.c.l.b16 %v898
        %v931 = vunpack.c.l.b16 %v899
        %v932 = vunpack.c.l.b16 %v900
        %v933 = vunpack.c.l.b16 %v901
        %v934 = vunpack.c.l.b16 %v902
        %v935 = vunpack.c.l.b16 %v903
        %v936 = vunpack.c.l.b16 %v904
        %v937 = vunpack.c.l.b16 %v905
        %v938 = vunpack.c.l.b16 %v906
        %v939 = vunpack.c.l.b16 %v907
        %v940 = vunpack.c.l.b16 %v908
        %v941 = vunpack.c.l.b16 %v909
        %v942 = vunpack.c.l.b16 %v910
        %v943 = vunpack.c.l.b16 %v911
        %v944 = vunpack.c.l.b16 %v912
        %v945 = vunpack.c.l.b16 %v913
        %v946 = vunpack.c.l.b16 %v914
        %v947 = vunpack.c.l.b16 %v915
        %v948 = vunpack.c.l.b16 %v916
        %v949 = vunpack.c.l.b16 %v917
        %v950 = vunpack.c.l.b16 %v918
        %v951 = vunpack.c.l.b16 %v919
        %v952 = vunpack.c.l.b16 %v920
        %v953 = vunpack.c.l.b16 %v921
        %v954 = vunpack.c.l.b16 %v922
        %v955 = vunpack.c.l.b16 %v923
        %v956 = vunpack.c.l.b16 %v924
        %v957 = vunpack.c.l.b16 %v925
        %v958 = vunpack.c.l.b16 %v926
        %v959 = vunpack.c.l.b16 %v927
        %v960 = vunpack.c.l.b16 %v928
        %v961 = vunpack.c.l.b16 %v929
        %v962 = vpack.c.b16 %v931, %v930
        %v963 = vpack.c.b16 %v933, %v932
        %v964 = vpack.c.b16 %v935, %v934
        %v965 = vpack.c.b16 %v937, %v936
        %v966 = vpack.c.b16 %v939, %v938
        %v967 = vpack.c.b16 %v941, %v940
        %v968 = vpack.c.b16 %v943, %v942
        %v969 = vpack.c.b16 %v945, %v944
        %v970 = vpack.c.b16 %v947, %v946
        %v971 = vpack.c.b16 %v949, %v948
        %v972 = vpack.c.b16 %v951, %v950
        %v973 = vpack.c.b16 %v953, %v952
        %v974 = vpack.c.b16 %v955, %v954
        %v975 = vpack.c.b16 %v957, %v956
        %v976 = vpack.c.b16 %v959, %v958
        %v977 = vpack.c.b16 %v961, %v960
        %vm978 = vcmp.ne.s16.totalorder %v962, 0
        %vm979 = vcmp.ne.s16.totalorder %v963, 0
        %vm980 = vcmp.ne.s16.totalorder %v964, 0
        %vm981 = vcmp.ne.s16.totalorder %v965, 0
        %vm982 = vcmp.ne.s16.totalorder %v966, 0
        %vm983 = vcmp.ne.s16.totalorder %v967, 0
        %vm984 = vcmp.ne.s16.totalorder %v968, 0
        %vm985 = vcmp.ne.s16.totalorder %v969, 0
        %vm986 = vcmp.ne.s16.totalorder %v970, 0
        %vm987 = vcmp.ne.s16.totalorder %v971, 0
        %vm988 = vcmp.ne.s16.totalorder %v972, 0
        %vm989 = vcmp.ne.s16.totalorder %v973, 0
        %vm990 = vcmp.ne.s16.totalorder %v974, 0
        %vm991 = vcmp.ne.s16.totalorder %v975, 0
        %vm992 = vcmp.ne.s16.totalorder %v976, 0
        %vm993 = vcmp.ne.s16.totalorder %v977, 0
        %v994 = vsel %vm978, %v442, 0
        %v995 = vsel %vm979, %v577, 0
        %v996 = vsel %vm980, %v459, 0
        %v997 = vsel %vm981, %v467, 0
        %v998 = vsel %vm982, %v475, 0
        %v999 = vsel %vm983, %v483, 0
        %v1000 = vsel %vm984, %v491, 0
        %v1001 = vsel %vm985, %v499, 0
        %v1002 = vsel %vm986, %v507, 0
        %v1003 = vsel %vm987, %v515, 0
        %v1004 = vsel %vm988, %v523, 0
        %v1005 = vsel %vm989, %v531, 0
        %v1006 = vsel %vm990, %v539, 0
        %v1007 = vsel %vm991, %v547, 0
        %v1008 = vsel %vm992, %v555, 0
        %v1009 = vsel %vm993, %v559, 0
        %vm1010 = vcmp.ge.s32.totalorder %v318, 0
        %vm1011 = vcmp.ge.s32.totalorder %v319, 0
        %vm1012 = vcmp.ge.s32.totalorder %v320, 0
        %vm1013 = vcmp.ge.s32.totalorder %v321, 0
        %vm1014 = vcmp.ge.s32.totalorder %v322, 0
        %vm1015 = vcmp.ge.s32.totalorder %v323, 0
        %vm1016 = vcmp.ge.s32.totalorder %v324, 0
        %vm1017 = vcmp.ge.s32.totalorder %v325, 0
        %vm1018 = vcmp.ge.s32.totalorder %v326, 0
        %vm1019 = vcmp.ge.s32.totalorder %v327, 0
        %vm1020 = vcmp.ge.s32.totalorder %v328, 0
        %vm1021 = vcmp.ge.s32.totalorder %v329, 0
        %vm1022 = vcmp.ge.s32.totalorder %v330, 0
        %vm1023 = vcmp.ge.s32.totalorder %v331, 0
        %vm1024 = vcmp.ge.s32.totalorder %v332, 0
        %vm1025 = vcmp.ge.s32.totalorder %v333, 0
        %vm1026 = vcmp.ge.s32.totalorder %v334, 0
        %vm1027 = vcmp.ge.s32.totalorder %v335, 0
        %vm1028 = vcmp.ge.s32.totalorder %v336, 0
        %vm1029 = vcmp.ge.s32.totalorder %v337, 0
        %vm1030 = vcmp.ge.s32.totalorder %v338, 0
        %vm1031 = vcmp.ge.s32.totalorder %v339, 0
        %vm1032 = vcmp.ge.s32.totalorder %v340, 0
        %vm1033 = vcmp.ge.s32.totalorder %v341, 0
        %vm1034 = vcmp.ge.s32.totalorder %v342, 0
        %vm1035 = vcmp.ge.s32.totalorder %v343, 0
        %vm1036 = vcmp.ge.s32.totalorder %v344, 0
        %vm1037 = vcmp.ge.s32.totalorder %v345, 0
        %vm1038 = vcmp.ge.s32.totalorder %v346, 0
        %vm1039 = vcmp.ge.s32.totalorder %v347, 0
        %vm1040 = vcmp.ge.s32.totalorder %v348, 0
        %vm1041 = vcmp.ge.s32.totalorder %v349, 0
        %vm1042 = vmand %vm674, %vm1010
        %vm1043 = vmand %vm675, %vm1011
        %vm1044 = vmand %vm676, %vm1012
        %vm1045 = vmand %vm677, %vm1013
        %vm1046 = vmand %vm678, %vm1014
        %vm1047 = vmand %vm679, %vm1015
        %vm1048 = vmand %vm680, %vm1016
        %vm1049 = vmand %vm681, %vm1017
        %vm1050 = vmand %vm682, %vm1018
        %vm1051 = vmand %vm683, %vm1019
        %vm1052 = vmand %vm684, %vm1020
        %vm1053 = vmand %vm685, %vm1021
        %vm1054 = vmand %vm686, %vm1022
        %vm1055 = vmand %vm687, %vm1023
        %vm1056 = vmand %vm688, %vm1024
        %vm1057 = vmand %vm689, %vm1025
        %vm1058 = vmand %vm690, %vm1026
        %vm1059 = vmand %vm691, %vm1027
        %vm1060 = vmand %vm692, %vm1028
        %vm1061 = vmand %vm693, %vm1029
        %vm1062 = vmand %vm694, %vm1030
        %vm1063 = vmand %vm695, %vm1031
        %vm1064 = vmand %vm696, %vm1032
        %vm1065 = vmand %vm697, %vm1033
        %vm1066 = vmand %vm698, %vm1034
        %vm1067 = vmand %vm699, %vm1035
        %vm1068 = vmand %vm700, %vm1036
        %vm1069 = vmand %vm701, %vm1037
        %vm1070 = vmand %vm702, %vm1038
        %vm1071 = vmand %vm703, %vm1039
        %vm1072 = vmand %vm704, %vm1040
        %vm1073 = vmand %vm705, %vm1041
        %vm1074 = vcmp.lt.s32.totalorder %v318, 16
        %vm1075 = vcmp.lt.s32.totalorder %v319, 16
        %vm1076 = vcmp.lt.s32.totalorder %v320, 16
        %vm1077 = vcmp.lt.s32.totalorder %v321, 16
        %vm1078 = vcmp.lt.s32.totalorder %v322, 16
        %vm1079 = vcmp.lt.s32.totalorder %v323, 16
        %vm1080 = vcmp.lt.s32.totalorder %v324, 16
        %vm1081 = vcmp.lt.s32.totalorder %v325, 16
        %vm1082 = vcmp.lt.s32.totalorder %v326, 16
        %vm1083 = vcmp.lt.s32.totalorder %v327, 16
        %vm1084 = vcmp.lt.s32.totalorder %v328, 16
        %vm1085 = vcmp.lt.s32.totalorder %v329, 16
        %vm1086 = vcmp.lt.s32.totalorder %v330, 16
        %vm1087 = vcmp.lt.s32.totalorder %v331, 16
        %vm1088 = vcmp.lt.s32.totalorder %v332, 16
        %vm1089 = vcmp.lt.s32.totalorder %v333, 16
        %vm1090 = vcmp.lt.s32.totalorder %v334, 16
        %vm1091 = vcmp.lt.s32.totalorder %v335, 16
        %vm1092 = vcmp.lt.s32.totalorder %v336, 16
        %vm1093 = vcmp.lt.s32.totalorder %v337, 16
        %vm1094 = vcmp.lt.s32.totalorder %v338, 16
        %vm1095 = vcmp.lt.s32.totalorder %v339, 16
        %vm1096 = vcmp.lt.s32.totalorder %v340, 16
        %vm1097 = vcmp.lt.s32.totalorder %v341, 16
        %vm1098 = vcmp.lt.s32.totalorder %v342, 16
        %vm1099 = vcmp.lt.s32.totalorder %v343, 16
        %vm1100 = vcmp.lt.s32.totalorder %v344, 16
        %vm1101 = vcmp.lt.s32.totalorder %v345, 16
        %vm1102 = vcmp.lt.s32.totalorder %v346, 16
        %vm1103 = vcmp.lt.s32.totalorder %v347, 16
        %vm1104 = vcmp.lt.s32.totalorder %v348, 16
        %vm1105 = vcmp.lt.s32.totalorder %v349, 16
        %vm1106 = vmand %vm1042, %vm1074
        %vm1107 = vmand %vm1043, %vm1075
        %vm1108 = vmand %vm1044, %vm1076
        %vm1109 = vmand %vm1045, %vm1077
        %vm1110 = vmand %vm1046, %vm1078
        %vm1111 = vmand %vm1047, %vm1079
        %vm1112 = vmand %vm1048, %vm1080
        %vm1113 = vmand %vm1049, %vm1081
        %vm1114 = vmand %vm1050, %vm1082
        %vm1115 = vmand %vm1051, %vm1083
        %vm1116 = vmand %vm1052, %vm1084
        %vm1117 = vmand %vm1053, %vm1085
        %vm1118 = vmand %vm1054, %vm1086
        %vm1119 = vmand %vm1055, %vm1087
        %vm1120 = vmand %vm1056, %vm1088
        %vm1121 = vmand %vm1057, %vm1089
        %vm1122 = vmand %vm1058, %vm1090
        %vm1123 = vmand %vm1059, %vm1091
        %vm1124 = vmand %vm1060, %vm1092
        %vm1125 = vmand %vm1061, %vm1093
        %vm1126 = vmand %vm1062, %vm1094
        %vm1127 = vmand %vm1063, %vm1095
        %vm1128 = vmand %vm1064, %vm1096
        %vm1129 = vmand %vm1065, %vm1097
        %vm1130 = vmand %vm1066, %vm1098
        %vm1131 = vmand %vm1067, %vm1099
        %vm1132 = vmand %vm1068, %vm1100
        %vm1133 = vmand %vm1069, %vm1101
        %vm1134 = vmand %vm1070, %vm1102
        %vm1135 = vmand %vm1071, %vm1103
        %vm1136 = vmand %vm1072, %vm1104
        %vm1137 = vmand %vm1073, %vm1105
        %vm1138 = vmpackc.low %vm1106, %vm1106
        %vm1139 = vmpackc.low %vm1107, %vm1107
        %vm1140 = vmpackc.low %vm1108, %vm1108
        %vm1141 = vmpackc.low %vm1109, %vm1109
        %vm1142 = vmpackc.low %vm1110, %vm1110
        %vm1143 = vmpackc.low %vm1111, %vm1111
        %vm1144 = vmpackc.low %vm1112, %vm1112
        %vm1145 = vmpackc.low %vm1113, %vm1113
        %vm1146 = vmpackc.low %vm1114, %vm1114
        %vm1147 = vmpackc.low %vm1115, %vm1115
        %vm1148 = vmpackc.low %vm1116, %vm1116
        %vm1149 = vmpackc.low %vm1117, %vm1117
        %vm1150 = vmpackc.low %vm1118, %vm1118
        %vm1151 = vmpackc.low %vm1119, %vm1119
        %vm1152 = vmpackc.low %vm1120, %vm1120
        %vm1153 = vmpackc.low %vm1121, %vm1121
        %vm1154 = vmpackc.low %vm1122, %vm1122
        %vm1155 = vmpackc.low %vm1123, %vm1123
        %vm1156 = vmpackc.low %vm1124, %vm1124
        %vm1157 = vmpackc.low %vm1125, %vm1125
        %vm1158 = vmpackc.low %vm1126, %vm1126
        %vm1159 = vmpackc.low %vm1127, %vm1127
        %vm1160 = vmpackc.low %vm1128, %vm1128
        %vm1161 = vmpackc.low %vm1129, %vm1129
        %vm1162 = vmpackc.low %vm1130, %vm1130
        %vm1163 = vmpackc.low %vm1131, %vm1131
        %vm1164 = vmpackc.low %vm1132, %vm1132
        %vm1165 = vmpackc.low %vm1133, %vm1133
        %vm1166 = vmpackc.low %vm1134, %vm1134
        %vm1167 = vmpackc.low %vm1135, %vm1135
        %vm1168 = vmpackc.low %vm1136, %vm1136
        %vm1169 = vmpackc.low %vm1137, %vm1137
        %v1170 = vsel %vm1138, 65537, 0
        %v1171 = vsel %vm1139, 65537, 0
        %v1172 = vsel %vm1140, 65537, 0
        %v1173 = vsel %vm1141, 65537, 0
        %v1174 = vsel %vm1142, 65537, 0
        %v1175 = vsel %vm1143, 65537, 0
        %v1176 = vsel %vm1144, 65537, 0
        %v1177 = vsel %vm1145, 65537, 0
        %v1178 = vsel %vm1146, 65537, 0
        %v1179 = vsel %vm1147, 65537, 0
        %v1180 = vsel %vm1148, 65537, 0
        %v1181 = vsel %vm1149, 65537, 0
        %v1182 = vsel %vm1150, 65537, 0
        %v1183 = vsel %vm1151, 65537, 0
        %v1184 = vsel %vm1152, 65537, 0
        %v1185 = vsel %vm1153, 65537, 0
        %v1186 = vsel %vm1154, 65537, 0
        %v1187 = vsel %vm1155, 65537, 0
        %v1188 = vsel %vm1156, 65537, 0
        %v1189 = vsel %vm1157, 65537, 0
        %v1190 = vsel %vm1158, 65537, 0
        %v1191 = vsel %vm1159, 65537, 0
        %v1192 = vsel %vm1160, 65537, 0
        %v1193 = vsel %vm1161, 65537, 0
        %v1194 = vsel %vm1162, 65537, 0
        %v1195 = vsel %vm1163, 65537, 0
        %v1196 = vsel %vm1164, 65537, 0
        %v1197 = vsel %vm1165, 65537, 0
        %v1198 = vsel %vm1166, 65537, 0
        %v1199 = vsel %vm1167, 65537, 0
        %v1200 = vsel %vm1168, 65537, 0
        %v1201 = vsel %vm1169, 65537, 0
        %v1202 = vunpack.c.l.b16 %v1170
        %v1203 = vunpack.c.l.b16 %v1171
        %v1204 = vunpack.c.l.b16 %v1172
        %v1205 = vunpack.c.l.b16 %v1173
        %v1206 = vunpack.c.l.b16 %v1174
        %v1207 = vunpack.c.l.b16 %v1175
        %v1208 = vunpack.c.l.b16 %v1176
        %v1209 = vunpack.c.l.b16 %v1177
        %v1210 = vunpack.c.l.b16 %v1178
        %v1211 = vunpack.c.l.b16 %v1179
        %v1212 = vunpack.c.l.b16 %v1180
        %v1213 = vunpack.c.l.b16 %v1181
        %v1214 = vunpack.c.l.b16 %v1182
        %v1215 = vunpack.c.l.b16 %v1183
        %v1216 = vunpack.c.l.b16 %v1184
        %v1217 = vunpack.c.l.b16 %v1185
        %v1218 = vunpack.c.l.b16 %v1186
        %v1219 = vunpack.c.l.b16 %v1187
        %v1220 = vunpack.c.l.b16 %v1188
        %v1221 = vunpack.c.l.b16 %v1189
        %v1222 = vunpack.c.l.b16 %v1190
        %v1223 = vunpack.c.l.b16 %v1191
        %v1224 = vunpack.c.l.b16 %v1192
        %v1225 = vunpack.c.l.b16 %v1193
        %v1226 = vunpack.c.l.b16 %v1194
        %v1227 = vunpack.c.l.b16 %v1195
        %v1228 = vunpack.c.l.b16 %v1196
        %v1229 = vunpack.c.l.b16 %v1197
        %v1230 = vunpack.c.l.b16 %v1198
        %v1231 = vunpack.c.l.b16 %v1199
        %v1232 = vunpack.c.l.b16 %v1200
        %v1233 = vunpack.c.l.b16 %v1201
        %v1234 = vpack.c.b16 %v1203, %v1202
        %v1235 = vpack.c.b16 %v1205, %v1204
        %v1236 = vpack.c.b16 %v1207, %v1206
        %v1237 = vpack.c.b16 %v1209, %v1208
        %v1238 = vpack.c.b16 %v1211, %v1210
        %v1239 = vpack.c.b16 %v1213, %v1212
        %v1240 = vpack.c.b16 %v1215, %v1214
        %v1241 = vpack.c.b16 %v1217, %v1216
        %v1242 = vpack.c.b16 %v1219, %v1218
        %v1243 = vpack.c.b16 %v1221, %v1220
        %v1244 = vpack.c.b16 %v1223, %v1222
        %v1245 = vpack.c.b16 %v1225, %v1224
        %v1246 = vpack.c.b16 %v1227, %v1226
        %v1247 = vpack.c.b16 %v1229, %v1228
        %v1248 = vpack.c.b16 %v1231, %v1230
        %v1249 = vpack.c.b16 %v1233, %v1232
        %vm1250 = vcmp.ne.s16.totalorder %v1234, 0
        %vm1251 = vcmp.ne.s16.totalorder %v1235, 0
        %vm1252 = vcmp.ne.s16.totalorder %v1236, 0
        %vm1253 = vcmp.ne.s16.totalorder %v1237, 0
        %vm1254 = vcmp.ne.s16.totalorder %v1238, 0
        %vm1255 = vcmp.ne.s16.totalorder %v1239, 0
        %vm1256 = vcmp.ne.s16.totalorder %v1240, 0
        %vm1257 = vcmp.ne.s16.totalorder %v1241, 0
        %vm1258 = vcmp.ne.s16.totalorder %v1242, 0
        %vm1259 = vcmp.ne.s16.totalorder %v1243, 0
        %vm1260 = vcmp.ne.s16.totalorder %v1244, 0
        %vm1261 = vcmp.ne.s16.totalorder %v1245, 0
        %vm1262 = vcmp.ne.s16.totalorder %v1246, 0
        %vm1263 = vcmp.ne.s16.totalorder %v1247, 0
        %vm1264 = vcmp.ne.s16.totalorder %v1248, 0
        %vm1265 = vcmp.ne.s16.totalorder %v1249, 0
        %v1266 = vsel %vm1250, %v429, 0
        %v1267 = vsel %vm1251, %v414, 0
        %v1268 = vsel %vm1252, %v415, 0
        %v1269 = vsel %vm1253, %v416, 0
        %v1270 = vsel %vm1254, %v417, 0
        %v1271 = vsel %vm1255, %v418, 0
        %v1272 = vsel %vm1256, %v419, 0
        %v1273 = vsel %vm1257, %v420, 0
        %v1274 = vsel %vm1258, %v421, 0
        %v1275 = vsel %vm1259, %v422, 0
        %v1276 = vsel %vm1260, %v423, 0
        %v1277 = vsel %vm1261, %v424, 0
        %v1278 = vsel %vm1262, %v425, 0
        %v1279 = vsel %vm1263, %v426, 0
        %v1280 = vsel %vm1264, %v427, 0
        %v1281 = vsel %vm1265, %v428, 0
        %v1282 = vrot.slane %v439, 1
        %v1283 = vor.u32 %v436, %v1282
        %vm1285 = vsmask.f32 7424
        %v1286 = vrot.slane %v449, 1
        %v1287 = vor.u32 %v446, %v1286
        %v1288 = vrot.slane %v456, 1
        %v1289 = vsel %vm1285, %v1287, %v1288
        %v1290 = vor.u32 %v453, %v1288
        %v1291 = vrot.slane %v464, 1
        %v1292 = vsel %vm1285, %v1290, %v1291
        %v1293 = vor.u32 %v461, %v1291
        %v1294 = vrot.slane %v472, 1
        %v1295 = vsel %vm1285, %v1293, %v1294
        %v1296 = vor.u32 %v469, %v1294
        %v1297 = vrot.slane %v480, 1
        %v1298 = vsel %vm1285, %v1296, %v1297
        %v1299 = vor.u32 %v477, %v1297
        %v1300 = vrot.slane %v488, 1
        %v1301 = vsel %vm1285, %v1299, %v1300
        %v1302 = vor.u32 %v485, %v1300
        %v1303 = vrot.slane %v496, 1
        %v1304 = vsel %vm1285, %v1302, %v1303
        %v1305 = vor.u32 %v493, %v1303
        %v1306 = vrot.slane %v504, 1
        %v1307 = vsel %vm1285, %v1305, %v1306
        %v1308 = vor.u32 %v501, %v1306
        %v1309 = vrot.slane %v512, 1
        %v1310 = vsel %vm1285, %v1308, %v1309
        %v1311 = vor.u32 %v509, %v1309
        %v1312 = vrot.slane %v520, 1
        %v1313 = vsel %vm1285, %v1311, %v1312
        %v1314 = vor.u32 %v517, %v1312
        %v1315 = vrot.slane %v528, 1
        %v1316 = vsel %vm1285, %v1314, %v1315
        %v1317 = vor.u32 %v525, %v1315
        %v1318 = vrot.slane %v536, 1
        %v1319 = vsel %vm1285, %v1317, %v1318
        %v1320 = vor.u32 %v533, %v1318
        %v1321 = vrot.slane %v544, 1
        %v1322 = vsel %vm1285, %v1320, %v1321
        %v1323 = vor.u32 %v541, %v1321
        %v1324 = vrot.slane %v552, 1
        %v1325 = vsel %vm1285, %v1323, %v1324
        %v1326 = vor.u32 %v549, %v1324
        %v1327 = vrot.slane %v556, 1
        %v1328 = vsel %vm1285, %v1326, %v1327
        %v1329 = vor.u32 %v432, %v1327
        %v1330 = vsel %vm1285, %v1329, %v1282
        %vm1347 = vcmask 1047552
        %vm1348 = vmand %vm1347, %vm1285
        %v1349 = vsel %vm1348, %v1283, %v1286
        %v1350 = vadd.s32 %v318, 1
        %v1351 = vadd.s32 %v319, 1
        %v1352 = vadd.s32 %v320, 1
        %v1353 = vadd.s32 %v321, 1
        %v1354 = vadd.s32 %v322, 1
        %v1355 = vadd.s32 %v323, 1
        %v1356 = vadd.s32 %v324, 1
        %v1357 = vadd.s32 %v325, 1
        %v1358 = vadd.s32 %v326, 1
        %v1359 = vadd.s32 %v327, 1
        %v1360 = vadd.s32 %v328, 1
        %v1361 = vadd.s32 %v329, 1
        %v1362 = vadd.s32 %v330, 1
        %v1363 = vadd.s32 %v331, 1
        %v1364 = vadd.s32 %v332, 1
        %v1365 = vadd.s32 %v333, 1
        %v1366 = vadd.s32 %v334, 1
        %v1367 = vadd.s32 %v335, 1
        %v1368 = vadd.s32 %v336, 1
        %v1369 = vadd.s32 %v337, 1
        %v1370 = vadd.s32 %v338, 1
        %v1371 = vadd.s32 %v339, 1
        %v1372 = vadd.s32 %v340, 1
        %v1373 = vadd.s32 %v341, 1
        %v1374 = vadd.s32 %v342, 1
        %v1375 = vadd.s32 %v343, 1
        %v1376 = vadd.s32 %v344, 1
        %v1377 = vadd.s32 %v345, 1
        %v1378 = vadd.s32 %v346, 1
        %v1379 = vadd.s32 %v347, 1
        %v1380 = vadd.s32 %v348, 1
        %v1381 = vadd.s32 %v349, 1
        %vm1382 = vcmp.ge.s32.totalorder %v1350, 0
        %vm1383 = vcmp.ge.s32.totalorder %v1351, 0
        %vm1384 = vcmp.ge.s32.totalorder %v1352, 0
        %vm1385 = vcmp.ge.s32.totalorder %v1353, 0
        %vm1386 = vcmp.ge.s32.totalorder %v1354, 0
        %vm1387 = vcmp.ge.s32.totalorder %v1355, 0
        %vm1388 = vcmp.ge.s32.totalorder %v1356, 0
        %vm1389 = vcmp.ge.s32.totalorder %v1357, 0
        %vm1390 = vcmp.ge.s32.totalorder %v1358, 0
        %vm1391 = vcmp.ge.s32.totalorder %v1359, 0
        %vm1392 = vcmp.ge.s32.totalorder %v1360, 0
        %vm1393 = vcmp.ge.s32.totalorder %v1361, 0
        %vm1394 = vcmp.ge.s32.totalorder %v1362, 0
        %vm1395 = vcmp.ge.s32.totalorder %v1363, 0
        %vm1396 = vcmp.ge.s32.totalorder %v1364, 0
        %vm1397 = vcmp.ge.s32.totalorder %v1365, 0
        %vm1398 = vcmp.ge.s32.totalorder %v1366, 0
        %vm1399 = vcmp.ge.s32.totalorder %v1367, 0
        %vm1400 = vcmp.ge.s32.totalorder %v1368, 0
        %vm1401 = vcmp.ge.s32.totalorder %v1369, 0
        %vm1402 = vcmp.ge.s32.totalorder %v1370, 0
        %vm1403 = vcmp.ge.s32.totalorder %v1371, 0
        %vm1404 = vcmp.ge.s32.totalorder %v1372, 0
        %vm1405 = vcmp.ge.s32.totalorder %v1373, 0
        %vm1406 = vcmp.ge.s32.totalorder %v1374, 0
        %vm1407 = vcmp.ge.s32.totalorder %v1375, 0
        %vm1408 = vcmp.ge.s32.totalorder %v1376, 0
        %vm1409 = vcmp.ge.s32.totalorder %v1377, 0
        %vm1410 = vcmp.ge.s32.totalorder %v1378, 0
        %vm1411 = vcmp.ge.s32.totalorder %v1379, 0
        %vm1412 = vcmp.ge.s32.totalorder %v1380, 0
        %vm1413 = vcmp.ge.s32.totalorder %v1381, 0
        %vm1414 = vmand %vm674, %vm1382
        %vm1415 = vmand %vm675, %vm1383
        %vm1416 = vmand %vm676, %vm1384
        %vm1417 = vmand %vm677, %vm1385
        %vm1418 = vmand %vm678, %vm1386
        %vm1419 = vmand %vm679, %vm1387
        %vm1420 = vmand %vm680, %vm1388
        %vm1421 = vmand %vm681, %vm1389
        %vm1422 = vmand %vm682, %vm1390
        %vm1423 = vmand %vm683, %vm1391
        %vm1424 = vmand %vm684, %vm1392
        %vm1425 = vmand %vm685, %vm1393
        %vm1426 = vmand %vm686, %vm1394
        %vm1427 = vmand %vm687, %vm1395
        %vm1428 = vmand %vm688, %vm1396
        %vm1429 = vmand %vm689, %vm1397
        %vm1430 = vmand %vm690, %vm1398
        %vm1431 = vmand %vm691, %vm1399
        %vm1432 = vmand %vm692, %vm1400
        %vm1433 = vmand %vm693, %vm1401
        %vm1434 = vmand %vm694, %vm1402
        %vm1435 = vmand %vm695, %vm1403
        %vm1436 = vmand %vm696, %vm1404
        %vm1437 = vmand %vm697, %vm1405
        %vm1438 = vmand %vm698, %vm1406
        %vm1439 = vmand %vm699, %vm1407
        %vm1440 = vmand %vm700, %vm1408
        %vm1441 = vmand %vm701, %vm1409
        %vm1442 = vmand %vm702, %vm1410
        %vm1443 = vmand %vm703, %vm1411
        %vm1444 = vmand %vm704, %vm1412
        %vm1445 = vmand %vm705, %vm1413
        %vm1446 = vcmp.lt.s32.totalorder %v1350, 16
        %vm1447 = vcmp.lt.s32.totalorder %v1351, 16
        %vm1448 = vcmp.lt.s32.totalorder %v1352, 16
        %vm1449 = vcmp.lt.s32.totalorder %v1353, 16
        %vm1450 = vcmp.lt.s32.totalorder %v1354, 16
        %vm1451 = vcmp.lt.s32.totalorder %v1355, 16
        %vm1452 = vcmp.lt.s32.totalorder %v1356, 16
        %vm1453 = vcmp.lt.s32.totalorder %v1357, 16
        %vm1454 = vcmp.lt.s32.totalorder %v1358, 16
        %vm1455 = vcmp.lt.s32.totalorder %v1359, 16
        %vm1456 = vcmp.lt.s32.totalorder %v1360, 16
        %vm1457 = vcmp.lt.s32.totalorder %v1361, 16
        %vm1458 = vcmp.lt.s32.totalorder %v1362, 16
        %vm1459 = vcmp.lt.s32.totalorder %v1363, 16
        %vm1460 = vcmp.lt.s32.totalorder %v1364, 16
        %vm1461 = vcmp.lt.s32.totalorder %v1365, 16
        %vm1462 = vcmp.lt.s32.totalorder %v1366, 16
        %vm1463 = vcmp.lt.s32.totalorder %v1367, 16
        %vm1464 = vcmp.lt.s32.totalorder %v1368, 16
        %vm1465 = vcmp.lt.s32.totalorder %v1369, 16
        %vm1466 = vcmp.lt.s32.totalorder %v1370, 16
        %vm1467 = vcmp.lt.s32.totalorder %v1371, 16
        %vm1468 = vcmp.lt.s32.totalorder %v1372, 16
        %vm1469 = vcmp.lt.s32.totalorder %v1373, 16
        %vm1470 = vcmp.lt.s32.totalorder %v1374, 16
        %vm1471 = vcmp.lt.s32.totalorder %v1375, 16
        %vm1472 = vcmp.lt.s32.totalorder %v1376, 16
        %vm1473 = vcmp.lt.s32.totalorder %v1377, 16
        %vm1474 = vcmp.lt.s32.totalorder %v1378, 16
        %vm1475 = vcmp.lt.s32.totalorder %v1379, 16
        %vm1476 = vcmp.lt.s32.totalorder %v1380, 16
        %vm1477 = vcmp.lt.s32.totalorder %v1381, 16
        %vm1478 = vmand %vm1414, %vm1446
        %vm1479 = vmand %vm1415, %vm1447
        %vm1480 = vmand %vm1416, %vm1448
        %vm1481 = vmand %vm1417, %vm1449
        %vm1482 = vmand %vm1418, %vm1450
        %vm1483 = vmand %vm1419, %vm1451
        %vm1484 = vmand %vm1420, %vm1452
        %vm1485 = vmand %vm1421, %vm1453
        %vm1486 = vmand %vm1422, %vm1454
        %vm1487 = vmand %vm1423, %vm1455
        %vm1488 = vmand %vm1424, %vm1456
        %vm1489 = vmand %vm1425, %vm1457
        %vm1490 = vmand %vm1426, %vm1458
        %vm1491 = vmand %vm1427, %vm1459
        %vm1492 = vmand %vm1428, %vm1460
        %vm1493 = vmand %vm1429, %vm1461
        %vm1494 = vmand %vm1430, %vm1462
        %vm1495 = vmand %vm1431, %vm1463
        %vm1496 = vmand %vm1432, %vm1464
        %vm1497 = vmand %vm1433, %vm1465
        %vm1498 = vmand %vm1434, %vm1466
        %vm1499 = vmand %vm1435, %vm1467
        %vm1500 = vmand %vm1436, %vm1468
        %vm1501 = vmand %vm1437, %vm1469
        %vm1502 = vmand %vm1438, %vm1470
        %vm1503 = vmand %vm1439, %vm1471
        %vm1504 = vmand %vm1440, %vm1472
        %vm1505 = vmand %vm1441, %vm1473
        %vm1506 = vmand %vm1442, %vm1474
        %vm1507 = vmand %vm1443, %vm1475
        %vm1508 = vmand %vm1444, %vm1476
        %vm1509 = vmand %vm1445, %vm1477
        %vm1510 = vmpackc.low %vm1478, %vm1478
        %vm1511 = vmpackc.low %vm1479, %vm1479
        %vm1512 = vmpackc.low %vm1480, %vm1480
        %vm1513 = vmpackc.low %vm1481, %vm1481
        %vm1514 = vmpackc.low %vm1482, %vm1482
        %vm1515 = vmpackc.low %vm1483, %vm1483
        %vm1516 = vmpackc.low %vm1484, %vm1484
        %vm1517 = vmpackc.low %vm1485, %vm1485
        %vm1518 = vmpackc.low %vm1486, %vm1486
        %vm1519 = vmpackc.low %vm1487, %vm1487
        %vm1520 = vmpackc.low %vm1488, %vm1488
        %vm1521 = vmpackc.low %vm1489, %vm1489
        %vm1522 = vmpackc.low %vm1490, %vm1490
        %vm1523 = vmpackc.low %vm1491, %vm1491
        %vm1524 = vmpackc.low %vm1492, %vm1492
        %vm1525 = vmpackc.low %vm1493, %vm1493
        %vm1526 = vmpackc.low %vm1494, %vm1494
        %vm1527 = vmpackc.low %vm1495, %vm1495
        %vm1528 = vmpackc.low %vm1496, %vm1496
        %vm1529 = vmpackc.low %vm1497, %vm1497
        %vm1530 = vmpackc.low %vm1498, %vm1498
        %vm1531 = vmpackc.low %vm1499, %vm1499
        %vm1532 = vmpackc.low %vm1500, %vm1500
        %vm1533 = vmpackc.low %vm1501, %vm1501
        %vm1534 = vmpackc.low %vm1502, %vm1502
        %vm1535 = vmpackc.low %vm1503, %vm1503
        %vm1536 = vmpackc.low %vm1504, %vm1504
        %vm1537 = vmpackc.low %vm1505, %vm1505
        %vm1538 = vmpackc.low %vm1506, %vm1506
        %vm1539 = vmpackc.low %vm1507, %vm1507
        %vm1540 = vmpackc.low %vm1508, %vm1508
        %vm1541 = vmpackc.low %vm1509, %vm1509
        %v1542 = vsel %vm1510, 65537, 0
        %v1543 = vsel %vm1511, 65537, 0
        %v1544 = vsel %vm1512, 65537, 0
        %v1545 = vsel %vm1513, 65537, 0
        %v1546 = vsel %vm1514, 65537, 0
        %v1547 = vsel %vm1515, 65537, 0
        %v1548 = vsel %vm1516, 65537, 0
        %v1549 = vsel %vm1517, 65537, 0
        %v1550 = vsel %vm1518, 65537, 0
        %v1551 = vsel %vm1519, 65537, 0
        %v1552 = vsel %vm1520, 65537, 0
        %v1553 = vsel %vm1521, 65537, 0
        %v1554 = vsel %vm1522, 65537, 0
        %v1555 = vsel %vm1523, 65537, 0
        %v1556 = vsel %vm1524, 65537, 0
        %v1557 = vsel %vm1525, 65537, 0
        %v1558 = vsel %vm1526, 65537, 0
        %v1559 = vsel %vm1527, 65537, 0
        %v1560 = vsel %vm1528, 65537, 0
        %v1561 = vsel %vm1529, 65537, 0
        %v1562 = vsel %vm1530, 65537, 0
        %v1563 = vsel %vm1531, 65537, 0
        %v1564 = vsel %vm1532, 65537, 0
        %v1565 = vsel %vm1533, 65537, 0
        %v1566 = vsel %vm1534, 65537, 0
        %v1567 = vsel %vm1535, 65537, 0
        %v1568 = vsel %vm1536, 65537, 0
        %v1569 = vsel %vm1537, 65537, 0
        %v1570 = vsel %vm1538, 65537, 0
        %v1571 = vsel %vm1539, 65537, 0
        %v1572 = vsel %vm1540, 65537, 0
        %v1573 = vsel %vm1541, 65537, 0
        %v1574 = vunpack.c.l.b16 %v1542
        %v1575 = vunpack.c.l.b16 %v1543
        %v1576 = vunpack.c.l.b16 %v1544
        %v1577 = vunpack.c.l.b16 %v1545
        %v1578 = vunpack.c.l.b16 %v1546
        %v1579 = vunpack.c.l.b16 %v1547
        %v1580 = vunpack.c.l.b16 %v1548
        %v1581 = vunpack.c.l.b16 %v1549
        %v1582 = vunpack.c.l.b16 %v1550
        %v1583 = vunpack.c.l.b16 %v1551
        %v1584 = vunpack.c.l.b16 %v1552
        %v1585 = vunpack.c.l.b16 %v1553
        %v1586 = vunpack.c.l.b16 %v1554
        %v1587 = vunpack.c.l.b16 %v1555
        %v1588 = vunpack.c.l.b16 %v1556
        %v1589 = vunpack.c.l.b16 %v1557
        %v1590 = vunpack.c.l.b16 %v1558
        %v1591 = vunpack.c.l.b16 %v1559
        %v1592 = vunpack.c.l.b16 %v1560
        %v1593 = vunpack.c.l.b16 %v1561
        %v1594 = vunpack.c.l.b16 %v1562
        %v1595 = vunpack.c.l.b16 %v1563
        %v1596 = vunpack.c.l.b16 %v1564
        %v1597 = vunpack.c.l.b16 %v1565
        %v1598 = vunpack.c.l.b16 %v1566
        %v1599 = vunpack.c.l.b16 %v1567
        %v1600 = vunpack.c.l.b16 %v1568
        %v1601 = vunpack.c.l.b16 %v1569
        %v1602 = vunpack.c.l.b16 %v1570
        %v1603 = vunpack.c.l.b16 %v1571
        %v1604 = vunpack.c.l.b16 %v1572
        %v1605 = vunpack.c.l.b16 %v1573
        %v1606 = vpack.c.b16 %v1575, %v1574
        %v1607 = vpack.c.b16 %v1577, %v1576
        %v1608 = vpack.c.b16 %v1579, %v1578
        %v1609 = vpack.c.b16 %v1581, %v1580
        %v1610 = vpack.c.b16 %v1583, %v1582
        %v1611 = vpack.c.b16 %v1585, %v1584
        %v1612 = vpack.c.b16 %v1587, %v1586
        %v1613 = vpack.c.b16 %v1589, %v1588
        %v1614 = vpack.c.b16 %v1591, %v1590
        %v1615 = vpack.c.b16 %v1593, %v1592
        %v1616 = vpack.c.b16 %v1595, %v1594
        %v1617 = vpack.c.b16 %v1597, %v1596
        %v1618 = vpack.c.b16 %v1599, %v1598
        %v1619 = vpack.c.b16 %v1601, %v1600
        %v1620 = vpack.c.b16 %v1603, %v1602
        %v1621 = vpack.c.b16 %v1605, %v1604
        %vm1622 = vcmp.ne.s16.totalorder %v1606, 0
        %vm1623 = vcmp.ne.s16.totalorder %v1607, 0
        %vm1624 = vcmp.ne.s16.totalorder %v1608, 0
        %vm1625 = vcmp.ne.s16.totalorder %v1609, 0
        %vm1626 = vcmp.ne.s16.totalorder %v1610, 0
        %vm1627 = vcmp.ne.s16.totalorder %v1611, 0
        %vm1628 = vcmp.ne.s16.totalorder %v1612, 0
        %vm1629 = vcmp.ne.s16.totalorder %v1613, 0
        %vm1630 = vcmp.ne.s16.totalorder %v1614, 0
        %vm1631 = vcmp.ne.s16.totalorder %v1615, 0
        %vm1632 = vcmp.ne.s16.totalorder %v1616, 0
        %vm1633 = vcmp.ne.s16.totalorder %v1617, 0
        %vm1634 = vcmp.ne.s16.totalorder %v1618, 0
        %vm1635 = vcmp.ne.s16.totalorder %v1619, 0
        %vm1636 = vcmp.ne.s16.totalorder %v1620, 0
        %vm1637 = vcmp.ne.s16.totalorder %v1621, 0
        %v1638 = vsel %vm1622, %v1349, 0
        %v1639 = vsel %vm1623, %v1289, 0
        %v1640 = vsel %vm1624, %v1292, 0
        %v1641 = vsel %vm1625, %v1295, 0
        %v1642 = vsel %vm1626, %v1298, 0
        %v1643 = vsel %vm1627, %v1301, 0
        %v1644 = vsel %vm1628, %v1304, 0
        %v1645 = vsel %vm1629, %v1307, 0
        %v1646 = vsel %vm1630, %v1310, 0
        %v1647 = vsel %vm1631, %v1313, 0
        %v1648 = vsel %vm1632, %v1316, 0
        %v1649 = vsel %vm1633, %v1319, 0
        %v1650 = vsel %vm1634, %v1322, 0
        %v1651 = vsel %vm1635, %v1325, 0
        %v1652 = vsel %vm1636, %v1328, 0
        %v1653 = vsel %vm1637, %v1330, 0
        %vm1654 = vcmp.ge.s32.totalorder %v382, 0
        %vm1655 = vcmp.ge.s32.totalorder %v383, 0
        %vm1656 = vcmp.ge.s32.totalorder %v384, 0
        %vm1657 = vcmp.ge.s32.totalorder %v385, 0
        %vm1658 = vcmp.ge.s32.totalorder %v386, 0
        %vm1659 = vcmp.ge.s32.totalorder %v387, 0
        %vm1660 = vcmp.ge.s32.totalorder %v388, 0
        %vm1661 = vcmp.ge.s32.totalorder %v389, 0
        %vm1662 = vcmp.ge.s32.totalorder %v390, 0
        %vm1663 = vcmp.ge.s32.totalorder %v391, 0
        %vm1664 = vcmp.ge.s32.totalorder %v392, 0
        %vm1665 = vcmp.ge.s32.totalorder %v393, 0
        %vm1666 = vcmp.ge.s32.totalorder %v394, 0
        %vm1667 = vcmp.ge.s32.totalorder %v395, 0
        %vm1668 = vcmp.ge.s32.totalorder %v396, 0
        %vm1669 = vcmp.ge.s32.totalorder %v397, 0
        %vm1670 = vcmp.ge.s32.totalorder %v398, 0
        %vm1671 = vcmp.ge.s32.totalorder %v399, 0
        %vm1672 = vcmp.ge.s32.totalorder %v400, 0
        %vm1673 = vcmp.ge.s32.totalorder %v401, 0
        %vm1674 = vcmp.ge.s32.totalorder %v402, 0
        %vm1675 = vcmp.ge.s32.totalorder %v403, 0
        %vm1676 = vcmp.ge.s32.totalorder %v404, 0
        %vm1677 = vcmp.ge.s32.totalorder %v405, 0
        %vm1678 = vcmp.ge.s32.totalorder %v406, 0
        %vm1679 = vcmp.ge.s32.totalorder %v407, 0
        %vm1680 = vcmp.ge.s32.totalorder %v408, 0
        %vm1681 = vcmp.ge.s32.totalorder %v409, 0
        %vm1682 = vcmp.ge.s32.totalorder %v410, 0
        %vm1683 = vcmp.ge.s32.totalorder %v411, 0
        %vm1684 = vcmp.ge.s32.totalorder %v412, 0
        %vm1685 = vcmp.ge.s32.totalorder %v413, 0
        %vm1686 = vcmp.lt.s32.totalorder %v382, 16
        %vm1687 = vcmp.lt.s32.totalorder %v383, 16
        %vm1688 = vcmp.lt.s32.totalorder %v384, 16
        %vm1689 = vcmp.lt.s32.totalorder %v385, 16
        %vm1690 = vcmp.lt.s32.totalorder %v386, 16
        %vm1691 = vcmp.lt.s32.totalorder %v387, 16
        %vm1692 = vcmp.lt.s32.totalorder %v388, 16
        %vm1693 = vcmp.lt.s32.totalorder %v389, 16
        %vm1694 = vcmp.lt.s32.totalorder %v390, 16
        %vm1695 = vcmp.lt.s32.totalorder %v391, 16
        %vm1696 = vcmp.lt.s32.totalorder %v392, 16
        %vm1697 = vcmp.lt.s32.totalorder %v393, 16
        %vm1698 = vcmp.lt.s32.totalorder %v394, 16
        %vm1699 = vcmp.lt.s32.totalorder %v395, 16
        %vm1700 = vcmp.lt.s32.totalorder %v396, 16
        %vm1701 = vcmp.lt.s32.totalorder %v397, 16
        %vm1702 = vcmp.lt.s32.totalorder %v398, 16
        %vm1703 = vcmp.lt.s32.totalorder %v399, 16
        %vm1704 = vcmp.lt.s32.totalorder %v400, 16
        %vm1705 = vcmp.lt.s32.totalorder %v401, 16
        %vm1706 = vcmp.lt.s32.totalorder %v402, 16
        %vm1707 = vcmp.lt.s32.totalorder %v403, 16
        %vm1708 = vcmp.lt.s32.totalorder %v404, 16
        %vm1709 = vcmp.lt.s32.totalorder %v405, 16
        %vm1710 = vcmp.lt.s32.totalorder %v406, 16
        %vm1711 = vcmp.lt.s32.totalorder %v407, 16
        %vm1712 = vcmp.lt.s32.totalorder %v408, 16
        %vm1713 = vcmp.lt.s32.totalorder %v409, 16
        %vm1714 = vcmp.lt.s32.totalorder %v410, 16
        %vm1715 = vcmp.lt.s32.totalorder %v411, 16
        %vm1716 = vcmp.lt.s32.totalorder %v412, 16
        %vm1717 = vcmp.lt.s32.totalorder %v413, 16
        %vm1718 = vmand %vm1654, %vm1686
        %vm1719 = vmand %vm1655, %vm1687
        %vm1720 = vmand %vm1656, %vm1688
        %vm1721 = vmand %vm1657, %vm1689
        %vm1722 = vmand %vm1658, %vm1690
        %vm1723 = vmand %vm1659, %vm1691
        %vm1724 = vmand %vm1660, %vm1692
        %vm1725 = vmand %vm1661, %vm1693
        %vm1726 = vmand %vm1662, %vm1694
        %vm1727 = vmand %vm1663, %vm1695
        %vm1728 = vmand %vm1664, %vm1696
        %vm1729 = vmand %vm1665, %vm1697
        %vm1730 = vmand %vm1666, %vm1698
        %vm1731 = vmand %vm1667, %vm1699
        %vm1732 = vmand %vm1668, %vm1700
        %vm1733 = vmand %vm1669, %vm1701
        %vm1734 = vmand %vm1670, %vm1702
        %vm1735 = vmand %vm1671, %vm1703
        %vm1736 = vmand %vm1672, %vm1704
        %vm1737 = vmand %vm1673, %vm1705
        %vm1738 = vmand %vm1674, %vm1706
        %vm1739 = vmand %vm1675, %vm1707
        %vm1740 = vmand %vm1676, %vm1708
        %vm1741 = vmand %vm1677, %vm1709
        %vm1742 = vmand %vm1678, %vm1710
        %vm1743 = vmand %vm1679, %vm1711
        %vm1744 = vmand %vm1680, %vm1712
        %vm1745 = vmand %vm1681, %vm1713
        %vm1746 = vmand %vm1682, %vm1714
        %vm1747 = vmand %vm1683, %vm1715
        %vm1748 = vmand %vm1684, %vm1716
        %vm1749 = vmand %vm1685, %vm1717
        %vm1750 = vmand %vm1718, %vm738
        %vm1751 = vmand %vm1719, %vm739
        %vm1752 = vmand %vm1720, %vm740
        %vm1753 = vmand %vm1721, %vm741
        %vm1754 = vmand %vm1722, %vm742
        %vm1755 = vmand %vm1723, %vm743
        %vm1756 = vmand %vm1724, %vm744
        %vm1757 = vmand %vm1725, %vm745
        %vm1758 = vmand %vm1726, %vm746
        %vm1759 = vmand %vm1727, %vm747
        %vm1760 = vmand %vm1728, %vm748
        %vm1761 = vmand %vm1729, %vm749
        %vm1762 = vmand %vm1730, %vm750
        %vm1763 = vmand %vm1731, %vm751
        %vm1764 = vmand %vm1732, %vm752
        %vm1765 = vmand %vm1733, %vm753
        %vm1766 = vmand %vm1734, %vm754
        %vm1767 = vmand %vm1735, %vm755
        %vm1768 = vmand %vm1736, %vm756
        %vm1769 = vmand %vm1737, %vm757
        %vm1770 = vmand %vm1738, %vm758
        %vm1771 = vmand %vm1739, %vm759
        %vm1772 = vmand %vm1740, %vm760
        %vm1773 = vmand %vm1741, %vm761
        %vm1774 = vmand %vm1742, %vm762
        %vm1775 = vmand %vm1743, %vm763
        %vm1776 = vmand %vm1744, %vm764
        %vm1777 = vmand %vm1745, %vm765
        %vm1778 = vmand %vm1746, %vm766
        %vm1779 = vmand %vm1747, %vm767
        %vm1780 = vmand %vm1748, %vm768
        %vm1781 = vmand %vm1749, %vm769
        %vm1782 = vmand %vm1750, %vm802
        %vm1783 = vmand %vm1751, %vm803
        %vm1784 = vmand %vm1752, %vm804
        %vm1785 = vmand %vm1753, %vm805
        %vm1786 = vmand %vm1754, %vm806
        %vm1787 = vmand %vm1755, %vm807
        %vm1788 = vmand %vm1756, %vm808
        %vm1789 = vmand %vm1757, %vm809
        %vm1790 = vmand %vm1758, %vm810
        %vm1791 = vmand %vm1759, %vm811
        %vm1792 = vmand %vm1760, %vm812
        %vm1793 = vmand %vm1761, %vm813
        %vm1794 = vmand %vm1762, %vm814
        %vm1795 = vmand %vm1763, %vm815
        %vm1796 = vmand %vm1764, %vm816
        %vm1797 = vmand %vm1765, %vm817
        %vm1798 = vmand %vm1766, %vm818
        %vm1799 = vmand %vm1767, %vm819
        %vm1800 = vmand %vm1768, %vm820
        %vm1801 = vmand %vm1769, %vm821
        %vm1802 = vmand %vm1770, %vm822
        %vm1803 = vmand %vm1771, %vm823
        %vm1804 = vmand %vm1772, %vm824
        %vm1805 = vmand %vm1773, %vm825
        %vm1806 = vmand %vm1774, %vm826
        %vm1807 = vmand %vm1775, %vm827
        %vm1808 = vmand %vm1776, %vm828
        %vm1809 = vmand %vm1777, %vm829
        %vm1810 = vmand %vm1778, %vm830
        %vm1811 = vmand %vm1779, %vm831
        %vm1812 = vmand %vm1780, %vm832
        %vm1813 = vmand %vm1781, %vm833
        %vm1814 = vmpackc.low %vm1782, %vm1782
        %vm1815 = vmpackc.low %vm1783, %vm1783
        %vm1816 = vmpackc.low %vm1784, %vm1784
        %vm1817 = vmpackc.low %vm1785, %vm1785
        %vm1818 = vmpackc.low %vm1786, %vm1786
        %vm1819 = vmpackc.low %vm1787, %vm1787
        %vm1820 = vmpackc.low %vm1788, %vm1788
        %vm1821 = vmpackc.low %vm1789, %vm1789
        %vm1822 = vmpackc.low %vm1790, %vm1790
        %vm1823 = vmpackc.low %vm1791, %vm1791
        %vm1824 = vmpackc.low %vm1792, %vm1792
        %vm1825 = vmpackc.low %vm1793, %vm1793
        %vm1826 = vmpackc.low %vm1794, %vm1794
        %vm1827 = vmpackc.low %vm1795, %vm1795
        %vm1828 = vmpackc.low %vm1796, %vm1796
        %vm1829 = vmpackc.low %vm1797, %vm1797
        %vm1830 = vmpackc.low %vm1798, %vm1798
        %vm1831 = vmpackc.low %vm1799, %vm1799
        %vm1832 = vmpackc.low %vm1800, %vm1800
        %vm1833 = vmpackc.low %vm1801, %vm1801
        %vm1834 = vmpackc.low %vm1802, %vm1802
        %vm1835 = vmpackc.low %vm1803, %vm1803
        %vm1836 = vmpackc.low %vm1804, %vm1804
        %vm1837 = vmpackc.low %vm1805, %vm1805
        %vm1838 = vmpackc.low %vm1806, %vm1806
        %vm1839 = vmpackc.low %vm1807, %vm1807
        %vm1840 = vmpackc.low %vm1808, %vm1808
        %vm1841 = vmpackc.low %vm1809, %vm1809
        %vm1842 = vmpackc.low %vm1810, %vm1810
        %vm1843 = vmpackc.low %vm1811, %vm1811
        %vm1844 = vmpackc.low %vm1812, %vm1812
        %vm1845 = vmpackc.low %vm1813, %vm1813
        %v1846 = vsel %vm1814, 65537, 0
        %v1847 = vsel %vm1815, 65537, 0
        %v1848 = vsel %vm1816, 65537, 0
        %v1849 = vsel %vm1817, 65537, 0
        %v1850 = vsel %vm1818, 65537, 0
        %v1851 = vsel %vm1819, 65537, 0
        %v1852 = vsel %vm1820, 65537, 0
        %v1853 = vsel %vm1821, 65537, 0
        %v1854 = vsel %vm1822, 65537, 0
        %v1855 = vsel %vm1823, 65537, 0
        %v1856 = vsel %vm1824, 65537, 0
        %v1857 = vsel %vm1825, 65537, 0
        %v1858 = vsel %vm1826, 65537, 0
        %v1859 = vsel %vm1827, 65537, 0
        %v1860 = vsel %vm1828, 65537, 0
        %v1861 = vsel %vm1829, 65537, 0
        %v1862 = vsel %vm1830, 65537, 0
        %v1863 = vsel %vm1831, 65537, 0
        %v1864 = vsel %vm1832, 65537, 0
        %v1865 = vsel %vm1833, 65537, 0
        %v1866 = vsel %vm1834, 65537, 0
        %v1867 = vsel %vm1835, 65537, 0
        %v1868 = vsel %vm1836, 65537, 0
        %v1869 = vsel %vm1837, 65537, 0
        %v1870 = vsel %vm1838, 65537, 0
        %v1871 = vsel %vm1839, 65537, 0
        %v1872 = vsel %vm1840, 65537, 0
        %v1873 = vsel %vm1841, 65537, 0
        %v1874 = vsel %vm1842, 65537, 0
        %v1875 = vsel %vm1843, 65537, 0
        %v1876 = vsel %vm1844, 65537, 0
        %v1877 = vsel %vm1845, 65537, 0
        %v1878 = vunpack.c.l.b16 %v1846
        %v1879 = vunpack.c.l.b16 %v1847
        %v1880 = vunpack.c.l.b16 %v1848
        %v1881 = vunpack.c.l.b16 %v1849
        %v1882 = vunpack.c.l.b16 %v1850
        %v1883 = vunpack.c.l.b16 %v1851
        %v1884 = vunpack.c.l.b16 %v1852
        %v1885 = vunpack.c.l.b16 %v1853
        %v1886 = vunpack.c.l.b16 %v1854
        %v1887 = vunpack.c.l.b16 %v1855
        %v1888 = vunpack.c.l.b16 %v1856
        %v1889 = vunpack.c.l.b16 %v1857
        %v1890 = vunpack.c.l.b16 %v1858
        %v1891 = vunpack.c.l.b16 %v1859
        %v1892 = vunpack.c.l.b16 %v1860
        %v1893 = vunpack.c.l.b16 %v1861
        %v1894 = vunpack.c.l.b16 %v1862
        %v1895 = vunpack.c.l.b16 %v1863
        %v1896 = vunpack.c.l.b16 %v1864
        %v1897 = vunpack.c.l.b16 %v1865
        %v1898 = vunpack.c.l.b16 %v1866
        %v1899 = vunpack.c.l.b16 %v1867
        %v1900 = vunpack.c.l.b16 %v1868
        %v1901 = vunpack.c.l.b16 %v1869
        %v1902 = vunpack.c.l.b16 %v1870
        %v1903 = vunpack.c.l.b16 %v1871
        %v1904 = vunpack.c.l.b16 %v1872
        %v1905 = vunpack.c.l.b16 %v1873
        %v1906 = vunpack.c.l.b16 %v1874
        %v1907 = vunpack.c.l.b16 %v1875
        %v1908 = vunpack.c.l.b16 %v1876
        %v1909 = vunpack.c.l.b16 %v1877
        %v1910 = vpack.c.b16 %v1879, %v1878
        %v1911 = vpack.c.b16 %v1881, %v1880
        %v1912 = vpack.c.b16 %v1883, %v1882
        %v1913 = vpack.c.b16 %v1885, %v1884
        %v1914 = vpack.c.b16 %v1887, %v1886
        %v1915 = vpack.c.b16 %v1889, %v1888
        %v1916 = vpack.c.b16 %v1891, %v1890
        %v1917 = vpack.c.b16 %v1893, %v1892
        %v1918 = vpack.c.b16 %v1895, %v1894
        %v1919 = vpack.c.b16 %v1897, %v1896
        %v1920 = vpack.c.b16 %v1899, %v1898
        %v1921 = vpack.c.b16 %v1901, %v1900
        %v1922 = vpack.c.b16 %v1903, %v1902
        %v1923 = vpack.c.b16 %v1905, %v1904
        %v1924 = vpack.c.b16 %v1907, %v1906
        %v1925 = vpack.c.b16 %v1909, %v1908
        %vm1926 = vcmp.ne.s16.totalorder %v1910, 0
        %vm1927 = vcmp.ne.s16.totalorder %v1911, 0
        %vm1928 = vcmp.ne.s16.totalorder %v1912, 0
        %vm1929 = vcmp.ne.s16.totalorder %v1913, 0
        %vm1930 = vcmp.ne.s16.totalorder %v1914, 0
        %vm1931 = vcmp.ne.s16.totalorder %v1915, 0
        %vm1932 = vcmp.ne.s16.totalorder %v1916, 0
        %vm1933 = vcmp.ne.s16.totalorder %v1917, 0
        %vm1934 = vcmp.ne.s16.totalorder %v1918, 0
        %vm1935 = vcmp.ne.s16.totalorder %v1919, 0
        %vm1936 = vcmp.ne.s16.totalorder %v1920, 0
        %vm1937 = vcmp.ne.s16.totalorder %v1921, 0
        %vm1938 = vcmp.ne.s16.totalorder %v1922, 0
        %vm1939 = vcmp.ne.s16.totalorder %v1923, 0
        %vm1940 = vcmp.ne.s16.totalorder %v1924, 0
        %vm1941 = vcmp.ne.s16.totalorder %v1925, 0
        %v1942 = vsel %vm1926, %v577, 0
        %v1943 = vsel %vm1927, %v459, 0
        %v1944 = vsel %vm1928, %v467, 0
        %v1945 = vsel %vm1929, %v475, 0
        %v1946 = vsel %vm1930, %v483, 0
        %v1947 = vsel %vm1931, %v491, 0
        %v1948 = vsel %vm1932, %v499, 0
        %v1949 = vsel %vm1933, %v507, 0
        %v1950 = vsel %vm1934, %v515, 0
        %v1951 = vsel %vm1935, %v523, 0
        %v1952 = vsel %vm1936, %v531, 0
        %v1953 = vsel %vm1937, %v539, 0
        %v1954 = vsel %vm1938, %v547, 0
        %v1955 = vsel %vm1939, %v555, 0
        %v1956 = vsel %vm1940, %v559, 0
        %v1957 = vsel %vm1941, %v442, 0
        %vm1958 = vmand %vm1718, %vm1010
        %vm1959 = vmand %vm1719, %vm1011
        %vm1960 = vmand %vm1720, %vm1012
        %vm1961 = vmand %vm1721, %vm1013
        %vm1962 = vmand %vm1722, %vm1014
        %vm1963 = vmand %vm1723, %vm1015
        %vm1964 = vmand %vm1724, %vm1016
        %vm1965 = vmand %vm1725, %vm1017
        %vm1966 = vmand %vm1726, %vm1018
        %vm1967 = vmand %vm1727, %vm1019
        %vm1968 = vmand %vm1728, %vm1020
        %vm1969 = vmand %vm1729, %vm1021
        %vm1970 = vmand %vm1730, %vm1022
        %vm1971 = vmand %vm1731, %vm1023
        %vm1972 = vmand %vm1732, %vm1024
        %vm1973 = vmand %vm1733, %vm1025
        %vm1974 = vmand %vm1734, %vm1026
        %vm1975 = vmand %vm1735, %vm1027
        %vm1976 = vmand %vm1736, %vm1028
        %vm1977 = vmand %vm1737, %vm1029
        %vm1978 = vmand %vm1738, %vm1030
        %vm1979 = vmand %vm1739, %vm1031
        %vm1980 = vmand %vm1740, %vm1032
        %vm1981 = vmand %vm1741, %vm1033
        %vm1982 = vmand %vm1742, %vm1034
        %vm1983 = vmand %vm1743, %vm1035
        %vm1984 = vmand %vm1744, %vm1036
        %vm1985 = vmand %vm1745, %vm1037
        %vm1986 = vmand %vm1746, %vm1038
        %vm1987 = vmand %vm1747, %vm1039
        %vm1988 = vmand %vm1748, %vm1040
        %vm1989 = vmand %vm1749, %vm1041
        %vm1990 = vmand %vm1958, %vm1074
        %vm1991 = vmand %vm1959, %vm1075
        %vm1992 = vmand %vm1960, %vm1076
        %vm1993 = vmand %vm1961, %vm1077
        %vm1994 = vmand %vm1962, %vm1078
        %vm1995 = vmand %vm1963, %vm1079
        %vm1996 = vmand %vm1964, %vm1080
        %vm1997 = vmand %vm1965, %vm1081
        %vm1998 = vmand %vm1966, %vm1082
        %vm1999 = vmand %vm1967, %vm1083
        %vm2000 = vmand %vm1968, %vm1084
        %vm2001 = vmand %vm1969, %vm1085
        %vm2002 = vmand %vm1970, %vm1086
        %vm2003 = vmand %vm1971, %vm1087
        %vm2004 = vmand %vm1972, %vm1088
        %vm2005 = vmand %vm1973, %vm1089
        %vm2006 = vmand %vm1974, %vm1090
        %vm2007 = vmand %vm1975, %vm1091
        %vm2008 = vmand %vm1976, %vm1092
        %vm2009 = vmand %vm1977, %vm1093
        %vm2010 = vmand %vm1978, %vm1094
        %vm2011 = vmand %vm1979, %vm1095
        %vm2012 = vmand %vm1980, %vm1096
        %vm2013 = vmand %vm1981, %vm1097
        %vm2014 = vmand %vm1982, %vm1098
        %vm2015 = vmand %vm1983, %vm1099
        %vm2016 = vmand %vm1984, %vm1100
        %vm2017 = vmand %vm1985, %vm1101
        %vm2018 = vmand %vm1986, %vm1102
        %vm2019 = vmand %vm1987, %vm1103
        %vm2020 = vmand %vm1988, %vm1104
        %vm2021 = vmand %vm1989, %vm1105
        %vm2022 = vmpackc.low %vm1990, %vm1990
        %vm2023 = vmpackc.low %vm1991, %vm1991
        %vm2024 = vmpackc.low %vm1992, %vm1992
        %vm2025 = vmpackc.low %vm1993, %vm1993
        %vm2026 = vmpackc.low %vm1994, %vm1994
        %vm2027 = vmpackc.low %vm1995, %vm1995
        %vm2028 = vmpackc.low %vm1996, %vm1996
        %vm2029 = vmpackc.low %vm1997, %vm1997
        %vm2030 = vmpackc.low %vm1998, %vm1998
        %vm2031 = vmpackc.low %vm1999, %vm1999
        %vm2032 = vmpackc.low %vm2000, %vm2000
        %vm2033 = vmpackc.low %vm2001, %vm2001
        %vm2034 = vmpackc.low %vm2002, %vm2002
        %vm2035 = vmpackc.low %vm2003, %vm2003
        %vm2036 = vmpackc.low %vm2004, %vm2004
        %vm2037 = vmpackc.low %vm2005, %vm2005
        %vm2038 = vmpackc.low %vm2006, %vm2006
        %vm2039 = vmpackc.low %vm2007, %vm2007
        %vm2040 = vmpackc.low %vm2008, %vm2008
        %vm2041 = vmpackc.low %vm2009, %vm2009
        %vm2042 = vmpackc.low %vm2010, %vm2010
        %vm2043 = vmpackc.low %vm2011, %vm2011
        %vm2044 = vmpackc.low %vm2012, %vm2012
        %vm2045 = vmpackc.low %vm2013, %vm2013
        %vm2046 = vmpackc.low %vm2014, %vm2014
        %vm2047 = vmpackc.low %vm2015, %vm2015
        %vm2048 = vmpackc.low %vm2016, %vm2016
        %vm2049 = vmpackc.low %vm2017, %vm2017
        %vm2050 = vmpackc.low %vm2018, %vm2018
        %vm2051 = vmpackc.low %vm2019, %vm2019
        %vm2052 = vmpackc.low %vm2020, %vm2020
        %vm2053 = vmpackc.low %vm2021, %vm2021
        %v2054 = vsel %vm2022, 65537, 0
        %v2055 = vsel %vm2023, 65537, 0
        %v2056 = vsel %vm2024, 65537, 0
        %v2057 = vsel %vm2025, 65537, 0
        %v2058 = vsel %vm2026, 65537, 0
        %v2059 = vsel %vm2027, 65537, 0
        %v2060 = vsel %vm2028, 65537, 0
        %v2061 = vsel %vm2029, 65537, 0
        %v2062 = vsel %vm2030, 65537, 0
        %v2063 = vsel %vm2031, 65537, 0
        %v2064 = vsel %vm2032, 65537, 0
        %v2065 = vsel %vm2033, 65537, 0
        %v2066 = vsel %vm2034, 65537, 0
        %v2067 = vsel %vm2035, 65537, 0
        %v2068 = vsel %vm2036, 65537, 0
        %v2069 = vsel %vm2037, 65537, 0
        %v2070 = vsel %vm2038, 65537, 0
        %v2071 = vsel %vm2039, 65537, 0
        %v2072 = vsel %vm2040, 65537, 0
        %v2073 = vsel %vm2041, 65537, 0
        %v2074 = vsel %vm2042, 65537, 0
        %v2075 = vsel %vm2043, 65537, 0
        %v2076 = vsel %vm2044, 65537, 0
        %v2077 = vsel %vm2045, 65537, 0
        %v2078 = vsel %vm2046, 65537, 0
        %v2079 = vsel %vm2047, 65537, 0
        %v2080 = vsel %vm2048, 65537, 0
        %v2081 = vsel %vm2049, 65537, 0
        %v2082 = vsel %vm2050, 65537, 0
        %v2083 = vsel %vm2051, 65537, 0
        %v2084 = vsel %vm2052, 65537, 0
        %v2085 = vsel %vm2053, 65537, 0
        %v2086 = vunpack.c.l.b16 %v2054
        %v2087 = vunpack.c.l.b16 %v2055
        %v2088 = vunpack.c.l.b16 %v2056
        %v2089 = vunpack.c.l.b16 %v2057
        %v2090 = vunpack.c.l.b16 %v2058
        %v2091 = vunpack.c.l.b16 %v2059
        %v2092 = vunpack.c.l.b16 %v2060
        %v2093 = vunpack.c.l.b16 %v2061
        %v2094 = vunpack.c.l.b16 %v2062
        %v2095 = vunpack.c.l.b16 %v2063
        %v2096 = vunpack.c.l.b16 %v2064
        %v2097 = vunpack.c.l.b16 %v2065
        %v2098 = vunpack.c.l.b16 %v2066
        %v2099 = vunpack.c.l.b16 %v2067
        %v2100 = vunpack.c.l.b16 %v2068
        %v2101 = vunpack.c.l.b16 %v2069
        %v2102 = vunpack.c.l.b16 %v2070
        %v2103 = vunpack.c.l.b16 %v2071
        %v2104 = vunpack.c.l.b16 %v2072
        %v2105 = vunpack.c.l.b16 %v2073
        %v2106 = vunpack.c.l.b16 %v2074
        %v2107 = vunpack.c.l.b16 %v2075
        %v2108 = vunpack.c.l.b16 %v2076
        %v2109 = vunpack.c.l.b16 %v2077
        %v2110 = vunpack.c.l.b16 %v2078
        %v2111 = vunpack.c.l.b16 %v2079
        %v2112 = vunpack.c.l.b16 %v2080
        %v2113 = vunpack.c.l.b16 %v2081
        %v2114 = vunpack.c.l.b16 %v2082
        %v2115 = vunpack.c.l.b16 %v2083
        %v2116 = vunpack.c.l.b16 %v2084
        %v2117 = vunpack.c.l.b16 %v2085
        %v2118 = vpack.c.b16 %v2087, %v2086
        %v2119 = vpack.c.b16 %v2089, %v2088
        %v2120 = vpack.c.b16 %v2091, %v2090
        %v2121 = vpack.c.b16 %v2093, %v2092
        %v2122 = vpack.c.b16 %v2095, %v2094
        %v2123 = vpack.c.b16 %v2097, %v2096
        %v2124 = vpack.c.b16 %v2099, %v2098
        %v2125 = vpack.c.b16 %v2101, %v2100
        %v2126 = vpack.c.b16 %v2103, %v2102
        %v2127 = vpack.c.b16 %v2105, %v2104
        %v2128 = vpack.c.b16 %v2107, %v2106
        %v2129 = vpack.c.b16 %v2109, %v2108
        %v2130 = vpack.c.b16 %v2111, %v2110
        %v2131 = vpack.c.b16 %v2113, %v2112
        %v2132 = vpack.c.b16 %v2115, %v2114
        %v2133 = vpack.c.b16 %v2117, %v2116
        %vm2134 = vcmp.ne.s16.totalorder %v2118, 0
        %vm2135 = vcmp.ne.s16.totalorder %v2119, 0
        %vm2136 = vcmp.ne.s16.totalorder %v2120, 0
        %vm2137 = vcmp.ne.s16.totalorder %v2121, 0
        %vm2138 = vcmp.ne.s16.totalorder %v2122, 0
        %vm2139 = vcmp.ne.s16.totalorder %v2123, 0
        %vm2140 = vcmp.ne.s16.totalorder %v2124, 0
        %vm2141 = vcmp.ne.s16.totalorder %v2125, 0
        %vm2142 = vcmp.ne.s16.totalorder %v2126, 0
        %vm2143 = vcmp.ne.s16.totalorder %v2127, 0
        %vm2144 = vcmp.ne.s16.totalorder %v2128, 0
        %vm2145 = vcmp.ne.s16.totalorder %v2129, 0
        %vm2146 = vcmp.ne.s16.totalorder %v2130, 0
        %vm2147 = vcmp.ne.s16.totalorder %v2131, 0
        %vm2148 = vcmp.ne.s16.totalorder %v2132, 0
        %vm2149 = vcmp.ne.s16.totalorder %v2133, 0
        %v2150 = vsel %vm2134, %v414, 0
        %v2151 = vsel %vm2135, %v415, 0
        %v2152 = vsel %vm2136, %v416, 0
        %v2153 = vsel %vm2137, %v417, 0
        %v2154 = vsel %vm2138, %v418, 0
        %v2155 = vsel %vm2139, %v419, 0
        %v2156 = vsel %vm2140, %v420, 0
        %v2157 = vsel %vm2141, %v421, 0
        %v2158 = vsel %vm2142, %v422, 0
        %v2159 = vsel %vm2143, %v423, 0
        %v2160 = vsel %vm2144, %v424, 0
        %v2161 = vsel %vm2145, %v425, 0
        %v2162 = vsel %vm2146, %v426, 0
        %v2163 = vsel %vm2147, %v427, 0
        %v2164 = vsel %vm2148, %v428, 0
        %v2165 = vsel %vm2149, %v429, 0
        %vm2166 = vmand %vm1718, %vm1382
        %vm2167 = vmand %vm1719, %vm1383
        %vm2168 = vmand %vm1720, %vm1384
        %vm2169 = vmand %vm1721, %vm1385
        %vm2170 = vmand %vm1722, %vm1386
        %vm2171 = vmand %vm1723, %vm1387
        %vm2172 = vmand %vm1724, %vm1388
        %vm2173 = vmand %vm1725, %vm1389
        %vm2174 = vmand %vm1726, %vm1390
        %vm2175 = vmand %vm1727, %vm1391
        %vm2176 = vmand %vm1728, %vm1392
        %vm2177 = vmand %vm1729, %vm1393
        %vm2178 = vmand %vm1730, %vm1394
        %vm2179 = vmand %vm1731, %vm1395
        %vm2180 = vmand %vm1732, %vm1396
        %vm2181 = vmand %vm1733, %vm1397
        %vm2182 = vmand %vm1734, %vm1398
        %vm2183 = vmand %vm1735, %vm1399
        %vm2184 = vmand %vm1736, %vm1400
        %vm2185 = vmand %vm1737, %vm1401
        %vm2186 = vmand %vm1738, %vm1402
        %vm2187 = vmand %vm1739, %vm1403
        %vm2188 = vmand %vm1740, %vm1404
        %vm2189 = vmand %vm1741, %vm1405
        %vm2190 = vmand %vm1742, %vm1406
        %vm2191 = vmand %vm1743, %vm1407
        %vm2192 = vmand %vm1744, %vm1408
        %vm2193 = vmand %vm1745, %vm1409
        %vm2194 = vmand %vm1746, %vm1410
        %vm2195 = vmand %vm1747, %vm1411
        %vm2196 = vmand %vm1748, %vm1412
        %vm2197 = vmand %vm1749, %vm1413
        %vm2198 = vmand %vm2166, %vm1446
        %vm2199 = vmand %vm2167, %vm1447
        %vm2200 = vmand %vm2168, %vm1448
        %vm2201 = vmand %vm2169, %vm1449
        %vm2202 = vmand %vm2170, %vm1450
        %vm2203 = vmand %vm2171, %vm1451
        %vm2204 = vmand %vm2172, %vm1452
        %vm2205 = vmand %vm2173, %vm1453
        %vm2206 = vmand %vm2174, %vm1454
        %vm2207 = vmand %vm2175, %vm1455
        %vm2208 = vmand %vm2176, %vm1456
        %vm2209 = vmand %vm2177, %vm1457
        %vm2210 = vmand %vm2178, %vm1458
        %vm2211 = vmand %vm2179, %vm1459
        %vm2212 = vmand %vm2180, %vm1460
        %vm2213 = vmand %vm2181, %vm1461
        %vm2214 = vmand %vm2182, %vm1462
        %vm2215 = vmand %vm2183, %vm1463
        %vm2216 = vmand %vm2184, %vm1464
        %vm2217 = vmand %vm2185, %vm1465
        %vm2218 = vmand %vm2186, %vm1466
        %vm2219 = vmand %vm2187, %vm1467
        %vm2220 = vmand %vm2188, %vm1468
        %vm2221 = vmand %vm2189, %vm1469
        %vm2222 = vmand %vm2190, %vm1470
        %vm2223 = vmand %vm2191, %vm1471
        %vm2224 = vmand %vm2192, %vm1472
        %vm2225 = vmand %vm2193, %vm1473
        %vm2226 = vmand %vm2194, %vm1474
        %vm2227 = vmand %vm2195, %vm1475
        %vm2228 = vmand %vm2196, %vm1476
        %vm2229 = vmand %vm2197, %vm1477
        %vm2230 = vmpackc.low %vm2198, %vm2198
        %vm2231 = vmpackc.low %vm2199, %vm2199
        %vm2232 = vmpackc.low %vm2200, %vm2200
        %vm2233 = vmpackc.low %vm2201, %vm2201
        %vm2234 = vmpackc.low %vm2202, %vm2202
        %vm2235 = vmpackc.low %vm2203, %vm2203
        %vm2236 = vmpackc.low %vm2204, %vm2204
        %vm2237 = vmpackc.low %vm2205, %vm2205
        %vm2238 = vmpackc.low %vm2206, %vm2206
        %vm2239 = vmpackc.low %vm2207, %vm2207
        %vm2240 = vmpackc.low %vm2208, %vm2208
        %vm2241 = vmpackc.low %vm2209, %vm2209
        %vm2242 = vmpackc.low %vm2210, %vm2210
        %vm2243 = vmpackc.low %vm2211, %vm2211
        %vm2244 = vmpackc.low %vm2212, %vm2212
        %vm2245 = vmpackc.low %vm2213, %vm2213
        %vm2246 = vmpackc.low %vm2214, %vm2214
        %vm2247 = vmpackc.low %vm2215, %vm2215
        %vm2248 = vmpackc.low %vm2216, %vm2216
        %vm2249 = vmpackc.low %vm2217, %vm2217
        %vm2250 = vmpackc.low %vm2218, %vm2218
        %vm2251 = vmpackc.low %vm2219, %vm2219
        %vm2252 = vmpackc.low %vm2220, %vm2220
        %vm2253 = vmpackc.low %vm2221, %vm2221
        %vm2254 = vmpackc.low %vm2222, %vm2222
        %vm2255 = vmpackc.low %vm2223, %vm2223
        %vm2256 = vmpackc.low %vm2224, %vm2224
        %vm2257 = vmpackc.low %vm2225, %vm2225
        %vm2258 = vmpackc.low %vm2226, %vm2226
        %vm2259 = vmpackc.low %vm2227, %vm2227
        %vm2260 = vmpackc.low %vm2228, %vm2228
        %vm2261 = vmpackc.low %vm2229, %vm2229
        %v2262 = vsel %vm2230, 65537, 0
        %v2263 = vsel %vm2231, 65537, 0
        %v2264 = vsel %vm2232, 65537, 0
        %v2265 = vsel %vm2233, 65537, 0
        %v2266 = vsel %vm2234, 65537, 0
        %v2267 = vsel %vm2235, 65537, 0
        %v2268 = vsel %vm2236, 65537, 0
        %v2269 = vsel %vm2237, 65537, 0
        %v2270 = vsel %vm2238, 65537, 0
        %v2271 = vsel %vm2239, 65537, 0
        %v2272 = vsel %vm2240, 65537, 0
        %v2273 = vsel %vm2241, 65537, 0
        %v2274 = vsel %vm2242, 65537, 0
        %v2275 = vsel %vm2243, 65537, 0
        %v2276 = vsel %vm2244, 65537, 0
        %v2277 = vsel %vm2245, 65537, 0
        %v2278 = vsel %vm2246, 65537, 0
        %v2279 = vsel %vm2247, 65537, 0
        %v2280 = vsel %vm2248, 65537, 0
        %v2281 = vsel %vm2249, 65537, 0
        %v2282 = vsel %vm2250, 65537, 0
        %v2283 = vsel %vm2251, 65537, 0
        %v2284 = vsel %vm2252, 65537, 0
        %v2285 = vsel %vm2253, 65537, 0
        %v2286 = vsel %vm2254, 65537, 0
        %v2287 = vsel %vm2255, 65537, 0
        %v2288 = vsel %vm2256, 65537, 0
        %v2289 = vsel %vm2257, 65537, 0
        %v2290 = vsel %vm2258, 65537, 0
        %v2291 = vsel %vm2259, 65537, 0
        %v2292 = vsel %vm2260, 65537, 0
        %v2293 = vsel %vm2261, 65537, 0
        %v2294 = vunpack.c.l.b16 %v2262
        %v2295 = vunpack.c.l.b16 %v2263
        %v2296 = vunpack.c.l.b16 %v2264
        %v2297 = vunpack.c.l.b16 %v2265
        %v2298 = vunpack.c.l.b16 %v2266
        %v2299 = vunpack.c.l.b16 %v2267
        %v2300 = vunpack.c.l.b16 %v2268
        %v2301 = vunpack.c.l.b16 %v2269
        %v2302 = vunpack.c.l.b16 %v2270
        %v2303 = vunpack.c.l.b16 %v2271
        %v2304 = vunpack.c.l.b16 %v2272
        %v2305 = vunpack.c.l.b16 %v2273
        %v2306 = vunpack.c.l.b16 %v2274
        %v2307 = vunpack.c.l.b16 %v2275
        %v2308 = vunpack.c.l.b16 %v2276
        %v2309 = vunpack.c.l.b16 %v2277
        %v2310 = vunpack.c.l.b16 %v2278
        %v2311 = vunpack.c.l.b16 %v2279
        %v2312 = vunpack.c.l.b16 %v2280
        %v2313 = vunpack.c.l.b16 %v2281
        %v2314 = vunpack.c.l.b16 %v2282
        %v2315 = vunpack.c.l.b16 %v2283
        %v2316 = vunpack.c.l.b16 %v2284
        %v2317 = vunpack.c.l.b16 %v2285
        %v2318 = vunpack.c.l.b16 %v2286
        %v2319 = vunpack.c.l.b16 %v2287
        %v2320 = vunpack.c.l.b16 %v2288
        %v2321 = vunpack.c.l.b16 %v2289
        %v2322 = vunpack.c.l.b16 %v2290
        %v2323 = vunpack.c.l.b16 %v2291
        %v2324 = vunpack.c.l.b16 %v2292
        %v2325 = vunpack.c.l.b16 %v2293
        %v2326 = vpack.c.b16 %v2295, %v2294
        %v2327 = vpack.c.b16 %v2297, %v2296
        %v2328 = vpack.c.b16 %v2299, %v2298
        %v2329 = vpack.c.b16 %v2301, %v2300
        %v2330 = vpack.c.b16 %v2303, %v2302
        %v2331 = vpack.c.b16 %v2305, %v2304
        %v2332 = vpack.c.b16 %v2307, %v2306
        %v2333 = vpack.c.b16 %v2309, %v2308
        %v2334 = vpack.c.b16 %v2311, %v2310
        %v2335 = vpack.c.b16 %v2313, %v2312
        %v2336 = vpack.c.b16 %v2315, %v2314
        %v2337 = vpack.c.b16 %v2317, %v2316
        %v2338 = vpack.c.b16 %v2319, %v2318
        %v2339 = vpack.c.b16 %v2321, %v2320
        %v2340 = vpack.c.b16 %v2323, %v2322
        %v2341 = vpack.c.b16 %v2325, %v2324
        %vm2342 = vcmp.ne.s16.totalorder %v2326, 0
        %vm2343 = vcmp.ne.s16.totalorder %v2327, 0
        %vm2344 = vcmp.ne.s16.totalorder %v2328, 0
        %vm2345 = vcmp.ne.s16.totalorder %v2329, 0
        %vm2346 = vcmp.ne.s16.totalorder %v2330, 0
        %vm2347 = vcmp.ne.s16.totalorder %v2331, 0
        %vm2348 = vcmp.ne.s16.totalorder %v2332, 0
        %vm2349 = vcmp.ne.s16.totalorder %v2333, 0
        %vm2350 = vcmp.ne.s16.totalorder %v2334, 0
        %vm2351 = vcmp.ne.s16.totalorder %v2335, 0
        %vm2352 = vcmp.ne.s16.totalorder %v2336, 0
        %vm2353 = vcmp.ne.s16.totalorder %v2337, 0
        %vm2354 = vcmp.ne.s16.totalorder %v2338, 0
        %vm2355 = vcmp.ne.s16.totalorder %v2339, 0
        %vm2356 = vcmp.ne.s16.totalorder %v2340, 0
        %vm2357 = vcmp.ne.s16.totalorder %v2341, 0
        %v2358 = vsel %vm2342, %v1289, 0
        %v2359 = vsel %vm2343, %v1292, 0
        %v2360 = vsel %vm2344, %v1295, 0
        %v2361 = vsel %vm2345, %v1298, 0
        %v2362 = vsel %vm2346, %v1301, 0
        %v2363 = vsel %vm2347, %v1304, 0
        %v2364 = vsel %vm2348, %v1307, 0
        %v2365 = vsel %vm2349, %v1310, 0
        %v2366 = vsel %vm2350, %v1313, 0
        %v2367 = vsel %vm2351, %v1316, 0
        %v2368 = vsel %vm2352, %v1319, 0
        %v2369 = vsel %vm2353, %v1322, 0
        %v2370 = vsel %vm2354, %v1325, 0
        %v2371 = vsel %vm2355, %v1328, 0
        %v2372 = vsel %vm2356, %v1330, 0
        %v2373 = vsel %vm2357, %v1349, 0
        %v2374 = vadd.s32 %v382, 1
        %v2375 = vadd.s32 %v383, 1
        %v2376 = vadd.s32 %v384, 1
        %v2377 = vadd.s32 %v385, 1
        %v2378 = vadd.s32 %v386, 1
        %v2379 = vadd.s32 %v387, 1
        %v2380 = vadd.s32 %v388, 1
        %v2381 = vadd.s32 %v389, 1
        %v2382 = vadd.s32 %v390, 1
        %v2383 = vadd.s32 %v391, 1
        %v2384 = vadd.s32 %v392, 1
        %v2385 = vadd.s32 %v393, 1
        %v2386 = vadd.s32 %v394, 1
        %v2387 = vadd.s32 %v395, 1
        %v2388 = vadd.s32 %v396, 1
        %v2389 = vadd.s32 %v397, 1
        %v2390 = vadd.s32 %v398, 1
        %v2391 = vadd.s32 %v399, 1
        %v2392 = vadd.s32 %v400, 1
        %v2393 = vadd.s32 %v401, 1
        %v2394 = vadd.s32 %v402, 1
        %v2395 = vadd.s32 %v403, 1
        %v2396 = vadd.s32 %v404, 1
        %v2397 = vadd.s32 %v405, 1
        %v2398 = vadd.s32 %v406, 1
        %v2399 = vadd.s32 %v407, 1
        %v2400 = vadd.s32 %v408, 1
        %v2401 = vadd.s32 %v409, 1
        %v2402 = vadd.s32 %v410, 1
        %v2403 = vadd.s32 %v411, 1
        %v2404 = vadd.s32 %v412, 1
        %v2405 = vadd.s32 %v413, 1
        %vm2406 = vcmp.ge.s32.totalorder %v2374, 0
        %vm2407 = vcmp.ge.s32.totalorder %v2375, 0
        %vm2408 = vcmp.ge.s32.totalorder %v2376, 0
        %vm2409 = vcmp.ge.s32.totalorder %v2377, 0
        %vm2410 = vcmp.ge.s32.totalorder %v2378, 0
        %vm2411 = vcmp.ge.s32.totalorder %v2379, 0
        %vm2412 = vcmp.ge.s32.totalorder %v2380, 0
        %vm2413 = vcmp.ge.s32.totalorder %v2381, 0
        %vm2414 = vcmp.ge.s32.totalorder %v2382, 0
        %vm2415 = vcmp.ge.s32.totalorder %v2383, 0
        %vm2416 = vcmp.ge.s32.totalorder %v2384, 0
        %vm2417 = vcmp.ge.s32.totalorder %v2385, 0
        %vm2418 = vcmp.ge.s32.totalorder %v2386, 0
        %vm2419 = vcmp.ge.s32.totalorder %v2387, 0
        %vm2420 = vcmp.ge.s32.totalorder %v2388, 0
        %vm2421 = vcmp.ge.s32.totalorder %v2389, 0
        %vm2422 = vcmp.ge.s32.totalorder %v2390, 0
        %vm2423 = vcmp.ge.s32.totalorder %v2391, 0
        %vm2424 = vcmp.ge.s32.totalorder %v2392, 0
        %vm2425 = vcmp.ge.s32.totalorder %v2393, 0
        %vm2426 = vcmp.ge.s32.totalorder %v2394, 0
        %vm2427 = vcmp.ge.s32.totalorder %v2395, 0
        %vm2428 = vcmp.ge.s32.totalorder %v2396, 0
        %vm2429 = vcmp.ge.s32.totalorder %v2397, 0
        %vm2430 = vcmp.ge.s32.totalorder %v2398, 0
        %vm2431 = vcmp.ge.s32.totalorder %v2399, 0
        %vm2432 = vcmp.ge.s32.totalorder %v2400, 0
        %vm2433 = vcmp.ge.s32.totalorder %v2401, 0
        %vm2434 = vcmp.ge.s32.totalorder %v2402, 0
        %vm2435 = vcmp.ge.s32.totalorder %v2403, 0
        %vm2436 = vcmp.ge.s32.totalorder %v2404, 0
        %vm2437 = vcmp.ge.s32.totalorder %v2405, 0
        %vm2438 = vcmp.lt.s32.totalorder %v2374, 16
        %vm2439 = vcmp.lt.s32.totalorder %v2375, 16
        %vm2440 = vcmp.lt.s32.totalorder %v2376, 16
        %vm2441 = vcmp.lt.s32.totalorder %v2377, 16
        %vm2442 = vcmp.lt.s32.totalorder %v2378, 16
        %vm2443 = vcmp.lt.s32.totalorder %v2379, 16
        %vm2444 = vcmp.lt.s32.totalorder %v2380, 16
        %vm2445 = vcmp.lt.s32.totalorder %v2381, 16
        %vm2446 = vcmp.lt.s32.totalorder %v2382, 16
        %vm2447 = vcmp.lt.s32.totalorder %v2383, 16
        %vm2448 = vcmp.lt.s32.totalorder %v2384, 16
        %vm2449 = vcmp.lt.s32.totalorder %v2385, 16
        %vm2450 = vcmp.lt.s32.totalorder %v2386, 16
        %vm2451 = vcmp.lt.s32.totalorder %v2387, 16
        %vm2452 = vcmp.lt.s32.totalorder %v2388, 16
        %vm2453 = vcmp.lt.s32.totalorder %v2389, 16
        %vm2454 = vcmp.lt.s32.totalorder %v2390, 16
        %vm2455 = vcmp.lt.s32.totalorder %v2391, 16
        %vm2456 = vcmp.lt.s32.totalorder %v2392, 16
        %vm2457 = vcmp.lt.s32.totalorder %v2393, 16
        %vm2458 = vcmp.lt.s32.totalorder %v2394, 16
        %vm2459 = vcmp.lt.s32.totalorder %v2395, 16
        %vm2460 = vcmp.lt.s32.totalorder %v2396, 16
        %vm2461 = vcmp.lt.s32.totalorder %v2397, 16
        %vm2462 = vcmp.lt.s32.totalorder %v2398, 16
        %vm2463 = vcmp.lt.s32.totalorder %v2399, 16
        %vm2464 = vcmp.lt.s32.totalorder %v2400, 16
        %vm2465 = vcmp.lt.s32.totalorder %v2401, 16
        %vm2466 = vcmp.lt.s32.totalorder %v2402, 16
        %vm2467 = vcmp.lt.s32.totalorder %v2403, 16
        %vm2468 = vcmp.lt.s32.totalorder %v2404, 16
        %vm2469 = vcmp.lt.s32.totalorder %v2405, 16
        %vm2470 = vmand %vm2406, %vm2438
        %vm2471 = vmand %vm2407, %vm2439
        %vm2472 = vmand %vm2408, %vm2440
        %vm2473 = vmand %vm2409, %vm2441
        %vm2474 = vmand %vm2410, %vm2442
        %vm2475 = vmand %vm2411, %vm2443
        %vm2476 = vmand %vm2412, %vm2444
        %vm2477 = vmand %vm2413, %vm2445
        %vm2478 = vmand %vm2414, %vm2446
        %vm2479 = vmand %vm2415, %vm2447
        %vm2480 = vmand %vm2416, %vm2448
        %vm2481 = vmand %vm2417, %vm2449
        %vm2482 = vmand %vm2418, %vm2450
        %vm2483 = vmand %vm2419, %vm2451
        %vm2484 = vmand %vm2420, %vm2452
        %vm2485 = vmand %vm2421, %vm2453
        %vm2486 = vmand %vm2422, %vm2454
        %vm2487 = vmand %vm2423, %vm2455
        %vm2488 = vmand %vm2424, %vm2456
        %vm2489 = vmand %vm2425, %vm2457
        %vm2490 = vmand %vm2426, %vm2458
        %vm2491 = vmand %vm2427, %vm2459
        %vm2492 = vmand %vm2428, %vm2460
        %vm2493 = vmand %vm2429, %vm2461
        %vm2494 = vmand %vm2430, %vm2462
        %vm2495 = vmand %vm2431, %vm2463
        %vm2496 = vmand %vm2432, %vm2464
        %vm2497 = vmand %vm2433, %vm2465
        %vm2498 = vmand %vm2434, %vm2466
        %vm2499 = vmand %vm2435, %vm2467
        %vm2500 = vmand %vm2436, %vm2468
        %vm2501 = vmand %vm2437, %vm2469
        %vm2502 = vmand %vm2470, %vm738
        %vm2503 = vmand %vm2471, %vm739
        %vm2504 = vmand %vm2472, %vm740
        %vm2505 = vmand %vm2473, %vm741
        %vm2506 = vmand %vm2474, %vm742
        %vm2507 = vmand %vm2475, %vm743
        %vm2508 = vmand %vm2476, %vm744
        %vm2509 = vmand %vm2477, %vm745
        %vm2510 = vmand %vm2478, %vm746
        %vm2511 = vmand %vm2479, %vm747
        %vm2512 = vmand %vm2480, %vm748
        %vm2513 = vmand %vm2481, %vm749
        %vm2514 = vmand %vm2482, %vm750
        %vm2515 = vmand %vm2483, %vm751
        %vm2516 = vmand %vm2484, %vm752
        %vm2517 = vmand %vm2485, %vm753
        %vm2518 = vmand %vm2486, %vm754
        %vm2519 = vmand %vm2487, %vm755
        %vm2520 = vmand %vm2488, %vm756
        %vm2521 = vmand %vm2489, %vm757
        %vm2522 = vmand %vm2490, %vm758
        %vm2523 = vmand %vm2491, %vm759
        %vm2524 = vmand %vm2492, %vm760
        %vm2525 = vmand %vm2493, %vm761
        %vm2526 = vmand %vm2494, %vm762
        %vm2527 = vmand %vm2495, %vm763
        %vm2528 = vmand %vm2496, %vm764
        %vm2529 = vmand %vm2497, %vm765
        %vm2530 = vmand %vm2498, %vm766
        %vm2531 = vmand %vm2499, %vm767
        %vm2532 = vmand %vm2500, %vm768
        %vm2533 = vmand %vm2501, %vm769
        %vm2534 = vmand %vm2502, %vm802
        %vm2535 = vmand %vm2503, %vm803
        %vm2536 = vmand %vm2504, %vm804
        %vm2537 = vmand %vm2505, %vm805
        %vm2538 = vmand %vm2506, %vm806
        %vm2539 = vmand %vm2507, %vm807
        %vm2540 = vmand %vm2508, %vm808
        %vm2541 = vmand %vm2509, %vm809
        %vm2542 = vmand %vm2510, %vm810
        %vm2543 = vmand %vm2511, %vm811
        %vm2544 = vmand %vm2512, %vm812
        %vm2545 = vmand %vm2513, %vm813
        %vm2546 = vmand %vm2514, %vm814
        %vm2547 = vmand %vm2515, %vm815
        %vm2548 = vmand %vm2516, %vm816
        %vm2549 = vmand %vm2517, %vm817
        %vm2550 = vmand %vm2518, %vm818
        %vm2551 = vmand %vm2519, %vm819
        %vm2552 = vmand %vm2520, %vm820
        %vm2553 = vmand %vm2521, %vm821
        %vm2554 = vmand %vm2522, %vm822
        %vm2555 = vmand %vm2523, %vm823
        %vm2556 = vmand %vm2524, %vm824
        %vm2557 = vmand %vm2525, %vm825
        %vm2558 = vmand %vm2526, %vm826
        %vm2559 = vmand %vm2527, %vm827
        %vm2560 = vmand %vm2528, %vm828
        %vm2561 = vmand %vm2529, %vm829
        %vm2562 = vmand %vm2530, %vm830
        %vm2563 = vmand %vm2531, %vm831
        %vm2564 = vmand %vm2532, %vm832
        %vm2565 = vmand %vm2533, %vm833
        %vm2566 = vmpackc.low %vm2534, %vm2534
        %vm2567 = vmpackc.low %vm2535, %vm2535
        %vm2568 = vmpackc.low %vm2536, %vm2536
        %vm2569 = vmpackc.low %vm2537, %vm2537
        %vm2570 = vmpackc.low %vm2538, %vm2538
        %vm2571 = vmpackc.low %vm2539, %vm2539
        %vm2572 = vmpackc.low %vm2540, %vm2540
        %vm2573 = vmpackc.low %vm2541, %vm2541
        %vm2574 = vmpackc.low %vm2542, %vm2542
        %vm2575 = vmpackc.low %vm2543, %vm2543
        %vm2576 = vmpackc.low %vm2544, %vm2544
        %vm2577 = vmpackc.low %vm2545, %vm2545
        %vm2578 = vmpackc.low %vm2546, %vm2546
        %vm2579 = vmpackc.low %vm2547, %vm2547
        %vm2580 = vmpackc.low %vm2548, %vm2548
        %vm2581 = vmpackc.low %vm2549, %vm2549
        %vm2582 = vmpackc.low %vm2550, %vm2550
        %vm2583 = vmpackc.low %vm2551, %vm2551
        %vm2584 = vmpackc.low %vm2552, %vm2552
        %vm2585 = vmpackc.low %vm2553, %vm2553
        %vm2586 = vmpackc.low %vm2554, %vm2554
        %vm2587 = vmpackc.low %vm2555, %vm2555
        %vm2588 = vmpackc.low %vm2556, %vm2556
        %vm2589 = vmpackc.low %vm2557, %vm2557
        %vm2590 = vmpackc.low %vm2558, %vm2558
        %vm2591 = vmpackc.low %vm2559, %vm2559
        %vm2592 = vmpackc.low %vm2560, %vm2560
        %vm2593 = vmpackc.low %vm2561, %vm2561
        %vm2594 = vmpackc.low %vm2562, %vm2562
        %vm2595 = vmpackc.low %vm2563, %vm2563
        %vm2596 = vmpackc.low %vm2564, %vm2564
        %vm2597 = vmpackc.low %vm2565, %vm2565
        %v2598 = vsel %vm2566, 65537, 0
        %v2599 = vsel %vm2567, 65537, 0
        %v2600 = vsel %vm2568, 65537, 0
        %v2601 = vsel %vm2569, 65537, 0
        %v2602 = vsel %vm2570, 65537, 0
        %v2603 = vsel %vm2571, 65537, 0
        %v2604 = vsel %vm2572, 65537, 0
        %v2605 = vsel %vm2573, 65537, 0
        %v2606 = vsel %vm2574, 65537, 0
        %v2607 = vsel %vm2575, 65537, 0
        %v2608 = vsel %vm2576, 65537, 0
        %v2609 = vsel %vm2577, 65537, 0
        %v2610 = vsel %vm2578, 65537, 0
        %v2611 = vsel %vm2579, 65537, 0
        %v2612 = vsel %vm2580, 65537, 0
        %v2613 = vsel %vm2581, 65537, 0
        %v2614 = vsel %vm2582, 65537, 0
        %v2615 = vsel %vm2583, 65537, 0
        %v2616 = vsel %vm2584, 65537, 0
        %v2617 = vsel %vm2585, 65537, 0
        %v2618 = vsel %vm2586, 65537, 0
        %v2619 = vsel %vm2587, 65537, 0
        %v2620 = vsel %vm2588, 65537, 0
        %v2621 = vsel %vm2589, 65537, 0
        %v2622 = vsel %vm2590, 65537, 0
        %v2623 = vsel %vm2591, 65537, 0
        %v2624 = vsel %vm2592, 65537, 0
        %v2625 = vsel %vm2593, 65537, 0
        %v2626 = vsel %vm2594, 65537, 0
        %v2627 = vsel %vm2595, 65537, 0
        %v2628 = vsel %vm2596, 65537, 0
        %v2629 = vsel %vm2597, 65537, 0
        %v2630 = vunpack.c.l.b16 %v2598
        %v2631 = vunpack.c.l.b16 %v2599
        %v2632 = vunpack.c.l.b16 %v2600
        %v2633 = vunpack.c.l.b16 %v2601
        %v2634 = vunpack.c.l.b16 %v2602
        %v2635 = vunpack.c.l.b16 %v2603
        %v2636 = vunpack.c.l.b16 %v2604
        %v2637 = vunpack.c.l.b16 %v2605
        %v2638 = vunpack.c.l.b16 %v2606
        %v2639 = vunpack.c.l.b16 %v2607
        %v2640 = vunpack.c.l.b16 %v2608
        %v2641 = vunpack.c.l.b16 %v2609
        %v2642 = vunpack.c.l.b16 %v2610
        %v2643 = vunpack.c.l.b16 %v2611
        %v2644 = vunpack.c.l.b16 %v2612
        %v2645 = vunpack.c.l.b16 %v2613
        %v2646 = vunpack.c.l.b16 %v2614
        %v2647 = vunpack.c.l.b16 %v2615
        %v2648 = vunpack.c.l.b16 %v2616
        %v2649 = vunpack.c.l.b16 %v2617
        %v2650 = vunpack.c.l.b16 %v2618
        %v2651 = vunpack.c.l.b16 %v2619
        %v2652 = vunpack.c.l.b16 %v2620
        %v2653 = vunpack.c.l.b16 %v2621
        %v2654 = vunpack.c.l.b16 %v2622
        %v2655 = vunpack.c.l.b16 %v2623
        %v2656 = vunpack.c.l.b16 %v2624
        %v2657 = vunpack.c.l.b16 %v2625
        %v2658 = vunpack.c.l.b16 %v2626
        %v2659 = vunpack.c.l.b16 %v2627
        %v2660 = vunpack.c.l.b16 %v2628
        %v2661 = vunpack.c.l.b16 %v2629
        %v2662 = vpack.c.b16 %v2631, %v2630
        %v2663 = vpack.c.b16 %v2633, %v2632
        %v2664 = vpack.c.b16 %v2635, %v2634
        %v2665 = vpack.c.b16 %v2637, %v2636
        %v2666 = vpack.c.b16 %v2639, %v2638
        %v2667 = vpack.c.b16 %v2641, %v2640
        %v2668 = vpack.c.b16 %v2643, %v2642
        %v2669 = vpack.c.b16 %v2645, %v2644
        %v2670 = vpack.c.b16 %v2647, %v2646
        %v2671 = vpack.c.b16 %v2649, %v2648
        %v2672 = vpack.c.b16 %v2651, %v2650
        %v2673 = vpack.c.b16 %v2653, %v2652
        %v2674 = vpack.c.b16 %v2655, %v2654
        %v2675 = vpack.c.b16 %v2657, %v2656
        %v2676 = vpack.c.b16 %v2659, %v2658
        %v2677 = vpack.c.b16 %v2661, %v2660
        %vm2678 = vcmp.ne.s16.totalorder %v2662, 0
        %vm2679 = vcmp.ne.s16.totalorder %v2663, 0
        %vm2680 = vcmp.ne.s16.totalorder %v2664, 0
        %vm2681 = vcmp.ne.s16.totalorder %v2665, 0
        %vm2682 = vcmp.ne.s16.totalorder %v2666, 0
        %vm2683 = vcmp.ne.s16.totalorder %v2667, 0
        %vm2684 = vcmp.ne.s16.totalorder %v2668, 0
        %vm2685 = vcmp.ne.s16.totalorder %v2669, 0
        %vm2686 = vcmp.ne.s16.totalorder %v2670, 0
        %vm2687 = vcmp.ne.s16.totalorder %v2671, 0
        %vm2688 = vcmp.ne.s16.totalorder %v2672, 0
        %vm2689 = vcmp.ne.s16.totalorder %v2673, 0
        %vm2690 = vcmp.ne.s16.totalorder %v2674, 0
        %vm2691 = vcmp.ne.s16.totalorder %v2675, 0
        %vm2692 = vcmp.ne.s16.totalorder %v2676, 0
        %vm2693 = vcmp.ne.s16.totalorder %v2677, 0
        %v2694 = vsel %vm2678, %v459, 0
        %v2695 = vsel %vm2679, %v467, 0
        %v2696 = vsel %vm2680, %v475, 0
        %v2697 = vsel %vm2681, %v483, 0
        %v2698 = vsel %vm2682, %v491, 0
        %v2699 = vsel %vm2683, %v499, 0
        %v2700 = vsel %vm2684, %v507, 0
        %v2701 = vsel %vm2685, %v515, 0
        %v2702 = vsel %vm2686, %v523, 0
        %v2703 = vsel %vm2687, %v531, 0
        %v2704 = vsel %vm2688, %v539, 0
        %v2705 = vsel %vm2689, %v547, 0
        %v2706 = vsel %vm2690, %v555, 0
        %v2707 = vsel %vm2691, %v559, 0
        %v2708 = vsel %vm2692, %v442, 0
        %v2709 = vsel %vm2693, %v577, 0
        %vm2710 = vmand %vm2470, %vm1010
        %vm2711 = vmand %vm2471, %vm1011
        %vm2712 = vmand %vm2472, %vm1012
        %vm2713 = vmand %vm2473, %vm1013
        %vm2714 = vmand %vm2474, %vm1014
        %vm2715 = vmand %vm2475, %vm1015
        %vm2716 = vmand %vm2476, %vm1016
        %vm2717 = vmand %vm2477, %vm1017
        %vm2718 = vmand %vm2478, %vm1018
        %vm2719 = vmand %vm2479, %vm1019
        %vm2720 = vmand %vm2480, %vm1020
        %vm2721 = vmand %vm2481, %vm1021
        %vm2722 = vmand %vm2482, %vm1022
        %vm2723 = vmand %vm2483, %vm1023
        %vm2724 = vmand %vm2484, %vm1024
        %vm2725 = vmand %vm2485, %vm1025
        %vm2726 = vmand %vm2486, %vm1026
        %vm2727 = vmand %vm2487, %vm1027
        %vm2728 = vmand %vm2488, %vm1028
        %vm2729 = vmand %vm2489, %vm1029
        %vm2730 = vmand %vm2490, %vm1030
        %vm2731 = vmand %vm2491, %vm1031
        %vm2732 = vmand %vm2492, %vm1032
        %vm2733 = vmand %vm2493, %vm1033
        %vm2734 = vmand %vm2494, %vm1034
        %vm2735 = vmand %vm2495, %vm1035
        %vm2736 = vmand %vm2496, %vm1036
        %vm2737 = vmand %vm2497, %vm1037
        %vm2738 = vmand %vm2498, %vm1038
        %vm2739 = vmand %vm2499, %vm1039
        %vm2740 = vmand %vm2500, %vm1040
        %vm2741 = vmand %vm2501, %vm1041
        %vm2742 = vmand %vm2710, %vm1074
        %vm2743 = vmand %vm2711, %vm1075
        %vm2744 = vmand %vm2712, %vm1076
        %vm2745 = vmand %vm2713, %vm1077
        %vm2746 = vmand %vm2714, %vm1078
        %vm2747 = vmand %vm2715, %vm1079
        %vm2748 = vmand %vm2716, %vm1080
        %vm2749 = vmand %vm2717, %vm1081
        %vm2750 = vmand %vm2718, %vm1082
        %vm2751 = vmand %vm2719, %vm1083
        %vm2752 = vmand %vm2720, %vm1084
        %vm2753 = vmand %vm2721, %vm1085
        %vm2754 = vmand %vm2722, %vm1086
        %vm2755 = vmand %vm2723, %vm1087
        %vm2756 = vmand %vm2724, %vm1088
        %vm2757 = vmand %vm2725, %vm1089
        %vm2758 = vmand %vm2726, %vm1090
        %vm2759 = vmand %vm2727, %vm1091
        %vm2760 = vmand %vm2728, %vm1092
        %vm2761 = vmand %vm2729, %vm1093
        %vm2762 = vmand %vm2730, %vm1094
        %vm2763 = vmand %vm2731, %vm1095
        %vm2764 = vmand %vm2732, %vm1096
        %vm2765 = vmand %vm2733, %vm1097
        %vm2766 = vmand %vm2734, %vm1098
        %vm2767 = vmand %vm2735, %vm1099
        %vm2768 = vmand %vm2736, %vm1100
        %vm2769 = vmand %vm2737, %vm1101
        %vm2770 = vmand %vm2738, %vm1102
        %vm2771 = vmand %vm2739, %vm1103
        %vm2772 = vmand %vm2740, %vm1104
        %vm2773 = vmand %vm2741, %vm1105
        %vm2774 = vmpackc.low %vm2742, %vm2742
        %vm2775 = vmpackc.low %vm2743, %vm2743
        %vm2776 = vmpackc.low %vm2744, %vm2744
        %vm2777 = vmpackc.low %vm2745, %vm2745
        %vm2778 = vmpackc.low %vm2746, %vm2746
        %vm2779 = vmpackc.low %vm2747, %vm2747
        %vm2780 = vmpackc.low %vm2748, %vm2748
        %vm2781 = vmpackc.low %vm2749, %vm2749
        %vm2782 = vmpackc.low %vm2750, %vm2750
        %vm2783 = vmpackc.low %vm2751, %vm2751
        %vm2784 = vmpackc.low %vm2752, %vm2752
        %vm2785 = vmpackc.low %vm2753, %vm2753
        %vm2786 = vmpackc.low %vm2754, %vm2754
        %vm2787 = vmpackc.low %vm2755, %vm2755
        %vm2788 = vmpackc.low %vm2756, %vm2756
        %vm2789 = vmpackc.low %vm2757, %vm2757
        %vm2790 = vmpackc.low %vm2758, %vm2758
        %vm2791 = vmpackc.low %vm2759, %vm2759
        %vm2792 = vmpackc.low %vm2760, %vm2760
        %vm2793 = vmpackc.low %vm2761, %vm2761
        %vm2794 = vmpackc.low %vm2762, %vm2762
        %vm2795 = vmpackc.low %vm2763, %vm2763
        %vm2796 = vmpackc.low %vm2764, %vm2764
        %vm2797 = vmpackc.low %vm2765, %vm2765
        %vm2798 = vmpackc.low %vm2766, %vm2766
        %vm2799 = vmpackc.low %vm2767, %vm2767
        %vm2800 = vmpackc.low %vm2768, %vm2768
        %vm2801 = vmpackc.low %vm2769, %vm2769
        %vm2802 = vmpackc.low %vm2770, %vm2770
        %vm2803 = vmpackc.low %vm2771, %vm2771
        %vm2804 = vmpackc.low %vm2772, %vm2772
        %vm2805 = vmpackc.low %vm2773, %vm2773
        %v2806 = vsel %vm2774, 65537, 0
        %v2807 = vsel %vm2775, 65537, 0
        %v2808 = vsel %vm2776, 65537, 0
        %v2809 = vsel %vm2777, 65537, 0
        %v2810 = vsel %vm2778, 65537, 0
        %v2811 = vsel %vm2779, 65537, 0
        %v2812 = vsel %vm2780, 65537, 0
        %v2813 = vsel %vm2781, 65537, 0
        %v2814 = vsel %vm2782, 65537, 0
        %v2815 = vsel %vm2783, 65537, 0
        %v2816 = vsel %vm2784, 65537, 0
        %v2817 = vsel %vm2785, 65537, 0
        %v2818 = vsel %vm2786, 65537, 0
        %v2819 = vsel %vm2787, 65537, 0
        %v2820 = vsel %vm2788, 65537, 0
        %v2821 = vsel %vm2789, 65537, 0
        %v2822 = vsel %vm2790, 65537, 0
        %v2823 = vsel %vm2791, 65537, 0
        %v2824 = vsel %vm2792, 65537, 0
        %v2825 = vsel %vm2793, 65537, 0
        %v2826 = vsel %vm2794, 65537, 0
        %v2827 = vsel %vm2795, 65537, 0
        %v2828 = vsel %vm2796, 65537, 0
        %v2829 = vsel %vm2797, 65537, 0
        %v2830 = vsel %vm2798, 65537, 0
        %v2831 = vsel %vm2799, 65537, 0
        %v2832 = vsel %vm2800, 65537, 0
        %v2833 = vsel %vm2801, 65537, 0
        %v2834 = vsel %vm2802, 65537, 0
        %v2835 = vsel %vm2803, 65537, 0
        %v2836 = vsel %vm2804, 65537, 0
        %v2837 = vsel %vm2805, 65537, 0
        %v2838 = vunpack.c.l.b16 %v2806
        %v2839 = vunpack.c.l.b16 %v2807
        %v2840 = vunpack.c.l.b16 %v2808
        %v2841 = vunpack.c.l.b16 %v2809
        %v2842 = vunpack.c.l.b16 %v2810
        %v2843 = vunpack.c.l.b16 %v2811
        %v2844 = vunpack.c.l.b16 %v2812
        %v2845 = vunpack.c.l.b16 %v2813
        %v2846 = vunpack.c.l.b16 %v2814
        %v2847 = vunpack.c.l.b16 %v2815
        %v2848 = vunpack.c.l.b16 %v2816
        %v2849 = vunpack.c.l.b16 %v2817
        %v2850 = vunpack.c.l.b16 %v2818
        %v2851 = vunpack.c.l.b16 %v2819
        %v2852 = vunpack.c.l.b16 %v2820
        %v2853 = vunpack.c.l.b16 %v2821
        %v2854 = vunpack.c.l.b16 %v2822
        %v2855 = vunpack.c.l.b16 %v2823
        %v2856 = vunpack.c.l.b16 %v2824
        %v2857 = vunpack.c.l.b16 %v2825
        %v2858 = vunpack.c.l.b16 %v2826
        %v2859 = vunpack.c.l.b16 %v2827
        %v2860 = vunpack.c.l.b16 %v2828
        %v2861 = vunpack.c.l.b16 %v2829
        %v2862 = vunpack.c.l.b16 %v2830
        %v2863 = vunpack.c.l.b16 %v2831
        %v2864 = vunpack.c.l.b16 %v2832
        %v2865 = vunpack.c.l.b16 %v2833
        %v2866 = vunpack.c.l.b16 %v2834
        %v2867 = vunpack.c.l.b16 %v2835
        %v2868 = vunpack.c.l.b16 %v2836
        %v2869 = vunpack.c.l.b16 %v2837
        %v2870 = vpack.c.b16 %v2839, %v2838
        %v2871 = vpack.c.b16 %v2841, %v2840
        %v2872 = vpack.c.b16 %v2843, %v2842
        %v2873 = vpack.c.b16 %v2845, %v2844
        %v2874 = vpack.c.b16 %v2847, %v2846
        %v2875 = vpack.c.b16 %v2849, %v2848
        %v2876 = vpack.c.b16 %v2851, %v2850
        %v2877 = vpack.c.b16 %v2853, %v2852
        %v2878 = vpack.c.b16 %v2855, %v2854
        %v2879 = vpack.c.b16 %v2857, %v2856
        %v2880 = vpack.c.b16 %v2859, %v2858
        %v2881 = vpack.c.b16 %v2861, %v2860
        %v2882 = vpack.c.b16 %v2863, %v2862
        %v2883 = vpack.c.b16 %v2865, %v2864
        %v2884 = vpack.c.b16 %v2867, %v2866
        %v2885 = vpack.c.b16 %v2869, %v2868
        %vm2886 = vcmp.ne.s16.totalorder %v2870, 0
        %vm2887 = vcmp.ne.s16.totalorder %v2871, 0
        %vm2888 = vcmp.ne.s16.totalorder %v2872, 0
        %vm2889 = vcmp.ne.s16.totalorder %v2873, 0
        %vm2890 = vcmp.ne.s16.totalorder %v2874, 0
        %vm2891 = vcmp.ne.s16.totalorder %v2875, 0
        %vm2892 = vcmp.ne.s16.totalorder %v2876, 0
        %vm2893 = vcmp.ne.s16.totalorder %v2877, 0
        %vm2894 = vcmp.ne.s16.totalorder %v2878, 0
        %vm2895 = vcmp.ne.s16.totalorder %v2879, 0
        %vm2896 = vcmp.ne.s16.totalorder %v2880, 0
        %vm2897 = vcmp.ne.s16.totalorder %v2881, 0
        %vm2898 = vcmp.ne.s16.totalorder %v2882, 0
        %vm2899 = vcmp.ne.s16.totalorder %v2883, 0
        %vm2900 = vcmp.ne.s16.totalorder %v2884, 0
        %vm2901 = vcmp.ne.s16.totalorder %v2885, 0
        %v2902 = vsel %vm2886, %v415, 0
        %v2903 = vsel %vm2887, %v416, 0
        %v2904 = vsel %vm2888, %v417, 0
        %v2905 = vsel %vm2889, %v418, 0
        %v2906 = vsel %vm2890, %v419, 0
        %v2907 = vsel %vm2891, %v420, 0
        %v2908 = vsel %vm2892, %v421, 0
        %v2909 = vsel %vm2893, %v422, 0
        %v2910 = vsel %vm2894, %v423, 0
        %v2911 = vsel %vm2895, %v424, 0
        %v2912 = vsel %vm2896, %v425, 0
        %v2913 = vsel %vm2897, %v426, 0
        %v2914 = vsel %vm2898, %v427, 0
        %v2915 = vsel %vm2899, %v428, 0
        %v2916 = vsel %vm2900, %v429, 0
        %v2917 = vsel %vm2901, %v414, 0
        %vm2918 = vmand %vm2470, %vm1382
        %vm2919 = vmand %vm2471, %vm1383
        %vm2920 = vmand %vm2472, %vm1384
        %vm2921 = vmand %vm2473, %vm1385
        %vm2922 = vmand %vm2474, %vm1386
        %vm2923 = vmand %vm2475, %vm1387
        %vm2924 = vmand %vm2476, %vm1388
        %vm2925 = vmand %vm2477, %vm1389
        %vm2926 = vmand %vm2478, %vm1390
        %vm2927 = vmand %vm2479, %vm1391
        %vm2928 = vmand %vm2480, %vm1392
        %vm2929 = vmand %vm2481, %vm1393
        %vm2930 = vmand %vm2482, %vm1394
        %vm2931 = vmand %vm2483, %vm1395
        %vm2932 = vmand %vm2484, %vm1396
        %vm2933 = vmand %vm2485, %vm1397
        %vm2934 = vmand %vm2486, %vm1398
        %vm2935 = vmand %vm2487, %vm1399
        %vm2936 = vmand %vm2488, %vm1400
        %vm2937 = vmand %vm2489, %vm1401
        %vm2938 = vmand %vm2490, %vm1402
        %vm2939 = vmand %vm2491, %vm1403
        %vm2940 = vmand %vm2492, %vm1404
        %vm2941 = vmand %vm2493, %vm1405
        %vm2942 = vmand %vm2494, %vm1406
        %vm2943 = vmand %vm2495, %vm1407
        %vm2944 = vmand %vm2496, %vm1408
        %vm2945 = vmand %vm2497, %vm1409
        %vm2946 = vmand %vm2498, %vm1410
        %vm2947 = vmand %vm2499, %vm1411
        %vm2948 = vmand %vm2500, %vm1412
        %vm2949 = vmand %vm2501, %vm1413
        %vm2950 = vmand %vm2918, %vm1446
        %vm2951 = vmand %vm2919, %vm1447
        %vm2952 = vmand %vm2920, %vm1448
        %vm2953 = vmand %vm2921, %vm1449
        %vm2954 = vmand %vm2922, %vm1450
        %vm2955 = vmand %vm2923, %vm1451
        %vm2956 = vmand %vm2924, %vm1452
        %vm2957 = vmand %vm2925, %vm1453
        %vm2958 = vmand %vm2926, %vm1454
        %vm2959 = vmand %vm2927, %vm1455
        %vm2960 = vmand %vm2928, %vm1456
        %vm2961 = vmand %vm2929, %vm1457
        %vm2962 = vmand %vm2930, %vm1458
        %vm2963 = vmand %vm2931, %vm1459
        %vm2964 = vmand %vm2932, %vm1460
        %vm2965 = vmand %vm2933, %vm1461
        %vm2966 = vmand %vm2934, %vm1462
        %vm2967 = vmand %vm2935, %vm1463
        %vm2968 = vmand %vm2936, %vm1464
        %vm2969 = vmand %vm2937, %vm1465
        %vm2970 = vmand %vm2938, %vm1466
        %vm2971 = vmand %vm2939, %vm1467
        %vm2972 = vmand %vm2940, %vm1468
        %vm2973 = vmand %vm2941, %vm1469
        %vm2974 = vmand %vm2942, %vm1470
        %vm2975 = vmand %vm2943, %vm1471
        %vm2976 = vmand %vm2944, %vm1472
        %vm2977 = vmand %vm2945, %vm1473
        %vm2978 = vmand %vm2946, %vm1474
        %vm2979 = vmand %vm2947, %vm1475
        %vm2980 = vmand %vm2948, %vm1476
        %vm2981 = vmand %vm2949, %vm1477
        %vm2982 = vmpackc.low %vm2950, %vm2950
        %vm2983 = vmpackc.low %vm2951, %vm2951
        %vm2984 = vmpackc.low %vm2952, %vm2952
        %vm2985 = vmpackc.low %vm2953, %vm2953
        %vm2986 = vmpackc.low %vm2954, %vm2954
        %vm2987 = vmpackc.low %vm2955, %vm2955
        %vm2988 = vmpackc.low %vm2956, %vm2956
        %vm2989 = vmpackc.low %vm2957, %vm2957
        %vm2990 = vmpackc.low %vm2958, %vm2958
        %vm2991 = vmpackc.low %vm2959, %vm2959
        %vm2992 = vmpackc.low %vm2960, %vm2960
        %vm2993 = vmpackc.low %vm2961, %vm2961
        %vm2994 = vmpackc.low %vm2962, %vm2962
        %vm2995 = vmpackc.low %vm2963, %vm2963
        %vm2996 = vmpackc.low %vm2964, %vm2964
        %vm2997 = vmpackc.low %vm2965, %vm2965
        %vm2998 = vmpackc.low %vm2966, %vm2966
        %vm2999 = vmpackc.low %vm2967, %vm2967
        %vm3000 = vmpackc.low %vm2968, %vm2968
        %vm3001 = vmpackc.low %vm2969, %vm2969
        %vm3002 = vmpackc.low %vm2970, %vm2970
        %vm3003 = vmpackc.low %vm2971, %vm2971
        %vm3004 = vmpackc.low %vm2972, %vm2972
        %vm3005 = vmpackc.low %vm2973, %vm2973
        %vm3006 = vmpackc.low %vm2974, %vm2974
        %vm3007 = vmpackc.low %vm2975, %vm2975
        %vm3008 = vmpackc.low %vm2976, %vm2976
        %vm3009 = vmpackc.low %vm2977, %vm2977
        %vm3010 = vmpackc.low %vm2978, %vm2978
        %vm3011 = vmpackc.low %vm2979, %vm2979
        %vm3012 = vmpackc.low %vm2980, %vm2980
        %vm3013 = vmpackc.low %vm2981, %vm2981
        %v3014 = vsel %vm2982, 65537, 0
        %v3015 = vsel %vm2983, 65537, 0
        %v3016 = vsel %vm2984, 65537, 0
        %v3017 = vsel %vm2985, 65537, 0
        %v3018 = vsel %vm2986, 65537, 0
        %v3019 = vsel %vm2987, 65537, 0
        %v3020 = vsel %vm2988, 65537, 0
        %v3021 = vsel %vm2989, 65537, 0
        %v3022 = vsel %vm2990, 65537, 0
        %v3023 = vsel %vm2991, 65537, 0
        %v3024 = vsel %vm2992, 65537, 0
        %v3025 = vsel %vm2993, 65537, 0
        %v3026 = vsel %vm2994, 65537, 0
        %v3027 = vsel %vm2995, 65537, 0
        %v3028 = vsel %vm2996, 65537, 0
        %v3029 = vsel %vm2997, 65537, 0
        %v3030 = vsel %vm2998, 65537, 0
        %v3031 = vsel %vm2999, 65537, 0
        %v3032 = vsel %vm3000, 65537, 0
        %v3033 = vsel %vm3001, 65537, 0
        %v3034 = vsel %vm3002, 65537, 0
        %v3035 = vsel %vm3003, 65537, 0
        %v3036 = vsel %vm3004, 65537, 0
        %v3037 = vsel %vm3005, 65537, 0
        %v3038 = vsel %vm3006, 65537, 0
        %v3039 = vsel %vm3007, 65537, 0
        %v3040 = vsel %vm3008, 65537, 0
        %v3041 = vsel %vm3009, 65537, 0
        %v3042 = vsel %vm3010, 65537, 0
        %v3043 = vsel %vm3011, 65537, 0
        %v3044 = vsel %vm3012, 65537, 0
        %v3045 = vsel %vm3013, 65537, 0
        %v3046 = vunpack.c.l.b16 %v3014
        %v3047 = vunpack.c.l.b16 %v3015
        %v3048 = vunpack.c.l.b16 %v3016
        %v3049 = vunpack.c.l.b16 %v3017
        %v3050 = vunpack.c.l.b16 %v3018
        %v3051 = vunpack.c.l.b16 %v3019
        %v3052 = vunpack.c.l.b16 %v3020
        %v3053 = vunpack.c.l.b16 %v3021
        %v3054 = vunpack.c.l.b16 %v3022
        %v3055 = vunpack.c.l.b16 %v3023
        %v3056 = vunpack.c.l.b16 %v3024
        %v3057 = vunpack.c.l.b16 %v3025
        %v3058 = vunpack.c.l.b16 %v3026
        %v3059 = vunpack.c.l.b16 %v3027
        %v3060 = vunpack.c.l.b16 %v3028
        %v3061 = vunpack.c.l.b16 %v3029
        %v3062 = vunpack.c.l.b16 %v3030
        %v3063 = vunpack.c.l.b16 %v3031
        %v3064 = vunpack.c.l.b16 %v3032
        %v3065 = vunpack.c.l.b16 %v3033
        %v3066 = vunpack.c.l.b16 %v3034
        %v3067 = vunpack.c.l.b16 %v3035
        %v3068 = vunpack.c.l.b16 %v3036
        %v3069 = vunpack.c.l.b16 %v3037
        %v3070 = vunpack.c.l.b16 %v3038
        %v3071 = vunpack.c.l.b16 %v3039
        %v3072 = vunpack.c.l.b16 %v3040
        %v3073 = vunpack.c.l.b16 %v3041
        %v3074 = vunpack.c.l.b16 %v3042
        %v3075 = vunpack.c.l.b16 %v3043
        %v3076 = vunpack.c.l.b16 %v3044
        %v3077 = vunpack.c.l.b16 %v3045
        %v3078 = vpack.c.b16 %v3047, %v3046
        %v3079 = vpack.c.b16 %v3049, %v3048
        %v3080 = vpack.c.b16 %v3051, %v3050
        %v3081 = vpack.c.b16 %v3053, %v3052
        %v3082 = vpack.c.b16 %v3055, %v3054
        %v3083 = vpack.c.b16 %v3057, %v3056
        %v3084 = vpack.c.b16 %v3059, %v3058
        %v3085 = vpack.c.b16 %v3061, %v3060
        %v3086 = vpack.c.b16 %v3063, %v3062
        %v3087 = vpack.c.b16 %v3065, %v3064
        %v3088 = vpack.c.b16 %v3067, %v3066
        %v3089 = vpack.c.b16 %v3069, %v3068
        %v3090 = vpack.c.b16 %v3071, %v3070
        %v3091 = vpack.c.b16 %v3073, %v3072
        %v3092 = vpack.c.b16 %v3075, %v3074
        %v3093 = vpack.c.b16 %v3077, %v3076
        %vm3094 = vcmp.ne.s16.totalorder %v3078, 0
        %vm3095 = vcmp.ne.s16.totalorder %v3079, 0
        %vm3096 = vcmp.ne.s16.totalorder %v3080, 0
        %vm3097 = vcmp.ne.s16.totalorder %v3081, 0
        %vm3098 = vcmp.ne.s16.totalorder %v3082, 0
        %vm3099 = vcmp.ne.s16.totalorder %v3083, 0
        %vm3100 = vcmp.ne.s16.totalorder %v3084, 0
        %vm3101 = vcmp.ne.s16.totalorder %v3085, 0
        %vm3102 = vcmp.ne.s16.totalorder %v3086, 0
        %vm3103 = vcmp.ne.s16.totalorder %v3087, 0
        %vm3104 = vcmp.ne.s16.totalorder %v3088, 0
        %vm3105 = vcmp.ne.s16.totalorder %v3089, 0
        %vm3106 = vcmp.ne.s16.totalorder %v3090, 0
        %vm3107 = vcmp.ne.s16.totalorder %v3091, 0
        %vm3108 = vcmp.ne.s16.totalorder %v3092, 0
        %vm3109 = vcmp.ne.s16.totalorder %v3093, 0
        %v3110 = vsel %vm3094, %v1292, 0
        %v3111 = vsel %vm3095, %v1295, 0
        %v3112 = vsel %vm3096, %v1298, 0
        %v3113 = vsel %vm3097, %v1301, 0
        %v3114 = vsel %vm3098, %v1304, 0
        %v3115 = vsel %vm3099, %v1307, 0
        %v3116 = vsel %vm3100, %v1310, 0
        %v3117 = vsel %vm3101, %v1313, 0
        %v3118 = vsel %vm3102, %v1316, 0
        %v3119 = vsel %vm3103, %v1319, 0
        %v3120 = vsel %vm3104, %v1322, 0
        %v3121 = vsel %vm3105, %v1325, 0
        %v3122 = vsel %vm3106, %v1328, 0
        %v3123 = vsel %vm3107, %v1330, 0
        %v3124 = vsel %vm3108, %v1349, 0
        %v3125 = vsel %vm3109, %v1289, 0
        %3142 = vrot.lane.b32.xlu0 %v1266, 1
        %v3143 = vpop.permute.xlu0 %3142
        %3144 = vrot.lane.b32.xlu0 %v1267, 1
        %v3145 = vpop.permute.xlu0 %3144
        %3146 = vrot.lane.b32.xlu0 %v1268, 1
        %v3147 = vpop.permute.xlu0 %3146
        %3148 = vrot.lane.b32.xlu0 %v1269, 1
        %v3149 = vpop.permute.xlu0 %3148
        %3150 = vrot.lane.b32.xlu0 %v1270, 1
        %v3151 = vpop.permute.xlu0 %3150
        %3152 = vrot.lane.b32.xlu0 %v1271, 1
        %v3153 = vpop.permute.xlu0 %3152
        %3154 = vrot.lane.b32.xlu0 %v1272, 1
        %v3155 = vpop.permute.xlu0 %3154
        %3156 = vrot.lane.b32.xlu0 %v1273, 1
        %v3157 = vpop.permute.xlu0 %3156
        %3158 = vrot.lane.b32.xlu0 %v1274, 1
        %v3159 = vpop.permute.xlu0 %3158
        %3160 = vrot.lane.b32.xlu0 %v1275, 1
        %v3161 = vpop.permute.xlu0 %3160
        %3162 = vrot.lane.b32.xlu0 %v1276, 1
        %v3163 = vpop.permute.xlu0 %3162
        %3164 = vrot.lane.b32.xlu0 %v1277, 1
        %v3165 = vpop.permute.xlu0 %3164
        %3166 = vrot.lane.b32.xlu0 %v1278, 1
        %v3167 = vpop.permute.xlu0 %3166
        %3168 = vrot.lane.b32.xlu0 %v1279, 1
        %v3169 = vpop.permute.xlu0 %3168
        %3170 = vrot.lane.b32.xlu0 %v1280, 1
        %v3171 = vpop.permute.xlu0 %3170
        %3172 = vrot.lane.b32.xlu0 %v1281, 1
        %v3173 = vpop.permute.xlu0 %3172
        %3190 = vrot.lane.b32.xlu0 %v1638, 2
        %v3191 = vpop.permute.xlu0 %3190
        %3192 = vrot.lane.b32.xlu0 %v1639, 2
        %v3193 = vpop.permute.xlu0 %3192
        %3194 = vrot.lane.b32.xlu0 %v1640, 2
        %v3195 = vpop.permute.xlu0 %3194
        %3196 = vrot.lane.b32.xlu0 %v1641, 2
        %v3197 = vpop.permute.xlu0 %3196
        %3198 = vrot.lane.b32.xlu0 %v1642, 2
        %v3199 = vpop.permute.xlu0 %3198
        %3200 = vrot.lane.b32.xlu0 %v1643, 2
        %v3201 = vpop.permute.xlu0 %3200
        %3202 = vrot.lane.b32.xlu0 %v1644, 2
        %v3203 = vpop.permute.xlu0 %3202
        %3204 = vrot.lane.b32.xlu0 %v1645, 2
        %v3205 = vpop.permute.xlu0 %3204
        %3206 = vrot.lane.b32.xlu0 %v1646, 2
        %v3207 = vpop.permute.xlu0 %3206
        %3208 = vrot.lane.b32.xlu0 %v1647, 2
        %v3209 = vpop.permute.xlu0 %3208
        %3210 = vrot.lane.b32.xlu0 %v1648, 2
        %v3211 = vpop.permute.xlu0 %3210
        %3212 = vrot.lane.b32.xlu0 %v1649, 2
        %v3213 = vpop.permute.xlu0 %3212
        %3214 = vrot.lane.b32.xlu0 %v1650, 2
        %v3215 = vpop.permute.xlu0 %3214
        %3216 = vrot.lane.b32.xlu0 %v1651, 2
        %v3217 = vpop.permute.xlu0 %3216
        %3218 = vrot.lane.b32.xlu0 %v1652, 2
        %v3219 = vpop.permute.xlu0 %3218
        %3220 = vrot.lane.b32.xlu0 %v1653, 2
        %v3221 = vpop.permute.xlu0 %3220
        %3238 = vrot.lane.b32.xlu0 %v1942, 3
        %v3239 = vpop.permute.xlu0 %3238
        %3240 = vrot.lane.b32.xlu0 %v1943, 3
        %v3241 = vpop.permute.xlu0 %3240
        %3242 = vrot.lane.b32.xlu0 %v1944, 3
        %v3243 = vpop.permute.xlu0 %3242
        %3244 = vrot.lane.b32.xlu0 %v1945, 3
        %v3245 = vpop.permute.xlu0 %3244
        %3246 = vrot.lane.b32.xlu0 %v1946, 3
        %v3247 = vpop.permute.xlu0 %3246
        %3248 = vrot.lane.b32.xlu0 %v1947, 3
        %v3249 = vpop.permute.xlu0 %3248
        %3250 = vrot.lane.b32.xlu0 %v1948, 3
        %v3251 = vpop.permute.xlu0 %3250
        %3252 = vrot.lane.b32.xlu0 %v1949, 3
        %v3253 = vpop.permute.xlu0 %3252
        %3254 = vrot.lane.b32.xlu0 %v1950, 3
        %v3255 = vpop.permute.xlu0 %3254
        %3256 = vrot.lane.b32.xlu0 %v1951, 3
        %v3257 = vpop.permute.xlu0 %3256
        %3258 = vrot.lane.b32.xlu0 %v1952, 3
        %v3259 = vpop.permute.xlu0 %3258
        %3260 = vrot.lane.b32.xlu0 %v1953, 3
        %v3261 = vpop.permute.xlu0 %3260
        %3262 = vrot.lane.b32.xlu0 %v1954, 3
        %v3263 = vpop.permute.xlu0 %3262
        %3264 = vrot.lane.b32.xlu0 %v1955, 3
        %v3265 = vpop.permute.xlu0 %3264
        %3266 = vrot.lane.b32.xlu0 %v1956, 3
        %v3267 = vpop.permute.xlu0 %3266
        %3268 = vrot.lane.b32.xlu0 %v1957, 3
        %v3269 = vpop.permute.xlu0 %3268
        %3286 = vrot.lane.b32.xlu0 %v2150, 4
        %v3287 = vpop.permute.xlu0 %3286
        %3288 = vrot.lane.b32.xlu0 %v2151, 4
        %v3289 = vpop.permute.xlu0 %3288
        %3290 = vrot.lane.b32.xlu0 %v2152, 4
        %v3291 = vpop.permute.xlu0 %3290
        %3292 = vrot.lane.b32.xlu0 %v2153, 4
        %v3293 = vpop.permute.xlu0 %3292
        %3294 = vrot.lane.b32.xlu0 %v2154, 4
        %v3295 = vpop.permute.xlu0 %3294
        %3296 = vrot.lane.b32.xlu0 %v2155, 4
        %v3297 = vpop.permute.xlu0 %3296
        %3298 = vrot.lane.b32.xlu0 %v2156, 4
        %v3299 = vpop.permute.xlu0 %3298
        %3300 = vrot.lane.b32.xlu0 %v2157, 4
        %v3301 = vpop.permute.xlu0 %3300
        %3302 = vrot.lane.b32.xlu0 %v2158, 4
        %v3303 = vpop.permute.xlu0 %3302
        %3304 = vrot.lane.b32.xlu0 %v2159, 4
        %v3305 = vpop.permute.xlu0 %3304
        %3306 = vrot.lane.b32.xlu0 %v2160, 4
        %v3307 = vpop.permute.xlu0 %3306
        %3308 = vrot.lane.b32.xlu0 %v2161, 4
        %v3309 = vpop.permute.xlu0 %3308
        %3310 = vrot.lane.b32.xlu0 %v2162, 4
        %v3311 = vpop.permute.xlu0 %3310
        %3312 = vrot.lane.b32.xlu0 %v2163, 4
        %v3313 = vpop.permute.xlu0 %3312
        %3314 = vrot.lane.b32.xlu0 %v2164, 4
        %v3315 = vpop.permute.xlu0 %3314
        %3316 = vrot.lane.b32.xlu0 %v2165, 4
        %v3317 = vpop.permute.xlu0 %3316
        %3334 = vrot.lane.b32.xlu0 %v2358, 5
        %v3335 = vpop.permute.xlu0 %3334
        %3336 = vrot.lane.b32.xlu0 %v2359, 5
        %v3337 = vpop.permute.xlu0 %3336
        %3338 = vrot.lane.b32.xlu0 %v2360, 5
        %v3339 = vpop.permute.xlu0 %3338
        %3340 = vrot.lane.b32.xlu0 %v2361, 5
        %v3341 = vpop.permute.xlu0 %3340
        %3342 = vrot.lane.b32.xlu0 %v2362, 5
        %v3343 = vpop.permute.xlu0 %3342
        %3344 = vrot.lane.b32.xlu0 %v2363, 5
        %v3345 = vpop.permute.xlu0 %3344
        %3346 = vrot.lane.b32.xlu0 %v2364, 5
        %v3347 = vpop.permute.xlu0 %3346
        %3348 = vrot.lane.b32.xlu0 %v2365, 5
        %v3349 = vpop.permute.xlu0 %3348
        %3350 = vrot.lane.b32.xlu0 %v2366, 5
        %v3351 = vpop.permute.xlu0 %3350
        %3352 = vrot.lane.b32.xlu0 %v2367, 5
        %v3353 = vpop.permute.xlu0 %3352
        %3354 = vrot.lane.b32.xlu0 %v2368, 5
        %v3355 = vpop.permute.xlu0 %3354
        %3356 = vrot.lane.b32.xlu0 %v2369, 5
        %v3357 = vpop.permute.xlu0 %3356
        %3358 = vrot.lane.b32.xlu0 %v2370, 5
        %v3359 = vpop.permute.xlu0 %3358
        %3360 = vrot.lane.b32.xlu0 %v2371, 5
        %v3361 = vpop.permute.xlu0 %3360
        %3362 = vrot.lane.b32.xlu0 %v2372, 5
        %v3363 = vpop.permute.xlu0 %3362
        %3364 = vrot.lane.b32.xlu0 %v2373, 5
        %v3365 = vpop.permute.xlu0 %3364
        %3382 = vrot.lane.b32.xlu0 %v2694, 6
        %v3383 = vpop.permute.xlu0 %3382
        %3384 = vrot.lane.b32.xlu0 %v2695, 6
        %v3385 = vpop.permute.xlu0 %3384
        %3386 = vrot.lane.b32.xlu0 %v2696, 6
        %v3387 = vpop.permute.xlu0 %3386
        %3388 = vrot.lane.b32.xlu0 %v2697, 6
        %v3389 = vpop.permute.xlu0 %3388
        %3390 = vrot.lane.b32.xlu0 %v2698, 6
        %v3391 = vpop.permute.xlu0 %3390
        %3392 = vrot.lane.b32.xlu0 %v2699, 6
        %v3393 = vpop.permute.xlu0 %3392
        %3394 = vrot.lane.b32.xlu0 %v2700, 6
        %v3395 = vpop.permute.xlu0 %3394
        %3396 = vrot.lane.b32.xlu0 %v2701, 6
        %v3397 = vpop.permute.xlu0 %3396
        %3398 = vrot.lane.b32.xlu0 %v2702, 6
        %v3399 = vpop.permute.xlu0 %3398
        %3400 = vrot.lane.b32.xlu0 %v2703, 6
        %v3401 = vpop.permute.xlu0 %3400
        %3402 = vrot.lane.b32.xlu0 %v2704, 6
        %v3403 = vpop.permute.xlu0 %3402
        %3404 = vrot.lane.b32.xlu0 %v2705, 6
        %v3405 = vpop.permute.xlu0 %3404
        %3406 = vrot.lane.b32.xlu0 %v2706, 6
        %v3407 = vpop.permute.xlu0 %3406
        %3408 = vrot.lane.b32.xlu0 %v2707, 6
        %v3409 = vpop.permute.xlu0 %3408
        %3410 = vrot.lane.b32.xlu0 %v2708, 6
        %v3411 = vpop.permute.xlu0 %3410
        %3412 = vrot.lane.b32.xlu0 %v2709, 6
        %v3413 = vpop.permute.xlu0 %3412
        %3430 = vrot.lane.b32.xlu0 %v2902, 7
        %v3431 = vpop.permute.xlu0 %3430
        %3432 = vrot.lane.b32.xlu0 %v2903, 7
        %v3433 = vpop.permute.xlu0 %3432
        %3434 = vrot.lane.b32.xlu0 %v2904, 7
        %v3435 = vpop.permute.xlu0 %3434
        %3436 = vrot.lane.b32.xlu0 %v2905, 7
        %v3437 = vpop.permute.xlu0 %3436
        %3438 = vrot.lane.b32.xlu0 %v2906, 7
        %v3439 = vpop.permute.xlu0 %3438
        %3440 = vrot.lane.b32.xlu0 %v2907, 7
        %v3441 = vpop.permute.xlu0 %3440
        %3442 = vrot.lane.b32.xlu0 %v2908, 7
        %v3443 = vpop.permute.xlu0 %3442
        %3444 = vrot.lane.b32.xlu0 %v2909, 7
        %v3445 = vpop.permute.xlu0 %3444
        %3446 = vrot.lane.b32.xlu0 %v2910, 7
        %v3447 = vpop.permute.xlu0 %3446
        %3448 = vrot.lane.b32.xlu0 %v2911, 7
        %v3449 = vpop.permute.xlu0 %3448
        %3450 = vrot.lane.b32.xlu0 %v2912, 7
        %v3451 = vpop.permute.xlu0 %3450
        %3452 = vrot.lane.b32.xlu0 %v2913, 7
        %v3453 = vpop.permute.xlu0 %3452
        %3454 = vrot.lane.b32.xlu0 %v2914, 7
        %v3455 = vpop.permute.xlu0 %3454
        %3456 = vrot.lane.b32.xlu0 %v2915, 7
        %v3457 = vpop.permute.xlu0 %3456
        %3458 = vrot.lane.b32.xlu0 %v2916, 7
        %v3459 = vpop.permute.xlu0 %3458
        %3460 = vrot.lane.b32.xlu0 %v2917, 7
        %v3461 = vpop.permute.xlu0 %3460
        %3478 = vrot.lane.b32.xlu0 %v3110, 8
        %v3479 = vpop.permute.xlu0 %3478
        %3480 = vrot.lane.b32.xlu0 %v3111, 8
        %v3481 = vpop.permute.xlu0 %3480
        %3482 = vrot.lane.b32.xlu0 %v3112, 8
        %v3483 = vpop.permute.xlu0 %3482
        %3484 = vrot.lane.b32.xlu0 %v3113, 8
        %v3485 = vpop.permute.xlu0 %3484
        %3486 = vrot.lane.b32.xlu0 %v3114, 8
        %v3487 = vpop.permute.xlu0 %3486
        %3488 = vrot.lane.b32.xlu0 %v3115, 8
        %v3489 = vpop.permute.xlu0 %3488
        %3490 = vrot.lane.b32.xlu0 %v3116, 8
        %v3491 = vpop.permute.xlu0 %3490
        %3492 = vrot.lane.b32.xlu0 %v3117, 8
        %v3493 = vpop.permute.xlu0 %3492
        %3494 = vrot.lane.b32.xlu0 %v3118, 8
        %v3495 = vpop.permute.xlu0 %3494
        %3496 = vrot.lane.b32.xlu0 %v3119, 8
        %v3497 = vpop.permute.xlu0 %3496
        %3498 = vrot.lane.b32.xlu0 %v3120, 8
        %v3499 = vpop.permute.xlu0 %3498
        %3500 = vrot.lane.b32.xlu0 %v3121, 8
        %v3501 = vpop.permute.xlu0 %3500
        %3502 = vrot.lane.b32.xlu0 %v3122, 8
        %v3503 = vpop.permute.xlu0 %3502
        %3504 = vrot.lane.b32.xlu0 %v3123, 8
        %v3505 = vpop.permute.xlu0 %3504
        %3506 = vrot.lane.b32.xlu0 %v3124, 8
        %v3507 = vpop.permute.xlu0 %3506
        %3508 = vrot.lane.b32.xlu0 %v3125, 8
        %v3509 = vpop.permute.xlu0 %3508
        %vm3510 = vcmask 7168
        %v3513 = vsel %vm3510, %v994, %v3143
        %v3516 = vsel %vm3510, %v995, %v3145
        %v3519 = vsel %vm3510, %v996, %v3147
        %v3522 = vsel %vm3510, %v997, %v3149
        %v3525 = vsel %vm3510, %v998, %v3151
        %v3528 = vsel %vm3510, %v999, %v3153
        %v3531 = vsel %vm3510, %v1000, %v3155
        %v3534 = vsel %vm3510, %v1001, %v3157
        %v3537 = vsel %vm3510, %v1002, %v3159
        %v3540 = vsel %vm3510, %v1003, %v3161
        %v3543 = vsel %vm3510, %v1004, %v3163
        %v3546 = vsel %vm3510, %v1005, %v3165
        %v3549 = vsel %vm3510, %v1006, %v3167
        %v3552 = vsel %vm3510, %v1007, %v3169
        %v3555 = vsel %vm3510, %v1008, %v3171
        %v3558 = vsel %vm3510, %v1009, %v3173
        %vm3559 = vcmask 15360
        %v3561 = vsel %vm3559, %v3513, %v3191
        %v3563 = vsel %vm3559, %v3516, %v3193
        %v3565 = vsel %vm3559, %v3519, %v3195
        %v3567 = vsel %vm3559, %v3522, %v3197
        %v3569 = vsel %vm3559, %v3525, %v3199
        %v3571 = vsel %vm3559, %v3528, %v3201
        %v3573 = vsel %vm3559, %v3531, %v3203
        %v3575 = vsel %vm3559, %v3534, %v3205
        %v3577 = vsel %vm3559, %v3537, %v3207
        %v3579 = vsel %vm3559, %v3540, %v3209
        %v3581 = vsel %vm3559, %v3543, %v3211
        %v3583 = vsel %vm3559, %v3546, %v3213
        %v3585 = vsel %vm3559, %v3549, %v3215
        %v3587 = vsel %vm3559, %v3552, %v3217
        %v3589 = vsel %vm3559, %v3555, %v3219
        %v3591 = vsel %vm3559, %v3558, %v3221
        %vm3592 = vcmask 23552
        %v3594 = vsel %vm3592, %v3561, %v3239
        %v3596 = vsel %vm3592, %v3563, %v3241
        %v3598 = vsel %vm3592, %v3565, %v3243
        %v3600 = vsel %vm3592, %v3567, %v3245
        %v3602 = vsel %vm3592, %v3569, %v3247
        %v3604 = vsel %vm3592, %v3571, %v3249
        %v3606 = vsel %vm3592, %v3573, %v3251
        %v3608 = vsel %vm3592, %v3575, %v3253
        %v3610 = vsel %vm3592, %v3577, %v3255
        %v3612 = vsel %vm3592, %v3579, %v3257
        %v3614 = vsel %vm3592, %v3581, %v3259
        %v3616 = vsel %vm3592, %v3583, %v3261
        %v3618 = vsel %vm3592, %v3585, %v3263
        %v3620 = vsel %vm3592, %v3587, %v3265
        %v3622 = vsel %vm3592, %v3589, %v3267
        %v3624 = vsel %vm3592, %v3591, %v3269
        %vm3625 = vcmask 31744
        %v3627 = vsel %vm3625, %v3594, %v3287
        %v3629 = vsel %vm3625, %v3596, %v3289
        %v3631 = vsel %vm3625, %v3598, %v3291
        %v3633 = vsel %vm3625, %v3600, %v3293
        %v3635 = vsel %vm3625, %v3602, %v3295
        %v3637 = vsel %vm3625, %v3604, %v3297
        %v3639 = vsel %vm3625, %v3606, %v3299
        %v3641 = vsel %vm3625, %v3608, %v3301
        %v3643 = vsel %vm3625, %v3610, %v3303
        %v3645 = vsel %vm3625, %v3612, %v3305
        %v3647 = vsel %vm3625, %v3614, %v3307
        %v3649 = vsel %vm3625, %v3616, %v3309
        %v3651 = vsel %vm3625, %v3618, %v3311
        %v3653 = vsel %vm3625, %v3620, %v3313
        %v3655 = vsel %vm3625, %v3622, %v3315
        %v3657 = vsel %vm3625, %v3624, %v3317
        %vm3658 = vcmask 39936
        %v3660 = vsel %vm3658, %v3627, %v3335
        %v3662 = vsel %vm3658, %v3629, %v3337
        %v3664 = vsel %vm3658, %v3631, %v3339
        %v3666 = vsel %vm3658, %v3633, %v3341
        %v3668 = vsel %vm3658, %v3635, %v3343
        %v3670 = vsel %vm3658, %v3637, %v3345
        %v3672 = vsel %vm3658, %v3639, %v3347
        %v3674 = vsel %vm3658, %v3641, %v3349
        %v3676 = vsel %vm3658, %v3643, %v3351
        %v3678 = vsel %vm3658, %v3645, %v3353
        %v3680 = vsel %vm3658, %v3647, %v3355
        %v3682 = vsel %vm3658, %v3649, %v3357
        %v3684 = vsel %vm3658, %v3651, %v3359
        %v3686 = vsel %vm3658, %v3653, %v3361
        %v3688 = vsel %vm3658, %v3655, %v3363
        %v3690 = vsel %vm3658, %v3657, %v3365
        %vm3691 = vcmask 48128
        %v3693 = vsel %vm3691, %v3660, %v3383
        %v3695 = vsel %vm3691, %v3662, %v3385
        %v3697 = vsel %vm3691, %v3664, %v3387
        %v3699 = vsel %vm3691, %v3666, %v3389
        %v3701 = vsel %vm3691, %v3668, %v3391
        %v3703 = vsel %vm3691, %v3670, %v3393
        %v3705 = vsel %vm3691, %v3672, %v3395
        %v3707 = vsel %vm3691, %v3674, %v3397
        %v3709 = vsel %vm3691, %v3676, %v3399
        %v3711 = vsel %vm3691, %v3678, %v3401
        %v3713 = vsel %vm3691, %v3680, %v3403
        %v3715 = vsel %vm3691, %v3682, %v3405
        %v3717 = vsel %vm3691, %v3684, %v3407
        %v3719 = vsel %vm3691, %v3686, %v3409
        %v3721 = vsel %vm3691, %v3688, %v3411
        %v3723 = vsel %vm3691, %v3690, %v3413
        %vm3724 = vcmask 56320
        %v3726 = vsel %vm3724, %v3693, %v3431
        %v3728 = vsel %vm3724, %v3695, %v3433
        %v3730 = vsel %vm3724, %v3697, %v3435
        %v3732 = vsel %vm3724, %v3699, %v3437
        %v3734 = vsel %vm3724, %v3701, %v3439
        %v3736 = vsel %vm3724, %v3703, %v3441
        %v3738 = vsel %vm3724, %v3705, %v3443
        %v3740 = vsel %vm3724, %v3707, %v3445
        %v3742 = vsel %vm3724, %v3709, %v3447
        %v3744 = vsel %vm3724, %v3711, %v3449
        %v3746 = vsel %vm3724, %v3713, %v3451
        %v3748 = vsel %vm3724, %v3715, %v3453
        %v3750 = vsel %vm3724, %v3717, %v3455
        %v3752 = vsel %vm3724, %v3719, %v3457
        %v3754 = vsel %vm3724, %v3721, %v3459
        %v3756 = vsel %vm3724, %v3723, %v3461
        %vm3757 = vcmask 64512
        %v3759 = vsel %vm3757, %v3726, %v3479
        %v3761 = vsel %vm3757, %v3728, %v3481
        %v3763 = vsel %vm3757, %v3730, %v3483
        %v3765 = vsel %vm3757, %v3732, %v3485
        %v3767 = vsel %vm3757, %v3734, %v3487
        %v3769 = vsel %vm3757, %v3736, %v3489
        %v3771 = vsel %vm3757, %v3738, %v3491
        %v3773 = vsel %vm3757, %v3740, %v3493
        %v3775 = vsel %vm3757, %v3742, %v3495
        %v3777 = vsel %vm3757, %v3744, %v3497
        %v3779 = vsel %vm3757, %v3746, %v3499
        %v3781 = vsel %vm3757, %v3748, %v3501
        %v3783 = vsel %vm3757, %v3750, %v3503
        %v3785 = vsel %vm3757, %v3752, %v3505
        %v3787 = vsel %vm3757, %v3754, %v3507
        %v3789 = vsel %vm3757, %v3756, %v3509
        %v3790 = vld [vmem:[%s1] sm:$0xf]
        %v3791 = vld [vmem:[%s1 + $0x4] sm:$0x1]
        %v3792 = vlaneseq
        %v3793 = vshrl.u32 %v3792, 7
        %v3794 = vsub.s32 0, %v3793
        %v3795 = vrot.slane %v252, %v3794
        %v3798 = vunpack.c.l.b16 %v3790
        %v3799 = vunpack.c.l.b16 %v3791
        %v3800 = vpack.c.b16 %v3799, %v3798
        %vm3801 = vcmask 72704
        %v3802 = vsel %vm3801, %v3759, 0
        %v3804 = vsel %vm3801, %v3761, 0
        %v3806 = vsel %vm3801, %v3763, 0
        %v3808 = vsel %vm3801, %v3765, 0
        %v3810 = vsel %vm3801, %v3767, 0
        %v3812 = vsel %vm3801, %v3769, 0
        %v3814 = vsel %vm3801, %v3771, 0
        %v3816 = vsel %vm3801, %v3773, 0
        %v3818 = vsel %vm3801, %v3775, 0
        %v3820 = vsel %vm3801, %v3777, 0
        %v3822 = vsel %vm3801, %v3779, 0
        %v3824 = vsel %vm3801, %v3781, 0
        %v3826 = vsel %vm3801, %v3783, 0
        %v3828 = vsel %vm3801, %v3785, 0
        %v3830 = vsel %vm3801, %v3787, 0
        %v3832 = vsel %vm3801, %v3789, 0
        %vm3834 = vcmask 1043456
        %vm3835 = vcmask 1044480
        %v3836 = vsel %vm3834, 4294967295, 65535
        %v3837 = vsel %vm3835, %v3836, 0
        %v3839 = vand.u32 %v3800, %v3837
        %3841 = vmatprep.subr.bf16.mxu0 0
        %3842 = vmatpush1.bf16.msra.mxu0 %v3839
        %3843 = vmatprep.subr.bf16.mxu0 0
        %3844 = vmatpush1.bf16.msra.mxu0 0
        %3845 = vmatprep.subr.bf16.mxu0 0
        %3846 = vmatpush1.bf16.msra.mxu0 0
        %3847 = vmatprep.subr.bf16.mxu0 0
        %3848 = vmatpush1.bf16.msra.mxu0 0
        %3849 = vmatprep.subr.bf16.mxu0 0
        %3850 = vmatpush1.bf16.msra.mxu0 0
        %3851 = vmatprep.subr.bf16.mxu0 0
        %3852 = vmatpush1.bf16.msra.mxu0 0
        %3853 = vmatprep.subr.bf16.mxu0 0
        %3854 = vmatpush1.bf16.msra.mxu0 0
        %3855 = vmatprep.subr.bf16.mxu0 0
        %3856 = vmatpush1.bf16.msra.mxu0 0
        %3857 = vmatprep.subr.bf16.mxu0 0
        %3858 = vmatpush1.bf16.msra.mxu0 0
        %3859 = vmatprep.subr.bf16.mxu0 0
        %3860 = vmatpush1.bf16.msra.mxu0 0
        %3861 = vmatprep.subr.bf16.mxu0 0
        %3862 = vmatpush1.bf16.msra.mxu0 0
        %3863 = vmatprep.subr.bf16.mxu0 0
        %3864 = vmatpush1.bf16.msra.mxu0 0
        %3865 = vmatprep.subr.bf16.mxu0 0
        %3866 = vmatpush1.bf16.msra.mxu0 0
        %3867 = vmatprep.subr.bf16.mxu0 0
        %3868 = vmatpush1.bf16.msra.mxu0 0
        %3869 = vmatprep.subr.bf16.mxu0 0
        %3870 = vmatpush1.bf16.msra.mxu0 0
        %3871 = vmatprep.subr.bf16.mxu0 0
        %3872 = vmatpush1.bf16.msra.mxu0 0
        %3873 = vmatprep.mubr.bf16.mxu0 0
        %3874 = vmatmul.mubr.bf16.gmra.mrb[0].mxu0 %v3802
        %v3875 = vpop.f32.mrb[0].mxu0
        %v3876 = vadd.f32 %v3795, %v3875
        %v3877 = vpop.f32.mrb[0].mxu0
        %v3878 = vpop.f32.mrb[0].mxu0
        %v3879 = vadd.f32 %v3795, %v3878
        %v3880 = vpop.f32.mrb[0].mxu0
        %3881 = vmatprep.mubr.bf16.mxu0 0
        %3882 = vmatmul.mubr.bf16.gmra.mrb[0].mxu0 %v3804
        %v3883 = vpop.f32.mrb[0].mxu0
        %v3884 = vadd.f32 %v3795, %v3883
        %v3885 = vpop.f32.mrb[0].mxu0
        %v3886 = vpop.f32.mrb[0].mxu0
        %v3887 = vadd.f32 %v3795, %v3886
        %v3888 = vpop.f32.mrb[0].mxu0
        %3889 = vmatprep.mubr.bf16.mxu0 0
        %3890 = vmatmul.mubr.bf16.gmra.mrb[0].mxu0 %v3806
        %v3891 = vpop.f32.mrb[0].mxu0
        %v3892 = vadd.f32 %v3795, %v3891
        %v3893 = vpop.f32.mrb[0].mxu0
        %v3894 = vpop.f32.mrb[0].mxu0
        %v3895 = vadd.f32 %v3795, %v3894
        %v3896 = vpop.f32.mrb[0].mxu0
        %3897 = vmatprep.mubr.bf16.mxu0 0
        %3898 = vmatmul.mubr.bf16.gmra.mrb[0].mxu0 %v3808
        %v3899 = vpop.f32.mrb[0].mxu0
        %v3900 = vadd.f32 %v3795, %v3899
        %v3901 = vpop.f32.mrb[0].mxu0
        %v3902 = vpop.f32.mrb[0].mxu0
        %v3903 = vadd.f32 %v3795, %v3902
        %v3904 = vpop.f32.mrb[0].mxu0
        %3905 = vmatprep.mubr.bf16.mxu0 0
        %3906 = vmatmul.mubr.bf16.gmra.mrb[0].mxu0 %v3810
        %v3907 = vpop.f32.mrb[0].mxu0
        %v3908 = vadd.f32 %v3795, %v3907
        %v3909 = vpop.f32.mrb[0].mxu0
        %v3910 = vpop.f32.mrb[0].mxu0
        %v3911 = vadd.f32 %v3795, %v3910
        %v3912 = vpop.f32.mrb[0].mxu0
        %3913 = vmatprep.mubr.bf16.mxu0 0
        %3914 = vmatmul.mubr.bf16.gmra.mrb[0].mxu0 %v3812
        %v3915 = vpop.f32.mrb[0].mxu0
        %v3916 = vadd.f32 %v3795, %v3915
        %v3917 = vpop.f32.mrb[0].mxu0
        %v3918 = vpop.f32.mrb[0].mxu0
        %v3919 = vadd.f32 %v3795, %v3918
        %v3920 = vpop.f32.mrb[0].mxu0
        %3921 = vmatprep.mubr.bf16.mxu0 0
        %3922 = vmatmul.mubr.bf16.gmra.mrb[0].mxu0 %v3814
        %v3923 = vpop.f32.mrb[0].mxu0
        %v3924 = vadd.f32 %v3795, %v3923
        %v3925 = vpop.f32.mrb[0].mxu0
        %v3926 = vpop.f32.mrb[0].mxu0
        %v3927 = vadd.f32 %v3795, %v3926
        %v3928 = vpop.f32.mrb[0].mxu0
        %3929 = vmatprep.mubr.bf16.mxu0 0
        %3930 = vmatmul.mubr.bf16.gmra.mrb[0].mxu0 %v3816
        %v3931 = vpop.f32.mrb[0].mxu0
        %v3932 = vadd.f32 %v3795, %v3931
        %v3933 = vpop.f32.mrb[0].mxu0
        %v3934 = vpop.f32.mrb[0].mxu0
        %v3935 = vadd.f32 %v3795, %v3934
        %v3936 = vpop.f32.mrb[0].mxu0
        %3937 = vmatprep.mubr.bf16.mxu0 0
        %3938 = vmatmul.mubr.bf16.gmra.mrb[0].mxu0 %v3818
        %v3939 = vpop.f32.mrb[0].mxu0
        %v3940 = vadd.f32 %v3795, %v3939
        %v3941 = vpop.f32.mrb[0].mxu0
        %v3942 = vpop.f32.mrb[0].mxu0
        %v3943 = vadd.f32 %v3795, %v3942
        %v3944 = vpop.f32.mrb[0].mxu0
        %3945 = vmatprep.mubr.bf16.mxu0 0
        %3946 = vmatmul.mubr.bf16.gmra.mrb[0].mxu0 %v3820
        %v3947 = vpop.f32.mrb[0].mxu0
        %v3948 = vadd.f32 %v3795, %v3947
        %v3949 = vpop.f32.mrb[0].mxu0
        %v3950 = vpop.f32.mrb[0].mxu0
        %v3951 = vadd.f32 %v3795, %v3950
        %v3952 = vpop.f32.mrb[0].mxu0
        %3953 = vmatprep.mubr.bf16.mxu0 0
        %3954 = vmatmul.mubr.bf16.gmra.mrb[0].mxu0 %v3822
        %v3955 = vpop.f32.mrb[0].mxu0
        %v3956 = vadd.f32 %v3795, %v3955
        %v3957 = vpop.f32.mrb[0].mxu0
        %v3958 = vpop.f32.mrb[0].mxu0
        %v3959 = vadd.f32 %v3795, %v3958
        %v3960 = vpop.f32.mrb[0].mxu0
        %3961 = vmatprep.mubr.bf16.mxu0 0
        %3962 = vmatmul.mubr.bf16.gmra.mrb[0].mxu0 %v3824
        %v3963 = vpop.f32.mrb[0].mxu0
        %v3964 = vadd.f32 %v3795, %v3963
        %v3965 = vpop.f32.mrb[0].mxu0
        %v3966 = vpop.f32.mrb[0].mxu0
        %v3967 = vadd.f32 %v3795, %v3966
        %v3968 = vpop.f32.mrb[0].mxu0
        %3969 = vmatprep.mubr.bf16.mxu0 0
        %3970 = vmatmul.mubr.bf16.gmra.mrb[0].mxu0 %v3826
        %v3971 = vpop.f32.mrb[0].mxu0
        %v3972 = vadd.f32 %v3795, %v3971
        %v3973 = vpop.f32.mrb[0].mxu0
        %v3974 = vpop.f32.mrb[0].mxu0
        %v3975 = vadd.f32 %v3795, %v3974
        %v3976 = vpop.f32.mrb[0].mxu0
        %3977 = vmatprep.mubr.bf16.mxu0 0
        %3978 = vmatmul.mubr.bf16.gmra.mrb[0].mxu0 %v3828
        %v3979 = vpop.f32.mrb[0].mxu0
        %v3980 = vadd.f32 %v3795, %v3979
        %v3981 = vpop.f32.mrb[0].mxu0
        %v3982 = vpop.f32.mrb[0].mxu0
        %v3983 = vadd.f32 %v3795, %v3982
        %v3984 = vpop.f32.mrb[0].mxu0
        %3985 = vmatprep.mubr.bf16.mxu0 0
        %3986 = vmatmul.mubr.bf16.gmra.mrb[0].mxu0 %v3830
        %v3987 = vpop.f32.mrb[0].mxu0
        %v3988 = vadd.f32 %v3795, %v3987
        %v3989 = vpop.f32.mrb[0].mxu0
        %v3990 = vpop.f32.mrb[0].mxu0
        %v3991 = vadd.f32 %v3795, %v3990
        %v3992 = vpop.f32.mrb[0].mxu0
        %3993 = vmatprep.mubr.bf16.mxu0 0
        %3994 = vmatmul.mubr.bf16.gmra.mrb[0].mxu0 %v3832
        %v3995 = vpop.f32.mrb[0].mxu0
        %v3996 = vadd.f32 %v3795, %v3995
        %v3997 = vpop.f32.mrb[0].mxu0
        %v3998 = vpop.f32.mrb[0].mxu0
        %v3999 = vadd.f32 %v3795, %v3998
        %v4000 = vpop.f32.mrb[0].mxu0
        %4001 = vdwg.mxu0
        %v4002 = vmax.f32 %v3876, 0.0
        %v4003 = vmax.f32 %v3879, 0.0
        %v4004 = vmax.f32 %v3884, 0.0
        %v4005 = vmax.f32 %v3887, 0.0
        %v4006 = vmax.f32 %v3892, 0.0
        %v4007 = vmax.f32 %v3895, 0.0
        %v4008 = vmax.f32 %v3900, 0.0
        %v4009 = vmax.f32 %v3903, 0.0
        %v4010 = vmax.f32 %v3908, 0.0
        %v4011 = vmax.f32 %v3911, 0.0
        %v4012 = vmax.f32 %v3916, 0.0
        %v4013 = vmax.f32 %v3919, 0.0
        %v4014 = vmax.f32 %v3924, 0.0
        %v4015 = vmax.f32 %v3927, 0.0
        %v4016 = vmax.f32 %v3932, 0.0
        %v4017 = vmax.f32 %v3935, 0.0
        %v4018 = vmax.f32 %v3940, 0.0
        %v4019 = vmax.f32 %v3943, 0.0
        %v4020 = vmax.f32 %v3948, 0.0
        %v4021 = vmax.f32 %v3951, 0.0
        %v4022 = vmax.f32 %v3956, 0.0
        %v4023 = vmax.f32 %v3959, 0.0
        %v4024 = vmax.f32 %v3964, 0.0
        %v4025 = vmax.f32 %v3967, 0.0
        %v4026 = vmax.f32 %v3972, 0.0
        %v4027 = vmax.f32 %v3975, 0.0
        %v4028 = vmax.f32 %v3980, 0.0
        %v4029 = vmax.f32 %v3983, 0.0
        %v4030 = vmax.f32 %v3988, 0.0
        %v4031 = vmax.f32 %v3991, 0.0
        %v4032 = vmax.f32 %v3996, 0.0
        %v4033 = vmax.f32 %v3999, 0.0
        %vm4066 = vcmask 1046528
        %v4067 = vrot.slane %v4002, 1
        %v4068 = vrot.slane %v4003, 1
        %v4069 = vsel %vm4066, %v4067, %v4068
        %v4070 = vrot.slane %v4004, 1
        %v4071 = vsel %vm4066, %v4068, %v4070
        %v4072 = vrot.slane %v4005, 1
        %v4073 = vsel %vm4066, %v4070, %v4072
        %v4074 = vrot.slane %v4006, 1
        %v4075 = vsel %vm4066, %v4072, %v4074
        %v4076 = vrot.slane %v4007, 1
        %v4077 = vsel %vm4066, %v4074, %v4076
        %v4078 = vrot.slane %v4008, 1
        %v4079 = vsel %vm4066, %v4076, %v4078
        %v4080 = vrot.slane %v4009, 1
        %v4081 = vsel %vm4066, %v4078, %v4080
        %v4082 = vrot.slane %v4010, 1
        %v4083 = vsel %vm4066, %v4080, %v4082
        %v4084 = vrot.slane %v4011, 1
        %v4085 = vsel %vm4066, %v4082, %v4084
        %v4086 = vrot.slane %v4012, 1
        %v4087 = vsel %vm4066, %v4084, %v4086
        %v4088 = vrot.slane %v4013, 1
        %v4089 = vsel %vm4066, %v4086, %v4088
        %v4090 = vrot.slane %v4014, 1
        %v4091 = vsel %vm4066, %v4088, %v4090
        %v4092 = vrot.slane %v4015, 1
        %v4093 = vsel %vm4066, %v4090, %v4092
        %v4094 = vrot.slane %v4016, 1
        %v4095 = vsel %vm4066, %v4092, %v4094
        %v4096 = vrot.slane %v4017, 1
        %v4097 = vsel %vm4066, %v4094, %v4096
        %v4098 = vrot.slane %v4018, 1
        %v4099 = vsel %vm4066, %v4096, %v4098
        %v4100 = vrot.slane %v4019, 1
        %v4101 = vsel %vm4066, %v4098, %v4100
        %v4102 = vrot.slane %v4020, 1
        %v4103 = vsel %vm4066, %v4100, %v4102
        %v4104 = vrot.slane %v4021, 1
        %v4105 = vsel %vm4066, %v4102, %v4104
        %v4106 = vrot.slane %v4022, 1
        %v4107 = vsel %vm4066, %v4104, %v4106
        %v4108 = vrot.slane %v4023, 1
        %v4109 = vsel %vm4066, %v4106, %v4108
        %v4110 = vrot.slane %v4024, 1
        %v4111 = vsel %vm4066, %v4108, %v4110
        %v4112 = vrot.slane %v4025, 1
        %v4113 = vsel %vm4066, %v4110, %v4112
        %v4114 = vrot.slane %v4026, 1
        %v4115 = vsel %vm4066, %v4112, %v4114
        %v4116 = vrot.slane %v4027, 1
        %v4117 = vsel %vm4066, %v4114, %v4116
        %v4118 = vrot.slane %v4028, 1
        %v4119 = vsel %vm4066, %v4116, %v4118
        %v4120 = vrot.slane %v4029, 1
        %v4121 = vsel %vm4066, %v4118, %v4120
        %v4122 = vrot.slane %v4030, 1
        %v4123 = vsel %vm4066, %v4120, %v4122
        %v4124 = vrot.slane %v4031, 1
        %v4125 = vsel %vm4066, %v4122, %v4124
        %v4126 = vrot.slane %v4032, 1
        %v4127 = vsel %vm4066, %v4124, %v4126
        %v4128 = vrot.slane %v4033, 1
        %v4129 = vsel %vm4066, %v4126, %v4128
        %v4163 = vsel %vm4066, %v4128, %v4067
        %v4164 = vmax.f32 %v4002, %v4069
        %v4165 = vmax.f32 %v4003, %v4071
        %v4166 = vmax.f32 %v4004, %v4073
        %v4167 = vmax.f32 %v4005, %v4075
        %v4168 = vmax.f32 %v4006, %v4077
        %v4169 = vmax.f32 %v4007, %v4079
        %v4170 = vmax.f32 %v4008, %v4081
        %v4171 = vmax.f32 %v4009, %v4083
        %v4172 = vmax.f32 %v4010, %v4085
        %v4173 = vmax.f32 %v4011, %v4087
        %v4174 = vmax.f32 %v4012, %v4089
        %v4175 = vmax.f32 %v4013, %v4091
        %v4176 = vmax.f32 %v4014, %v4093
        %v4177 = vmax.f32 %v4015, %v4095
        %v4178 = vmax.f32 %v4016, %v4097
        %v4179 = vmax.f32 %v4017, %v4099
        %v4180 = vmax.f32 %v4018, %v4101
        %v4181 = vmax.f32 %v4019, %v4103
        %v4182 = vmax.f32 %v4020, %v4105
        %v4183 = vmax.f32 %v4021, %v4107
        %v4184 = vmax.f32 %v4022, %v4109
        %v4185 = vmax.f32 %v4023, %v4111
        %v4186 = vmax.f32 %v4024, %v4113
        %v4187 = vmax.f32 %v4025, %v4115
        %v4188 = vmax.f32 %v4026, %v4117
        %v4189 = vmax.f32 %v4027, %v4119
        %v4190 = vmax.f32 %v4028, %v4121
        %v4191 = vmax.f32 %v4029, %v4123
        %v4192 = vmax.f32 %v4030, %v4125
        %v4193 = vmax.f32 %v4031, %v4127
        %v4194 = vmax.f32 %v4032, %v4129
        %v4195 = vmax.f32 %v4033, %v4163
        %v4196 = vmax.f32 %v4164, %v4166
        %v4197 = vmax.f32 %v4165, %v4167
        %v4198 = vmax.f32 %v4168, %v4170
        %v4199 = vmax.f32 %v4169, %v4171
        %v4200 = vmax.f32 %v4172, %v4174
        %v4201 = vmax.f32 %v4173, %v4175
        %v4202 = vmax.f32 %v4176, %v4178
        %v4203 = vmax.f32 %v4177, %v4179
        %v4204 = vmax.f32 %v4180, %v4182
        %v4205 = vmax.f32 %v4181, %v4183
        %v4206 = vmax.f32 %v4184, %v4186
        %v4207 = vmax.f32 %v4185, %v4187
        %v4208 = vmax.f32 %v4188, %v4190
        %v4209 = vmax.f32 %v4189, %v4191
        %v4210 = vmax.f32 %v4192, %v4194
        %v4211 = vmax.f32 %v4193, %v4195
        %vm4212 = vcmask 523264
        %4213 = vst.msk [vmem:[#allocation2] sm:$0xff] %vm4212, %v4196
        %4214 = vst.msk [vmem:[#allocation2 + $0x8] sm:$0xff] %vm4212, %v4197
        %4215 = vst.msk [vmem:[#allocation2 + $0x10] sm:$0xff] %vm4212, %v4198
        %4216 = vst.msk [vmem:[#allocation2 + $0x18] sm:$0xff] %vm4212, %v4199
        %4217 = vst.msk [vmem:[#allocation2 + $0x20] sm:$0xff] %vm4212, %v4200
        %4218 = vst.msk [vmem:[#allocation2 + $0x28] sm:$0xff] %vm4212, %v4201
        %4219 = vst.msk [vmem:[#allocation2 + $0x30] sm:$0xff] %vm4212, %v4202
        %4220 = vst.msk [vmem:[#allocation2 + $0x38] sm:$0xff] %vm4212, %v4203
        %4221 = vst.msk [vmem:[#allocation2 + $0x40] sm:$0xff] %vm4212, %v4204
        %4222 = vst.msk [vmem:[#allocation2 + $0x48] sm:$0xff] %vm4212, %v4205
        %4223 = vst.msk [vmem:[#allocation2 + $0x50] sm:$0xff] %vm4212, %v4206
        %4224 = vst.msk [vmem:[#allocation2 + $0x58] sm:$0xff] %vm4212, %v4207
        %4225 = vst.msk [vmem:[#allocation2 + $0x60] sm:$0xff] %vm4212, %v4208
        %4226 = vst.msk [vmem:[#allocation2 + $0x68] sm:$0xff] %vm4212, %v4209
        %4227 = vst.msk [vmem:[#allocation2 + $0x70] sm:$0xff] %vm4212, %v4210
        %4228 = vst.msk [vmem:[#allocation2 + $0x78] sm:$0xff] %vm4212, %v4211
        %v4229 = vld [vmem:[#allocation2] ss:$2 sm:$0xff]
        %s4230 = scalar_lea.vmem [#allocation2], 16
        %v4231 = vld [vmem:[%s4230] ss:$2 sm:$0xff]
        %s4232 = scalar_lea.vmem [#allocation2], 32
        %v4233 = vld [vmem:[%s4232] ss:$2 sm:$0xff]
        %s4234 = scalar_lea.vmem [#allocation2], 48
        %v4235 = vld [vmem:[%s4234] ss:$2 sm:$0xff]
        %s4236 = scalar_lea.vmem [#allocation2], 64
        %v4237 = vld [vmem:[%s4236] ss:$2 sm:$0xff]
        %s4238 = scalar_lea.vmem [#allocation2], 80
        %v4239 = vld [vmem:[%s4238] ss:$2 sm:$0xff]
        %s4240 = scalar_lea.vmem [#allocation2], 96
        %v4241 = vld [vmem:[%s4240] ss:$2 sm:$0xff]
        %s4242 = scalar_lea.vmem [#allocation2], 112
        %v4243 = vld [vmem:[%s4242] ss:$2 sm:$0xff]
        %v4244 = vand.u32 %v286, 7
        %v4245 = vand.u32 %v287, 7
        %v4246 = vand.u32 %v288, 7
        %v4247 = vand.u32 %v289, 7
        %v4248 = vand.u32 %v290, 7
        %v4249 = vand.u32 %v291, 7
        %v4250 = vand.u32 %v292, 7
        %v4251 = vand.u32 %v293, 7
        %v4252 = vshra.s32 %v286, 3
        %v4253 = vshra.s32 %v287, 3
        %v4254 = vshra.s32 %v288, 3
        %v4255 = vshra.s32 %v289, 3
        %v4256 = vshra.s32 %v290, 3
        %v4257 = vshra.s32 %v291, 3
        %v4258 = vshra.s32 %v292, 3
        %v4259 = vshra.s32 %v293, 3
        %v4260 = vand.u32 %v4252, 7
        %v4261 = vand.u32 %v4253, 7
        %v4262 = vand.u32 %v4254, 7
        %v4263 = vand.u32 %v4255, 7
        %v4264 = vand.u32 %v4256, 7
        %v4265 = vand.u32 %v4257, 7
        %v4266 = vand.u32 %v4258, 7
        %v4267 = vand.u32 %v4259, 7
        %v4268 = vpack.c.bf16 %v4231, %v4229
        %v4269 = vpack.c.bf16 %v4235, %v4233
        %v4270 = vpack.c.bf16 %v4239, %v4237
        %v4271 = vpack.c.bf16 %v4243, %v4241
        %v4273 = vshrl.u32 %v4271, 16
        %v4275 = vrot.slane %v4273, 3
        %v4276 = vshll.u32 %v4271, 16
        %v4278 = vrot.slane %v4276, 4
        %v4279 = vor.u32 %v4275, %v4278
        %vm4281 = vsmask.f32 4352
        %v4283 = vshrl.u32 %v4268, 16
        %v4285 = vrot.slane %v4283, 3
        %v4286 = vshll.u32 %v4268, 16
        %v4288 = vrot.slane %v4286, 4
        %v4289 = vor.u32 %v4285, %v4288
        %v4291 = vshrl.u32 %v4269, 16
        %v4293 = vrot.slane %v4291, 3
        %v4294 = vshll.u32 %v4269, 16
        %v4296 = vrot.slane %v4294, 4
        %v4297 = vor.u32 %v4293, %v4296
        %v4298 = vsel %vm4281, %v4289, %v4297
        %v4300 = vshrl.u32 %v4270, 16
        %v4302 = vrot.slane %v4300, 3
        %v4303 = vshll.u32 %v4270, 16
        %v4305 = vrot.slane %v4303, 4
        %v4306 = vor.u32 %v4302, %v4305
        %v4307 = vsel %vm4281, %v4297, %v4306
        %v4308 = vsel %vm4281, %v4306, %v4279
        %vm4313 = vcmask 1044480
        %vm4314 = vmand %vm4313, %vm4281
        %v4315 = vsel %vm4314, %v4279, %v4289
        %v4316 = vadd.s32 %v4260, 4294967295
        %v4317 = vadd.s32 %v4261, 4294967295
        %v4318 = vadd.s32 %v4262, 4294967295
        %v4319 = vadd.s32 %v4263, 4294967295
        %v4320 = vadd.s32 %v4264, 4294967295
        %v4321 = vadd.s32 %v4265, 4294967295
        %v4322 = vadd.s32 %v4266, 4294967295
        %v4323 = vadd.s32 %v4267, 4294967295
        %vm4324 = vcmp.ge.s32.totalorder %v4316, 0
        %vm4325 = vcmp.ge.s32.totalorder %v4317, 0
        %vm4326 = vcmp.ge.s32.totalorder %v4318, 0
        %vm4327 = vcmp.ge.s32.totalorder %v4319, 0
        %vm4328 = vcmp.ge.s32.totalorder %v4320, 0
        %vm4329 = vcmp.ge.s32.totalorder %v4321, 0
        %vm4330 = vcmp.ge.s32.totalorder %v4322, 0
        %vm4331 = vcmp.ge.s32.totalorder %v4323, 0
        %vm4332 = vcmp.lt.s32.totalorder %v4316, 8
        %vm4333 = vcmp.lt.s32.totalorder %v4317, 8
        %vm4334 = vcmp.lt.s32.totalorder %v4318, 8
        %vm4335 = vcmp.lt.s32.totalorder %v4319, 8
        %vm4336 = vcmp.lt.s32.totalorder %v4320, 8
        %vm4337 = vcmp.lt.s32.totalorder %v4321, 8
        %vm4338 = vcmp.lt.s32.totalorder %v4322, 8
        %vm4339 = vcmp.lt.s32.totalorder %v4323, 8
        %vm4340 = vmand %vm4324, %vm4332
        %vm4341 = vmand %vm4325, %vm4333
        %vm4342 = vmand %vm4326, %vm4334
        %vm4343 = vmand %vm4327, %vm4335
        %vm4344 = vmand %vm4328, %vm4336
        %vm4345 = vmand %vm4329, %vm4337
        %vm4346 = vmand %vm4330, %vm4338
        %vm4347 = vmand %vm4331, %vm4339
        %v4348 = vadd.s32 %v4244, 4294967295
        %v4349 = vadd.s32 %v4245, 4294967295
        %v4350 = vadd.s32 %v4246, 4294967295
        %v4351 = vadd.s32 %v4247, 4294967295
        %v4352 = vadd.s32 %v4248, 4294967295
        %v4353 = vadd.s32 %v4249, 4294967295
        %v4354 = vadd.s32 %v4250, 4294967295
        %v4355 = vadd.s32 %v4251, 4294967295
        %vm4356 = vcmp.ge.s32.totalorder %v4348, 0
        %vm4357 = vcmp.ge.s32.totalorder %v4349, 0
        %vm4358 = vcmp.ge.s32.totalorder %v4350, 0
        %vm4359 = vcmp.ge.s32.totalorder %v4351, 0
        %vm4360 = vcmp.ge.s32.totalorder %v4352, 0
        %vm4361 = vcmp.ge.s32.totalorder %v4353, 0
        %vm4362 = vcmp.ge.s32.totalorder %v4354, 0
        %vm4363 = vcmp.ge.s32.totalorder %v4355, 0
        %vm4364 = vmand %vm4340, %vm4356
        %vm4365 = vmand %vm4341, %vm4357
        %vm4366 = vmand %vm4342, %vm4358
        %vm4367 = vmand %vm4343, %vm4359
        %vm4368 = vmand %vm4344, %vm4360
        %vm4369 = vmand %vm4345, %vm4361
        %vm4370 = vmand %vm4346, %vm4362
        %vm4371 = vmand %vm4347, %vm4363
        %vm4372 = vcmp.lt.s32.totalorder %v4348, 8
        %vm4373 = vcmp.lt.s32.totalorder %v4349, 8
        %vm4374 = vcmp.lt.s32.totalorder %v4350, 8
        %vm4375 = vcmp.lt.s32.totalorder %v4351, 8
        %vm4376 = vcmp.lt.s32.totalorder %v4352, 8
        %vm4377 = vcmp.lt.s32.totalorder %v4353, 8
        %vm4378 = vcmp.lt.s32.totalorder %v4354, 8
        %vm4379 = vcmp.lt.s32.totalorder %v4355, 8
        %vm4380 = vmand %vm4364, %vm4372
        %vm4381 = vmand %vm4365, %vm4373
        %vm4382 = vmand %vm4366, %vm4374
        %vm4383 = vmand %vm4367, %vm4375
        %vm4384 = vmand %vm4368, %vm4376
        %vm4385 = vmand %vm4369, %vm4377
        %vm4386 = vmand %vm4370, %vm4378
        %vm4387 = vmand %vm4371, %vm4379
        %v4388 = vsel %vm4380, 1, 0
        %v4389 = vsel %vm4381, 1, 0
        %v4390 = vsel %vm4382, 1, 0
        %v4391 = vsel %vm4383, 1, 0
        %v4392 = vsel %vm4384, 1, 0
        %v4393 = vsel %vm4385, 1, 0
        %v4394 = vsel %vm4386, 1, 0
        %v4395 = vsel %vm4387, 1, 0
        %vm4396 = vcmp.eq.s32.totalorder %v4388, 1
        %vm4397 = vcmp.eq.s32.totalorder %v4389, 1
        %vm4398 = vcmp.eq.s32.totalorder %v4390, 1
        %vm4399 = vcmp.eq.s32.totalorder %v4391, 1
        %vm4400 = vcmp.eq.s32.totalorder %v4392, 1
        %vm4401 = vcmp.eq.s32.totalorder %v4393, 1
        %vm4402 = vcmp.eq.s32.totalorder %v4394, 1
        %vm4403 = vcmp.eq.s32.totalorder %v4395, 1
        %vm4404 = vmpackc.low %vm4396, %vm4396
        %vm4405 = vmpackc.low %vm4397, %vm4397
        %vm4406 = vmpackc.low %vm4398, %vm4398
        %vm4407 = vmpackc.low %vm4399, %vm4399
        %vm4408 = vmpackc.low %vm4400, %vm4400
        %vm4409 = vmpackc.low %vm4401, %vm4401
        %vm4410 = vmpackc.low %vm4402, %vm4402
        %vm4411 = vmpackc.low %vm4403, %vm4403
        %v4412 = vsel %vm4404, 65537, 0
        %v4413 = vsel %vm4405, 65537, 0
        %v4414 = vsel %vm4406, 65537, 0
        %v4415 = vsel %vm4407, 65537, 0
        %v4416 = vsel %vm4408, 65537, 0
        %v4417 = vsel %vm4409, 65537, 0
        %v4418 = vsel %vm4410, 65537, 0
        %v4419 = vsel %vm4411, 65537, 0
        %v4420 = vunpack.c.l.b16 %v4412
        %v4421 = vunpack.c.l.b16 %v4413
        %v4422 = vunpack.c.l.b16 %v4414
        %v4423 = vunpack.c.l.b16 %v4415
        %v4424 = vunpack.c.l.b16 %v4416
        %v4425 = vunpack.c.l.b16 %v4417
        %v4426 = vunpack.c.l.b16 %v4418
        %v4427 = vunpack.c.l.b16 %v4419
        %v4428 = vpack.c.b16 %v4421, %v4420
        %v4429 = vpack.c.b16 %v4423, %v4422
        %v4430 = vpack.c.b16 %v4425, %v4424
        %v4431 = vpack.c.b16 %v4427, %v4426
        %vm4432 = vcmp.ne.s16.totalorder %v4428, 0
        %vm4433 = vcmp.ne.s16.totalorder %v4429, 0
        %vm4434 = vcmp.ne.s16.totalorder %v4430, 0
        %vm4435 = vcmp.ne.s16.totalorder %v4431, 0
        %v4436 = vsel %vm4432, %v4315, 0
        %v4437 = vsel %vm4433, %v4298, 0
        %v4438 = vsel %vm4434, %v4307, 0
        %v4439 = vsel %vm4435, %v4308, 0
        %v4441 = vrot.slane %v4271, 4
        %vm4445 = vcmask 1043456
        %v4446 = vrot.slane %v4268, 4
        %v4447 = vrot.slane %v4269, 4
        %v4448 = vsel %vm4445, %v4446, %v4447
        %v4449 = vrot.slane %v4270, 4
        %v4450 = vsel %vm4445, %v4447, %v4449
        %v4451 = vsel %vm4445, %v4449, %v4441
        %v4457 = vsel %vm3834, %v4441, %v4446
        %vm4459 = vcmp.ge.s32.totalorder %v4244, 0
        %vm4460 = vcmp.ge.s32.totalorder %v4245, 0
        %vm4461 = vcmp.ge.s32.totalorder %v4246, 0
        %vm4462 = vcmp.ge.s32.totalorder %v4247, 0
        %vm4463 = vcmp.ge.s32.totalorder %v4248, 0
        %vm4464 = vcmp.ge.s32.totalorder %v4249, 0
        %vm4465 = vcmp.ge.s32.totalorder %v4250, 0
        %vm4466 = vcmp.ge.s32.totalorder %v4251, 0
        %vm4467 = vmand %vm4340, %vm4459
        %vm4468 = vmand %vm4341, %vm4460
        %vm4469 = vmand %vm4342, %vm4461
        %vm4470 = vmand %vm4343, %vm4462
        %vm4471 = vmand %vm4344, %vm4463
        %vm4472 = vmand %vm4345, %vm4464
        %vm4473 = vmand %vm4346, %vm4465
        %vm4474 = vmand %vm4347, %vm4466
        %vm4475 = vcmp.lt.s32.totalorder %v4244, 8
        %vm4476 = vcmp.lt.s32.totalorder %v4245, 8
        %vm4477 = vcmp.lt.s32.totalorder %v4246, 8
        %vm4478 = vcmp.lt.s32.totalorder %v4247, 8
        %vm4479 = vcmp.lt.s32.totalorder %v4248, 8
        %vm4480 = vcmp.lt.s32.totalorder %v4249, 8
        %vm4481 = vcmp.lt.s32.totalorder %v4250, 8
        %vm4482 = vcmp.lt.s32.totalorder %v4251, 8
        %vm4483 = vmand %vm4467, %vm4475
        %vm4484 = vmand %vm4468, %vm4476
        %vm4485 = vmand %vm4469, %vm4477
        %vm4486 = vmand %vm4470, %vm4478
        %vm4487 = vmand %vm4471, %vm4479
        %vm4488 = vmand %vm4472, %vm4480
        %vm4489 = vmand %vm4473, %vm4481
        %vm4490 = vmand %vm4474, %vm4482
        %v4491 = vsel %vm4483, 1, 0
        %v4492 = vsel %vm4484, 1, 0
        %v4493 = vsel %vm4485, 1, 0
        %v4494 = vsel %vm4486, 1, 0
        %v4495 = vsel %vm4487, 1, 0
        %v4496 = vsel %vm4488, 1, 0
        %v4497 = vsel %vm4489, 1, 0
        %v4498 = vsel %vm4490, 1, 0
        %vm4499 = vcmp.eq.s32.totalorder %v4491, 1
        %vm4500 = vcmp.eq.s32.totalorder %v4492, 1
        %vm4501 = vcmp.eq.s32.totalorder %v4493, 1
        %vm4502 = vcmp.eq.s32.totalorder %v4494, 1
        %vm4503 = vcmp.eq.s32.totalorder %v4495, 1
        %vm4504 = vcmp.eq.s32.totalorder %v4496, 1
        %vm4505 = vcmp.eq.s32.totalorder %v4497, 1
        %vm4506 = vcmp.eq.s32.totalorder %v4498, 1
        %vm4507 = vmpackc.low %vm4499, %vm4499
        %vm4508 = vmpackc.low %vm4500, %vm4500
        %vm4509 = vmpackc.low %vm4501, %vm4501
        %vm4510 = vmpackc.low %vm4502, %vm4502
        %vm4511 = vmpackc.low %vm4503, %vm4503
        %vm4512 = vmpackc.low %vm4504, %vm4504
        %vm4513 = vmpackc.low %vm4505, %vm4505
        %vm4514 = vmpackc.low %vm4506, %vm4506
        %v4515 = vsel %vm4507, 65537, 0
        %v4516 = vsel %vm4508, 65537, 0
        %v4517 = vsel %vm4509, 65537, 0
        %v4518 = vsel %vm4510, 65537, 0
        %v4519 = vsel %vm4511, 65537, 0
        %v4520 = vsel %vm4512, 65537, 0
        %v4521 = vsel %vm4513, 65537, 0
        %v4522 = vsel %vm4514, 65537, 0
        %v4523 = vunpack.c.l.b16 %v4515
        %v4524 = vunpack.c.l.b16 %v4516
        %v4525 = vunpack.c.l.b16 %v4517
        %v4526 = vunpack.c.l.b16 %v4518
        %v4527 = vunpack.c.l.b16 %v4519
        %v4528 = vunpack.c.l.b16 %v4520
        %v4529 = vunpack.c.l.b16 %v4521
        %v4530 = vunpack.c.l.b16 %v4522
        %v4531 = vpack.c.b16 %v4524, %v4523
        %v4532 = vpack.c.b16 %v4526, %v4525
        %v4533 = vpack.c.b16 %v4528, %v4527
        %v4534 = vpack.c.b16 %v4530, %v4529
        %vm4535 = vcmp.ne.s16.totalorder %v4531, 0
        %vm4536 = vcmp.ne.s16.totalorder %v4532, 0
        %vm4537 = vcmp.ne.s16.totalorder %v4533, 0
        %vm4538 = vcmp.ne.s16.totalorder %v4534, 0
        %v4539 = vsel %vm4535, %v4457, 0
        %v4540 = vsel %vm4536, %v4448, 0
        %v4541 = vsel %vm4537, %v4450, 0
        %v4542 = vsel %vm4538, %v4451, 0
        %v4543 = vrot.slane %v4273, 4
        %v4544 = vrot.slane %v4276, 5
        %v4545 = vor.u32 %v4543, %v4544
        %vm4547 = vsmask.f32 3328
        %v4548 = vrot.slane %v4283, 4
        %v4549 = vrot.slane %v4286, 5
        %v4550 = vor.u32 %v4548, %v4549
        %v4551 = vrot.slane %v4291, 4
        %v4552 = vrot.slane %v4294, 5
        %v4553 = vor.u32 %v4551, %v4552
        %v4554 = vsel %vm4547, %v4550, %v4553
        %v4555 = vrot.slane %v4300, 4
        %v4556 = vrot.slane %v4303, 5
        %v4557 = vor.u32 %v4555, %v4556
        %v4558 = vsel %vm4547, %v4553, %v4557
        %v4559 = vsel %vm4547, %v4557, %v4545
        %vm4564 = vmand %vm4445, %vm4547
        %v4565 = vsel %vm4564, %v4545, %v4550
        %v4566 = vadd.s32 %v4244, 1
        %v4567 = vadd.s32 %v4245, 1
        %v4568 = vadd.s32 %v4246, 1
        %v4569 = vadd.s32 %v4247, 1
        %v4570 = vadd.s32 %v4248, 1
        %v4571 = vadd.s32 %v4249, 1
        %v4572 = vadd.s32 %v4250, 1
        %v4573 = vadd.s32 %v4251, 1
        %vm4574 = vcmp.ge.s32.totalorder %v4566, 0
        %vm4575 = vcmp.ge.s32.totalorder %v4567, 0
        %vm4576 = vcmp.ge.s32.totalorder %v4568, 0
        %vm4577 = vcmp.ge.s32.totalorder %v4569, 0
        %vm4578 = vcmp.ge.s32.totalorder %v4570, 0
        %vm4579 = vcmp.ge.s32.totalorder %v4571, 0
        %vm4580 = vcmp.ge.s32.totalorder %v4572, 0
        %vm4581 = vcmp.ge.s32.totalorder %v4573, 0
        %vm4582 = vmand %vm4340, %vm4574
        %vm4583 = vmand %vm4341, %vm4575
        %vm4584 = vmand %vm4342, %vm4576
        %vm4585 = vmand %vm4343, %vm4577
        %vm4586 = vmand %vm4344, %vm4578
        %vm4587 = vmand %vm4345, %vm4579
        %vm4588 = vmand %vm4346, %vm4580
        %vm4589 = vmand %vm4347, %vm4581
        %vm4590 = vcmp.lt.s32.totalorder %v4566, 8
        %vm4591 = vcmp.lt.s32.totalorder %v4567, 8
        %vm4592 = vcmp.lt.s32.totalorder %v4568, 8
        %vm4593 = vcmp.lt.s32.totalorder %v4569, 8
        %vm4594 = vcmp.lt.s32.totalorder %v4570, 8
        %vm4595 = vcmp.lt.s32.totalorder %v4571, 8
        %vm4596 = vcmp.lt.s32.totalorder %v4572, 8
        %vm4597 = vcmp.lt.s32.totalorder %v4573, 8
        %vm4598 = vmand %vm4582, %vm4590
        %vm4599 = vmand %vm4583, %vm4591
        %vm4600 = vmand %vm4584, %vm4592
        %vm4601 = vmand %vm4585, %vm4593
        %vm4602 = vmand %vm4586, %vm4594
        %vm4603 = vmand %vm4587, %vm4595
        %vm4604 = vmand %vm4588, %vm4596
        %vm4605 = vmand %vm4589, %vm4597
        %v4606 = vsel %vm4598, 1, 0
        %v4607 = vsel %vm4599, 1, 0
        %v4608 = vsel %vm4600, 1, 0
        %v4609 = vsel %vm4601, 1, 0
        %v4610 = vsel %vm4602, 1, 0
        %v4611 = vsel %vm4603, 1, 0
        %v4612 = vsel %vm4604, 1, 0
        %v4613 = vsel %vm4605, 1, 0
        %vm4614 = vcmp.eq.s32.totalorder %v4606, 1
        %vm4615 = vcmp.eq.s32.totalorder %v4607, 1
        %vm4616 = vcmp.eq.s32.totalorder %v4608, 1
        %vm4617 = vcmp.eq.s32.totalorder %v4609, 1
        %vm4618 = vcmp.eq.s32.totalorder %v4610, 1
        %vm4619 = vcmp.eq.s32.totalorder %v4611, 1
        %vm4620 = vcmp.eq.s32.totalorder %v4612, 1
        %vm4621 = vcmp.eq.s32.totalorder %v4613, 1
        %vm4622 = vmpackc.low %vm4614, %vm4614
        %vm4623 = vmpackc.low %vm4615, %vm4615
        %vm4624 = vmpackc.low %vm4616, %vm4616
        %vm4625 = vmpackc.low %vm4617, %vm4617
        %vm4626 = vmpackc.low %vm4618, %vm4618
        %vm4627 = vmpackc.low %vm4619, %vm4619
        %vm4628 = vmpackc.low %vm4620, %vm4620
        %vm4629 = vmpackc.low %vm4621, %vm4621
        %v4630 = vsel %vm4622, 65537, 0
        %v4631 = vsel %vm4623, 65537, 0
        %v4632 = vsel %vm4624, 65537, 0
        %v4633 = vsel %vm4625, 65537, 0
        %v4634 = vsel %vm4626, 65537, 0
        %v4635 = vsel %vm4627, 65537, 0
        %v4636 = vsel %vm4628, 65537, 0
        %v4637 = vsel %vm4629, 65537, 0
        %v4638 = vunpack.c.l.b16 %v4630
        %v4639 = vunpack.c.l.b16 %v4631
        %v4640 = vunpack.c.l.b16 %v4632
        %v4641 = vunpack.c.l.b16 %v4633
        %v4642 = vunpack.c.l.b16 %v4634
        %v4643 = vunpack.c.l.b16 %v4635
        %v4644 = vunpack.c.l.b16 %v4636
        %v4645 = vunpack.c.l.b16 %v4637
        %v4646 = vpack.c.b16 %v4639, %v4638
        %v4647 = vpack.c.b16 %v4641, %v4640
        %v4648 = vpack.c.b16 %v4643, %v4642
        %v4649 = vpack.c.b16 %v4645, %v4644
        %vm4650 = vcmp.ne.s16.totalorder %v4646, 0
        %vm4651 = vcmp.ne.s16.totalorder %v4647, 0
        %vm4652 = vcmp.ne.s16.totalorder %v4648, 0
        %vm4653 = vcmp.ne.s16.totalorder %v4649, 0
        %v4654 = vsel %vm4650, %v4565, 0
        %v4655 = vsel %vm4651, %v4554, 0
        %v4656 = vsel %vm4652, %v4558, 0
        %v4657 = vsel %vm4653, %v4559, 0
        %v4658 = vrot.slane %v4273, 7
        %v4660 = vrot.slane %v4283, 7
        %v4661 = vor.u32 %v4660, %v4286
        %v4662 = vrot.slane %v4291, 7
        %v4663 = vor.u32 %v4662, %v4294
        %v4664 = vsel %vm430, %v4660, %v4663
        %v4665 = vrot.slane %v4300, 7
        %v4666 = vor.u32 %v4665, %v4303
        %v4667 = vsel %vm430, %v4662, %v4666
        %v4668 = vor.u32 %v4658, %v4276
        %v4669 = vsel %vm430, %v4665, %v4668
        %v4674 = vsel %vm576, %v4658, %v4661
        %vm4675 = vcmp.ge.s32.totalorder %v4260, 0
        %vm4676 = vcmp.ge.s32.totalorder %v4261, 0
        %vm4677 = vcmp.ge.s32.totalorder %v4262, 0
        %vm4678 = vcmp.ge.s32.totalorder %v4263, 0
        %vm4679 = vcmp.ge.s32.totalorder %v4264, 0
        %vm4680 = vcmp.ge.s32.totalorder %v4265, 0
        %vm4681 = vcmp.ge.s32.totalorder %v4266, 0
        %vm4682 = vcmp.ge.s32.totalorder %v4267, 0
        %vm4683 = vcmp.lt.s32.totalorder %v4260, 8
        %vm4684 = vcmp.lt.s32.totalorder %v4261, 8
        %vm4685 = vcmp.lt.s32.totalorder %v4262, 8
        %vm4686 = vcmp.lt.s32.totalorder %v4263, 8
        %vm4687 = vcmp.lt.s32.totalorder %v4264, 8
        %vm4688 = vcmp.lt.s32.totalorder %v4265, 8
        %vm4689 = vcmp.lt.s32.totalorder %v4266, 8
        %vm4690 = vcmp.lt.s32.totalorder %v4267, 8
        %vm4691 = vmand %vm4675, %vm4683
        %vm4692 = vmand %vm4676, %vm4684
        %vm4693 = vmand %vm4677, %vm4685
        %vm4694 = vmand %vm4678, %vm4686
        %vm4695 = vmand %vm4679, %vm4687
        %vm4696 = vmand %vm4680, %vm4688
        %vm4697 = vmand %vm4681, %vm4689
        %vm4698 = vmand %vm4682, %vm4690
        %vm4699 = vmand %vm4691, %vm4356
        %vm4700 = vmand %vm4692, %vm4357
        %vm4701 = vmand %vm4693, %vm4358
        %vm4702 = vmand %vm4694, %vm4359
        %vm4703 = vmand %vm4695, %vm4360
        %vm4704 = vmand %vm4696, %vm4361
        %vm4705 = vmand %vm4697, %vm4362
        %vm4706 = vmand %vm4698, %vm4363
        %vm4707 = vmand %vm4699, %vm4372
        %vm4708 = vmand %vm4700, %vm4373
        %vm4709 = vmand %vm4701, %vm4374
        %vm4710 = vmand %vm4702, %vm4375
        %vm4711 = vmand %vm4703, %vm4376
        %vm4712 = vmand %vm4704, %vm4377
        %vm4713 = vmand %vm4705, %vm4378
        %vm4714 = vmand %vm4706, %vm4379
        %v4715 = vsel %vm4707, 1, 0
        %v4716 = vsel %vm4708, 1, 0
        %v4717 = vsel %vm4709, 1, 0
        %v4718 = vsel %vm4710, 1, 0
        %v4719 = vsel %vm4711, 1, 0
        %v4720 = vsel %vm4712, 1, 0
        %v4721 = vsel %vm4713, 1, 0
        %v4722 = vsel %vm4714, 1, 0
        %vm4723 = vcmp.eq.s32.totalorder %v4715, 1
        %vm4724 = vcmp.eq.s32.totalorder %v4716, 1
        %vm4725 = vcmp.eq.s32.totalorder %v4717, 1
        %vm4726 = vcmp.eq.s32.totalorder %v4718, 1
        %vm4727 = vcmp.eq.s32.totalorder %v4719, 1
        %vm4728 = vcmp.eq.s32.totalorder %v4720, 1
        %vm4729 = vcmp.eq.s32.totalorder %v4721, 1
        %vm4730 = vcmp.eq.s32.totalorder %v4722, 1
        %vm4731 = vmpackc.low %vm4723, %vm4723
        %vm4732 = vmpackc.low %vm4724, %vm4724
        %vm4733 = vmpackc.low %vm4725, %vm4725
        %vm4734 = vmpackc.low %vm4726, %vm4726
        %vm4735 = vmpackc.low %vm4727, %vm4727
        %vm4736 = vmpackc.low %vm4728, %vm4728
        %vm4737 = vmpackc.low %vm4729, %vm4729
        %vm4738 = vmpackc.low %vm4730, %vm4730
        %v4739 = vsel %vm4731, 65537, 0
        %v4740 = vsel %vm4732, 65537, 0
        %v4741 = vsel %vm4733, 65537, 0
        %v4742 = vsel %vm4734, 65537, 0
        %v4743 = vsel %vm4735, 65537, 0
        %v4744 = vsel %vm4736, 65537, 0
        %v4745 = vsel %vm4737, 65537, 0
        %v4746 = vsel %vm4738, 65537, 0
        %v4747 = vunpack.c.l.b16 %v4739
        %v4748 = vunpack.c.l.b16 %v4740
        %v4749 = vunpack.c.l.b16 %v4741
        %v4750 = vunpack.c.l.b16 %v4742
        %v4751 = vunpack.c.l.b16 %v4743
        %v4752 = vunpack.c.l.b16 %v4744
        %v4753 = vunpack.c.l.b16 %v4745
        %v4754 = vunpack.c.l.b16 %v4746
        %v4755 = vpack.c.b16 %v4748, %v4747
        %v4756 = vpack.c.b16 %v4750, %v4749
        %v4757 = vpack.c.b16 %v4752, %v4751
        %v4758 = vpack.c.b16 %v4754, %v4753
        %vm4759 = vcmp.ne.s16.totalorder %v4755, 0
        %vm4760 = vcmp.ne.s16.totalorder %v4756, 0
        %vm4761 = vcmp.ne.s16.totalorder %v4757, 0
        %vm4762 = vcmp.ne.s16.totalorder %v4758, 0
        %v4763 = vsel %vm4759, %v4674, 0
        %v4764 = vsel %vm4760, %v4664, 0
        %v4765 = vsel %vm4761, %v4667, 0
        %v4766 = vsel %vm4762, %v4669, 0
        %vm4767 = vmand %vm4691, %vm4459
        %vm4768 = vmand %vm4692, %vm4460
        %vm4769 = vmand %vm4693, %vm4461
        %vm4770 = vmand %vm4694, %vm4462
        %vm4771 = vmand %vm4695, %vm4463
        %vm4772 = vmand %vm4696, %vm4464
        %vm4773 = vmand %vm4697, %vm4465
        %vm4774 = vmand %vm4698, %vm4466
        %vm4775 = vmand %vm4767, %vm4475
        %vm4776 = vmand %vm4768, %vm4476
        %vm4777 = vmand %vm4769, %vm4477
        %vm4778 = vmand %vm4770, %vm4478
        %vm4779 = vmand %vm4771, %vm4479
        %vm4780 = vmand %vm4772, %vm4480
        %vm4781 = vmand %vm4773, %vm4481
        %vm4782 = vmand %vm4774, %vm4482
        %v4783 = vsel %vm4775, 1, 0
        %v4784 = vsel %vm4776, 1, 0
        %v4785 = vsel %vm4777, 1, 0
        %v4786 = vsel %vm4778, 1, 0
        %v4787 = vsel %vm4779, 1, 0
        %v4788 = vsel %vm4780, 1, 0
        %v4789 = vsel %vm4781, 1, 0
        %v4790 = vsel %vm4782, 1, 0
        %vm4791 = vcmp.eq.s32.totalorder %v4783, 1
        %vm4792 = vcmp.eq.s32.totalorder %v4784, 1
        %vm4793 = vcmp.eq.s32.totalorder %v4785, 1
        %vm4794 = vcmp.eq.s32.totalorder %v4786, 1
        %vm4795 = vcmp.eq.s32.totalorder %v4787, 1
        %vm4796 = vcmp.eq.s32.totalorder %v4788, 1
        %vm4797 = vcmp.eq.s32.totalorder %v4789, 1
        %vm4798 = vcmp.eq.s32.totalorder %v4790, 1
        %vm4799 = vmpackc.low %vm4791, %vm4791
        %vm4800 = vmpackc.low %vm4792, %vm4792
        %vm4801 = vmpackc.low %vm4793, %vm4793
        %vm4802 = vmpackc.low %vm4794, %vm4794
        %vm4803 = vmpackc.low %vm4795, %vm4795
        %vm4804 = vmpackc.low %vm4796, %vm4796
        %vm4805 = vmpackc.low %vm4797, %vm4797
        %vm4806 = vmpackc.low %vm4798, %vm4798
        %v4807 = vsel %vm4799, 65537, 0
        %v4808 = vsel %vm4800, 65537, 0
        %v4809 = vsel %vm4801, 65537, 0
        %v4810 = vsel %vm4802, 65537, 0
        %v4811 = vsel %vm4803, 65537, 0
        %v4812 = vsel %vm4804, 65537, 0
        %v4813 = vsel %vm4805, 65537, 0
        %v4814 = vsel %vm4806, 65537, 0
        %v4815 = vunpack.c.l.b16 %v4807
        %v4816 = vunpack.c.l.b16 %v4808
        %v4817 = vunpack.c.l.b16 %v4809
        %v4818 = vunpack.c.l.b16 %v4810
        %v4819 = vunpack.c.l.b16 %v4811
        %v4820 = vunpack.c.l.b16 %v4812
        %v4821 = vunpack.c.l.b16 %v4813
        %v4822 = vunpack.c.l.b16 %v4814
        %v4823 = vpack.c.b16 %v4816, %v4815
        %v4824 = vpack.c.b16 %v4818, %v4817
        %v4825 = vpack.c.b16 %v4820, %v4819
        %v4826 = vpack.c.b16 %v4822, %v4821
        %vm4827 = vcmp.ne.s16.totalorder %v4823, 0
        %vm4828 = vcmp.ne.s16.totalorder %v4824, 0
        %vm4829 = vcmp.ne.s16.totalorder %v4825, 0
        %vm4830 = vcmp.ne.s16.totalorder %v4826, 0
        %v4831 = vsel %vm4827, %v4268, 0
        %v4832 = vsel %vm4828, %v4269, 0
        %v4833 = vsel %vm4829, %v4270, 0
        %v4834 = vsel %vm4830, %v4271, 0
        %v4835 = vrot.slane %v4286, 1
        %v4836 = vor.u32 %v4283, %v4835
        %v4837 = vrot.slane %v4294, 1
        %v4838 = vsel %vm1285, %v4836, %v4837
        %v4839 = vor.u32 %v4291, %v4837
        %v4840 = vrot.slane %v4303, 1
        %v4841 = vsel %vm1285, %v4839, %v4840
        %v4842 = vor.u32 %v4300, %v4840
        %v4843 = vrot.slane %v4276, 1
        %v4844 = vsel %vm1285, %v4842, %v4843
        %v4845 = vor.u32 %v4273, %v4843
        %v4851 = vsel %vm1348, %v4845, %v4835
        %vm4852 = vmand %vm4691, %vm4574
        %vm4853 = vmand %vm4692, %vm4575
        %vm4854 = vmand %vm4693, %vm4576
        %vm4855 = vmand %vm4694, %vm4577
        %vm4856 = vmand %vm4695, %vm4578
        %vm4857 = vmand %vm4696, %vm4579
        %vm4858 = vmand %vm4697, %vm4580
        %vm4859 = vmand %vm4698, %vm4581
        %vm4860 = vmand %vm4852, %vm4590
        %vm4861 = vmand %vm4853, %vm4591
        %vm4862 = vmand %vm4854, %vm4592
        %vm4863 = vmand %vm4855, %vm4593
        %vm4864 = vmand %vm4856, %vm4594
        %vm4865 = vmand %vm4857, %vm4595
        %vm4866 = vmand %vm4858, %vm4596
        %vm4867 = vmand %vm4859, %vm4597
        %v4868 = vsel %vm4860, 1, 0
        %v4869 = vsel %vm4861, 1, 0
        %v4870 = vsel %vm4862, 1, 0
        %v4871 = vsel %vm4863, 1, 0
        %v4872 = vsel %vm4864, 1, 0
        %v4873 = vsel %vm4865, 1, 0
        %v4874 = vsel %vm4866, 1, 0
        %v4875 = vsel %vm4867, 1, 0
        %vm4876 = vcmp.eq.s32.totalorder %v4868, 1
        %vm4877 = vcmp.eq.s32.totalorder %v4869, 1
        %vm4878 = vcmp.eq.s32.totalorder %v4870, 1
        %vm4879 = vcmp.eq.s32.totalorder %v4871, 1
        %vm4880 = vcmp.eq.s32.totalorder %v4872, 1
        %vm4881 = vcmp.eq.s32.totalorder %v4873, 1
        %vm4882 = vcmp.eq.s32.totalorder %v4874, 1
        %vm4883 = vcmp.eq.s32.totalorder %v4875, 1
        %vm4884 = vmpackc.low %vm4876, %vm4876
        %vm4885 = vmpackc.low %vm4877, %vm4877
        %vm4886 = vmpackc.low %vm4878, %vm4878
        %vm4887 = vmpackc.low %vm4879, %vm4879
        %vm4888 = vmpackc.low %vm4880, %vm4880
        %vm4889 = vmpackc.low %vm4881, %vm4881
        %vm4890 = vmpackc.low %vm4882, %vm4882
        %vm4891 = vmpackc.low %vm4883, %vm4883
        %v4892 = vsel %vm4884, 65537, 0
        %v4893 = vsel %vm4885, 65537, 0
        %v4894 = vsel %vm4886, 65537, 0
        %v4895 = vsel %vm4887, 65537, 0
        %v4896 = vsel %vm4888, 65537, 0
        %v4897 = vsel %vm4889, 65537, 0
        %v4898 = vsel %vm4890, 65537, 0
        %v4899 = vsel %vm4891, 65537, 0
        %v4900 = vunpack.c.l.b16 %v4892
        %v4901 = vunpack.c.l.b16 %v4893
        %v4902 = vunpack.c.l.b16 %v4894
        %v4903 = vunpack.c.l.b16 %v4895
        %v4904 = vunpack.c.l.b16 %v4896
        %v4905 = vunpack.c.l.b16 %v4897
        %v4906 = vunpack.c.l.b16 %v4898
        %v4907 = vunpack.c.l.b16 %v4899
        %v4908 = vpack.c.b16 %v4901, %v4900
        %v4909 = vpack.c.b16 %v4903, %v4902
        %v4910 = vpack.c.b16 %v4905, %v4904
        %v4911 = vpack.c.b16 %v4907, %v4906
        %vm4912 = vcmp.ne.s16.totalorder %v4908, 0
        %vm4913 = vcmp.ne.s16.totalorder %v4909, 0
        %vm4914 = vcmp.ne.s16.totalorder %v4910, 0
        %vm4915 = vcmp.ne.s16.totalorder %v4911, 0
        %v4916 = vsel %vm4912, %v4838, 0
        %v4917 = vsel %vm4913, %v4841, 0
        %v4918 = vsel %vm4914, %v4844, 0
        %v4919 = vsel %vm4915, %v4851, 0
        %v4920 = vadd.s32 %v4260, 1
        %v4921 = vadd.s32 %v4261, 1
        %v4922 = vadd.s32 %v4262, 1
        %v4923 = vadd.s32 %v4263, 1
        %v4924 = vadd.s32 %v4264, 1
        %v4925 = vadd.s32 %v4265, 1
        %v4926 = vadd.s32 %v4266, 1
        %v4927 = vadd.s32 %v4267, 1
        %vm4928 = vcmp.ge.s32.totalorder %v4920, 0
        %vm4929 = vcmp.ge.s32.totalorder %v4921, 0
        %vm4930 = vcmp.ge.s32.totalorder %v4922, 0
        %vm4931 = vcmp.ge.s32.totalorder %v4923, 0
        %vm4932 = vcmp.ge.s32.totalorder %v4924, 0
        %vm4933 = vcmp.ge.s32.totalorder %v4925, 0
        %vm4934 = vcmp.ge.s32.totalorder %v4926, 0
        %vm4935 = vcmp.ge.s32.totalorder %v4927, 0
        %vm4936 = vcmp.lt.s32.totalorder %v4920, 8
        %vm4937 = vcmp.lt.s32.totalorder %v4921, 8
        %vm4938 = vcmp.lt.s32.totalorder %v4922, 8
        %vm4939 = vcmp.lt.s32.totalorder %v4923, 8
        %vm4940 = vcmp.lt.s32.totalorder %v4924, 8
        %vm4941 = vcmp.lt.s32.totalorder %v4925, 8
        %vm4942 = vcmp.lt.s32.totalorder %v4926, 8
        %vm4943 = vcmp.lt.s32.totalorder %v4927, 8
        %vm4944 = vmand %vm4928, %vm4936
        %vm4945 = vmand %vm4929, %vm4937
        %vm4946 = vmand %vm4930, %vm4938
        %vm4947 = vmand %vm4931, %vm4939
        %vm4948 = vmand %vm4932, %vm4940
        %vm4949 = vmand %vm4933, %vm4941
        %vm4950 = vmand %vm4934, %vm4942
        %vm4951 = vmand %vm4935, %vm4943
        %vm4952 = vmand %vm4944, %vm4356
        %vm4953 = vmand %vm4945, %vm4357
        %vm4954 = vmand %vm4946, %vm4358
        %vm4955 = vmand %vm4947, %vm4359
        %vm4956 = vmand %vm4948, %vm4360
        %vm4957 = vmand %vm4949, %vm4361
        %vm4958 = vmand %vm4950, %vm4362
        %vm4959 = vmand %vm4951, %vm4363
        %vm4960 = vmand %vm4952, %vm4372
        %vm4961 = vmand %vm4953, %vm4373
        %vm4962 = vmand %vm4954, %vm4374
        %vm4963 = vmand %vm4955, %vm4375
        %vm4964 = vmand %vm4956, %vm4376
        %vm4965 = vmand %vm4957, %vm4377
        %vm4966 = vmand %vm4958, %vm4378
        %vm4967 = vmand %vm4959, %vm4379
        %v4968 = vsel %vm4960, 1, 0
        %v4969 = vsel %vm4961, 1, 0
        %v4970 = vsel %vm4962, 1, 0
        %v4971 = vsel %vm4963, 1, 0
        %v4972 = vsel %vm4964, 1, 0
        %v4973 = vsel %vm4965, 1, 0
        %v4974 = vsel %vm4966, 1, 0
        %v4975 = vsel %vm4967, 1, 0
        %vm4976 = vcmp.eq.s32.totalorder %v4968, 1
        %vm4977 = vcmp.eq.s32.totalorder %v4969, 1
        %vm4978 = vcmp.eq.s32.totalorder %v4970, 1
        %vm4979 = vcmp.eq.s32.totalorder %v4971, 1
        %vm4980 = vcmp.eq.s32.totalorder %v4972, 1
        %vm4981 = vcmp.eq.s32.totalorder %v4973, 1
        %vm4982 = vcmp.eq.s32.totalorder %v4974, 1
        %vm4983 = vcmp.eq.s32.totalorder %v4975, 1
        %vm4984 = vmpackc.low %vm4976, %vm4976
        %vm4985 = vmpackc.low %vm4977, %vm4977
        %vm4986 = vmpackc.low %vm4978, %vm4978
        %vm4987 = vmpackc.low %vm4979, %vm4979
        %vm4988 = vmpackc.low %vm4980, %vm4980
        %vm4989 = vmpackc.low %vm4981, %vm4981
        %vm4990 = vmpackc.low %vm4982, %vm4982
        %vm4991 = vmpackc.low %vm4983, %vm4983
        %v4992 = vsel %vm4984, 65537, 0
        %v4993 = vsel %vm4985, 65537, 0
        %v4994 = vsel %vm4986, 65537, 0
        %v4995 = vsel %vm4987, 65537, 0
        %v4996 = vsel %vm4988, 65537, 0
        %v4997 = vsel %vm4989, 65537, 0
        %v4998 = vsel %vm4990, 65537, 0
        %v4999 = vsel %vm4991, 65537, 0
        %v5000 = vunpack.c.l.b16 %v4992
        %v5001 = vunpack.c.l.b16 %v4993
        %v5002 = vunpack.c.l.b16 %v4994
        %v5003 = vunpack.c.l.b16 %v4995
        %v5004 = vunpack.c.l.b16 %v4996
        %v5005 = vunpack.c.l.b16 %v4997
        %v5006 = vunpack.c.l.b16 %v4998
        %v5007 = vunpack.c.l.b16 %v4999
        %v5008 = vpack.c.b16 %v5001, %v5000
        %v5009 = vpack.c.b16 %v5003, %v5002
        %v5010 = vpack.c.b16 %v5005, %v5004
        %v5011 = vpack.c.b16 %v5007, %v5006
        %vm5012 = vcmp.ne.s16.totalorder %v5008, 0
        %vm5013 = vcmp.ne.s16.totalorder %v5009, 0
        %vm5014 = vcmp.ne.s16.totalorder %v5010, 0
        %vm5015 = vcmp.ne.s16.totalorder %v5011, 0
        %v5016 = vsel %vm5012, %v4298, 0
        %v5017 = vsel %vm5013, %v4307, 0
        %v5018 = vsel %vm5014, %v4308, 0
        %v5019 = vsel %vm5015, %v4315, 0
        %vm5020 = vmand %vm4944, %vm4459
        %vm5021 = vmand %vm4945, %vm4460
        %vm5022 = vmand %vm4946, %vm4461
        %vm5023 = vmand %vm4947, %vm4462
        %vm5024 = vmand %vm4948, %vm4463
        %vm5025 = vmand %vm4949, %vm4464
        %vm5026 = vmand %vm4950, %vm4465
        %vm5027 = vmand %vm4951, %vm4466
        %vm5028 = vmand %vm5020, %vm4475
        %vm5029 = vmand %vm5021, %vm4476
        %vm5030 = vmand %vm5022, %vm4477
        %vm5031 = vmand %vm5023, %vm4478
        %vm5032 = vmand %vm5024, %vm4479
        %vm5033 = vmand %vm5025, %vm4480
        %vm5034 = vmand %vm5026, %vm4481
        %vm5035 = vmand %vm5027, %vm4482
        %v5036 = vsel %vm5028, 1, 0
        %v5037 = vsel %vm5029, 1, 0
        %v5038 = vsel %vm5030, 1, 0
        %v5039 = vsel %vm5031, 1, 0
        %v5040 = vsel %vm5032, 1, 0
        %v5041 = vsel %vm5033, 1, 0
        %v5042 = vsel %vm5034, 1, 0
        %v5043 = vsel %vm5035, 1, 0
        %vm5044 = vcmp.eq.s32.totalorder %v5036, 1
        %vm5045 = vcmp.eq.s32.totalorder %v5037, 1
        %vm5046 = vcmp.eq.s32.totalorder %v5038, 1
        %vm5047 = vcmp.eq.s32.totalorder %v5039, 1
        %vm5048 = vcmp.eq.s32.totalorder %v5040, 1
        %vm5049 = vcmp.eq.s32.totalorder %v5041, 1
        %vm5050 = vcmp.eq.s32.totalorder %v5042, 1
        %vm5051 = vcmp.eq.s32.totalorder %v5043, 1
        %vm5052 = vmpackc.low %vm5044, %vm5044
        %vm5053 = vmpackc.low %vm5045, %vm5045
        %vm5054 = vmpackc.low %vm5046, %vm5046
        %vm5055 = vmpackc.low %vm5047, %vm5047
        %vm5056 = vmpackc.low %vm5048, %vm5048
        %vm5057 = vmpackc.low %vm5049, %vm5049
        %vm5058 = vmpackc.low %vm5050, %vm5050
        %vm5059 = vmpackc.low %vm5051, %vm5051
        %v5060 = vsel %vm5052, 65537, 0
        %v5061 = vsel %vm5053, 65537, 0
        %v5062 = vsel %vm5054, 65537, 0
        %v5063 = vsel %vm5055, 65537, 0
        %v5064 = vsel %vm5056, 65537, 0
        %v5065 = vsel %vm5057, 65537, 0
        %v5066 = vsel %vm5058, 65537, 0
        %v5067 = vsel %vm5059, 65537, 0
        %v5068 = vunpack.c.l.b16 %v5060
        %v5069 = vunpack.c.l.b16 %v5061
        %v5070 = vunpack.c.l.b16 %v5062
        %v5071 = vunpack.c.l.b16 %v5063
        %v5072 = vunpack.c.l.b16 %v5064
        %v5073 = vunpack.c.l.b16 %v5065
        %v5074 = vunpack.c.l.b16 %v5066
        %v5075 = vunpack.c.l.b16 %v5067
        %v5076 = vpack.c.b16 %v5069, %v5068
        %v5077 = vpack.c.b16 %v5071, %v5070
        %v5078 = vpack.c.b16 %v5073, %v5072
        %v5079 = vpack.c.b16 %v5075, %v5074
        %vm5080 = vcmp.ne.s16.totalorder %v5076, 0
        %vm5081 = vcmp.ne.s16.totalorder %v5077, 0
        %vm5082 = vcmp.ne.s16.totalorder %v5078, 0
        %vm5083 = vcmp.ne.s16.totalorder %v5079, 0
        %v5084 = vsel %vm5080, %v4448, 0
        %v5085 = vsel %vm5081, %v4450, 0
        %v5086 = vsel %vm5082, %v4451, 0
        %v5087 = vsel %vm5083, %v4457, 0
        %vm5088 = vmand %vm4944, %vm4574
        %vm5089 = vmand %vm4945, %vm4575
        %vm5090 = vmand %vm4946, %vm4576
        %vm5091 = vmand %vm4947, %vm4577
        %vm5092 = vmand %vm4948, %vm4578
        %vm5093 = vmand %vm4949, %vm4579
        %vm5094 = vmand %vm4950, %vm4580
        %vm5095 = vmand %vm4951, %vm4581
        %vm5096 = vmand %vm5088, %vm4590
        %vm5097 = vmand %vm5089, %vm4591
        %vm5098 = vmand %vm5090, %vm4592
        %vm5099 = vmand %vm5091, %vm4593
        %vm5100 = vmand %vm5092, %vm4594
        %vm5101 = vmand %vm5093, %vm4595
        %vm5102 = vmand %vm5094, %vm4596
        %vm5103 = vmand %vm5095, %vm4597
        %v5104 = vsel %vm5096, 1, 0
        %v5105 = vsel %vm5097, 1, 0
        %v5106 = vsel %vm5098, 1, 0
        %v5107 = vsel %vm5099, 1, 0
        %v5108 = vsel %vm5100, 1, 0
        %v5109 = vsel %vm5101, 1, 0
        %v5110 = vsel %vm5102, 1, 0
        %v5111 = vsel %vm5103, 1, 0
        %vm5112 = vcmp.eq.s32.totalorder %v5104, 1
        %vm5113 = vcmp.eq.s32.totalorder %v5105, 1
        %vm5114 = vcmp.eq.s32.totalorder %v5106, 1
        %vm5115 = vcmp.eq.s32.totalorder %v5107, 1
        %vm5116 = vcmp.eq.s32.totalorder %v5108, 1
        %vm5117 = vcmp.eq.s32.totalorder %v5109, 1
        %vm5118 = vcmp.eq.s32.totalorder %v5110, 1
        %vm5119 = vcmp.eq.s32.totalorder %v5111, 1
        %vm5120 = vmpackc.low %vm5112, %vm5112
        %vm5121 = vmpackc.low %vm5113, %vm5113
        %vm5122 = vmpackc.low %vm5114, %vm5114
        %vm5123 = vmpackc.low %vm5115, %vm5115
        %vm5124 = vmpackc.low %vm5116, %vm5116
        %vm5125 = vmpackc.low %vm5117, %vm5117
        %vm5126 = vmpackc.low %vm5118, %vm5118
        %vm5127 = vmpackc.low %vm5119, %vm5119
        %v5128 = vsel %vm5120, 65537, 0
        %v5129 = vsel %vm5121, 65537, 0
        %v5130 = vsel %vm5122, 65537, 0
        %v5131 = vsel %vm5123, 65537, 0
        %v5132 = vsel %vm5124, 65537, 0
        %v5133 = vsel %vm5125, 65537, 0
        %v5134 = vsel %vm5126, 65537, 0
        %v5135 = vsel %vm5127, 65537, 0
        %v5136 = vunpack.c.l.b16 %v5128
        %v5137 = vunpack.c.l.b16 %v5129
        %v5138 = vunpack.c.l.b16 %v5130
        %v5139 = vunpack.c.l.b16 %v5131
        %v5140 = vunpack.c.l.b16 %v5132
        %v5141 = vunpack.c.l.b16 %v5133
        %v5142 = vunpack.c.l.b16 %v5134
        %v5143 = vunpack.c.l.b16 %v5135
        %v5144 = vpack.c.b16 %v5137, %v5136
        %v5145 = vpack.c.b16 %v5139, %v5138
        %v5146 = vpack.c.b16 %v5141, %v5140
        %v5147 = vpack.c.b16 %v5143, %v5142
        %vm5148 = vcmp.ne.s16.totalorder %v5144, 0
        %vm5149 = vcmp.ne.s16.totalorder %v5145, 0
        %vm5150 = vcmp.ne.s16.totalorder %v5146, 0
        %vm5151 = vcmp.ne.s16.totalorder %v5147, 0
        %v5152 = vsel %vm5148, %v4554, 0
        %v5153 = vsel %vm5149, %v4558, 0
        %v5154 = vsel %vm5150, %v4559, 0
        %v5155 = vsel %vm5151, %v4565, 0
        %5160 = vrot.lane.b32.xlu0 %v4539, 64
        %v5161 = vpop.permute.xlu0 %5160
        %5162 = vrot.lane.b32.xlu0 %v4540, 64
        %v5163 = vpop.permute.xlu0 %5162
        %5164 = vrot.lane.b32.xlu0 %v4541, 64
        %v5165 = vpop.permute.xlu0 %5164
        %5166 = vrot.lane.b32.xlu0 %v4542, 64
        %v5167 = vpop.permute.xlu0 %5166
        %5172 = vrot.lane.b32.xlu0 %v4763, 64
        %v5173 = vpop.permute.xlu0 %5172
        %5174 = vrot.lane.b32.xlu0 %v4764, 64
        %v5175 = vpop.permute.xlu0 %5174
        %5176 = vrot.lane.b32.xlu0 %v4765, 64
        %v5177 = vpop.permute.xlu0 %5176
        %5178 = vrot.lane.b32.xlu0 %v4766, 64
        %v5179 = vpop.permute.xlu0 %5178
        %5184 = vrot.lane.b32.xlu0 %v4916, 64
        %v5185 = vpop.permute.xlu0 %5184
        %5186 = vrot.lane.b32.xlu0 %v4917, 64
        %v5187 = vpop.permute.xlu0 %5186
        %5188 = vrot.lane.b32.xlu0 %v4918, 64
        %v5189 = vpop.permute.xlu0 %5188
        %5190 = vrot.lane.b32.xlu0 %v4919, 64
        %v5191 = vpop.permute.xlu0 %5190
        %5196 = vrot.lane.b32.xlu0 %v5084, 64
        %v5197 = vpop.permute.xlu0 %5196
        %5198 = vrot.lane.b32.xlu0 %v5085, 64
        %v5199 = vpop.permute.xlu0 %5198
        %5200 = vrot.lane.b32.xlu0 %v5086, 64
        %v5201 = vpop.permute.xlu0 %5200
        %5202 = vrot.lane.b32.xlu0 %v5087, 64
        %v5203 = vpop.permute.xlu0 %5202
        %v5206 = vsel %vm4212, %v4436, %v5161
        %v5210 = vsel %vm4212, %v4437, %v5163
        %v5214 = vsel %vm4212, %v4438, %v5165
        %v5218 = vsel %vm4212, %v4439, %v5167
        %v5222 = vsel %vm4212, %v4654, %v5173
        %v5226 = vsel %vm4212, %v4655, %v5175
        %v5230 = vsel %vm4212, %v4656, %v5177
        %v5234 = vsel %vm4212, %v4657, %v5179
        %v5238 = vsel %vm4212, %v4831, %v5185
        %v5242 = vsel %vm4212, %v4832, %v5187
        %v5246 = vsel %vm4212, %v4833, %v5189
        %v5250 = vsel %vm4212, %v4834, %v5191
        %v5254 = vsel %vm4212, %v5016, %v5197
        %v5258 = vsel %vm4212, %v5017, %v5199
        %v5262 = vsel %vm4212, %v5018, %v5201
        %v5266 = vsel %vm4212, %v5019, %v5203
        %v5268 = vld [vmem:[%s2] sm:$0xf]
        %v5269 = vld [vmem:[%s2 + $0x4] sm:$0xf]
        %v5270 = vld [vmem:[%s2 + $0x8] sm:$0xf]
        %v5271 = vld [vmem:[%s2 + $0xc] sm:$0xf]
        %v5272 = vld [vmem:[%s2 + $0x10] sm:$0xf]
        %v5273 = vld [vmem:[%s2 + $0x14] sm:$0xf]
        %v5274 = vld [vmem:[%s2 + $0x18] sm:$0xf]
        %v5275 = vld [vmem:[%s2 + $0x1c] sm:$0xf]
        %v5276 = vld [vmem:[%s2 + $0x20] sm:$0xf]
        %v5277 = vld [vmem:[%s2 + $0x24] sm:$0xf]
        %v5278 = vld [vmem:[%s2 + $0x28] sm:$0xf]
        %v5279 = vld [vmem:[%s2 + $0x2c] sm:$0xf]
        %v5280 = vld [vmem:[%s2 + $0x30] sm:$0xf]
        %v5281 = vld [vmem:[%s2 + $0x34] sm:$0xf]
        %v5282 = vld [vmem:[%s2 + $0x38] sm:$0xf]
        %v5283 = vld [vmem:[%s2 + $0x3c] sm:$0xf]
        %v5284 = vld [vmem:[%s2 + $0x40] sm:$0xf]
        %v5285 = vld [vmem:[%s2 + $0x44] sm:$0xf]
        %v5286 = vld [vmem:[%s2 + $0x48] sm:$0xf]
        %v5287 = vld [vmem:[%s2 + $0x4c] sm:$0xf]
        %v5288 = vld [vmem:[%s2 + $0x50] sm:$0xf]
        %v5289 = vld [vmem:[%s2 + $0x54] sm:$0xf]
        %v5290 = vld [vmem:[%s2 + $0x58] sm:$0xf]
        %v5291 = vld [vmem:[%s2 + $0x5c] sm:$0xf]
        %v5292 = vld [vmem:[%s2 + $0x60] sm:$0xf]
        %v5293 = vld [vmem:[%s2 + $0x64] sm:$0xf]
        %v5294 = vld [vmem:[%s2 + $0x68] sm:$0xf]
        %v5295 = vld [vmem:[%s2 + $0x6c] sm:$0xf]
        %v5296 = vld [vmem:[%s2 + $0x70] sm:$0xf]
        %v5297 = vld [vmem:[%s2 + $0x74] sm:$0xf]
        %v5298 = vld [vmem:[%s2 + $0x78] sm:$0xf]
        %v5299 = vld [vmem:[%s2 + $0x7c] sm:$0xf]
        %v5300 = vld [vmem:[%s2 + $0x80] sm:$0xf]
        %v5301 = vld [vmem:[%s2 + $0x84] sm:$0xf]
        %v5302 = vld [vmem:[%s2 + $0x88] sm:$0xf]
        %v5303 = vld [vmem:[%s2 + $0x8c] sm:$0xf]
        %v5304 = vld [vmem:[%s2 + $0x90] sm:$0xf]
        %v5305 = vld [vmem:[%s2 + $0x94] sm:$0xf]
        %v5306 = vld [vmem:[%s2 + $0x98] sm:$0xf]
        %v5307 = vld [vmem:[%s2 + $0x9c] sm:$0xf]
        %v5308 = vld [vmem:[%s2 + $0xa0] sm:$0xf]
        %v5309 = vld [vmem:[%s2 + $0xa4] sm:$0xf]
        %v5310 = vld [vmem:[%s2 + $0xa8] sm:$0xf]
        %v5311 = vld [vmem:[%s2 + $0xac] sm:$0xf]
        %v5312 = vld [vmem:[%s2 + $0xb0] sm:$0xf]
        %v5313 = vld [vmem:[%s2 + $0xb4] sm:$0xf]
        %v5314 = vld [vmem:[%s2 + $0xb8] sm:$0xf]
        %v5315 = vld [vmem:[%s2 + $0xbc] sm:$0xf]
        %v5316 = vld [vmem:[%s2 + $0xc0] sm:$0xf]
        %v5317 = vld [vmem:[%s2 + $0xc4] sm:$0xf]
        %v5318 = vld [vmem:[%s2 + $0xc8] sm:$0xf]
        %v5319 = vld [vmem:[%s2 + $0xcc] sm:$0xf]
        %v5320 = vld [vmem:[%s2 + $0xd0] sm:$0xf]
        %v5321 = vld [vmem:[%s2 + $0xd4] sm:$0xf]
        %v5322 = vld [vmem:[%s2 + $0xd8] sm:$0xf]
        %v5323 = vld [vmem:[%s2 + $0xdc] sm:$0xf]
        %v5324 = vld [vmem:[%s2 + $0xe0] sm:$0xf]
        %v5325 = vld [vmem:[%s2 + $0xe4] sm:$0xf]
        %v5326 = vld [vmem:[%s2 + $0xe8] sm:$0xf]
        %v5327 = vld [vmem:[%s2 + $0xec] sm:$0xf]
        %v5328 = vld [vmem:[%s2 + $0xf0] sm:$0xf]
        %v5329 = vld [vmem:[%s2 + $0xf4] sm:$0xf]
        %v5330 = vld [vmem:[%s2 + $0xf8] sm:$0xf]
        %v5331 = vld [vmem:[%s2 + $0xfc] sm:$0xf]
        %v5332 = vld [vmem:[%s2 + $0x100] sm:$0xf]
        %v5333 = vld [vmem:[%s2 + $0x104] sm:$0xf]
        %v5334 = vld [vmem:[%s2 + $0x108] sm:$0xf]
        %v5335 = vld [vmem:[%s2 + $0x10c] sm:$0xf]
        %v5336 = vld [vmem:[%s2 + $0x110] sm:$0xf]
        %v5337 = vld [vmem:[%s2 + $0x114] sm:$0xf]
        %v5338 = vld [vmem:[%s2 + $0x118] sm:$0xf]
        %v5339 = vld [vmem:[%s2 + $0x11c] sm:$0xf]
        %v5340 = vlaneseq
        %v5341 = vshrl.u32 %v5340, 7
        %v5342 = vsub.s32 1, %v5341
        %v5343 = vrot.slane %v252, %v5342
        %v5416 = vunpack.c.l.b16 %v5268
        %v5417 = vunpack.c.l.b16 %v5269
        %v5418 = vunpack.c.l.b16 %v5270
        %v5419 = vunpack.c.l.b16 %v5271
        %v5420 = vunpack.c.l.b16 %v5272
        %v5421 = vunpack.c.l.b16 %v5273
        %v5422 = vunpack.c.l.b16 %v5274
        %v5423 = vunpack.c.l.b16 %v5275
        %v5424 = vunpack.c.l.b16 %v5276
        %v5425 = vunpack.c.l.b16 %v5277
        %v5426 = vunpack.c.l.b16 %v5278
        %v5427 = vunpack.c.l.b16 %v5279
        %v5428 = vunpack.c.l.b16 %v5280
        %v5429 = vunpack.c.l.b16 %v5281
        %v5430 = vunpack.c.l.b16 %v5282
        %v5431 = vunpack.c.l.b16 %v5283
        %v5432 = vunpack.c.l.b16 %v5284
        %v5433 = vunpack.c.l.b16 %v5285
        %v5434 = vunpack.c.l.b16 %v5286
        %v5435 = vunpack.c.l.b16 %v5287
        %v5436 = vunpack.c.l.b16 %v5288
        %v5437 = vunpack.c.l.b16 %v5289
        %v5438 = vunpack.c.l.b16 %v5290
        %v5439 = vunpack.c.l.b16 %v5291
        %v5440 = vunpack.c.l.b16 %v5292
        %v5441 = vunpack.c.l.b16 %v5293
        %v5442 = vunpack.c.l.b16 %v5294
        %v5443 = vunpack.c.l.b16 %v5295
        %v5444 = vunpack.c.l.b16 %v5296
        %v5445 = vunpack.c.l.b16 %v5297
        %v5446 = vunpack.c.l.b16 %v5298
        %v5447 = vunpack.c.l.b16 %v5299
        %v5448 = vunpack.c.l.b16 %v5300
        %v5449 = vunpack.c.l.b16 %v5301
        %v5450 = vunpack.c.l.b16 %v5302
        %v5451 = vunpack.c.l.b16 %v5303
        %v5452 = vunpack.c.l.b16 %v5304
        %v5453 = vunpack.c.l.b16 %v5305
        %v5454 = vunpack.c.l.b16 %v5306
        %v5455 = vunpack.c.l.b16 %v5307
        %v5456 = vunpack.c.l.b16 %v5308
        %v5457 = vunpack.c.l.b16 %v5309
        %v5458 = vunpack.c.l.b16 %v5310
        %v5459 = vunpack.c.l.b16 %v5311
        %v5460 = vunpack.c.l.b16 %v5312
        %v5461 = vunpack.c.l.b16 %v5313
        %v5462 = vunpack.c.l.b16 %v5314
        %v5463 = vunpack.c.l.b16 %v5315
        %v5464 = vunpack.c.l.b16 %v5316
        %v5465 = vunpack.c.l.b16 %v5317
        %v5466 = vunpack.c.l.b16 %v5318
        %v5467 = vunpack.c.l.b16 %v5319
        %v5468 = vunpack.c.l.b16 %v5320
        %v5469 = vunpack.c.l.b16 %v5321
        %v5470 = vunpack.c.l.b16 %v5322
        %v5471 = vunpack.c.l.b16 %v5323
        %v5472 = vunpack.c.l.b16 %v5324
        %v5473 = vunpack.c.l.b16 %v5325
        %v5474 = vunpack.c.l.b16 %v5326
        %v5475 = vunpack.c.l.b16 %v5327
        %v5476 = vunpack.c.l.b16 %v5328
        %v5477 = vunpack.c.l.b16 %v5329
        %v5478 = vunpack.c.l.b16 %v5330
        %v5479 = vunpack.c.l.b16 %v5331
        %v5480 = vunpack.c.l.b16 %v5332
        %v5481 = vunpack.c.l.b16 %v5333
        %v5482 = vunpack.c.l.b16 %v5334
        %v5483 = vunpack.c.l.b16 %v5335
        %v5484 = vunpack.c.l.b16 %v5336
        %v5485 = vunpack.c.l.b16 %v5337
        %v5486 = vunpack.c.l.b16 %v5338
        %v5487 = vunpack.c.l.b16 %v5339
        %v5488 = vpack.c.b16 %v5417, %v5416
        %v5489 = vpack.c.b16 %v5419, %v5418
        %v5490 = vpack.c.b16 %v5421, %v5420
        %v5491 = vpack.c.b16 %v5423, %v5422
        %v5492 = vpack.c.b16 %v5425, %v5424
        %v5493 = vpack.c.b16 %v5427, %v5426
        %v5494 = vpack.c.b16 %v5429, %v5428
        %v5495 = vpack.c.b16 %v5431, %v5430
        %v5496 = vpack.c.b16 %v5433, %v5432
        %v5497 = vpack.c.b16 %v5435, %v5434
        %v5498 = vpack.c.b16 %v5437, %v5436
        %v5499 = vpack.c.b16 %v5439, %v5438
        %v5500 = vpack.c.b16 %v5441, %v5440
        %v5501 = vpack.c.b16 %v5443, %v5442
        %v5502 = vpack.c.b16 %v5445, %v5444
        %v5503 = vpack.c.b16 %v5447, %v5446
        %v5504 = vpack.c.b16 %v5449, %v5448
        %v5505 = vpack.c.b16 %v5451, %v5450
        %v5506 = vpack.c.b16 %v5453, %v5452
        %v5507 = vpack.c.b16 %v5455, %v5454
        %v5508 = vpack.c.b16 %v5457, %v5456
        %v5509 = vpack.c.b16 %v5459, %v5458
        %v5510 = vpack.c.b16 %v5461, %v5460
        %v5511 = vpack.c.b16 %v5463, %v5462
        %v5512 = vpack.c.b16 %v5465, %v5464
        %v5513 = vpack.c.b16 %v5467, %v5466
        %v5514 = vpack.c.b16 %v5469, %v5468
        %v5515 = vpack.c.b16 %v5471, %v5470
        %v5516 = vpack.c.b16 %v5473, %v5472
        %v5517 = vpack.c.b16 %v5475, %v5474
        %v5518 = vpack.c.b16 %v5477, %v5476
        %v5519 = vpack.c.b16 %v5479, %v5478
        %v5520 = vpack.c.b16 %v5481, %v5480
        %v5521 = vpack.c.b16 %v5483, %v5482
        %v5522 = vpack.c.b16 %v5485, %v5484
        %v5523 = vpack.c.b16 %v5487, %v5486
        %v5561 = vsel %vm4212, %v5152, 0
        %v5564 = vsel %vm4212, %v5153, 0
        %v5567 = vsel %vm4212, %v5154, 0
        %v5570 = vsel %vm4212, %v5155, 0
        %5572 = vmatprep.subr.bf16.mxu0 0
        %5573 = vmatpush1.bf16.msra.mxu0 %v5488
        %5574 = vmatprep.subr.bf16.mxu0 0
        %5575 = vmatpush1.bf16.msra.mxu0 %v5489
        %5576 = vmatprep.subr.bf16.mxu0 0
        %5577 = vmatpush1.bf16.msra.mxu0 %v5490
        %5578 = vmatprep.subr.bf16.mxu0 0
        %5579 = vmatpush1.bf16.msra.mxu0 %v5491
        %5580 = vmatprep.subr.bf16.mxu0 0
        %5581 = vmatpush1.bf16.msra.mxu0 %v5492
        %5582 = vmatprep.subr.bf16.mxu0 0
        %5583 = vmatpush1.bf16.msra.mxu0 %v5493
        %5584 = vmatprep.subr.bf16.mxu0 0
        %5585 = vmatpush1.bf16.msra.mxu0 %v5494
        %5586 = vmatprep.subr.bf16.mxu0 0
        %5587 = vmatpush1.bf16.msra.mxu0 %v5495
        %5588 = vmatprep.subr.bf16.mxu0 0
        %5589 = vmatpush1.bf16.msra.mxu0 %v5496
        %5590 = vmatprep.subr.bf16.mxu0 0
        %5591 = vmatpush1.bf16.msra.mxu0 %v5497
        %5592 = vmatprep.subr.bf16.mxu0 0
        %5593 = vmatpush1.bf16.msra.mxu0 %v5498
        %5594 = vmatprep.subr.bf16.mxu0 0
        %5595 = vmatpush1.bf16.msra.mxu0 %v5499
        %5596 = vmatprep.subr.bf16.mxu0 0
        %5597 = vmatpush1.bf16.msra.mxu0 %v5500
        %5598 = vmatprep.subr.bf16.mxu0 0
        %5599 = vmatpush1.bf16.msra.mxu0 %v5501
        %5600 = vmatprep.subr.bf16.mxu0 0
        %5601 = vmatpush1.bf16.msra.mxu0 %v5502
        %5602 = vmatprep.subr.bf16.mxu0 0
        %5603 = vmatpush1.bf16.msra.mxu0 %v5503
        %5604 = vmatprep.mubr.bf16.mxu0 %v5222
        %5605 = vmatmul.mubr.bf16.gmra.mrb[0].mxu0 %v5206
        %v5606 = vpop.f32.mrb[0].mxu0
        %v5607 = vadd.f32 %v5343, %v5606
        %v5608 = vpop.f32.mrb[0].mxu0
        %v5609 = vpop.f32.mrb[0].mxu0
        %v5610 = vadd.f32 %v5343, %v5609
        %v5611 = vpop.f32.mrb[0].mxu0
        %5612 = vmatprep.mubr.bf16.mxu0 %v5226
        %5613 = vmatmul.mubr.bf16.gmra.mrb[0].mxu0 %v5210
        %v5614 = vpop.f32.mrb[0].mxu0
        %v5615 = vadd.f32 %v5343, %v5614
        %v5616 = vpop.f32.mrb[0].mxu0
        %v5617 = vpop.f32.mrb[0].mxu0
        %v5618 = vadd.f32 %v5343, %v5617
        %v5619 = vpop.f32.mrb[0].mxu0
        %5620 = vmatprep.mubr.bf16.mxu0 %v5230
        %5621 = vmatmul.mubr.bf16.gmra.mrb[0].mxu0 %v5214
        %v5622 = vpop.f32.mrb[0].mxu0
        %v5623 = vadd.f32 %v5343, %v5622
        %v5624 = vpop.f32.mrb[0].mxu0
        %v5625 = vpop.f32.mrb[0].mxu0
        %v5626 = vadd.f32 %v5343, %v5625
        %v5627 = vpop.f32.mrb[0].mxu0
        %5628 = vmatprep.mubr.bf16.mxu0 %v5234
        %5629 = vmatmul.mubr.bf16.gmra.mrb[0].mxu0 %v5218
        %v5630 = vpop.f32.mrb[0].mxu0
        %v5631 = vadd.f32 %v5343, %v5630
        %v5632 = vpop.f32.mrb[0].mxu0
        %v5633 = vpop.f32.mrb[0].mxu0
        %v5634 = vadd.f32 %v5343, %v5633
        %v5635 = vpop.f32.mrb[0].mxu0
        %5636 = vdwg.mxu0
        %5637 = vmatprep.subr.bf16.mxu0 0
        %5638 = vmatpush1.bf16.msra.mxu0 %v5504
        %5639 = vmatprep.subr.bf16.mxu0 0
        %5640 = vmatpush1.bf16.msra.mxu0 %v5505
        %5641 = vmatprep.subr.bf16.mxu0 0
        %5642 = vmatpush1.bf16.msra.mxu0 %v5506
        %5643 = vmatprep.subr.bf16.mxu0 0
        %5644 = vmatpush1.bf16.msra.mxu0 %v5507
        %5645 = vmatprep.subr.bf16.mxu0 0
        %5646 = vmatpush1.bf16.msra.mxu0 %v5508
        %5647 = vmatprep.subr.bf16.mxu0 0
        %5648 = vmatpush1.bf16.msra.mxu0 %v5509
        %5649 = vmatprep.subr.bf16.mxu0 0
        %5650 = vmatpush1.bf16.msra.mxu0 %v5510
        %5651 = vmatprep.subr.bf16.mxu0 0
        %5652 = vmatpush1.bf16.msra.mxu0 %v5511
        %5653 = vmatprep.subr.bf16.mxu0 0
        %5654 = vmatpush1.bf16.msra.mxu0 %v5512
        %5655 = vmatprep.subr.bf16.mxu0 0
        %5656 = vmatpush1.bf16.msra.mxu0 %v5513
        %5657 = vmatprep.subr.bf16.mxu0 0
        %5658 = vmatpush1.bf16.msra.mxu0 %v5514
        %5659 = vmatprep.subr.bf16.mxu0 0
        %5660 = vmatpush1.bf16.msra.mxu0 %v5515
        %5661 = vmatprep.subr.bf16.mxu0 0
        %5662 = vmatpush1.bf16.msra.mxu0 %v5516
        %5663 = vmatprep.subr.bf16.mxu0 0
        %5664 = vmatpush1.bf16.msra.mxu0 %v5517
        %5665 = vmatprep.subr.bf16.mxu0 0
        %5666 = vmatpush1.bf16.msra.mxu0 %v5518
        %5667 = vmatprep.subr.bf16.mxu0 0
        %5668 = vmatpush1.bf16.msra.mxu0 %v5519
        %5669 = vmatprep.mubr.bf16.mxu0 %v5254
        %5670 = vmatmul.mubr.bf16.gmra.mrb[0].mxu0 %v5238
        %v5671 = vpop.f32.mrb[0].mxu0
        %v5672 = vadd.f32 %v5607, %v5671
        %v5673 = vpop.f32.mrb[0].mxu0
        %v5674 = vpop.f32.mrb[0].mxu0
        %v5675 = vadd.f32 %v5610, %v5674
        %v5676 = vpop.f32.mrb[0].mxu0
        %5677 = vmatprep.mubr.bf16.mxu0 %v5258
        %5678 = vmatmul.mubr.bf16.gmra.mrb[0].mxu0 %v5242
        %v5679 = vpop.f32.mrb[0].mxu0
        %v5680 = vadd.f32 %v5615, %v5679
        %v5681 = vpop.f32.mrb[0].mxu0
        %v5682 = vpop.f32.mrb[0].mxu0
        %v5683 = vadd.f32 %v5618, %v5682
        %v5684 = vpop.f32.mrb[0].mxu0
        %5685 = vmatprep.mubr.bf16.mxu0 %v5262
        %5686 = vmatmul.mubr.bf16.gmra.mrb[0].mxu0 %v5246
        %v5687 = vpop.f32.mrb[0].mxu0
        %v5688 = vadd.f32 %v5623, %v5687
        %v5689 = vpop.f32.mrb[0].mxu0
        %v5690 = vpop.f32.mrb[0].mxu0
        %v5691 = vadd.f32 %v5626, %v5690
        %v5692 = vpop.f32.mrb[0].mxu0
        %5693 = vmatprep.mubr.bf16.mxu0 %v5266
        %5694 = vmatmul.mubr.bf16.gmra.mrb[0].mxu0 %v5250
        %v5695 = vpop.f32.mrb[0].mxu0
        %v5696 = vadd.f32 %v5631, %v5695
        %v5697 = vpop.f32.mrb[0].mxu0
        %v5698 = vpop.f32.mrb[0].mxu0
        %v5699 = vadd.f32 %v5634, %v5698
        %v5700 = vpop.f32.mrb[0].mxu0
        %5701 = vdwg.mxu0
        %5702 = vmatprep.subr.bf16.mxu0 0
        %5703 = vmatpush1.bf16.msra.mxu0 %v5520
        %5704 = vmatprep.subr.bf16.mxu0 0
        %5705 = vmatpush1.bf16.msra.mxu0 %v5521
        %5706 = vmatprep.subr.bf16.mxu0 0
        %5707 = vmatpush1.bf16.msra.mxu0 %v5522
        %5708 = vmatprep.subr.bf16.mxu0 0
        %5709 = vmatpush1.bf16.msra.mxu0 %v5523
        %5710 = vmatprep.subr.bf16.mxu0 0
        %5711 = vmatpush1.bf16.msra.mxu0 0
        %5712 = vmatprep.subr.bf16.mxu0 0
        %5713 = vmatpush1.bf16.msra.mxu0 0
        %5714 = vmatprep.subr.bf16.mxu0 0
        %5715 = vmatpush1.bf16.msra.mxu0 0
        %5716 = vmatprep.subr.bf16.mxu0 0
        %5717 = vmatpush1.bf16.msra.mxu0 0
        %5718 = vmatprep.subr.bf16.mxu0 0
        %5719 = vmatpush1.bf16.msra.mxu0 0
        %5720 = vmatprep.subr.bf16.mxu0 0
        %5721 = vmatpush1.bf16.msra.mxu0 0
        %5722 = vmatprep.subr.bf16.mxu0 0
        %5723 = vmatpush1.bf16.msra.mxu0 0
        %5724 = vmatprep.subr.bf16.mxu0 0
        %5725 = vmatpush1.bf16.msra.mxu0 0
        %5726 = vmatprep.subr.bf16.mxu0 0
        %5727 = vmatpush1.bf16.msra.mxu0 0
        %5728 = vmatprep.subr.bf16.mxu0 0
        %5729 = vmatpush1.bf16.msra.mxu0 0
        %5730 = vmatprep.subr.bf16.mxu0 0
        %5731 = vmatpush1.bf16.msra.mxu0 0
        %5732 = vmatprep.subr.bf16.mxu0 0
        %5733 = vmatpush1.bf16.msra.mxu0 0
        %5734 = vmatprep.mubr.bf16.mxu0 0
        %5735 = vmatmul.mubr.bf16.gmra.mrb[0].mxu0 %v5561
        %v5736 = vpop.f32.mrb[0].mxu0
        %v5737 = vadd.f32 %v5672, %v5736
        %v5738 = vpop.f32.mrb[0].mxu0
        %v5739 = vpop.f32.mrb[0].mxu0
        %v5740 = vadd.f32 %v5675, %v5739
        %v5741 = vpop.f32.mrb[0].mxu0
        %5742 = vmatprep.mubr.bf16.mxu0 0
        %5743 = vmatmul.mubr.bf16.gmra.mrb[0].mxu0 %v5564
        %v5744 = vpop.f32.mrb[0].mxu0
        %v5745 = vadd.f32 %v5680, %v5744
        %v5746 = vpop.f32.mrb[0].mxu0
        %v5747 = vpop.f32.mrb[0].mxu0
        %v5748 = vadd.f32 %v5683, %v5747
        %v5749 = vpop.f32.mrb[0].mxu0
        %5750 = vmatprep.mubr.bf16.mxu0 0
        %5751 = vmatmul.mubr.bf16.gmra.mrb[0].mxu0 %v5567
        %v5752 = vpop.f32.mrb[0].mxu0
        %v5753 = vadd.f32 %v5688, %v5752
        %v5754 = vpop.f32.mrb[0].mxu0
        %v5755 = vpop.f32.mrb[0].mxu0
        %v5756 = vadd.f32 %v5691, %v5755
        %v5757 = vpop.f32.mrb[0].mxu0
        %5758 = vmatprep.mubr.bf16.mxu0 0
        %5759 = vmatmul.mubr.bf16.gmra.mrb[0].mxu0 %v5570
        %v5760 = vpop.f32.mrb[0].mxu0
        %v5761 = vadd.f32 %v5696, %v5760
        %v5762 = vpop.f32.mrb[0].mxu0
        %v5763 = vpop.f32.mrb[0].mxu0
        %v5764 = vadd.f32 %v5699, %v5763
        %v5765 = vpop.f32.mrb[0].mxu0
        %5766 = vdwg.mxu0
        %v5767 = vmax.f32 %v5737, 0.0
        %v5768 = vmax.f32 %v5740, 0.0
        %v5769 = vmax.f32 %v5745, 0.0
        %v5770 = vmax.f32 %v5748, 0.0
        %v5771 = vmax.f32 %v5753, 0.0
        %v5772 = vmax.f32 %v5756, 0.0
        %v5773 = vmax.f32 %v5761, 0.0
        %v5774 = vmax.f32 %v5764, 0.0
        %v5783 = vrot.slane %v5767, 1
        %v5784 = vrot.slane %v5768, 1
        %v5785 = vsel %vm4066, %v5783, %v5784
        %v5786 = vrot.slane %v5769, 1
        %v5787 = vsel %vm4066, %v5784, %v5786
        %v5788 = vrot.slane %v5770, 1
        %v5789 = vsel %vm4066, %v5786, %v5788
        %v5790 = vrot.slane %v5771, 1
        %v5791 = vsel %vm4066, %v5788, %v5790
        %v5792 = vrot.slane %v5772, 1
        %v5793 = vsel %vm4066, %v5790, %v5792
        %v5794 = vrot.slane %v5773, 1
        %v5795 = vsel %vm4066, %v5792, %v5794
        %v5796 = vrot.slane %v5774, 1
        %v5797 = vsel %vm4066, %v5794, %v5796
        %v5807 = vsel %vm4066, %v5796, %v5783
        %v5808 = vmax.f32 %v5767, %v5785
        %v5809 = vmax.f32 %v5768, %v5787
        %v5810 = vmax.f32 %v5769, %v5789
        %v5811 = vmax.f32 %v5770, %v5791
        %v5812 = vmax.f32 %v5771, %v5793
        %v5813 = vmax.f32 %v5772, %v5795
        %v5814 = vmax.f32 %v5773, %v5797
        %v5815 = vmax.f32 %v5774, %v5807
        %v5816 = vmax.f32 %v5808, %v5809
        %v5817 = vmax.f32 %v5810, %v5811
        %v5818 = vmax.f32 %v5812, %v5813
        %v5819 = vmax.f32 %v5814, %v5815
        %5820 = vst.msk [vmem:[#allocation2] sm:$0xff] %vm4212, %v5816
        %5821 = vst.msk [vmem:[#allocation2 + $0x8] sm:$0xff] %vm4212, %v5817
        %5822 = vst.msk [vmem:[#allocation2 + $0x10] sm:$0xff] %vm4212, %v5818
        %5823 = vst.msk [vmem:[#allocation2 + $0x18] sm:$0xff] %vm4212, %v5819
        %v5824 = vld [vmem:[#allocation2] ss:$2 sm:$0xff]
        %v5825 = vld [vmem:[%s4230] ss:$2 sm:$0xff]
        %v5826 = vand.u32 %v286, 3
        %v5827 = vand.u32 %v287, 3
        %v5828 = vshra.s32 %v286, 2
        %v5829 = vshra.s32 %v287, 2
        %v5830 = vand.u32 %v5828, 3
        %v5831 = vand.u32 %v5829, 3
        %v5832 = vpack.c.bf16 %v5825, %v5824
        %v5834 = vshrl.u32 %v5832, 16
        %v5836 = vrot.slane %v5834, 5
        %v5837 = vshll.u32 %v5832, 16
        %v5839 = vrot.slane %v5837, 6
        %v5840 = vor.u32 %v5836, %v5839
        %vm5842 = vcmask 1042432
        %vm5843 = vsmask.f32 2304
        %vm5844 = vmand %vm5842, %vm5843
        %v5845 = vsel %vm5844, %v5840, %v5840
        %v5846 = vadd.s32 %v5830, 4294967295
        %v5847 = vadd.s32 %v5831, 4294967295
        %vm5848 = vcmp.ge.s32.totalorder %v5846, 0
        %vm5849 = vcmp.ge.s32.totalorder %v5847, 0
        %vm5850 = vcmp.lt.s32.totalorder %v5846, 4
        %vm5851 = vcmp.lt.s32.totalorder %v5847, 4
        %vm5852 = vmand %vm5848, %vm5850
        %vm5853 = vmand %vm5849, %vm5851
        %v5854 = vadd.s32 %v5826, 4294967295
        %v5855 = vadd.s32 %v5827, 4294967295
        %vm5856 = vcmp.ge.s32.totalorder %v5854, 0
        %vm5857 = vcmp.ge.s32.totalorder %v5855, 0
        %vm5858 = vmand %vm5852, %vm5856
        %vm5859 = vmand %vm5853, %vm5857
        %vm5860 = vcmp.lt.s32.totalorder %v5854, 4
        %vm5861 = vcmp.lt.s32.totalorder %v5855, 4
        %vm5862 = vmand %vm5858, %vm5860
        %vm5863 = vmand %vm5859, %vm5861
        %v5864 = vsel %vm5862, 1, 0
        %v5865 = vsel %vm5863, 1, 0
        %vm5866 = vcmp.eq.s32.totalorder %v5864, 1
        %vm5867 = vcmp.eq.s32.totalorder %v5865, 1
        %vm5868 = vmpackc.low %vm5866, %vm5866
        %vm5869 = vmpackc.low %vm5867, %vm5867
        %v5870 = vsel %vm5868, 65537, 0
        %v5871 = vsel %vm5869, 65537, 0
        %v5872 = vunpack.c.l.b16 %v5870
        %v5873 = vunpack.c.l.b16 %v5871
        %v5874 = vpack.c.b16 %v5873, %v5872
        %vm5875 = vcmp.ne.s16.totalorder %v5874, 0
        %v5876 = vsel %vm5875, %v5845, 0
        %v5878 = vrot.slane %v5832, 6
        %vm5879 = vcmask 1041408
        %v5881 = vsel %vm5879, %v5878, %v5878
        %vm5883 = vcmp.ge.s32.totalorder %v5826, 0
        %vm5884 = vcmp.ge.s32.totalorder %v5827, 0
        %vm5885 = vmand %vm5852, %vm5883
        %vm5886 = vmand %vm5853, %vm5884
        %vm5887 = vcmp.lt.s32.totalorder %v5826, 4
        %vm5888 = vcmp.lt.s32.totalorder %v5827, 4
        %vm5889 = vmand %vm5885, %vm5887
        %vm5890 = vmand %vm5886, %vm5888
        %v5891 = vsel %vm5889, 1, 0
        %v5892 = vsel %vm5890, 1, 0
        %vm5893 = vcmp.eq.s32.totalorder %v5891, 1
        %vm5894 = vcmp.eq.s32.totalorder %v5892, 1
        %vm5895 = vmpackc.low %vm5893, %vm5893
        %vm5896 = vmpackc.low %vm5894, %vm5894
        %v5897 = vsel %vm5895, 65537, 0
        %v5898 = vsel %vm5896, 65537, 0
        %v5899 = vunpack.c.l.b16 %v5897
        %v5900 = vunpack.c.l.b16 %v5898
        %v5901 = vpack.c.b16 %v5900, %v5899
        %vm5902 = vcmp.ne.s16.totalorder %v5901, 0
        %v5903 = vsel %vm5902, %v5881, 0
        %v5904 = vrot.slane %v5834, 6
        %v5905 = vrot.slane %v5837, 7
        %v5906 = vor.u32 %v5904, %v5905
        %vm5908 = vcmask 1041408
        %vm5909 = vsmask.f32 1280
        %vm5910 = vmand %vm5908, %vm5909
        %v5911 = vsel %vm5910, %v5906, %v5906
        %v5912 = vadd.s32 %v5826, 1
        %v5913 = vadd.s32 %v5827, 1
        %vm5914 = vcmp.ge.s32.totalorder %v5912, 0
        %vm5915 = vcmp.ge.s32.totalorder %v5913, 0
        %vm5916 = vmand %vm5852, %vm5914
        %vm5917 = vmand %vm5853, %vm5915
        %vm5918 = vcmp.lt.s32.totalorder %v5912, 4
        %vm5919 = vcmp.lt.s32.totalorder %v5913, 4
        %vm5920 = vmand %vm5916, %vm5918
        %vm5921 = vmand %vm5917, %vm5919
        %v5922 = vsel %vm5920, 1, 0
        %v5923 = vsel %vm5921, 1, 0
        %vm5924 = vcmp.eq.s32.totalorder %v5922, 1
        %vm5925 = vcmp.eq.s32.totalorder %v5923, 1
        %vm5926 = vmpackc.low %vm5924, %vm5924
        %vm5927 = vmpackc.low %vm5925, %vm5925
        %v5928 = vsel %vm5926, 65537, 0
        %v5929 = vsel %vm5927, 65537, 0
        %v5930 = vunpack.c.l.b16 %v5928
        %v5931 = vunpack.c.l.b16 %v5929
        %v5932 = vpack.c.b16 %v5931, %v5930
        %vm5933 = vcmp.ne.s16.totalorder %v5932, 0
        %v5934 = vsel %vm5933, %v5911, 0
        %v5935 = vrot.slane %v5834, 7
        %v5937 = vor.u32 %v5935, %v5837
        %v5939 = vsel %vm576, %v5935, %v5937
        %vm5940 = vcmp.ge.s32.totalorder %v5830, 0
        %vm5941 = vcmp.ge.s32.totalorder %v5831, 0
        %vm5942 = vcmp.lt.s32.totalorder %v5830, 4
        %vm5943 = vcmp.lt.s32.totalorder %v5831, 4
        %vm5944 = vmand %vm5940, %vm5942
        %vm5945 = vmand %vm5941, %vm5943
        %vm5946 = vmand %vm5944, %vm5856
        %vm5947 = vmand %vm5945, %vm5857
        %vm5948 = vmand %vm5946, %vm5860
        %vm5949 = vmand %vm5947, %vm5861
        %v5950 = vsel %vm5948, 1, 0
        %v5951 = vsel %vm5949, 1, 0
        %vm5952 = vcmp.eq.s32.totalorder %v5950, 1
        %vm5953 = vcmp.eq.s32.totalorder %v5951, 1
        %vm5954 = vmpackc.low %vm5952, %vm5952
        %vm5955 = vmpackc.low %vm5953, %vm5953
        %v5956 = vsel %vm5954, 65537, 0
        %v5957 = vsel %vm5955, 65537, 0
        %v5958 = vunpack.c.l.b16 %v5956
        %v5959 = vunpack.c.l.b16 %v5957
        %v5960 = vpack.c.b16 %v5959, %v5958
        %vm5961 = vcmp.ne.s16.totalorder %v5960, 0
        %v5962 = vsel %vm5961, %v5939, 0
        %vm5963 = vmand %vm5944, %vm5883
        %vm5964 = vmand %vm5945, %vm5884
        %vm5965 = vmand %vm5963, %vm5887
        %vm5966 = vmand %vm5964, %vm5888
        %v5967 = vsel %vm5965, 1, 0
        %v5968 = vsel %vm5966, 1, 0
        %vm5969 = vcmp.eq.s32.totalorder %v5967, 1
        %vm5970 = vcmp.eq.s32.totalorder %v5968, 1
        %vm5971 = vmpackc.low %vm5969, %vm5969
        %vm5972 = vmpackc.low %vm5970, %vm5970
        %v5973 = vsel %vm5971, 65537, 0
        %v5974 = vsel %vm5972, 65537, 0
        %v5975 = vunpack.c.l.b16 %v5973
        %v5976 = vunpack.c.l.b16 %v5974
        %v5977 = vpack.c.b16 %v5976, %v5975
        %vm5978 = vcmp.ne.s16.totalorder %v5977, 0
        %v5979 = vsel %vm5978, %v5832, 0
        %v5980 = vrot.slane %v5837, 1
        %v5981 = vor.u32 %v5834, %v5980
        %v5984 = vsel %vm1348, %v5981, %v5980
        %vm5985 = vmand %vm5944, %vm5914
        %vm5986 = vmand %vm5945, %vm5915
        %vm5987 = vmand %vm5985, %vm5918
        %vm5988 = vmand %vm5986, %vm5919
        %v5989 = vsel %vm5987, 1, 0
        %v5990 = vsel %vm5988, 1, 0
        %vm5991 = vcmp.eq.s32.totalorder %v5989, 1
        %vm5992 = vcmp.eq.s32.totalorder %v5990, 1
        %vm5993 = vmpackc.low %vm5991, %vm5991
        %vm5994 = vmpackc.low %vm5992, %vm5992
        %v5995 = vsel %vm5993, 65537, 0
        %v5996 = vsel %vm5994, 65537, 0
        %v5997 = vunpack.c.l.b16 %v5995
        %v5998 = vunpack.c.l.b16 %v5996
        %v5999 = vpack.c.b16 %v5998, %v5997
        %vm6000 = vcmp.ne.s16.totalorder %v5999, 0
        %v6001 = vsel %vm6000, %v5984, 0
        %v6002 = vrot.slane %v5834, 1
        %v6003 = vrot.slane %v5837, 2
        %v6004 = vor.u32 %v6002, %v6003
        %vm6006 = vcmask 1046528
        %vm6007 = vsmask.f32 6400
        %vm6008 = vmand %vm6006, %vm6007
        %v6009 = vsel %vm6008, %v6004, %v6004
        %v6010 = vadd.s32 %v5830, 1
        %v6011 = vadd.s32 %v5831, 1
        %vm6012 = vcmp.ge.s32.totalorder %v6010, 0
        %vm6013 = vcmp.ge.s32.totalorder %v6011, 0
        %vm6014 = vcmp.lt.s32.totalorder %v6010, 4
        %vm6015 = vcmp.lt.s32.totalorder %v6011, 4
        %vm6016 = vmand %vm6012, %vm6014
        %vm6017 = vmand %vm6013, %vm6015
        %vm6018 = vmand %vm6016, %vm5856
        %vm6019 = vmand %vm6017, %vm5857
        %vm6020 = vmand %vm6018, %vm5860
        %vm6021 = vmand %vm6019, %vm5861
        %v6022 = vsel %vm6020, 1, 0
        %v6023 = vsel %vm6021, 1, 0
        %vm6024 = vcmp.eq.s32.totalorder %v6022, 1
        %vm6025 = vcmp.eq.s32.totalorder %v6023, 1
        %vm6026 = vmpackc.low %vm6024, %vm6024
        %vm6027 = vmpackc.low %vm6025, %vm6025
        %v6028 = vsel %vm6026, 65537, 0
        %v6029 = vsel %vm6027, 65537, 0
        %v6030 = vunpack.c.l.b16 %v6028
        %v6031 = vunpack.c.l.b16 %v6029
        %v6032 = vpack.c.b16 %v6031, %v6030
        %vm6033 = vcmp.ne.s16.totalorder %v6032, 0
        %v6034 = vsel %vm6033, %v6009, 0
        %v6035 = vrot.slane %v5832, 2
        %vm6036 = vcmask 1045504
        %v6038 = vsel %vm6036, %v6035, %v6035
        %vm6040 = vmand %vm6016, %vm5883
        %vm6041 = vmand %vm6017, %vm5884
        %vm6042 = vmand %vm6040, %vm5887
        %vm6043 = vmand %vm6041, %vm5888
        %v6044 = vsel %vm6042, 1, 0
        %v6045 = vsel %vm6043, 1, 0
        %vm6046 = vcmp.eq.s32.totalorder %v6044, 1
        %vm6047 = vcmp.eq.s32.totalorder %v6045, 1
        %vm6048 = vmpackc.low %vm6046, %vm6046
        %vm6049 = vmpackc.low %vm6047, %vm6047
        %v6050 = vsel %vm6048, 65537, 0
        %v6051 = vsel %vm6049, 65537, 0
        %v6052 = vunpack.c.l.b16 %v6050
        %v6053 = vunpack.c.l.b16 %v6051
        %v6054 = vpack.c.b16 %v6053, %v6052
        %vm6055 = vcmp.ne.s16.totalorder %v6054, 0
        %v6056 = vsel %vm6055, %v6038, 0
        %v6057 = vrot.slane %v5834, 2
        %v6058 = vrot.slane %v5837, 3
        %v6059 = vor.u32 %v6057, %v6058
        %vm6061 = vcmask 1045504
        %vm6062 = vsmask.f32 5376
        %vm6063 = vmand %vm6061, %vm6062
        %v6064 = vsel %vm6063, %v6059, %v6059
        %vm6065 = vmand %vm6016, %vm5914
        %vm6066 = vmand %vm6017, %vm5915
        %vm6067 = vmand %vm6065, %vm5918
        %vm6068 = vmand %vm6066, %vm5919
        %v6069 = vsel %vm6067, 1, 0
        %v6070 = vsel %vm6068, 1, 0
        %vm6071 = vcmp.eq.s32.totalorder %v6069, 1
        %vm6072 = vcmp.eq.s32.totalorder %v6070, 1
        %vm6073 = vmpackc.low %vm6071, %vm6071
        %vm6074 = vmpackc.low %vm6072, %vm6072
        %v6075 = vsel %vm6073, 65537, 0
        %v6076 = vsel %vm6074, 65537, 0
        %v6077 = vunpack.c.l.b16 %v6075
        %v6078 = vunpack.c.l.b16 %v6076
        %v6079 = vpack.c.b16 %v6078, %v6077
        %vm6080 = vcmp.ne.s16.totalorder %v6079, 0
        %v6081 = vsel %vm6080, %v6064, 0
        %6083 = vrot.lane.b32.xlu0 %v5903, 64
        %v6084 = vpop.permute.xlu0 %6083
        %6086 = vrot.lane.b32.xlu0 %v5962, 64
        %v6087 = vpop.permute.xlu0 %6086
        %6089 = vrot.lane.b32.xlu0 %v6001, 64
        %v6090 = vpop.permute.xlu0 %6089
        %6092 = vrot.lane.b32.xlu0 %v6056, 64
        %v6093 = vpop.permute.xlu0 %6092
        %v6096 = vsel %vm4212, %v5876, %v6084
        %v6100 = vsel %vm4212, %v5934, %v6087
        %v6104 = vsel %vm4212, %v5979, %v6090
        %v6108 = vsel %vm4212, %v6034, %v6093
        %v6110 = vld [vmem:[%s3] sm:$0xf]
        %v6111 = vld [vmem:[%s3 + $0x4] sm:$0xf]
        %v6112 = vld [vmem:[%s3 + $0x8] sm:$0xf]
        %v6113 = vld [vmem:[%s3 + $0xc] sm:$0xf]
        %v6114 = vld [vmem:[%s3 + $0x10] sm:$0xf]
        %v6115 = vld [vmem:[%s3 + $0x14] sm:$0xf]
        %v6116 = vld [vmem:[%s3 + $0x18] sm:$0xf]
        %v6117 = vld [vmem:[%s3 + $0x1c] sm:$0xf]
        %v6118 = vld [vmem:[%s3 + $0x20] sm:$0xf]
        %v6119 = vld [vmem:[%s3 + $0x24] sm:$0xf]
        %v6120 = vld [vmem:[%s3 + $0x28] sm:$0xf]
        %v6121 = vld [vmem:[%s3 + $0x2c] sm:$0xf]
        %v6122 = vld [vmem:[%s3 + $0x30] sm:$0xf]
        %v6123 = vld [vmem:[%s3 + $0x34] sm:$0xf]
        %v6124 = vld [vmem:[%s3 + $0x38] sm:$0xf]
        %v6125 = vld [vmem:[%s3 + $0x3c] sm:$0xf]
        %v6126 = vld [vmem:[%s3 + $0x40] sm:$0xf]
        %v6127 = vld [vmem:[%s3 + $0x44] sm:$0xf]
        %v6128 = vld [vmem:[%s3 + $0x48] sm:$0xf]
        %v6129 = vld [vmem:[%s3 + $0x4c] sm:$0xf]
        %v6130 = vld [vmem:[%s3 + $0x50] sm:$0xf]
        %v6131 = vld [vmem:[%s3 + $0x54] sm:$0xf]
        %v6132 = vld [vmem:[%s3 + $0x58] sm:$0xf]
        %v6133 = vld [vmem:[%s3 + $0x5c] sm:$0xf]
        %v6134 = vld [vmem:[%s3 + $0x60] sm:$0xf]
        %v6135 = vld [vmem:[%s3 + $0x64] sm:$0xf]
        %v6136 = vld [vmem:[%s3 + $0x68] sm:$0xf]
        %v6137 = vld [vmem:[%s3 + $0x6c] sm:$0xf]
        %v6138 = vld [vmem:[%s3 + $0x70] sm:$0xf]
        %v6139 = vld [vmem:[%s3 + $0x74] sm:$0xf]
        %v6140 = vld [vmem:[%s3 + $0x78] sm:$0xf]
        %v6141 = vld [vmem:[%s3 + $0x7c] sm:$0xf]
        %v6142 = vld [vmem:[%s3 + $0x80] sm:$0xf]
        %v6143 = vld [vmem:[%s3 + $0x84] sm:$0xf]
        %v6144 = vld [vmem:[%s3 + $0x88] sm:$0xf]
        %v6145 = vld [vmem:[%s3 + $0x8c] sm:$0xf]
        %v6146 = vld [vmem:[%s3 + $0x90] sm:$0xf]
        %v6147 = vld [vmem:[%s3 + $0x94] sm:$0xf]
        %v6148 = vld [vmem:[%s3 + $0x98] sm:$0xf]
        %v6149 = vld [vmem:[%s3 + $0x9c] sm:$0xf]
        %v6150 = vld [vmem:[%s3 + $0xa0] sm:$0xf]
        %v6151 = vld [vmem:[%s3 + $0xa4] sm:$0xf]
        %v6152 = vld [vmem:[%s3 + $0xa8] sm:$0xf]
        %v6153 = vld [vmem:[%s3 + $0xac] sm:$0xf]
        %v6154 = vld [vmem:[%s3 + $0xb0] sm:$0xf]
        %v6155 = vld [vmem:[%s3 + $0xb4] sm:$0xf]
        %v6156 = vld [vmem:[%s3 + $0xb8] sm:$0xf]
        %v6157 = vld [vmem:[%s3 + $0xbc] sm:$0xf]
        %v6158 = vld [vmem:[%s3 + $0xc0] sm:$0xf]
        %v6159 = vld [vmem:[%s3 + $0xc4] sm:$0xf]
        %v6160 = vld [vmem:[%s3 + $0xc8] sm:$0xf]
        %v6161 = vld [vmem:[%s3 + $0xcc] sm:$0xf]
        %v6162 = vld [vmem:[%s3 + $0xd0] sm:$0xf]
        %v6163 = vld [vmem:[%s3 + $0xd4] sm:$0xf]
        %v6164 = vld [vmem:[%s3 + $0xd8] sm:$0xf]
        %v6165 = vld [vmem:[%s3 + $0xdc] sm:$0xf]
        %v6166 = vld [vmem:[%s3 + $0xe0] sm:$0xf]
        %v6167 = vld [vmem:[%s3 + $0xe4] sm:$0xf]
        %v6168 = vld [vmem:[%s3 + $0xe8] sm:$0xf]
        %v6169 = vld [vmem:[%s3 + $0xec] sm:$0xf]
        %v6170 = vld [vmem:[%s3 + $0xf0] sm:$0xf]
        %v6171 = vld [vmem:[%s3 + $0xf4] sm:$0xf]
        %v6172 = vld [vmem:[%s3 + $0xf8] sm:$0xf]
        %v6173 = vld [vmem:[%s3 + $0xfc] sm:$0xf]
        %v6174 = vld [vmem:[%s3 + $0x100] sm:$0xf]
        %v6175 = vld [vmem:[%s3 + $0x104] sm:$0xf]
        %v6176 = vld [vmem:[%s3 + $0x108] sm:$0xf]
        %v6177 = vld [vmem:[%s3 + $0x10c] sm:$0xf]
        %v6178 = vld [vmem:[%s3 + $0x110] sm:$0xf]
        %v6179 = vld [vmem:[%s3 + $0x114] sm:$0xf]
        %v6180 = vld [vmem:[%s3 + $0x118] sm:$0xf]
        %v6181 = vld [vmem:[%s3 + $0x11c] sm:$0xf]
        %v6182 = vlaneseq
        %v6183 = vshrl.u32 %v6182, 7
        %v6184 = vsub.s32 2, %v6183
        %v6185 = vrot.slane %v252, %v6184
        %v6258 = vunpack.c.l.b16 %v6110
        %v6259 = vunpack.c.l.b16 %v6111
        %v6260 = vunpack.c.l.b16 %v6112
        %v6261 = vunpack.c.l.b16 %v6113
        %v6262 = vunpack.c.l.b16 %v6114
        %v6263 = vunpack.c.l.b16 %v6115
        %v6264 = vunpack.c.l.b16 %v6116
        %v6265 = vunpack.c.l.b16 %v6117
        %v6266 = vunpack.c.l.b16 %v6118
        %v6267 = vunpack.c.l.b16 %v6119
        %v6268 = vunpack.c.l.b16 %v6120
        %v6269 = vunpack.c.l.b16 %v6121
        %v6270 = vunpack.c.l.b16 %v6122
        %v6271 = vunpack.c.l.b16 %v6123
        %v6272 = vunpack.c.l.b16 %v6124
        %v6273 = vunpack.c.l.b16 %v6125
        %v6274 = vunpack.c.l.b16 %v6126
        %v6275 = vunpack.c.l.b16 %v6127
        %v6276 = vunpack.c.l.b16 %v6128
        %v6277 = vunpack.c.l.b16 %v6129
        %v6278 = vunpack.c.l.b16 %v6130
        %v6279 = vunpack.c.l.b16 %v6131
        %v6280 = vunpack.c.l.b16 %v6132
        %v6281 = vunpack.c.l.b16 %v6133
        %v6282 = vunpack.c.l.b16 %v6134
        %v6283 = vunpack.c.l.b16 %v6135
        %v6284 = vunpack.c.l.b16 %v6136
        %v6285 = vunpack.c.l.b16 %v6137
        %v6286 = vunpack.c.l.b16 %v6138
        %v6287 = vunpack.c.l.b16 %v6139
        %v6288 = vunpack.c.l.b16 %v6140
        %v6289 = vunpack.c.l.b16 %v6141
        %v6290 = vunpack.c.l.b16 %v6142
        %v6291 = vunpack.c.l.b16 %v6143
        %v6292 = vunpack.c.l.b16 %v6144
        %v6293 = vunpack.c.l.b16 %v6145
        %v6294 = vunpack.c.l.b16 %v6146
        %v6295 = vunpack.c.l.b16 %v6147
        %v6296 = vunpack.c.l.b16 %v6148
        %v6297 = vunpack.c.l.b16 %v6149
        %v6298 = vunpack.c.l.b16 %v6150
        %v6299 = vunpack.c.l.b16 %v6151
        %v6300 = vunpack.c.l.b16 %v6152
        %v6301 = vunpack.c.l.b16 %v6153
        %v6302 = vunpack.c.l.b16 %v6154
        %v6303 = vunpack.c.l.b16 %v6155
        %v6304 = vunpack.c.l.b16 %v6156
        %v6305 = vunpack.c.l.b16 %v6157
        %v6306 = vunpack.c.l.b16 %v6158
        %v6307 = vunpack.c.l.b16 %v6159
        %v6308 = vunpack.c.l.b16 %v6160
        %v6309 = vunpack.c.l.b16 %v6161
        %v6310 = vunpack.c.l.b16 %v6162
        %v6311 = vunpack.c.l.b16 %v6163
        %v6312 = vunpack.c.l.b16 %v6164
        %v6313 = vunpack.c.l.b16 %v6165
        %v6314 = vunpack.c.l.b16 %v6166
        %v6315 = vunpack.c.l.b16 %v6167
        %v6316 = vunpack.c.l.b16 %v6168
        %v6317 = vunpack.c.l.b16 %v6169
        %v6318 = vunpack.c.l.b16 %v6170
        %v6319 = vunpack.c.l.b16 %v6171
        %v6320 = vunpack.c.l.b16 %v6172
        %v6321 = vunpack.c.l.b16 %v6173
        %v6322 = vunpack.c.l.b16 %v6174
        %v6323 = vunpack.c.l.b16 %v6175
        %v6324 = vunpack.c.l.b16 %v6176
        %v6325 = vunpack.c.l.b16 %v6177
        %v6326 = vunpack.c.l.b16 %v6178
        %v6327 = vunpack.c.l.b16 %v6179
        %v6328 = vunpack.c.l.b16 %v6180
        %v6329 = vunpack.c.l.b16 %v6181
        %v6330 = vpack.c.b16 %v6259, %v6258
        %v6331 = vpack.c.b16 %v6261, %v6260
        %v6332 = vpack.c.b16 %v6263, %v6262
        %v6333 = vpack.c.b16 %v6265, %v6264
        %v6334 = vpack.c.b16 %v6267, %v6266
        %v6335 = vpack.c.b16 %v6269, %v6268
        %v6336 = vpack.c.b16 %v6271, %v6270
        %v6337 = vpack.c.b16 %v6273, %v6272
        %v6338 = vpack.c.b16 %v6275, %v6274
        %v6339 = vpack.c.b16 %v6277, %v6276
        %v6340 = vpack.c.b16 %v6279, %v6278
        %v6341 = vpack.c.b16 %v6281, %v6280
        %v6342 = vpack.c.b16 %v6283, %v6282
        %v6343 = vpack.c.b16 %v6285, %v6284
        %v6344 = vpack.c.b16 %v6287, %v6286
        %v6345 = vpack.c.b16 %v6289, %v6288
        %v6346 = vpack.c.b16 %v6291, %v6290
        %v6347 = vpack.c.b16 %v6293, %v6292
        %v6348 = vpack.c.b16 %v6295, %v6294
        %v6349 = vpack.c.b16 %v6297, %v6296
        %v6350 = vpack.c.b16 %v6299, %v6298
        %v6351 = vpack.c.b16 %v6301, %v6300
        %v6352 = vpack.c.b16 %v6303, %v6302
        %v6353 = vpack.c.b16 %v6305, %v6304
        %v6354 = vpack.c.b16 %v6307, %v6306
        %v6355 = vpack.c.b16 %v6309, %v6308
        %v6356 = vpack.c.b16 %v6311, %v6310
        %v6357 = vpack.c.b16 %v6313, %v6312
        %v6358 = vpack.c.b16 %v6315, %v6314
        %v6359 = vpack.c.b16 %v6317, %v6316
        %v6360 = vpack.c.b16 %v6319, %v6318
        %v6361 = vpack.c.b16 %v6321, %v6320
        %v6362 = vpack.c.b16 %v6323, %v6322
        %v6363 = vpack.c.b16 %v6325, %v6324
        %v6364 = vpack.c.b16 %v6327, %v6326
        %v6365 = vpack.c.b16 %v6329, %v6328
        %v6403 = vsel %vm4212, %v6081, 0
        %6405 = vmatprep.subr.bf16.mxu0 0
        %6406 = vmatpush1.bf16.msra.mxu0 %v6330
        %6407 = vmatprep.subr.bf16.mxu0 0
        %6408 = vmatpush1.bf16.msra.mxu0 %v6331
        %6409 = vmatprep.subr.bf16.mxu0 0
        %6410 = vmatpush1.bf16.msra.mxu0 %v6332
        %6411 = vmatprep.subr.bf16.mxu0 0
        %6412 = vmatpush1.bf16.msra.mxu0 %v6333
        %6413 = vmatprep.subr.bf16.mxu0 0
        %6414 = vmatpush1.bf16.msra.mxu0 %v6334
        %6415 = vmatprep.subr.bf16.mxu0 0
        %6416 = vmatpush1.bf16.msra.mxu0 %v6335
        %6417 = vmatprep.subr.bf16.mxu0 0
        %6418 = vmatpush1.bf16.msra.mxu0 %v6336
        %6419 = vmatprep.subr.bf16.mxu0 0
        %6420 = vmatpush1.bf16.msra.mxu0 %v6337
        %6421 = vmatprep.subr.bf16.mxu0 0
        %6422 = vmatpush1.bf16.msra.mxu0 %v6338
        %6423 = vmatprep.subr.bf16.mxu0 0
        %6424 = vmatpush1.bf16.msra.mxu0 %v6339
        %6425 = vmatprep.subr.bf16.mxu0 0
        %6426 = vmatpush1.bf16.msra.mxu0 %v6340
        %6427 = vmatprep.subr.bf16.mxu0 0
        %6428 = vmatpush1.bf16.msra.mxu0 %v6341
        %6429 = vmatprep.subr.bf16.mxu0 0
        %6430 = vmatpush1.bf16.msra.mxu0 %v6342
        %6431 = vmatprep.subr.bf16.mxu0 0
        %6432 = vmatpush1.bf16.msra.mxu0 %v6343
        %6433 = vmatprep.subr.bf16.mxu0 0
        %6434 = vmatpush1.bf16.msra.mxu0 %v6344
        %6435 = vmatprep.subr.bf16.mxu0 0
        %6436 = vmatpush1.bf16.msra.mxu0 %v6345
        %6437 = vmatprep.mubr.bf16.mxu0 %v6100
        %6438 = vmatmul.mubr.bf16.gmra.mrb[0].mxu0 %v6096
        %v6439 = vpop.f32.mrb[0].mxu0
        %v6440 = vadd.f32 %v6185, %v6439
        %v6441 = vpop.f32.mrb[0].mxu0
        %v6442 = vpop.f32.mrb[0].mxu0
        %v6443 = vadd.f32 %v6185, %v6442
        %v6444 = vpop.f32.mrb[0].mxu0
        %6445 = vdwg.mxu0
        %6446 = vmatprep.subr.bf16.mxu0 0
        %6447 = vmatpush1.bf16.msra.mxu0 %v6346
        %6448 = vmatprep.subr.bf16.mxu0 0
        %6449 = vmatpush1.bf16.msra.mxu0 %v6347
        %6450 = vmatprep.subr.bf16.mxu0 0
        %6451 = vmatpush1.bf16.msra.mxu0 %v6348
        %6452 = vmatprep.subr.bf16.mxu0 0
        %6453 = vmatpush1.bf16.msra.mxu0 %v6349
        %6454 = vmatprep.subr.bf16.mxu0 0
        %6455 = vmatpush1.bf16.msra.mxu0 %v6350
        %6456 = vmatprep.subr.bf16.mxu0 0
        %6457 = vmatpush1.bf16.msra.mxu0 %v6351
        %6458 = vmatprep.subr.bf16.mxu0 0
        %6459 = vmatpush1.bf16.msra.mxu0 %v6352
        %6460 = vmatprep.subr.bf16.mxu0 0
        %6461 = vmatpush1.bf16.msra.mxu0 %v6353
        %6462 = vmatprep.subr.bf16.mxu0 0
        %6463 = vmatpush1.bf16.msra.mxu0 %v6354
        %6464 = vmatprep.subr.bf16.mxu0 0
        %6465 = vmatpush1.bf16.msra.mxu0 %v6355
        %6466 = vmatprep.subr.bf16.mxu0 0
        %6467 = vmatpush1.bf16.msra.mxu0 %v6356
        %6468 = vmatprep.subr.bf16.mxu0 0
        %6469 = vmatpush1.bf16.msra.mxu0 %v6357
        %6470 = vmatprep.subr.bf16.mxu0 0
        %6471 = vmatpush1.bf16.msra.mxu0 %v6358
        %6472 = vmatprep.subr.bf16.mxu0 0
        %6473 = vmatpush1.bf16.msra.mxu0 %v6359
        %6474 = vmatprep.subr.bf16.mxu0 0
        %6475 = vmatpush1.bf16.msra.mxu0 %v6360
        %6476 = vmatprep.subr.bf16.mxu0 0
        %6477 = vmatpush1.bf16.msra.mxu0 %v6361
        %6478 = vmatprep.mubr.bf16.mxu0 %v6108
        %6479 = vmatmul.mubr.bf16.gmra.mrb[0].mxu0 %v6104
        %v6480 = vpop.f32.mrb[0].mxu0
        %v6481 = vadd.f32 %v6440, %v6480
        %v6482 = vpop.f32.mrb[0].mxu0
        %v6483 = vpop.f32.mrb[0].mxu0
        %v6484 = vadd.f32 %v6443, %v6483
        %v6485 = vpop.f32.mrb[0].mxu0
        %6486 = vdwg.mxu0
        %6487 = vmatprep.subr.bf16.mxu0 0
        %6488 = vmatpush1.bf16.msra.mxu0 %v6362
        %6489 = vmatprep.subr.bf16.mxu0 0
        %6490 = vmatpush1.bf16.msra.mxu0 %v6363
        %6491 = vmatprep.subr.bf16.mxu0 0
        %6492 = vmatpush1.bf16.msra.mxu0 %v6364
        %6493 = vmatprep.subr.bf16.mxu0 0
        %6494 = vmatpush1.bf16.msra.mxu0 %v6365
        %6495 = vmatprep.subr.bf16.mxu0 0
        %6496 = vmatpush1.bf16.msra.mxu0 0
        %6497 = vmatprep.subr.bf16.mxu0 0
        %6498 = vmatpush1.bf16.msra.mxu0 0
        %6499 = vmatprep.subr.bf16.mxu0 0
        %6500 = vmatpush1.bf16.msra.mxu0 0
        %6501 = vmatprep.subr.bf16.mxu0 0
        %6502 = vmatpush1.bf16.msra.mxu0 0
        %6503 = vmatprep.subr.bf16.mxu0 0
        %6504 = vmatpush1.bf16.msra.mxu0 0
        %6505 = vmatprep.subr.bf16.mxu0 0
        %6506 = vmatpush1.bf16.msra.mxu0 0
        %6507 = vmatprep.subr.bf16.mxu0 0
        %6508 = vmatpush1.bf16.msra.mxu0 0
        %6509 = vmatprep.subr.bf16.mxu0 0
        %6510 = vmatpush1.bf16.msra.mxu0 0
        %6511 = vmatprep.subr.bf16.mxu0 0
        %6512 = vmatpush1.bf16.msra.mxu0 0
        %6513 = vmatprep.subr.bf16.mxu0 0
        %6514 = vmatpush1.bf16.msra.mxu0 0
        %6515 = vmatprep.subr.bf16.mxu0 0
        %6516 = vmatpush1.bf16.msra.mxu0 0
        %6517 = vmatprep.subr.bf16.mxu0 0
        %6518 = vmatpush1.bf16.msra.mxu0 0
        %6519 = vmatprep.mubr.bf16.mxu0 0
        %6520 = vmatmul.mubr.bf16.gmra.mrb[0].mxu0 %v6403
        %v6521 = vpop.f32.mrb[0].mxu0
        %v6522 = vadd.f32 %v6481, %v6521
        %v6523 = vpop.f32.mrb[0].mxu0
        %v6524 = vpop.f32.mrb[0].mxu0
        %v6525 = vadd.f32 %v6484, %v6524
        %v6526 = vpop.f32.mrb[0].mxu0
        %6527 = vdwg.mxu0
        %v6528 = vmax.f32 %v6522, 0.0
        %v6529 = vmax.f32 %v6525, 0.0
        %v6532 = vrot.slane %v6528, 1
        %v6533 = vrot.slane %v6529, 1
        %v6534 = vsel %vm4066, %v6532, %v6533
        %v6538 = vsel %vm4066, %v6533, %v6532
        %v6539 = vmax.f32 %v6528, %v6534
        %v6540 = vmax.f32 %v6529, %v6538
        %v6543 = vrot.slane %v6539, 4
        %v6544 = vrot.slane %v6540, 4
        %v6545 = vsel %vm3834, %v6543, %v6544
        %v6549 = vsel %vm3834, %v6544, %v6543
        %v6550 = vmax.f32 %v6539, %v6545
        %v6551 = vmax.f32 %v6540, %v6549
        %v6552 = vshra.s32 %v5830, 1
        %v6553 = vshra.s32 %v5831, 1
        %v6554 = vshra.s32 %v5826, 1
        %v6555 = vshra.s32 %v5827, 1
        %v6556 = vpack.c.bf16 %v6551, %v6550
        %v6558 = vrot.slane %v6556, 3
        %v6560 = vsel %vm3835, %v6558, %v6558
        %v6562 = vadd.s32 %v6552, 4294967295
        %v6563 = vadd.s32 %v6553, 4294967295
        %vm6564 = vcmp.ge.s32.totalorder %v6562, 0
        %vm6565 = vcmp.ge.s32.totalorder %v6563, 0
        %vm6566 = vcmp.lt.s32.totalorder %v6562, 2
        %vm6567 = vcmp.lt.s32.totalorder %v6563, 2
        %vm6568 = vmand %vm6564, %vm6566
        %vm6569 = vmand %vm6565, %vm6567
        %v6570 = vadd.s32 %v6554, 4294967295
        %v6571 = vadd.s32 %v6555, 4294967295
        %vm6572 = vcmp.ge.s32.totalorder %v6570, 0
        %vm6573 = vcmp.ge.s32.totalorder %v6571, 0
        %vm6574 = vmand %vm6568, %vm6572
        %vm6575 = vmand %vm6569, %vm6573
        %vm6576 = vcmp.lt.s32.totalorder %v6570, 2
        %vm6577 = vcmp.lt.s32.totalorder %v6571, 2
        %vm6578 = vmand %vm6574, %vm6576
        %vm6579 = vmand %vm6575, %vm6577
        %v6580 = vsel %vm6578, 1, 0
        %v6581 = vsel %vm6579, 1, 0
        %vm6582 = vcmp.eq.s32.totalorder %v6580, 1
        %vm6583 = vcmp.eq.s32.totalorder %v6581, 1
        %vm6584 = vmpackc.low %vm6582, %vm6582
        %vm6585 = vmpackc.low %vm6583, %vm6583
        %v6586 = vsel %vm6584, 65537, 0
        %v6587 = vsel %vm6585, 65537, 0
        %v6588 = vunpack.c.l.b16 %v6586
        %v6589 = vunpack.c.l.b16 %v6587
        %v6590 = vpack.c.b16 %v6589, %v6588
        %vm6591 = vcmp.ne.s16.totalorder %v6590, 0
        %v6592 = vsel %vm6591, %v6560, 0
        %v6593 = vrot.slane %v6556, 4
        %v6595 = vsel %vm3834, %v6593, %v6593
        %vm6597 = vcmp.ge.s32.totalorder %v6554, 0
        %vm6598 = vcmp.ge.s32.totalorder %v6555, 0
        %vm6599 = vmand %vm6568, %vm6597
        %vm6600 = vmand %vm6569, %vm6598
        %vm6601 = vcmp.lt.s32.totalorder %v6554, 2
        %vm6602 = vcmp.lt.s32.totalorder %v6555, 2
        %vm6603 = vmand %vm6599, %vm6601
        %vm6604 = vmand %vm6600, %vm6602
        %v6605 = vsel %vm6603, 1, 0
        %v6606 = vsel %vm6604, 1, 0
        %vm6607 = vcmp.eq.s32.totalorder %v6605, 1
        %vm6608 = vcmp.eq.s32.totalorder %v6606, 1
        %vm6609 = vmpackc.low %vm6607, %vm6607
        %vm6610 = vmpackc.low %vm6608, %vm6608
        %v6611 = vsel %vm6609, 65537, 0
        %v6612 = vsel %vm6610, 65537, 0
        %v6613 = vunpack.c.l.b16 %v6611
        %v6614 = vunpack.c.l.b16 %v6612
        %v6615 = vpack.c.b16 %v6614, %v6613
        %vm6616 = vcmp.ne.s16.totalorder %v6615, 0
        %v6617 = vsel %vm6616, %v6595, 0
        %v6618 = vrot.slane %v6556, 5
        %vm6619 = vcmask 1042432
        %v6621 = vsel %vm6619, %v6618, %v6618
        %v6623 = vadd.s32 %v6554, 1
        %v6624 = vadd.s32 %v6555, 1
        %vm6625 = vcmp.ge.s32.totalorder %v6623, 0
        %vm6626 = vcmp.ge.s32.totalorder %v6624, 0
        %vm6627 = vmand %vm6568, %vm6625
        %vm6628 = vmand %vm6569, %vm6626
        %vm6629 = vcmp.lt.s32.totalorder %v6623, 2
        %vm6630 = vcmp.lt.s32.totalorder %v6624, 2
        %vm6631 = vmand %vm6627, %vm6629
        %vm6632 = vmand %vm6628, %vm6630
        %v6633 = vsel %vm6631, 1, 0
        %v6634 = vsel %vm6632, 1, 0
        %vm6635 = vcmp.eq.s32.totalorder %v6633, 1
        %vm6636 = vcmp.eq.s32.totalorder %v6634, 1
        %vm6637 = vmpackc.low %vm6635, %vm6635
        %vm6638 = vmpackc.low %vm6636, %vm6636
        %v6639 = vsel %vm6637, 65537, 0
        %v6640 = vsel %vm6638, 65537, 0
        %v6641 = vunpack.c.l.b16 %v6639
        %v6642 = vunpack.c.l.b16 %v6640
        %v6643 = vpack.c.b16 %v6642, %v6641
        %vm6644 = vcmp.ne.s16.totalorder %v6643, 0
        %v6645 = vsel %vm6644, %v6621, 0
        %v6646 = vrot.slane %v6556, 7
        %vm6647 = vcmask 1040384
        %v6649 = vsel %vm6647, %v6646, %v6646
        %vm6651 = vcmp.ge.s32.totalorder %v6552, 0
        %vm6652 = vcmp.ge.s32.totalorder %v6553, 0
        %vm6653 = vcmp.lt.s32.totalorder %v6552, 2
        %vm6654 = vcmp.lt.s32.totalorder %v6553, 2
        %vm6655 = vmand %vm6651, %vm6653
        %vm6656 = vmand %vm6652, %vm6654
        %vm6657 = vmand %vm6655, %vm6572
        %vm6658 = vmand %vm6656, %vm6573
        %vm6659 = vmand %vm6657, %vm6576
        %vm6660 = vmand %vm6658, %vm6577
        %v6661 = vsel %vm6659, 1, 0
        %v6662 = vsel %vm6660, 1, 0
        %vm6663 = vcmp.eq.s32.totalorder %v6661, 1
        %vm6664 = vcmp.eq.s32.totalorder %v6662, 1
        %vm6665 = vmpackc.low %vm6663, %vm6663
        %vm6666 = vmpackc.low %vm6664, %vm6664
        %v6667 = vsel %vm6665, 65537, 0
        %v6668 = vsel %vm6666, 65537, 0
        %v6669 = vunpack.c.l.b16 %v6667
        %v6670 = vunpack.c.l.b16 %v6668
        %v6671 = vpack.c.b16 %v6670, %v6669
        %vm6672 = vcmp.ne.s16.totalorder %v6671, 0
        %v6673 = vsel %vm6672, %v6649, 0
        %vm6674 = vmand %vm6655, %vm6597
        %vm6675 = vmand %vm6656, %vm6598
        %vm6676 = vmand %vm6674, %vm6601
        %vm6677 = vmand %vm6675, %vm6602
        %v6678 = vsel %vm6676, 1, 0
        %v6679 = vsel %vm6677, 1, 0
        %vm6680 = vcmp.eq.s32.totalorder %v6678, 1
        %vm6681 = vcmp.eq.s32.totalorder %v6679, 1
        %vm6682 = vmpackc.low %vm6680, %vm6680
        %vm6683 = vmpackc.low %vm6681, %vm6681
        %v6684 = vsel %vm6682, 65537, 0
        %v6685 = vsel %vm6683, 65537, 0
        %v6686 = vunpack.c.l.b16 %v6684
        %v6687 = vunpack.c.l.b16 %v6685
        %v6688 = vpack.c.b16 %v6687, %v6686
        %vm6689 = vcmp.ne.s16.totalorder %v6688, 0
        %v6690 = vsel %vm6689, %v6556, 0
        %v6691 = vrot.slane %v6556, 1
        %v6693 = vsel %vm4066, %v6691, %v6691
        %vm6695 = vmand %vm6655, %vm6625
        %vm6696 = vmand %vm6656, %vm6626
        %vm6697 = vmand %vm6695, %vm6629
        %vm6698 = vmand %vm6696, %vm6630
        %v6699 = vsel %vm6697, 1, 0
        %v6700 = vsel %vm6698, 1, 0
        %vm6701 = vcmp.eq.s32.totalorder %v6699, 1
        %vm6702 = vcmp.eq.s32.totalorder %v6700, 1
        %vm6703 = vmpackc.low %vm6701, %vm6701
        %vm6704 = vmpackc.low %vm6702, %vm6702
        %v6705 = vsel %vm6703, 65537, 0
        %v6706 = vsel %vm6704, 65537, 0
        %v6707 = vunpack.c.l.b16 %v6705
        %v6708 = vunpack.c.l.b16 %v6706
        %v6709 = vpack.c.b16 %v6708, %v6707
        %vm6710 = vcmp.ne.s16.totalorder %v6709, 0
        %v6711 = vsel %vm6710, %v6693, 0
        %v6712 = vadd.s32 %v6552, 1
        %v6713 = vadd.s32 %v6553, 1
        %vm6714 = vcmp.ge.s32.totalorder %v6712, 0
        %vm6715 = vcmp.ge.s32.totalorder %v6713, 0
        %vm6716 = vcmp.lt.s32.totalorder %v6712, 2
        %vm6717 = vcmp.lt.s32.totalorder %v6713, 2
        %vm6718 = vmand %vm6714, %vm6716
        %vm6719 = vmand %vm6715, %vm6717
        %vm6720 = vmand %vm6718, %vm6572
        %vm6721 = vmand %vm6719, %vm6573
        %vm6722 = vmand %vm6720, %vm6576
        %vm6723 = vmand %vm6721, %vm6577
        %v6724 = vsel %vm6722, 1, 0
        %v6725 = vsel %vm6723, 1, 0
        %vm6726 = vcmp.eq.s32.totalorder %v6724, 1
        %vm6727 = vcmp.eq.s32.totalorder %v6725, 1
        %vm6728 = vmpackc.low %vm6726, %vm6726
        %vm6729 = vmpackc.low %vm6727, %vm6727
        %v6730 = vsel %vm6728, 65537, 0
        %v6731 = vsel %vm6729, 65537, 0
        %v6732 = vunpack.c.l.b16 %v6730
        %v6733 = vunpack.c.l.b16 %v6731
        %v6734 = vpack.c.b16 %v6733, %v6732
        %vm6735 = vcmp.ne.s16.totalorder %v6734, 0
        %v6736 = vsel %vm6735, %v6560, 0
        %vm6737 = vmand %vm6718, %vm6597
        %vm6738 = vmand %vm6719, %vm6598
        %vm6739 = vmand %vm6737, %vm6601
        %vm6740 = vmand %vm6738, %vm6602
        %v6741 = vsel %vm6739, 1, 0
        %v6742 = vsel %vm6740, 1, 0
        %vm6743 = vcmp.eq.s32.totalorder %v6741, 1
        %vm6744 = vcmp.eq.s32.totalorder %v6742, 1
        %vm6745 = vmpackc.low %vm6743, %vm6743
        %vm6746 = vmpackc.low %vm6744, %vm6744
        %v6747 = vsel %vm6745, 65537, 0
        %v6748 = vsel %vm6746, 65537, 0
        %v6749 = vunpack.c.l.b16 %v6747
        %v6750 = vunpack.c.l.b16 %v6748
        %v6751 = vpack.c.b16 %v6750, %v6749
        %vm6752 = vcmp.ne.s16.totalorder %v6751, 0
        %v6753 = vsel %vm6752, %v6595, 0
        %vm6754 = vmand %vm6718, %vm6625
        %vm6755 = vmand %vm6719, %vm6626
        %vm6756 = vmand %vm6754, %vm6629
        %vm6757 = vmand %vm6755, %vm6630
        %v6758 = vsel %vm6756, 1, 0
        %v6759 = vsel %vm6757, 1, 0
        %vm6760 = vcmp.eq.s32.totalorder %v6758, 1
        %vm6761 = vcmp.eq.s32.totalorder %v6759, 1
        %vm6762 = vmpackc.low %vm6760, %vm6760
        %vm6763 = vmpackc.low %vm6761, %vm6761
        %v6764 = vsel %vm6762, 65537, 0
        %v6765 = vsel %vm6763, 65537, 0
        %v6766 = vunpack.c.l.b16 %v6764
        %v6767 = vunpack.c.l.b16 %v6765
        %v6768 = vpack.c.b16 %v6767, %v6766
        %vm6769 = vcmp.ne.s16.totalorder %v6768, 0
        %v6770 = vsel %vm6769, %v6621, 0
        %6772 = vrot.lane.b32.xlu0 %v6617, 64
        %v6773 = vpop.permute.xlu0 %6772
        %6775 = vrot.lane.b32.xlu0 %v6673, 64
        %v6776 = vpop.permute.xlu0 %6775
        %6778 = vrot.lane.b32.xlu0 %v6711, 64
        %v6779 = vpop.permute.xlu0 %6778
        %6781 = vrot.lane.b32.xlu0 %v6753, 64
        %v6782 = vpop.permute.xlu0 %6781
        %v6785 = vsel %vm4212, %v6592, %v6773
        %v6789 = vsel %vm4212, %v6645, %v6776
        %v6793 = vsel %vm4212, %v6690, %v6779
        %v6797 = vsel %vm4212, %v6736, %v6782
        %v6799 = vld [vmem:[%s4] sm:$0xf]
        %v6800 = vld [vmem:[%s4 + $0x4] sm:$0xf]
        %v6801 = vld [vmem:[%s4 + $0x8] sm:$0xf]
        %v6802 = vld [vmem:[%s4 + $0xc] sm:$0xf]
        %v6803 = vld [vmem:[%s4 + $0x10] sm:$0xf]
        %v6804 = vld [vmem:[%s4 + $0x14] sm:$0xf]
        %v6805 = vld [vmem:[%s4 + $0x18] sm:$0xf]
        %v6806 = vld [vmem:[%s4 + $0x1c] sm:$0xf]
        %v6807 = vld [vmem:[%s4 + $0x20] sm:$0xf]
        %v6808 = vld [vmem:[%s4 + $0x24] sm:$0xf]
        %v6809 = vld [vmem:[%s4 + $0x28] sm:$0xf]
        %v6810 = vld [vmem:[%s4 + $0x2c] sm:$0xf]
        %v6811 = vld [vmem:[%s4 + $0x30] sm:$0xf]
        %v6812 = vld [vmem:[%s4 + $0x34] sm:$0xf]
        %v6813 = vld [vmem:[%s4 + $0x38] sm:$0xf]
        %v6814 = vld [vmem:[%s4 + $0x3c] sm:$0xf]
        %v6815 = vld [vmem:[%s4 + $0x40] sm:$0xf]
        %v6816 = vld [vmem:[%s4 + $0x44] sm:$0xf]
        %v6817 = vld [vmem:[%s4 + $0x48] sm:$0xf]
        %v6818 = vld [vmem:[%s4 + $0x4c] sm:$0xf]
        %v6819 = vld [vmem:[%s4 + $0x50] sm:$0xf]
        %v6820 = vld [vmem:[%s4 + $0x54] sm:$0xf]
        %v6821 = vld [vmem:[%s4 + $0x58] sm:$0xf]
        %v6822 = vld [vmem:[%s4 + $0x5c] sm:$0xf]
        %v6823 = vld [vmem:[%s4 + $0x60] sm:$0xf]
        %v6824 = vld [vmem:[%s4 + $0x64] sm:$0xf]
        %v6825 = vld [vmem:[%s4 + $0x68] sm:$0xf]
        %v6826 = vld [vmem:[%s4 + $0x6c] sm:$0xf]
        %v6827 = vld [vmem:[%s4 + $0x70] sm:$0xf]
        %v6828 = vld [vmem:[%s4 + $0x74] sm:$0xf]
        %v6829 = vld [vmem:[%s4 + $0x78] sm:$0xf]
        %v6830 = vld [vmem:[%s4 + $0x7c] sm:$0xf]
        %v6831 = vld [vmem:[%s4 + $0x80] sm:$0xf]
        %v6832 = vld [vmem:[%s4 + $0x84] sm:$0xf]
        %v6833 = vld [vmem:[%s4 + $0x88] sm:$0xf]
        %v6834 = vld [vmem:[%s4 + $0x8c] sm:$0xf]
        %v6835 = vld [vmem:[%s4 + $0x90] sm:$0xf]
        %v6836 = vld [vmem:[%s4 + $0x94] sm:$0xf]
        %v6837 = vld [vmem:[%s4 + $0x98] sm:$0xf]
        %v6838 = vld [vmem:[%s4 + $0x9c] sm:$0xf]
        %v6839 = vld [vmem:[%s4 + $0xa0] sm:$0xf]
        %v6840 = vld [vmem:[%s4 + $0xa4] sm:$0xf]
        %v6841 = vld [vmem:[%s4 + $0xa8] sm:$0xf]
        %v6842 = vld [vmem:[%s4 + $0xac] sm:$0xf]
        %v6843 = vld [vmem:[%s4 + $0xb0] sm:$0xf]
        %v6844 = vld [vmem:[%s4 + $0xb4] sm:$0xf]
        %v6845 = vld [vmem:[%s4 + $0xb8] sm:$0xf]
        %v6846 = vld [vmem:[%s4 + $0xbc] sm:$0xf]
        %v6847 = vld [vmem:[%s4 + $0xc0] sm:$0xf]
        %v6848 = vld [vmem:[%s4 + $0xc4] sm:$0xf]
        %v6849 = vld [vmem:[%s4 + $0xc8] sm:$0xf]
        %v6850 = vld [vmem:[%s4 + $0xcc] sm:$0xf]
        %v6851 = vld [vmem:[%s4 + $0xd0] sm:$0xf]
        %v6852 = vld [vmem:[%s4 + $0xd4] sm:$0xf]
        %v6853 = vld [vmem:[%s4 + $0xd8] sm:$0xf]
        %v6854 = vld [vmem:[%s4 + $0xdc] sm:$0xf]
        %v6855 = vld [vmem:[%s4 + $0xe0] sm:$0xf]
        %v6856 = vld [vmem:[%s4 + $0xe4] sm:$0xf]
        %v6857 = vld [vmem:[%s4 + $0xe8] sm:$0xf]
        %v6858 = vld [vmem:[%s4 + $0xec] sm:$0xf]
        %v6859 = vld [vmem:[%s4 + $0xf0] sm:$0xf]
        %v6860 = vld [vmem:[%s4 + $0xf4] sm:$0xf]
        %v6861 = vld [vmem:[%s4 + $0xf8] sm:$0xf]
        %v6862 = vld [vmem:[%s4 + $0xfc] sm:$0xf]
        %v6863 = vld [vmem:[%s4 + $0x100] sm:$0xf]
        %v6864 = vld [vmem:[%s4 + $0x104] sm:$0xf]
        %v6865 = vld [vmem:[%s4 + $0x108] sm:$0xf]
        %v6866 = vld [vmem:[%s4 + $0x10c] sm:$0xf]
        %v6867 = vld [vmem:[%s4 + $0x110] sm:$0xf]
        %v6868 = vld [vmem:[%s4 + $0x114] sm:$0xf]
        %v6869 = vld [vmem:[%s4 + $0x118] sm:$0xf]
        %v6870 = vld [vmem:[%s4 + $0x11c] sm:$0xf]
        %v6871 = vlaneseq
        %v6872 = vshrl.u32 %v6871, 7
        %v6873 = vsub.s32 3, %v6872
        %v6874 = vrot.slane %v252, %v6873
        %v6947 = vunpack.c.l.b16 %v6799
        %v6948 = vunpack.c.l.b16 %v6800
        %v6949 = vunpack.c.l.b16 %v6801
        %v6950 = vunpack.c.l.b16 %v6802
        %v6951 = vunpack.c.l.b16 %v6803
        %v6952 = vunpack.c.l.b16 %v6804
        %v6953 = vunpack.c.l.b16 %v6805
        %v6954 = vunpack.c.l.b16 %v6806
        %v6955 = vunpack.c.l.b16 %v6807
        %v6956 = vunpack.c.l.b16 %v6808
        %v6957 = vunpack.c.l.b16 %v6809
        %v6958 = vunpack.c.l.b16 %v6810
        %v6959 = vunpack.c.l.b16 %v6811
        %v6960 = vunpack.c.l.b16 %v6812
        %v6961 = vunpack.c.l.b16 %v6813
        %v6962 = vunpack.c.l.b16 %v6814
        %v6963 = vunpack.c.l.b16 %v6815
        %v6964 = vunpack.c.l.b16 %v6816
        %v6965 = vunpack.c.l.b16 %v6817
        %v6966 = vunpack.c.l.b16 %v6818
        %v6967 = vunpack.c.l.b16 %v6819
        %v6968 = vunpack.c.l.b16 %v6820
        %v6969 = vunpack.c.l.b16 %v6821
        %v6970 = vunpack.c.l.b16 %v6822
        %v6971 = vunpack.c.l.b16 %v6823
        %v6972 = vunpack.c.l.b16 %v6824
        %v6973 = vunpack.c.l.b16 %v6825
        %v6974 = vunpack.c.l.b16 %v6826
        %v6975 = vunpack.c.l.b16 %v6827
        %v6976 = vunpack.c.l.b16 %v6828
        %v6977 = vunpack.c.l.b16 %v6829
        %v6978 = vunpack.c.l.b16 %v6830
        %v6979 = vunpack.c.l.b16 %v6831
        %v6980 = vunpack.c.l.b16 %v6832
        %v6981 = vunpack.c.l.b16 %v6833
        %v6982 = vunpack.c.l.b16 %v6834
        %v6983 = vunpack.c.l.b16 %v6835
        %v6984 = vunpack.c.l.b16 %v6836
        %v6985 = vunpack.c.l.b16 %v6837
        %v6986 = vunpack.c.l.b16 %v6838
        %v6987 = vunpack.c.l.b16 %v6839
        %v6988 = vunpack.c.l.b16 %v6840
        %v6989 = vunpack.c.l.b16 %v6841
        %v6990 = vunpack.c.l.b16 %v6842
        %v6991 = vunpack.c.l.b16 %v6843
        %v6992 = vunpack.c.l.b16 %v6844
        %v6993 = vunpack.c.l.b16 %v6845
        %v6994 = vunpack.c.l.b16 %v6846
        %v6995 = vunpack.c.l.b16 %v6847
        %v6996 = vunpack.c.l.b16 %v6848
        %v6997 = vunpack.c.l.b16 %v6849
        %v6998 = vunpack.c.l.b16 %v6850
        %v6999 = vunpack.c.l.b16 %v6851
        %v7000 = vunpack.c.l.b16 %v6852
        %v7001 = vunpack.c.l.b16 %v6853
        %v7002 = vunpack.c.l.b16 %v6854
        %v7003 = vunpack.c.l.b16 %v6855
        %v7004 = vunpack.c.l.b16 %v6856
        %v7005 = vunpack.c.l.b16 %v6857
        %v7006 = vunpack.c.l.b16 %v6858
        %v7007 = vunpack.c.l.b16 %v6859
        %v7008 = vunpack.c.l.b16 %v6860
        %v7009 = vunpack.c.l.b16 %v6861
        %v7010 = vunpack.c.l.b16 %v6862
        %v7011 = vunpack.c.l.b16 %v6863
        %v7012 = vunpack.c.l.b16 %v6864
        %v7013 = vunpack.c.l.b16 %v6865
        %v7014 = vunpack.c.l.b16 %v6866
        %v7015 = vunpack.c.l.b16 %v6867
        %v7016 = vunpack.c.l.b16 %v6868
        %v7017 = vunpack.c.l.b16 %v6869
        %v7018 = vunpack.c.l.b16 %v6870
        %v7019 = vpack.c.b16 %v6948, %v6947
        %v7020 = vpack.c.b16 %v6950, %v6949
        %v7021 = vpack.c.b16 %v6952, %v6951
        %v7022 = vpack.c.b16 %v6954, %v6953
        %v7023 = vpack.c.b16 %v6956, %v6955
        %v7024 = vpack.c.b16 %v6958, %v6957
        %v7025 = vpack.c.b16 %v6960, %v6959
        %v7026 = vpack.c.b16 %v6962, %v6961
        %v7027 = vpack.c.b16 %v6964, %v6963
        %v7028 = vpack.c.b16 %v6966, %v6965
        %v7029 = vpack.c.b16 %v6968, %v6967
        %v7030 = vpack.c.b16 %v6970, %v6969
        %v7031 = vpack.c.b16 %v6972, %v6971
        %v7032 = vpack.c.b16 %v6974, %v6973
        %v7033 = vpack.c.b16 %v6976, %v6975
        %v7034 = vpack.c.b16 %v6978, %v6977
        %v7035 = vpack.c.b16 %v6980, %v6979
        %v7036 = vpack.c.b16 %v6982, %v6981
        %v7037 = vpack.c.b16 %v6984, %v6983
        %v7038 = vpack.c.b16 %v6986, %v6985
        %v7039 = vpack.c.b16 %v6988, %v6987
        %v7040 = vpack.c.b16 %v6990, %v6989
        %v7041 = vpack.c.b16 %v6992, %v6991
        %v7042 = vpack.c.b16 %v6994, %v6993
        %v7043 = vpack.c.b16 %v6996, %v6995
        %v7044 = vpack.c.b16 %v6998, %v6997
        %v7045 = vpack.c.b16 %v7000, %v6999
        %v7046 = vpack.c.b16 %v7002, %v7001
        %v7047 = vpack.c.b16 %v7004, %v7003
        %v7048 = vpack.c.b16 %v7006, %v7005
        %v7049 = vpack.c.b16 %v7008, %v7007
        %v7050 = vpack.c.b16 %v7010, %v7009
        %v7051 = vpack.c.b16 %v7012, %v7011
        %v7052 = vpack.c.b16 %v7014, %v7013
        %v7053 = vpack.c.b16 %v7016, %v7015
        %v7054 = vpack.c.b16 %v7018, %v7017
        %v7092 = vsel %vm4212, %v6770, 0
        %7094 = vmatprep.subr.bf16.mxu0 0
        %7095 = vmatpush1.bf16.msra.mxu0 %v7019
        %7096 = vmatprep.subr.bf16.mxu0 0
        %7097 = vmatpush1.bf16.msra.mxu0 %v7020
        %7098 = vmatprep.subr.bf16.mxu0 0
        %7099 = vmatpush1.bf16.msra.mxu0 %v7021
        %7100 = vmatprep.subr.bf16.mxu0 0
        %7101 = vmatpush1.bf16.msra.mxu0 %v7022
        %7102 = vmatprep.subr.bf16.mxu0 0
        %7103 = vmatpush1.bf16.msra.mxu0 %v7023
        %7104 = vmatprep.subr.bf16.mxu0 0
        %7105 = vmatpush1.bf16.msra.mxu0 %v7024
        %7106 = vmatprep.subr.bf16.mxu0 0
        %7107 = vmatpush1.bf16.msra.mxu0 %v7025
        %7108 = vmatprep.subr.bf16.mxu0 0
        %7109 = vmatpush1.bf16.msra.mxu0 %v7026
        %7110 = vmatprep.subr.bf16.mxu0 0
        %7111 = vmatpush1.bf16.msra.mxu0 %v7027
        %7112 = vmatprep.subr.bf16.mxu0 0
        %7113 = vmatpush1.bf16.msra.mxu0 %v7028
        %7114 = vmatprep.subr.bf16.mxu0 0
        %7115 = vmatpush1.bf16.msra.mxu0 %v7029
        %7116 = vmatprep.subr.bf16.mxu0 0
        %7117 = vmatpush1.bf16.msra.mxu0 %v7030
        %7118 = vmatprep.subr.bf16.mxu0 0
        %7119 = vmatpush1.bf16.msra.mxu0 %v7031
        %7120 = vmatprep.subr.bf16.mxu0 0
        %7121 = vmatpush1.bf16.msra.mxu0 %v7032
        %7122 = vmatprep.subr.bf16.mxu0 0
        %7123 = vmatpush1.bf16.msra.mxu0 %v7033
        %7124 = vmatprep.subr.bf16.mxu0 0
        %7125 = vmatpush1.bf16.msra.mxu0 %v7034
        %7126 = vmatprep.mubr.bf16.mxu0 %v6789
        %7127 = vmatmul.mubr.bf16.gmra.mrb[0].mxu0 %v6785
        %v7128 = vpop.f32.mrb[0].mxu0
        %v7129 = vadd.f32 %v6874, %v7128
        %v7130 = vpop.f32.mrb[0].mxu0
        %v7131 = vpop.f32.mrb[0].mxu0
        %v7132 = vadd.f32 %v6874, %v7131
        %v7133 = vpop.f32.mrb[0].mxu0
        %7134 = vdwg.mxu0
        %7135 = vmatprep.subr.bf16.mxu0 0
        %7136 = vmatpush1.bf16.msra.mxu0 %v7035
        %7137 = vmatprep.subr.bf16.mxu0 0
        %7138 = vmatpush1.bf16.msra.mxu0 %v7036
        %7139 = vmatprep.subr.bf16.mxu0 0
        %7140 = vmatpush1.bf16.msra.mxu0 %v7037
        %7141 = vmatprep.subr.bf16.mxu0 0
        %7142 = vmatpush1.bf16.msra.mxu0 %v7038
        %7143 = vmatprep.subr.bf16.mxu0 0
        %7144 = vmatpush1.bf16.msra.mxu0 %v7039
        %7145 = vmatprep.subr.bf16.mxu0 0
        %7146 = vmatpush1.bf16.msra.mxu0 %v7040
        %7147 = vmatprep.subr.bf16.mxu0 0
        %7148 = vmatpush1.bf16.msra.mxu0 %v7041
        %7149 = vmatprep.subr.bf16.mxu0 0
        %7150 = vmatpush1.bf16.msra.mxu0 %v7042
        %7151 = vmatprep.subr.bf16.mxu0 0
        %7152 = vmatpush1.bf16.msra.mxu0 %v7043
        %7153 = vmatprep.subr.bf16.mxu0 0
        %7154 = vmatpush1.bf16.msra.mxu0 %v7044
        %7155 = vmatprep.subr.bf16.mxu0 0
        %7156 = vmatpush1.bf16.msra.mxu0 %v7045
        %7157 = vmatprep.subr.bf16.mxu0 0
        %7158 = vmatpush1.bf16.msra.mxu0 %v7046
        %7159 = vmatprep.subr.bf16.mxu0 0
        %7160 = vmatpush1.bf16.msra.mxu0 %v7047
        %7161 = vmatprep.subr.bf16.mxu0 0
        %7162 = vmatpush1.bf16.msra.mxu0 %v7048
        %7163 = vmatprep.subr.bf16.mxu0 0
        %7164 = vmatpush1.bf16.msra.mxu0 %v7049
        %7165 = vmatprep.subr.bf16.mxu0 0
        %7166 = vmatpush1.bf16.msra.mxu0 %v7050
        %7167 = vmatprep.mubr.bf16.mxu0 %v6797
        %7168 = vmatmul.mubr.bf16.gmra.mrb[0].mxu0 %v6793
        %v7169 = vpop.f32.mrb[0].mxu0
        %v7170 = vadd.f32 %v7129, %v7169
        %v7171 = vpop.f32.mrb[0].mxu0
        %v7172 = vpop.f32.mrb[0].mxu0
        %v7173 = vadd.f32 %v7132, %v7172
        %v7174 = vpop.f32.mrb[0].mxu0
        %7175 = vdwg.mxu0
        %7176 = vmatprep.subr.bf16.mxu0 0
        %7177 = vmatpush1.bf16.msra.mxu0 %v7051
        %7178 = vmatprep.subr.bf16.mxu0 0
        %7179 = vmatpush1.bf16.msra.mxu0 %v7052
        %7180 = vmatprep.subr.bf16.mxu0 0
        %7181 = vmatpush1.bf16.msra.mxu0 %v7053
        %7182 = vmatprep.subr.bf16.mxu0 0
        %7183 = vmatpush1.bf16.msra.mxu0 %v7054
        %7184 = vmatprep.subr.bf16.mxu0 0
        %7185 = vmatpush1.bf16.msra.mxu0 0
        %7186 = vmatprep.subr.bf16.mxu0 0
        %7187 = vmatpush1.bf16.msra.mxu0 0
        %7188 = vmatprep.subr.bf16.mxu0 0
        %7189 = vmatpush1.bf16.msra.mxu0 0
        %7190 = vmatprep.subr.bf16.mxu0 0
        %7191 = vmatpush1.bf16.msra.mxu0 0
        %7192 = vmatprep.subr.bf16.mxu0 0
        %7193 = vmatpush1.bf16.msra.mxu0 0
        %7194 = vmatprep.subr.bf16.mxu0 0
        %7195 = vmatpush1.bf16.msra.mxu0 0
        %7196 = vmatprep.subr.bf16.mxu0 0
        %7197 = vmatpush1.bf16.msra.mxu0 0
        %7198 = vmatprep.subr.bf16.mxu0 0
        %7199 = vmatpush1.bf16.msra.mxu0 0
        %7200 = vmatprep.subr.bf16.mxu0 0
        %7201 = vmatpush1.bf16.msra.mxu0 0
        %7202 = vmatprep.subr.bf16.mxu0 0
        %7203 = vmatpush1.bf16.msra.mxu0 0
        %7204 = vmatprep.subr.bf16.mxu0 0
        %7205 = vmatpush1.bf16.msra.mxu0 0
        %7206 = vmatprep.subr.bf16.mxu0 0
        %7207 = vmatpush1.bf16.msra.mxu0 0
        %7208 = vmatprep.mubr.bf16.mxu0 0
        %7209 = vmatmul.mubr.bf16.gmra.mrb[0].mxu0 %v7092
        %v7210 = vpop.f32.mrb[0].mxu0
        %v7211 = vadd.f32 %v7170, %v7210
        %v7212 = vpop.f32.mrb[0].mxu0
        %v7213 = vpop.f32.mrb[0].mxu0
        %v7214 = vadd.f32 %v7173, %v7213
        %v7215 = vpop.f32.mrb[0].mxu0
        %7216 = vdwg.mxu0
        %v7217 = vmax.f32 %v7211, 0.0
        %v7218 = vmax.f32 %v7214, 0.0
        %v7221 = vrot.slane %v7217, 2
        %v7222 = vrot.slane %v7218, 2
        %v7223 = vsel %vm6036, %v7221, %v7222
        %v7227 = vsel %vm6036, %v7222, %v7221
        %v7228 = vmax.f32 %v7217, %v7223
        %v7229 = vmax.f32 %v7218, %v7227
        %v7230 = vmax.f32 %v7228, %v7229
        %vm7231 = vcmp.eq.s32.totalorder %v5830, 0
        %vm7232 = vcmp.eq.s32.totalorder %v5831, 0
        %vm7233 = vcmp.eq.s32.totalorder %v5826, 0
        %vm7234 = vcmp.eq.s32.totalorder %v5827, 0
        %vm7235 = vmand %vm7231, %vm7233
        %vm7236 = vmand %vm7232, %vm7234
        %v7237 = vsel %vm7235, 1, 0
        %v7238 = vsel %vm7236, 1, 0
        %vm7239 = vcmp.eq.s32.totalorder %v7237, 1
        %vm7240 = vcmp.eq.s32.totalorder %v7238, 1
        %v7241 = vsel %vm7239, %v7230, 0.0
        %v7242 = vsel %vm7240, %v7230, 0.0
        %v7243 = vadd.f32 %v7241, %v7242
        %v7244 = vrot.slane %v7243, 4
        %v7245 = vadd.f32 %v7243, %v7244
        %v7246 = vrot.slane %v7245, 2
        %v7247 = vadd.f32 %v7245, %v7246
        %v7248 = vrot.slane %v7247, 1
        %v7249 = vadd.f32 %v7247, %v7248
        %7250 = vst [vmem:[%s243] sm:$0x1] %v7249
        %s7251 = sand.u32 %s159, 1
        %s7252 = scalar_lea.sflag [#allocation4], %s7251
        %s7253 = sand.u32 %s159, 1
        %s7254 = scalar_lea.vmem [#allocation3], %s7253
        // Predicated region
        $region45: #{tpu_custom_call.1} parent=43 // pred_check
          %p7255 = pneg %p169
        $region46: #{tpu_custom_call.1} parent=43 // pred_check_branch
          %7257 = sbr.rel (%p7255) target = $region48
        $region47: #{tpu_custom_call.1} parent=43 // pred_region
          %s7259 = ssub.s32 16, 16
          %7260 = vsyncadd %s7252, %s7259
          %s7261 = smul.addr %s20, 16
          %s7262 = scalar_lea.hbm %s6, %s7261
          %s7264 = sshll.u32 %s7254, 4
          %s7265 = int_to_ptr.vmem [resolvable:$true] %s7264
          %7267 = dma.vmem_to_hbm [thread:$0]  %s7265, 16, %s7262, %s7252
        $region48: #{tpu_custom_call.1} parent=43 // pred_fallthru
          _
      $region44: #{tpu_custom_call.1} parent=5 // pred_fallthru
        _
      %p7268 = scmp.le.s32.totalorder 2, %s15
      // Predicated region
      $region49: #{tpu_custom_call.1} parent=5 // pred_check
        %p7269 = pneg %p7268
      $region50: #{tpu_custom_call.1} parent=5 // pred_check_branch
        %7271 = sbr.rel (%p7269) target = $region52
      $region51: #{tpu_custom_call.1} parent=5 // pred_region
        %s7272 = ssub.s32 %s15, 2
        // Predicated region
        $region53: #{tpu_custom_call.1} parent=51 // pred_check
          %p7273 = pneg %p175
        $region54: #{tpu_custom_call.1} parent=51 // pred_check_branch
          %7275 = sbr.rel (%p7273) target = $region56
        $region55: #{tpu_custom_call.1} parent=51 // pred_region
          %s7276 = sand.u32 %s160, 1
          %s7277 = scalar_lea.sflag [#allocation4], %s7276
          %s7278 = sand.u32 %s160, 1
          %s7279 = scalar_lea.vmem [#allocation3], %s7278
          %7280 = dma.done %s7277, 16
        $region56: #{tpu_custom_call.1} parent=51 // pred_fallthru
          _
      $region52: #{tpu_custom_call.1} parent=5 // pred_fallthru
        _
    $region6: #{tpu_custom_call.1} parent=1 // loop_footer
      %s19 = sadd.s32 1, %s15
    $region7: #{tpu_custom_call.1} parent=1 // loop_footer_branch
      %14 = sbr.rel target = $region3
    $region8: #{tpu_custom_call.1} parent=1 // loop_exit
      _
    %7281 = vsyncpa [#allocation4], 1
    %s7282 = scalar_lea.sflag [#allocation4], 1
    %7283 = vsyncpa %s7282, 1

</llo_original>
